<compile_context>
chip_gen: v7x
topology: tpu7x:2x2x1
jax: 0.10.0
libtpu: 0.0.40
codegen_flags: <defaults>
</compile_context>

<pallas_src>
import functools
import math

import jax
import jax.numpy as jnp
from jax.experimental import pallas as pl
from jax.experimental.pallas import tpu as pltpu


# ------------------------------------------------------------------ tiling

def _div_tile(n, cap, candidates):
    """Largest candidate tile <= cap that divides n (full n if small)."""
    if n <= cap:
        return n
    for t in candidates:
        if t <= cap and n % t == 0:
            return t
    return n


def _row_tile(m, cap=256):
    return _div_tile(m, cap, (256, 128, 64, 32, 16, 8))


def _seq_tile(s, cap=256):
    return _div_tile(s, cap, (256, 128, 64, 32, 16, 8))


def _f_tile(f, cap=512):
    return _div_tile(f, cap, (512, 256, 128))


def _col_tile(n, cap=512):
    """Vocab (lane) tile; caller pads N up to a multiple if needed."""
    if n <= cap:
        return n
    for t in (512, 256, 128):
        if n % t == 0:
            return t
    return 256  # caller pads


def _vmem_limit(*blocks):
    """Scoped-VMEM budget from (shape, dtype) block list: double-buffered
    inputs/outputs + slack, clamped to stay inside v7x's 64 MiB physical."""
    need = 2 * sum(math.prod(s) * jnp.dtype(d).itemsize for s, d in blocks)
    need += 4 << 20
    return int(min(max(need, 8 << 20), 56 << 20))


# ------------------------------------------------------------------ kernels

def _attn_block_kernel(x_ref, kv_ref, wq_ref, bq_ref, wkv_ref, bkv_ref,
                       wo_ref, bo_ref, g_ref, b_ref, o_ref,
                       *, nhead, scale, eps):
    """One (batch, query-tile): LN(x + MHA(x, kv, kv)) fully fused in VMEM."""
    x = x_ref[0]                                   # [tq, D] f32
    kv_in = kv_ref[0]                              # [Skv, D] f32
    tq, D = x.shape
    skv = kv_in.shape[0]
    hd = D // nhead

    xb = x.astype(jnp.bfloat16)
    kvb = kv_in.astype(jnp.bfloat16)

    # fused in-projections: bf16 MXU operands, f32 accumulation
    q = jnp.dot(xb, wq_ref[...], preferred_element_type=jnp.float32) + bq_ref[...]
    kvp = jnp.dot(kvb, wkv_ref[...], preferred_element_type=jnp.float32) + bkv_ref[...]

    # heads batched on a leading axis (no lane-axis per-head slicing / concat)
    qh = (q * scale).reshape(tq, nhead, hd).astype(jnp.bfloat16)
    kh = kvp[:, :D].reshape(skv, nhead, hd).astype(jnp.bfloat16)
    vh = kvp[:, D:].reshape(skv, nhead, hd).astype(jnp.bfloat16)

    s = jnp.einsum("qhd,khd->hqk", qh, kh,
                   preferred_element_type=jnp.float32)        # [H, tq, Skv]
    s = s - jnp.max(s, axis=-1, keepdims=True)
    p = jnp.exp(s)
    p = p / jnp.sum(p, axis=-1, keepdims=True)                # exact division

    ctx = jnp.einsum("hqk,khd->qhd", p.astype(jnp.bfloat16), vh,
                     preferred_element_type=jnp.float32)       # [tq, H, hd]
    ctx = ctx.reshape(tq, D).astype(jnp.bfloat16)

    attn = jnp.dot(ctx, wo_ref[...], preferred_element_type=jnp.float32) + bo_ref[...]

    # fused residual add + LayerNorm (f32 statistics)
    y = x.astype(jnp.float32) + attn
    mean = jnp.mean(y, axis=-1, keepdims=True)
    var = jnp.mean(jnp.square(y - mean), axis=-1, keepdims=True)
    yn = (y - mean) * jax.lax.rsqrt(var + eps)
    o_ref[0] = (yn * g_ref[...] + b_ref[...]).astype(o_ref.dtype)


def _ffn_block_kernel(x_ref, w1_ref, b1_ref, w2_ref, b2_ref, g_ref, b_ref,
                      o_ref, acc_ref, *, eps):
    """Token tile x hidden-dim (F) tile: accumulate relu(xW1+b1)W2 partial
    products in f32 scratch; finalize residual + LayerNorm on the last F step."""
    j = pl.program_id(1)

    @pl.when(j == 0)
    def _():
        acc_ref[...] = jnp.zeros_like(acc_ref)

    xb = x_ref[...].astype(jnp.bfloat16)
    h = jnp.dot(xb, w1_ref[...], preferred_element_type=jnp.float32) + b1_ref[...]
    h = jnp.maximum(h, 0.0).astype(jnp.bfloat16)
    acc_ref[...] += jnp.dot(h, w2_ref[...], preferred_element_type=jnp.float32)

    @pl.when(j == pl.num_programs(1) - 1)
    def _():
        x = x_ref[...].astype(jnp.float32)
        y = x + acc_ref[...] + b2_ref[...]
        mean = jnp.mean(y, axis=-1, keepdims=True)
        var = jnp.mean(jnp.square(y - mean), axis=-1, keepdims=True)
        yn = (y - mean) * jax.lax.rsqrt(var + eps)
        o_ref[...] = (yn * g_ref[...] + b_ref[...]).astype(o_ref.dtype)


def _out_linear_kernel(x_ref, w_ref, b_ref, o_ref):
    """Resident activation; W streamed over vocab tiles (read once)."""
    y = jnp.dot(x_ref[...].astype(jnp.bfloat16), w_ref[...],
                preferred_element_type=jnp.float32) + b_ref[...]
    o_ref[...] = y.astype(o_ref.dtype)


# ----------------------------------------------------------------- wrappers

def attn_block(x, kv, p, gamma, beta, nhead, eps=1e-5):
    """x: [B, S, D] queries, kv: [B, Skv, D] keys/values source."""
    B, S, D = x.shape
    Skv = kv.shape[1]
    scale = 1.0 / math.sqrt(D // nhead)
    tq = _seq_tile(S)
    kernel = functools.partial(_attn_block_kernel, nhead=nhead, scale=scale, eps=eps)
    limit = _vmem_limit(
        ((1, tq, D), x.dtype), ((1, Skv, D), kv.dtype),
        ((D, D), p["wq"].dtype), ((1, D), jnp.float32),
        ((D, 2 * D), p["wkv"].dtype), ((1, 2 * D), jnp.float32),
        ((D, D), p["wo"].dtype), ((1, D), jnp.float32),
        ((1, D), jnp.float32), ((1, D), jnp.float32),
        ((1, tq, D), x.dtype),
    )
    return pl.pallas_call(
        kernel,
        grid=(B, S // tq),
        in_specs=[
            pl.BlockSpec((1, tq, D), lambda b, q: (b, q, 0)),     # x (queries)
            pl.BlockSpec((1, Skv, D), lambda b, q: (b, 0, 0)),    # kv source
            pl.BlockSpec((D, D), lambda b, q: (0, 0)),            # wq (bf16)
            pl.BlockSpec((1, D), lambda b, q: (0, 0)),            # bq
            pl.BlockSpec((D, 2 * D), lambda b, q: (0, 0)),        # wkv (fused K|V)
            pl.BlockSpec((1, 2 * D), lambda b, q: (0, 0)),        # bkv
            pl.BlockSpec((D, D), lambda b, q: (0, 0)),            # wo
            pl.BlockSpec((1, D), lambda b, q: (0, 0)),            # bo
            pl.BlockSpec((1, D), lambda b, q: (0, 0)),            # ln gamma
            pl.BlockSpec((1, D), lambda b, q: (0, 0)),            # ln beta
        ],
        out_specs=pl.BlockSpec((1, tq, D), lambda b, q: (b, q, 0)),
        out_shape=jax.ShapeDtypeStruct((B, S, D), x.dtype),
        compiler_params=pltpu.CompilerParams(
            dimension_semantics=("parallel", "parallel"),
            vmem_limit_bytes=limit),
    )(x, kv, p["wq"], p["bq"], p["wkv"], p["bkv"], p["wo"], p["bo"], gamma, beta)


def ffn_block(x2d, p, eps=1e-5):
    """x2d: [M, D] -> LN3(x + FFN(x)), F-tiled with an f32 accumulator."""
    M, D = x2d.shape
    F = p["w1"].shape[1]
    tm = _row_tile(M)
    tf = _f_tile(F)
    limit = _vmem_limit(
        ((tm, D), x2d.dtype), ((D, tf), p["w1"].dtype), ((1, tf), jnp.float32),
        ((tf, D), p["w2"].dtype), ((1, D), jnp.float32), ((1, D), jnp.float32),
        ((1, D), jnp.float32), ((tm, D), x2d.dtype), ((tm, D), jnp.float32),
    )
    return pl.pallas_call(
        functools.partial(_ffn_block_kernel, eps=eps),
        grid=(M // tm, F // tf),
        in_specs=[
            pl.BlockSpec((tm, D), lambda i, j: (i, 0)),           # x
            pl.BlockSpec((D, tf), lambda i, j: (0, j)),           # w1 tile
            pl.BlockSpec((1, tf), lambda i, j: (0, j)),           # b1 tile
            pl.BlockSpec((tf, D), lambda i, j: (j, 0)),           # w2 tile
            pl.BlockSpec((1, D), lambda i, j: (0, 0)),            # b2
            pl.BlockSpec((1, D), lambda i, j: (0, 0)),            # ln gamma
            pl.BlockSpec((1, D), lambda i, j: (0, 0)),            # ln beta
        ],
        out_specs=pl.BlockSpec((tm, D), lambda i, j: (i, 0)),
        out_shape=jax.ShapeDtypeStruct((M, D), x2d.dtype),
        scratch_shapes=[pltpu.VMEM((tm, D), jnp.float32)],
        compiler_params=pltpu.CompilerParams(
            dimension_semantics=("parallel", "arbitrary"),
            vmem_limit_bytes=limit),
    )(x2d, p["w1"], p["b1"], p["w2"], p["b2"], p["ln3_g"], p["ln3_b"])


def out_linear(x2d, w, b):
    """x2d [M, K] @ w [K, N] + b. Activation resident; W streamed once over N."""
    M, K = x2d.shape
    N = w.shape[1]
    tn = _col_tile(N)
    if N % tn:
        pad = tn - (N % tn)
        w = jnp.pad(w, ((0, 0), (0, pad)))
        b = jnp.pad(b, ((0, 0), (0, pad)))
    Np = w.shape[1]
    limit = _vmem_limit(((M, K), x2d.dtype), ((K, tn), w.dtype),
                        ((1, tn), jnp.float32), ((M, tn), x2d.dtype))
    out = pl.pallas_call(
        _out_linear_kernel,
        grid=(Np // tn,),
        in_specs=[
            pl.BlockSpec((M, K), lambda j: (0, 0)),               # resident act
            pl.BlockSpec((K, tn), lambda j: (0, j)),              # W read once
            pl.BlockSpec((1, tn), lambda j: (0, j)),
        ],
        out_specs=pl.BlockSpec((M, tn), lambda j: (0, j)),
        out_shape=jax.ShapeDtypeStruct((M, Np), x2d.dtype),
        compiler_params=pltpu.CompilerParams(
            dimension_semantics=("parallel",),
            vmem_limit_bytes=limit),
    )(x2d, w, b)
    return out[:, :N] if Np != N else out


# ----------------------------------------------------------- model forward

def transformer_lm_forward(params, tokens, start_pos, nhead):
    """Matches TransformerLM.forward(x, start_pos) in eval mode."""
    B, S = tokens.shape
    emb = params["embedding"][tokens]                 # [B, S, D] gather (glue)
    D = emb.shape[-1]

    # memory == cache[:B, :start_pos+S] after the in-place write of emb at
    # [start_pos:start_pos+S]; built as concat(prefix, emb) so the whole
    # [max_batch, max_seq, D] cache is never copied through HBM.
    if start_pos:
        memory = jnp.concatenate([params["cache"][:B, :start_pos], emb], axis=1)
    else:
        memory = emb

    x = emb
    for lp in params["layers"]:
        x = attn_block(x, x, lp["self_attn"], lp["ln1_g"], lp["ln1_b"], nhead)
        x = attn_block(x, memory, lp["cross_attn"], lp["ln2_g"], lp["ln2_b"], nhead)
        x = ffn_block(x.reshape(B * S, D), lp).reshape(B, S, D)

    logits = out_linear(x.reshape(B * S, D), params["out_w"], params["out_b"])
    return logits.reshape(B, S, -1)


# ---------------------------------------------------------------- init

def init_params(key, num_tokens, d_model, nhead, num_layers, dim_ff,
                max_batch, max_seq, act_dtype=jnp.float32, w_dtype=jnp.bfloat16):
    keys = iter(jax.random.split(key, 3 + num_layers * 8))

    def nrm(shape, scale=0.02, dtype=w_dtype):
        return (scale * jax.random.normal(next(keys), shape)).astype(dtype)

    def mha_params():
        return dict(
            wq=nrm((d_model, d_model)), bq=jnp.zeros((1, d_model), act_dtype),
            wkv=nrm((d_model, 2 * d_model)), bkv=jnp.zeros((1, 2 * d_model), act_dtype),
            wo=nrm((d_model, d_model)), bo=jnp.zeros((1, d_model), act_dtype),
        )

    layers = []
    for _ in range(num_layers):
        layers.append(dict(
            self_attn=mha_params(),
            cross_attn=mha_params(),
            w1=nrm((d_model, dim_ff)), b1=jnp.zeros((1, dim_ff), act_dtype),
            w2=nrm((dim_ff, d_model)), b2=jnp.zeros((1, d_model), act_dtype),
            ln1_g=jnp.ones((1, d_model), act_dtype), ln1_b=jnp.zeros((1, d_model), act_dtype),
            ln2_g=jnp.ones((1, d_model), act_dtype), ln2_b=jnp.zeros((1, d_model), act_dtype),
            ln3_g=jnp.ones((1, d_model), act_dtype), ln3_b=jnp.zeros((1, d_model), act_dtype),
        ))

    return dict(
        embedding=nrm((num_tokens, d_model), scale=1.0, dtype=act_dtype),  # nn.Embedding ~ N(0,1)
        layers=layers,
        out_w=nrm((d_model, num_tokens)),
        out_b=jnp.zeros((1, num_tokens), act_dtype),
        cache=jnp.zeros((max_batch, max_seq, d_model), act_dtype),
    )


# ---------------------------------------------------------------- main

if __name__ == "__main__":
    # Small but lane-aligned dims (multiples of 128 on D / F / vocab so every
    # Pallas output block is lane-dense).
    NUM_TOKENS = 256
    D_MODEL = 128
    NHEAD = 4
    NUM_LAYERS = 2
    DIM_FF = 256
    MAX_BATCH = 4
    MAX_SEQ = 64

    B, S = 2, 8
    START_POS = 4

    key = jax.random.PRNGKey(0)
    k_param, k_tok = jax.random.split(key)
    params = init_params(k_param, NUM_TOKENS, D_MODEL, NHEAD, NUM_LAYERS,
                         DIM_FF, MAX_BATCH, MAX_SEQ)
    tokens = jax.random.randint(k_tok, (B, S), 0, NUM_TOKENS, dtype=jnp.int32)

    fwd = jax.jit(functools.partial(transformer_lm_forward, nhead=NHEAD),
                  static_argnums=(2,))
    logits = fwd(params, tokens, START_POS)
    jax.block_until_ready(logits)

    assert logits.shape == (B, S, NUM_TOKENS), logits.shape
    assert logits.dtype == jnp.float32
    assert bool(jnp.all(jnp.isfinite(logits)))
    print("KERNEL_OK")
</pallas_src>

<mosaic_0001>
module attributes {stable_mosaic.version = 11 : i64} {
  func.func @_attn_block_kernel(%arg0: i32, %arg1: i32, %arg2: memref<1x8x128xf32, #tpu.memory_space<vmem>>, %arg3: memref<1x12x128xf32, #tpu.memory_space<vmem>>, %arg4: memref<128x128xbf16, #tpu.memory_space<vmem>>, %arg5: memref<1x128xf32, #tpu.memory_space<vmem>>, %arg6: memref<128x256xbf16, #tpu.memory_space<vmem>>, %arg7: memref<1x256xf32, #tpu.memory_space<vmem>>, %arg8: memref<128x128xbf16, #tpu.memory_space<vmem>>, %arg9: memref<1x128xf32, #tpu.memory_space<vmem>>, %arg10: memref<1x128xf32, #tpu.memory_space<vmem>>, %arg11: memref<1x128xf32, #tpu.memory_space<vmem>>, %arg12: memref<1x8x128xf32, #tpu.memory_space<vmem>>) attributes {dimension_semantics = [#tpu.dimension_semantics<parallel>, #tpu.dimension_semantics<parallel>], iteration_bounds = array<i64: 2, 1>, scalar_prefetch = 0 : i64, scratch_operands = 0 : i64, tpu.core_type = #tpu.core_type<tc>, window_params = [{transform_indices = @transform_0, window_bounds = array<i64: 1, 8, 128>}, {transform_indices = @transform_1, window_bounds = array<i64: 1, 12, 128>}, {pipeline_mode = #tpu.pipeline_mode<synchronous>, transform_indices = @transform_2, window_bounds = array<i64: 128, 128>}, {pipeline_mode = #tpu.pipeline_mode<synchronous>, transform_indices = @transform_3, window_bounds = array<i64: 1, 128>}, {pipeline_mode = #tpu.pipeline_mode<synchronous>, transform_indices = @transform_4, window_bounds = array<i64: 128, 256>}, {pipeline_mode = #tpu.pipeline_mode<synchronous>, transform_indices = @transform_5, window_bounds = array<i64: 1, 256>}, {pipeline_mode = #tpu.pipeline_mode<synchronous>, transform_indices = @transform_6, window_bounds = array<i64: 128, 128>}, {pipeline_mode = #tpu.pipeline_mode<synchronous>, transform_indices = @transform_7, window_bounds = array<i64: 1, 128>}, {pipeline_mode = #tpu.pipeline_mode<synchronous>, transform_indices = @transform_8, window_bounds = array<i64: 1, 128>}, {pipeline_mode = #tpu.pipeline_mode<synchronous>, transform_indices = @transform_9, window_bounds = array<i64: 1, 128>}, {transform_indices = @transform_10, window_bounds = array<i64: 1, 8, 128>}]} {
    %c0 = arith.constant 0 : index
    %c0_0 = arith.constant 0 : index
    %c0_1 = arith.constant 0 : index
    %0 = vector.load %arg2[%c0, %c0_0, %c0_1] : memref<1x8x128xf32, #tpu.memory_space<vmem>>, vector<1x8x128xf32>
    %1 = vector.shape_cast %0 : vector<1x8x128xf32> to vector<8x128xf32>
    %c0_2 = arith.constant 0 : index
    %c0_3 = arith.constant 0 : index
    %c0_4 = arith.constant 0 : index
    %2 = vector.load %arg3[%c0_2, %c0_3, %c0_4] : memref<1x12x128xf32, #tpu.memory_space<vmem>>, vector<1x12x128xf32>
    %3 = vector.shape_cast %2 : vector<1x12x128xf32> to vector<12x128xf32>
    %4 = arith.truncf %1 : vector<8x128xf32> to vector<8x128xbf16>
    %5 = arith.truncf %3 : vector<12x128xf32> to vector<12x128xbf16>
    %c0_5 = arith.constant 0 : index
    %c0_6 = arith.constant 0 : index
    %6 = vector.load %arg4[%c0_5, %c0_6] : memref<128x128xbf16, #tpu.memory_space<vmem>>, vector<128x128xbf16>
    %cst = arith.constant dense<0.000000e+00> : vector<8x128xf32>
    %7 = tpu.matmul %4, %6, %cst {dimension_numbers = #tpu.dot_dimension_numbers<[1], [0], [0], [1], [0, 0, 1, 1], [], []>} : vector<8x128xbf16>, vector<128x128xbf16>, vector<8x128xf32> -> vector<8x128xf32>
    %c0_7 = arith.constant 0 : index
    %c0_8 = arith.constant 0 : index
    %8 = vector.load %arg5[%c0_7, %c0_8] : memref<1x128xf32, #tpu.memory_space<vmem>>, vector<1x128xf32>
    %9 = vector.broadcast %8 : vector<1x128xf32> to vector<8x128xf32>
    %10 = arith.addf %7, %9 : vector<8x128xf32>
    %c0_9 = arith.constant 0 : index
    %c0_10 = arith.constant 0 : index
    %11 = vector.load %arg6[%c0_9, %c0_10] : memref<128x256xbf16, #tpu.memory_space<vmem>>, vector<128x256xbf16>
    %cst_11 = arith.constant dense<0.000000e+00> : vector<12x256xf32>
    %12 = tpu.matmul %5, %11, %cst_11 {dimension_numbers = #tpu.dot_dimension_numbers<[1], [0], [0], [1], [0, 0, 1, 1], [], []>} : vector<12x128xbf16>, vector<128x256xbf16>, vector<12x256xf32> -> vector<12x256xf32>
    %c0_12 = arith.constant 0 : index
    %c0_13 = arith.constant 0 : index
    %13 = vector.load %arg7[%c0_12, %c0_13] : memref<1x256xf32, #tpu.memory_space<vmem>>, vector<1x256xf32>
    %14 = vector.broadcast %13 : vector<1x256xf32> to vector<12x256xf32>
    %15 = arith.addf %12, %14 : vector<12x256xf32>
    %cst_14 = arith.constant 0.176776692 : f32
    %16 = vector.broadcast %cst_14 : f32 to vector<8x128xf32>
    %17 = arith.mulf %10, %16 : vector<8x128xf32>
    %18 = vector.shape_cast %17 : vector<8x128xf32> to vector<8x4x32xf32>
    %19 = arith.truncf %18 : vector<8x4x32xf32> to vector<8x4x32xbf16>
    %20 = vector.extract_strided_slice %15 {offsets = [0, 0], sizes = [12, 128], strides = [1, 1]} : vector<12x256xf32> to vector<12x128xf32>
    %21 = vector.shape_cast %20 : vector<12x128xf32> to vector<12x4x32xf32>
    %22 = arith.truncf %21 : vector<12x4x32xf32> to vector<12x4x32xbf16>
    %23 = vector.extract_strided_slice %15 {offsets = [0, 128], sizes = [12, 128], strides = [1, 1]} : vector<12x256xf32> to vector<12x128xf32>
    %24 = vector.shape_cast %23 : vector<12x128xf32> to vector<12x4x32xf32>
    %25 = arith.truncf %24 : vector<12x4x32xf32> to vector<12x4x32xbf16>
    "tpu.trace_start"() <{level = 10 : i32, message = "qhd,khd->hqk"}> : () -> ()
    %cst_15 = arith.constant dense<0.000000e+00> : vector<4x8x12xf32>
    %26 = tpu.matmul %19, %22, %cst_15 {dimension_numbers = #tpu.dot_dimension_numbers<[2], [2], [0], [0], [0, 1, 0, 0, 1, 0], [1], [1]>} : vector<8x4x32xbf16>, vector<12x4x32xbf16>, vector<4x8x12xf32> -> vector<4x8x12xf32>
    "tpu.trace_stop"() : () -> ()
    %cst_16 = arith.constant dense<0xFF800000> : vector<4x8xf32>
    %27 = vector.multi_reduction <maximumf>, %26, %cst_16 [2] : vector<4x8x12xf32> to vector<4x8xf32>
    %28 = vector.shape_cast %27 : vector<4x8xf32> to vector<4x8x1xf32>
    %29 = vector.broadcast %28 : vector<4x8x1xf32> to vector<4x8x12xf32>
    %30 = arith.subf %26, %29 : vector<4x8x12xf32>
    %31 = math.exp %30 : vector<4x8x12xf32>
    %cst_17 = arith.constant dense<0.000000e+00> : vector<4x8xf32>
    %32 = vector.multi_reduction <add>, %31, %cst_17 [2] : vector<4x8x12xf32> to vector<4x8xf32>
    %33 = vector.shape_cast %32 : vector<4x8xf32> to vector<4x8x1xf32>
    %34 = vector.broadcast %33 : vector<4x8x1xf32> to vector<4x8x12xf32>
    %35 = arith.divf %31, %34 : vector<4x8x12xf32>
    %36 = arith.truncf %35 : vector<4x8x12xf32> to vector<4x8x12xbf16>
    "tpu.trace_start"() <{level = 10 : i32, message = "hqk,khd->qhd"}> : () -> ()
    %cst_18 = arith.constant dense<0.000000e+00> : vector<4x32x8xf32>
    %37 = tpu.matmul %25, %36, %cst_18 {dimension_numbers = #tpu.dot_dimension_numbers<[0], [2], [2], [1], [0, 1, 0, 2, 1, 1], [1], [0]>} : vector<12x4x32xbf16>, vector<4x8x12xbf16>, vector<4x32x8xf32> -> vector<4x32x8xf32>
    %38 = tpu.transpose %37, [2, 0, 1] : vector<4x32x8xf32> -> vector<8x4x32xf32>
    "tpu.trace_stop"() : () -> ()
    %39 = vector.shape_cast %38 : vector<8x4x32xf32> to vector<8x128xf32>
    %40 = arith.truncf %39 : vector<8x128xf32> to vector<8x128xbf16>
    %c0_19 = arith.constant 0 : index
    %c0_20 = arith.constant 0 : index
    %41 = vector.load %arg8[%c0_19, %c0_20] : memref<128x128xbf16, #tpu.memory_space<vmem>>, vector<128x128xbf16>
    %cst_21 = arith.constant dense<0.000000e+00> : vector<8x128xf32>
    %42 = tpu.matmul %40, %41, %cst_21 {dimension_numbers = #tpu.dot_dimension_numbers<[1], [0], [0], [1], [0, 0, 1, 1], [], []>} : vector<8x128xbf16>, vector<128x128xbf16>, vector<8x128xf32> -> vector<8x128xf32>
    %c0_22 = arith.constant 0 : index
    %c0_23 = arith.constant 0 : index
    %43 = vector.load %arg9[%c0_22, %c0_23] : memref<1x128xf32, #tpu.memory_space<vmem>>, vector<1x128xf32>
    %44 = vector.broadcast %43 : vector<1x128xf32> to vector<8x128xf32>
    %45 = arith.addf %42, %44 : vector<8x128xf32>
    %46 = arith.addf %1, %45 : vector<8x128xf32>
    %cst_24 = arith.constant dense<0.000000e+00> : vector<8xf32>
    %47 = vector.multi_reduction <add>, %46, %cst_24 [1] : vector<8x128xf32> to vector<8xf32>
    %48 = vector.shape_cast %47 : vector<8xf32> to vector<8x1xf32>
    %cst_25 = arith.constant 1.280000e+02 : f32
    %49 = vector.broadcast %cst_25 : f32 to vector<8x1xf32>
    %50 = arith.divf %48, %49 : vector<8x1xf32>
    %51 = vector.broadcast %50 : vector<8x1xf32> to vector<8x128xf32>
    %52 = arith.subf %46, %51 : vector<8x128xf32>
    %53 = arith.mulf %52, %52 : vector<8x128xf32>
    %cst_26 = arith.constant dense<0.000000e+00> : vector<8xf32>
    %54 = vector.multi_reduction <add>, %53, %cst_26 [1] : vector<8x128xf32> to vector<8xf32>
    %55 = vector.shape_cast %54 : vector<8xf32> to vector<8x1xf32>
    %cst_27 = arith.constant 1.280000e+02 : f32
    %56 = vector.broadcast %cst_27 : f32 to vector<8x1xf32>
    %57 = arith.divf %55, %56 : vector<8x1xf32>
    %58 = vector.broadcast %50 : vector<8x1xf32> to vector<8x128xf32>
    %59 = arith.subf %46, %58 : vector<8x128xf32>
    %cst_28 = arith.constant 9.99999974E-6 : f32
    %60 = vector.broadcast %cst_28 : f32 to vector<8x1xf32>
    %61 = arith.addf %57, %60 : vector<8x1xf32>
    %62 = math.rsqrt %61 : vector<8x1xf32>
    %63 = vector.broadcast %62 : vector<8x1xf32> to vector<8x128xf32>
    %64 = arith.mulf %59, %63 : vector<8x128xf32>
    %c0_29 = arith.constant 0 : index
    %c0_30 = arith.constant 0 : index
    %65 = vector.load %arg10[%c0_29, %c0_30] : memref<1x128xf32, #tpu.memory_space<vmem>>, vector<1x128xf32>
    %66 = vector.broadcast %65 : vector<1x128xf32> to vector<8x128xf32>
    %67 = arith.mulf %64, %66 : vector<8x128xf32>
    %c0_31 = arith.constant 0 : index
    %c0_32 = arith.constant 0 : index
    %68 = vector.load %arg11[%c0_31, %c0_32] : memref<1x128xf32, #tpu.memory_space<vmem>>, vector<1x128xf32>
    %69 = vector.broadcast %68 : vector<1x128xf32> to vector<8x128xf32>
    %70 = arith.addf %67, %69 : vector<8x128xf32>
    %c0_33 = arith.constant 0 : index
    %c0_34 = arith.constant 0 : index
    %c0_35 = arith.constant 0 : index
    %71 = vector.load %arg12[%c0_33, %c0_34, %c0_35] : memref<1x8x128xf32, #tpu.memory_space<vmem>>, vector<1x8x128xf32>
    %72 = vector.shape_cast %71 : vector<1x8x128xf32> to vector<8x128xf32>
    %73 = vector.shape_cast %70 : vector<8x128xf32> to vector<1x8x128xf32>
    tpu.vector_store %arg12[%c0_33, %c0_34, %c0_35], %73 {strides = array<i32>} : memref<1x8x128xf32, #tpu.memory_space<vmem>>, vector<1x8x128xf32>,
    return
  }
  func.func @transform_0(%arg0: i32, %arg1: i32) -> (i32, i32, i32) {
    %c0_i32 = arith.constant 0 : i32
    %c0_i32_0 = arith.constant 0 : i32
    return %arg0, %arg1, %c0_i32 : i32, i32, i32
  }
  func.func @transform_1(%arg0: i32, %arg1: i32) -> (i32, i32, i32) {
    %c0_i32 = arith.constant 0 : i32
    %c0_i32_0 = arith.constant 0 : i32
    %c0_i32_1 = arith.constant 0 : i32
    return %arg0, %c0_i32, %c0_i32_0 : i32, i32, i32
  }
  func.func @transform_2(%arg0: i32, %arg1: i32) -> (i32, i32) {
    %c0_i32 = arith.constant 0 : i32
    %c0_i32_0 = arith.constant 0 : i32
    %c0_i32_1 = arith.constant 0 : i32
    return %c0_i32, %c0_i32_0 : i32, i32
  }
  func.func @transform_3(%arg0: i32, %arg1: i32) -> (i32, i32) {
    %c0_i32 = arith.constant 0 : i32
    %c0_i32_0 = arith.constant 0 : i32
    %c0_i32_1 = arith.constant 0 : i32
    return %c0_i32, %c0_i32_0 : i32, i32
  }
  func.func @transform_4(%arg0: i32, %arg1: i32) -> (i32, i32) {
    %c0_i32 = arith.constant 0 : i32
    %c0_i32_0 = arith.constant 0 : i32
    %c0_i32_1 = arith.constant 0 : i32
    return %c0_i32, %c0_i32_0 : i32, i32
  }
  func.func @transform_5(%arg0: i32, %arg1: i32) -> (i32, i32) {
    %c0_i32 = arith.constant 0 : i32
    %c0_i32_0 = arith.constant 0 : i32
    %c0_i32_1 = arith.constant 0 : i32
    return %c0_i32, %c0_i32_0 : i32, i32
  }
  func.func @transform_6(%arg0: i32, %arg1: i32) -> (i32, i32) {
    %c0_i32 = arith.constant 0 : i32
    %c0_i32_0 = arith.constant 0 : i32
    %c0_i32_1 = arith.constant 0 : i32
    return %c0_i32, %c0_i32_0 : i32, i32
  }
  func.func @transform_7(%arg0: i32, %arg1: i32) -> (i32, i32) {
    %c0_i32 = arith.constant 0 : i32
    %c0_i32_0 = arith.constant 0 : i32
    %c0_i32_1 = arith.constant 0 : i32
    return %c0_i32, %c0_i32_0 : i32, i32
  }
  func.func @transform_8(%arg0: i32, %arg1: i32) -> (i32, i32) {
    %c0_i32 = arith.constant 0 : i32
    %c0_i32_0 = arith.constant 0 : i32
    %c0_i32_1 = arith.constant 0 : i32
    return %c0_i32, %c0_i32_0 : i32, i32
  }
  func.func @transform_9(%arg0: i32, %arg1: i32) -> (i32, i32) {
    %c0_i32 = arith.constant 0 : i32
    %c0_i32_0 = arith.constant 0 : i32
    %c0_i32_1 = arith.constant 0 : i32
    return %c0_i32, %c0_i32_0 : i32, i32
  }
  func.func @transform_10(%arg0: i32, %arg1: i32) -> (i32, i32, i32) {
    %c0_i32 = arith.constant 0 : i32
    %c0_i32_0 = arith.constant 0 : i32
    return %arg0, %arg1, %c0_i32 : i32, i32, i32
  }
}

module attributes {stable_mosaic.version = 11 : i64} {
  func.func @_out_linear_kernel(%arg0: i32, %arg1: memref<16x128xf32, #tpu.memory_space<vmem>>, %arg2: memref<128x256xbf16, #tpu.memory_space<vmem>>, %arg3: memref<1x256xf32, #tpu.memory_space<vmem>>, %arg4: memref<16x256xf32, #tpu.memory_space<vmem>>) attributes {dimension_semantics = [#tpu.dimension_semantics<parallel>], iteration_bounds = array<i64: 1>, scalar_prefetch = 0 : i64, scratch_operands = 0 : i64, tpu.core_type = #tpu.core_type<tc>, window_params = [{pipeline_mode = #tpu.pipeline_mode<synchronous>, transform_indices = @transform_0, window_bounds = array<i64: 16, 128>}, {transform_indices = @transform_1, window_bounds = array<i64: 128, 256>}, {transform_indices = @transform_2, window_bounds = array<i64: 1, 256>}, {transform_indices = @transform_3, window_bounds = array<i64: 16, 256>}]} {
    %c0 = arith.constant 0 : index
    %c0_0 = arith.constant 0 : index
    %0 = vector.load %arg1[%c0, %c0_0] : memref<16x128xf32, #tpu.memory_space<vmem>>, vector<16x128xf32>
    %1 = arith.truncf %0 : vector<16x128xf32> to vector<16x128xbf16>
    %c0_1 = arith.constant 0 : index
    %c0_2 = arith.constant 0 : index
    %2 = vector.load %arg2[%c0_1, %c0_2] : memref<128x256xbf16, #tpu.memory_space<vmem>>, vector<128x256xbf16>
    %cst = arith.constant dense<0.000000e+00> : vector<16x256xf32>
    %3 = tpu.matmul %1, %2, %cst {dimension_numbers = #tpu.dot_dimension_numbers<[1], [0], [0], [1], [0, 0, 1, 1], [], []>} : vector<16x128xbf16>, vector<128x256xbf16>, vector<16x256xf32> -> vector<16x256xf32>
    %c0_3 = arith.constant 0 : index
    %c0_4 = arith.constant 0 : index
    %4 = vector.load %arg3[%c0_3, %c0_4] : memref<1x256xf32, #tpu.memory_space<vmem>>, vector<1x256xf32>
    %5 = vector.broadcast %4 : vector<1x256xf32> to vector<16x256xf32>
    %6 = arith.addf %3, %5 : vector<16x256xf32>
    %c0_5 = arith.constant 0 : index
    %c0_6 = arith.constant 0 : index
    %7 = vector.load %arg4[%c0_5, %c0_6] : memref<16x256xf32, #tpu.memory_space<vmem>>, vector<16x256xf32>
    tpu.vector_store %arg4[%c0_5, %c0_6], %6 {strides = array<i32>} : memref<16x256xf32, #tpu.memory_space<vmem>>, vector<16x256xf32>,
    return
  }
  func.func @transform_0(%arg0: i32) -> (i32, i32) {
    %c0_i32 = arith.constant 0 : i32
    %c0_i32_0 = arith.constant 0 : i32
    %c0_i32_1 = arith.constant 0 : i32
    return %c0_i32, %c0_i32_0 : i32, i32
  }
  func.func @transform_1(%arg0: i32) -> (i32, i32) {
    %c0_i32 = arith.constant 0 : i32
    %c0_i32_0 = arith.constant 0 : i32
    return %c0_i32, %arg0 : i32, i32
  }
  func.func @transform_2(%arg0: i32) -> (i32, i32) {
    %c0_i32 = arith.constant 0 : i32
    %c0_i32_0 = arith.constant 0 : i32
    return %c0_i32, %arg0 : i32, i32
  }
  func.func @transform_3(%arg0: i32) -> (i32, i32) {
    %c0_i32 = arith.constant 0 : i32
    %c0_i32_0 = arith.constant 0 : i32
    return %c0_i32, %arg0 : i32, i32
  }
}

module attributes {stable_mosaic.version = 11 : i64} {
  func.func @_attn_block_kernel(%arg0: i32, %arg1: i32, %arg2: memref<1x8x128xf32, #tpu.memory_space<vmem>>, %arg3: memref<1x8x128xf32, #tpu.memory_space<vmem>>, %arg4: memref<128x128xbf16, #tpu.memory_space<vmem>>, %arg5: memref<1x128xf32, #tpu.memory_space<vmem>>, %arg6: memref<128x256xbf16, #tpu.memory_space<vmem>>, %arg7: memref<1x256xf32, #tpu.memory_space<vmem>>, %arg8: memref<128x128xbf16, #tpu.memory_space<vmem>>, %arg9: memref<1x128xf32, #tpu.memory_space<vmem>>, %arg10: memref<1x128xf32, #tpu.memory_space<vmem>>, %arg11: memref<1x128xf32, #tpu.memory_space<vmem>>, %arg12: memref<1x8x128xf32, #tpu.memory_space<vmem>>) attributes {dimension_semantics = [#tpu.dimension_semantics<parallel>, #tpu.dimension_semantics<parallel>], iteration_bounds = array<i64: 2, 1>, scalar_prefetch = 0 : i64, scratch_operands = 0 : i64, tpu.core_type = #tpu.core_type<tc>, window_params = [{transform_indices = @transform_0, window_bounds = array<i64: 1, 8, 128>}, {transform_indices = @transform_1, window_bounds = array<i64: 1, 8, 128>}, {pipeline_mode = #tpu.pipeline_mode<synchronous>, transform_indices = @transform_2, window_bounds = array<i64: 128, 128>}, {pipeline_mode = #tpu.pipeline_mode<synchronous>, transform_indices = @transform_3, window_bounds = array<i64: 1, 128>}, {pipeline_mode = #tpu.pipeline_mode<synchronous>, transform_indices = @transform_4, window_bounds = array<i64: 128, 256>}, {pipeline_mode = #tpu.pipeline_mode<synchronous>, transform_indices = @transform_5, window_bounds = array<i64: 1, 256>}, {pipeline_mode = #tpu.pipeline_mode<synchronous>, transform_indices = @transform_6, window_bounds = array<i64: 128, 128>}, {pipeline_mode = #tpu.pipeline_mode<synchronous>, transform_indices = @transform_7, window_bounds = array<i64: 1, 128>}, {pipeline_mode = #tpu.pipeline_mode<synchronous>, transform_indices = @transform_8, window_bounds = array<i64: 1, 128>}, {pipeline_mode = #tpu.pipeline_mode<synchronous>, transform_indices = @transform_9, window_bounds = array<i64: 1, 128>}, {transform_indices = @transform_10, window_bounds = array<i64: 1, 8, 128>}]} {
    %c0 = arith.constant 0 : index
    %c0_0 = arith.constant 0 : index
    %c0_1 = arith.constant 0 : index
    %0 = vector.load %arg2[%c0, %c0_0, %c0_1] : memref<1x8x128xf32, #tpu.memory_space<vmem>>, vector<1x8x128xf32>
    %1 = vector.shape_cast %0 : vector<1x8x128xf32> to vector<8x128xf32>
    %c0_2 = arith.constant 0 : index
    %c0_3 = arith.constant 0 : index
    %c0_4 = arith.constant 0 : index
    %2 = vector.load %arg3[%c0_2, %c0_3, %c0_4] : memref<1x8x128xf32, #tpu.memory_space<vmem>>, vector<1x8x128xf32>
    %3 = vector.shape_cast %2 : vector<1x8x128xf32> to vector<8x128xf32>
    %4 = arith.truncf %1 : vector<8x128xf32> to vector<8x128xbf16>
    %5 = arith.truncf %3 : vector<8x128xf32> to vector<8x128xbf16>
    %c0_5 = arith.constant 0 : index
    %c0_6 = arith.constant 0 : index
    %6 = vector.load %arg4[%c0_5, %c0_6] : memref<128x128xbf16, #tpu.memory_space<vmem>>, vector<128x128xbf16>
    %cst = arith.constant dense<0.000000e+00> : vector<8x128xf32>
    %7 = tpu.matmul %4, %6, %cst {dimension_numbers = #tpu.dot_dimension_numbers<[1], [0], [0], [1], [0, 0, 1, 1], [], []>} : vector<8x128xbf16>, vector<128x128xbf16>, vector<8x128xf32> -> vector<8x128xf32>
    %c0_7 = arith.constant 0 : index
    %c0_8 = arith.constant 0 : index
    %8 = vector.load %arg5[%c0_7, %c0_8] : memref<1x128xf32, #tpu.memory_space<vmem>>, vector<1x128xf32>
    %9 = vector.broadcast %8 : vector<1x128xf32> to vector<8x128xf32>
    %10 = arith.addf %7, %9 : vector<8x128xf32>
    %c0_9 = arith.constant 0 : index
    %c0_10 = arith.constant 0 : index
    %11 = vector.load %arg6[%c0_9, %c0_10] : memref<128x256xbf16, #tpu.memory_space<vmem>>, vector<128x256xbf16>
    %cst_11 = arith.constant dense<0.000000e+00> : vector<8x256xf32>
    %12 = tpu.matmul %5, %11, %cst_11 {dimension_numbers = #tpu.dot_dimension_numbers<[1], [0], [0], [1], [0, 0, 1, 1], [], []>} : vector<8x128xbf16>, vector<128x256xbf16>, vector<8x256xf32> -> vector<8x256xf32>
    %c0_12 = arith.constant 0 : index
    %c0_13 = arith.constant 0 : index
    %13 = vector.load %arg7[%c0_12, %c0_13] : memref<1x256xf32, #tpu.memory_space<vmem>>, vector<1x256xf32>
    %14 = vector.broadcast %13 : vector<1x256xf32> to vector<8x256xf32>
    %15 = arith.addf %12, %14 : vector<8x256xf32>
    %cst_14 = arith.constant 0.176776692 : f32
    %16 = vector.broadcast %cst_14 : f32 to vector<8x128xf32>
    %17 = arith.mulf %10, %16 : vector<8x128xf32>
    %18 = vector.shape_cast %17 : vector<8x128xf32> to vector<8x4x32xf32>
    %19 = arith.truncf %18 : vector<8x4x32xf32> to vector<8x4x32xbf16>
    %20 = vector.extract_strided_slice %15 {offsets = [0, 0], sizes = [8, 128], strides = [1, 1]} : vector<8x256xf32> to vector<8x128xf32>
    %21 = vector.shape_cast %20 : vector<8x128xf32> to vector<8x4x32xf32>
    %22 = arith.truncf %21 : vector<8x4x32xf32> to vector<8x4x32xbf16>
    %23 = vector.extract_strided_slice %15 {offsets = [0, 128], sizes = [8, 128], strides = [1, 1]} : vector<8x256xf32> to vector<8x128xf32>
    %24 = vector.shape_cast %23 : vector<8x128xf32> to vector<8x4x32xf32>
    %25 = arith.truncf %24 : vector<8x4x32xf32> to vector<8x4x32xbf16>
    "tpu.trace_start"() <{level = 10 : i32, message = "qhd,khd->hqk"}> : () -> ()
    %cst_15 = arith.constant dense<0.000000e+00> : vector<4x8x8xf32>
    %26 = tpu.matmul %19, %22, %cst_15 {dimension_numbers = #tpu.dot_dimension_numbers<[2], [2], [0], [0], [0, 1, 0, 0, 1, 0], [1], [1]>} : vector<8x4x32xbf16>, vector<8x4x32xbf16>, vector<4x8x8xf32> -> vector<4x8x8xf32>
    "tpu.trace_stop"() : () -> ()
    %cst_16 = arith.constant dense<0xFF800000> : vector<4x8xf32>
    %27 = vector.multi_reduction <maximumf>, %26, %cst_16 [2] : vector<4x8x8xf32> to vector<4x8xf32>
    %28 = vector.shape_cast %27 : vector<4x8xf32> to vector<4x8x1xf32>
    %29 = vector.broadcast %28 : vector<4x8x1xf32> to vector<4x8x8xf32>
    %30 = arith.subf %26, %29 : vector<4x8x8xf32>
    %31 = math.exp %30 : vector<4x8x8xf32>
    %cst_17 = arith.constant dense<0.000000e+00> : vector<4x8xf32>
    %32 = vector.multi_reduction <add>, %31, %cst_17 [2] : vector<4x8x8xf32> to vector<4x8xf32>
    %33 = vector.shape_cast %32 : vector<4x8xf32> to vector<4x8x1xf32>
    %34 = vector.broadcast %33 : vector<4x8x1xf32> to vector<4x8x8xf32>
    %35 = arith.divf %31, %34 : vector<4x8x8xf32>
    %36 = arith.truncf %35 : vector<4x8x8xf32> to vector<4x8x8xbf16>
    "tpu.trace_start"() <{level = 10 : i32, message = "hqk,khd->qhd"}> : () -> ()
    %cst_18 = arith.constant dense<0.000000e+00> : vector<4x32x8xf32>
    %37 = tpu.matmul %25, %36, %cst_18 {dimension_numbers = #tpu.dot_dimension_numbers<[0], [2], [2], [1], [0, 1, 0, 2, 1, 1], [1], [0]>} : vector<8x4x32xbf16>, vector<4x8x8xbf16>, vector<4x32x8xf32> -> vector<4x32x8xf32>
    %38 = tpu.transpose %37, [2, 0, 1] : vector<4x32x8xf32> -> vector<8x4x32xf32>
    "tpu.trace_stop"() : () -> ()
    %39 = vector.shape_cast %38 : vector<8x4x32xf32> to vector<8x128xf32>
    %40 = arith.truncf %39 : vector<8x128xf32> to vector<8x128xbf16>
    %c0_19 = arith.constant 0 : index
    %c0_20 = arith.constant 0 : index
    %41 = vector.load %arg8[%c0_19, %c0_20] : memref<128x128xbf16, #tpu.memory_space<vmem>>, vector<128x128xbf16>
    %cst_21 = arith.constant dense<0.000000e+00> : vector<8x128xf32>
    %42 = tpu.matmul %40, %41, %cst_21 {dimension_numbers = #tpu.dot_dimension_numbers<[1], [0], [0], [1], [0, 0, 1, 1], [], []>} : vector<8x128xbf16>, vector<128x128xbf16>, vector<8x128xf32> -> vector<8x128xf32>
    %c0_22 = arith.constant 0 : index
    %c0_23 = arith.constant 0 : index
    %43 = vector.load %arg9[%c0_22, %c0_23] : memref<1x128xf32, #tpu.memory_space<vmem>>, vector<1x128xf32>
    %44 = vector.broadcast %43 : vector<1x128xf32> to vector<8x128xf32>
    %45 = arith.addf %42, %44 : vector<8x128xf32>
    %46 = arith.addf %1, %45 : vector<8x128xf32>
    %cst_24 = arith.constant dense<0.000000e+00> : vector<8xf32>
    %47 = vector.multi_reduction <add>, %46, %cst_24 [1] : vector<8x128xf32> to vector<8xf32>
    %48 = vector.shape_cast %47 : vector<8xf32> to vector<8x1xf32>
    %cst_25 = arith.constant 1.280000e+02 : f32
    %49 = vector.broadcast %cst_25 : f32 to vector<8x1xf32>
    %50 = arith.divf %48, %49 : vector<8x1xf32>
    %51 = vector.broadcast %50 : vector<8x1xf32> to vector<8x128xf32>
    %52 = arith.subf %46, %51 : vector<8x128xf32>
    %53 = arith.mulf %52, %52 : vector<8x128xf32>
    %cst_26 = arith.constant dense<0.000000e+00> : vector<8xf32>
    %54 = vector.multi_reduction <add>, %53, %cst_26 [1] : vector<8x128xf32> to vector<8xf32>
    %55 = vector.shape_cast %54 : vector<8xf32> to vector<8x1xf32>
    %cst_27 = arith.constant 1.280000e+02 : f32
    %56 = vector.broadcast %cst_27 : f32 to vector<8x1xf32>
    %57 = arith.divf %55, %56 : vector<8x1xf32>
    %58 = vector.broadcast %50 : vector<8x1xf32> to vector<8x128xf32>
    %59 = arith.subf %46, %58 : vector<8x128xf32>
    %cst_28 = arith.constant 9.99999974E-6 : f32
    %60 = vector.broadcast %cst_28 : f32 to vector<8x1xf32>
    %61 = arith.addf %57, %60 : vector<8x1xf32>
    %62 = math.rsqrt %61 : vector<8x1xf32>
    %63 = vector.broadcast %62 : vector<8x1xf32> to vector<8x128xf32>
    %64 = arith.mulf %59, %63 : vector<8x128xf32>
    %c0_29 = arith.constant 0 : index
    %c0_30 = arith.constant 0 : index
    %65 = vector.load %arg10[%c0_29, %c0_30] : memref<1x128xf32, #tpu.memory_space<vmem>>, vector<1x128xf32>
    %66 = vector.broadcast %65 : vector<1x128xf32> to vector<8x128xf32>
    %67 = arith.mulf %64, %66 : vector<8x128xf32>
    %c0_31 = arith.constant 0 : index
    %c0_32 = arith.constant 0 : index
    %68 = vector.load %arg11[%c0_31, %c0_32] : memref<1x128xf32, #tpu.memory_space<vmem>>, vector<1x128xf32>
    %69 = vector.broadcast %68 : vector<1x128xf32> to vector<8x128xf32>
    %70 = arith.addf %67, %69 : vector<8x128xf32>
    %c0_33 = arith.constant 0 : index
    %c0_34 = arith.constant 0 : index
    %c0_35 = arith.constant 0 : index
    %71 = vector.load %arg12[%c0_33, %c0_34, %c0_35] : memref<1x8x128xf32, #tpu.memory_space<vmem>>, vector<1x8x128xf32>
    %72 = vector.shape_cast %71 : vector<1x8x128xf32> to vector<8x128xf32>
    %73 = vector.shape_cast %70 : vector<8x128xf32> to vector<1x8x128xf32>
    tpu.vector_store %arg12[%c0_33, %c0_34, %c0_35], %73 {strides = array<i32>} : memref<1x8x128xf32, #tpu.memory_space<vmem>>, vector<1x8x128xf32>,
    return
  }
  func.func @transform_0(%arg0: i32, %arg1: i32) -> (i32, i32, i32) {
    %c0_i32 = arith.constant 0 : i32
    %c0_i32_0 = arith.constant 0 : i32
    return %arg0, %arg1, %c0_i32 : i32, i32, i32
  }
  func.func @transform_1(%arg0: i32, %arg1: i32) -> (i32, i32, i32) {
    %c0_i32 = arith.constant 0 : i32
    %c0_i32_0 = arith.constant 0 : i32
    %c0_i32_1 = arith.constant 0 : i32
    return %arg0, %c0_i32, %c0_i32_0 : i32, i32, i32
  }
  func.func @transform_2(%arg0: i32, %arg1: i32) -> (i32, i32) {
    %c0_i32 = arith.constant 0 : i32
    %c0_i32_0 = arith.constant 0 : i32
    %c0_i32_1 = arith.constant 0 : i32
    return %c0_i32, %c0_i32_0 : i32, i32
  }
  func.func @transform_3(%arg0: i32, %arg1: i32) -> (i32, i32) {
    %c0_i32 = arith.constant 0 : i32
    %c0_i32_0 = arith.constant 0 : i32
    %c0_i32_1 = arith.constant 0 : i32
    return %c0_i32, %c0_i32_0 : i32, i32
  }
  func.func @transform_4(%arg0: i32, %arg1: i32) -> (i32, i32) {
    %c0_i32 = arith.constant 0 : i32
    %c0_i32_0 = arith.constant 0 : i32
    %c0_i32_1 = arith.constant 0 : i32
    return %c0_i32, %c0_i32_0 : i32, i32
  }
  func.func @transform_5(%arg0: i32, %arg1: i32) -> (i32, i32) {
    %c0_i32 = arith.constant 0 : i32
    %c0_i32_0 = arith.constant 0 : i32
    %c0_i32_1 = arith.constant 0 : i32
    return %c0_i32, %c0_i32_0 : i32, i32
  }
  func.func @transform_6(%arg0: i32, %arg1: i32) -> (i32, i32) {
    %c0_i32 = arith.constant 0 : i32
    %c0_i32_0 = arith.constant 0 : i32
    %c0_i32_1 = arith.constant 0 : i32
    return %c0_i32, %c0_i32_0 : i32, i32
  }
  func.func @transform_7(%arg0: i32, %arg1: i32) -> (i32, i32) {
    %c0_i32 = arith.constant 0 : i32
    %c0_i32_0 = arith.constant 0 : i32
    %c0_i32_1 = arith.constant 0 : i32
    return %c0_i32, %c0_i32_0 : i32, i32
  }
  func.func @transform_8(%arg0: i32, %arg1: i32) -> (i32, i32) {
    %c0_i32 = arith.constant 0 : i32
    %c0_i32_0 = arith.constant 0 : i32
    %c0_i32_1 = arith.constant 0 : i32
    return %c0_i32, %c0_i32_0 : i32, i32
  }
  func.func @transform_9(%arg0: i32, %arg1: i32) -> (i32, i32) {
    %c0_i32 = arith.constant 0 : i32
    %c0_i32_0 = arith.constant 0 : i32
    %c0_i32_1 = arith.constant 0 : i32
    return %c0_i32, %c0_i32_0 : i32, i32
  }
  func.func @transform_10(%arg0: i32, %arg1: i32) -> (i32, i32, i32) {
    %c0_i32 = arith.constant 0 : i32
    %c0_i32_0 = arith.constant 0 : i32
    return %arg0, %arg1, %c0_i32 : i32, i32, i32
  }
}

module attributes {stable_mosaic.version = 11 : i64} {
  func.func @_ffn_block_kernel(%arg0: i32, %arg1: i32, %arg2: memref<16x128xf32, #tpu.memory_space<vmem>>, %arg3: memref<128x256xbf16, #tpu.memory_space<vmem>>, %arg4: memref<1x256xf32, #tpu.memory_space<vmem>>, %arg5: memref<256x128xbf16, #tpu.memory_space<vmem>>, %arg6: memref<1x128xf32, #tpu.memory_space<vmem>>, %arg7: memref<1x128xf32, #tpu.memory_space<vmem>>, %arg8: memref<1x128xf32, #tpu.memory_space<vmem>>, %arg9: memref<16x128xf32, #tpu.memory_space<vmem>>, %arg10: memref<16x128xf32, #tpu.memory_space<vmem>>) attributes {dimension_semantics = [#tpu.dimension_semantics<parallel>, #tpu.dimension_semantics<arbitrary>], iteration_bounds = array<i64: 1, 1>, scalar_prefetch = 0 : i64, scratch_operands = 1 : i64, tpu.core_type = #tpu.core_type<tc>, window_params = [{transform_indices = @transform_0, window_bounds = array<i64: 16, 128>}, {transform_indices = @transform_1, window_bounds = array<i64: 128, 256>}, {transform_indices = @transform_2, window_bounds = array<i64: 1, 256>}, {transform_indices = @transform_3, window_bounds = array<i64: 256, 128>}, {pipeline_mode = #tpu.pipeline_mode<synchronous>, transform_indices = @transform_4, window_bounds = array<i64: 1, 128>}, {pipeline_mode = #tpu.pipeline_mode<synchronous>, transform_indices = @transform_5, window_bounds = array<i64: 1, 128>}, {pipeline_mode = #tpu.pipeline_mode<synchronous>, transform_indices = @transform_6, window_bounds = array<i64: 1, 128>}, {transform_indices = @transform_7, window_bounds = array<i64: 16, 128>}]} {
    %c0_i32 = arith.constant 0 : i32
    %0 = arith.cmpi eq, %arg1, %c0_i32 : i32
    %1 = arith.extui %0 : i1 to i32
    %c0_i32_0 = arith.constant 0 : i32
    %2 = arith.cmpi ne, %1, %c0_i32_0 : i32
    scf.if %2 {
      %cst_16 = arith.constant 0.000000e+00 : f32
      %21 = vector.broadcast %cst_16 : f32 to vector<16x128xf32>
      %c0_17 = arith.constant 0 : index
      %c0_18 = arith.constant 0 : index
      %22 = vector.load %arg10[%c0_17, %c0_18] : memref<16x128xf32, #tpu.memory_space<vmem>>, vector<16x128xf32>
      tpu.vector_store %arg10[%c0_17, %c0_18], %21 {strides = array<i32>} : memref<16x128xf32, #tpu.memory_space<vmem>>, vector<16x128xf32>,
    } else {
    }
    %c0 = arith.constant 0 : index
    %c0_1 = arith.constant 0 : index
    %3 = vector.load %arg2[%c0, %c0_1] : memref<16x128xf32, #tpu.memory_space<vmem>>, vector<16x128xf32>
    %4 = arith.truncf %3 : vector<16x128xf32> to vector<16x128xbf16>
    %c0_2 = arith.constant 0 : index
    %c0_3 = arith.constant 0 : index
    %5 = vector.load %arg3[%c0_2, %c0_3] : memref<128x256xbf16, #tpu.memory_space<vmem>>, vector<128x256xbf16>
    %cst = arith.constant dense<0.000000e+00> : vector<16x256xf32>
    %6 = tpu.matmul %4, %5, %cst {dimension_numbers = #tpu.dot_dimension_numbers<[1], [0], [0], [1], [0, 0, 1, 1], [], []>} : vector<16x128xbf16>, vector<128x256xbf16>, vector<16x256xf32> -> vector<16x256xf32>
    %c0_4 = arith.constant 0 : index
    %c0_5 = arith.constant 0 : index
    %7 = vector.load %arg4[%c0_4, %c0_5] : memref<1x256xf32, #tpu.memory_space<vmem>>, vector<1x256xf32>
    %8 = vector.broadcast %7 : vector<1x256xf32> to vector<16x256xf32>
    %9 = arith.addf %6, %8 : vector<16x256xf32>
    %cst_6 = arith.constant 0.000000e+00 : f32
    %10 = vector.broadcast %cst_6 : f32 to vector<16x256xf32>
    %11 = arith.maximumf %9, %10 : vector<16x256xf32>
    %12 = arith.truncf %11 : vector<16x256xf32> to vector<16x256xbf16>
    %c0_7 = arith.constant 0 : index
    %c0_8 = arith.constant 0 : index
    %13 = vector.load %arg10[%c0_7, %c0_8] : memref<16x128xf32, #tpu.memory_space<vmem>>, vector<16x128xf32>
    %c0_9 = arith.constant 0 : index
    %c0_10 = arith.constant 0 : index
    %14 = vector.load %arg5[%c0_9, %c0_10] : memref<256x128xbf16, #tpu.memory_space<vmem>>, vector<256x128xbf16>
    %cst_11 = arith.constant dense<0.000000e+00> : vector<16x128xf32>
    %15 = tpu.matmul %12, %14, %cst_11 {dimension_numbers = #tpu.dot_dimension_numbers<[1], [0], [0], [1], [0, 0, 1, 1], [], []>} : vector<16x256xbf16>, vector<256x128xbf16>, vector<16x128xf32> -> vector<16x128xf32>
    %16 = arith.addf %13, %15 : vector<16x128xf32>
    %c0_12 = arith.constant 0 : index
    %c0_13 = arith.constant 0 : index
    %17 = vector.load %arg10[%c0_12, %c0_13] : memref<16x128xf32, #tpu.memory_space<vmem>>, vector<16x128xf32>
    tpu.vector_store %arg10[%c0_12, %c0_13], %16 {strides = array<i32>} : memref<16x128xf32, #tpu.memory_space<vmem>>, vector<16x128xf32>,
    %c0_i32_14 = arith.constant 0 : i32
    %18 = arith.cmpi eq, %arg1, %c0_i32_14 : i32
    %19 = arith.extui %18 : i1 to i32
    %c0_i32_15 = arith.constant 0 : i32
    %20 = arith.cmpi ne, %19, %c0_i32_15 : i32
    scf.if %20 {
      %c0_16 = arith.constant 0 : index
      %c0_17 = arith.constant 0 : index
      %21 = vector.load %arg2[%c0_16, %c0_17] : memref<16x128xf32, #tpu.memory_space<vmem>>, vector<16x128xf32>
      %c0_18 = arith.constant 0 : index
      %c0_19 = arith.constant 0 : index
      %22 = vector.load %arg10[%c0_18, %c0_19] : memref<16x128xf32, #tpu.memory_space<vmem>>, vector<16x128xf32>
      %23 = arith.addf %21, %22 : vector<16x128xf32>
      %c0_20 = arith.constant 0 : index
      %c0_21 = arith.constant 0 : index
      %24 = vector.load %arg6[%c0_20, %c0_21] : memref<1x128xf32, #tpu.memory_space<vmem>>, vector<1x128xf32>
      %25 = vector.broadcast %24 : vector<1x128xf32> to vector<16x128xf32>
      %26 = arith.addf %23, %25 : vector<16x128xf32>
      %cst_22 = arith.constant dense<0.000000e+00> : vector<16xf32>
      %27 = vector.multi_reduction <add>, %26, %cst_22 [1] : vector<16x128xf32> to vector<16xf32>
      %28 = vector.shape_cast %27 : vector<16xf32> to vector<16x1xf32>
      %cst_23 = arith.constant 1.280000e+02 : f32
      %29 = vector.broadcast %cst_23 : f32 to vector<16x1xf32>
      %30 = arith.divf %28, %29 : vector<16x1xf32>
      %31 = vector.broadcast %30 : vector<16x1xf32> to vector<16x128xf32>
      %32 = arith.subf %26, %31 : vector<16x128xf32>
      %33 = arith.mulf %32, %32 : vector<16x128xf32>
      %cst_24 = arith.constant dense<0.000000e+00> : vector<16xf32>
      %34 = vector.multi_reduction <add>, %33, %cst_24 [1] : vector<16x128xf32> to vector<16xf32>
      %35 = vector.shape_cast %34 : vector<16xf32> to vector<16x1xf32>
      %cst_25 = arith.constant 1.280000e+02 : f32
      %36 = vector.broadcast %cst_25 : f32 to vector<16x1xf32>
      %37 = arith.divf %35, %36 : vector<16x1xf32>
      %38 = vector.broadcast %30 : vector<16x1xf32> to vector<16x128xf32>
      %39 = arith.subf %26, %38 : vector<16x128xf32>
      %cst_26 = arith.constant 9.99999974E-6 : f32
      %40 = vector.broadcast %cst_26 : f32 to vector<16x1xf32>
      %41 = arith.addf %37, %40 : vector<16x1xf32>
      %42 = math.rsqrt %41 : vector<16x1xf32>
      %43 = vector.broadcast %42 : vector<16x1xf32> to vector<16x128xf32>
      %44 = arith.mulf %39, %43 : vector<16x128xf32>
      %c0_27 = arith.constant 0 : index
      %c0_28 = arith.constant 0 : index
      %45 = vector.load %arg7[%c0_27, %c0_28] : memref<1x128xf32, #tpu.memory_space<vmem>>, vector<1x128xf32>
      %46 = vector.broadcast %45 : vector<1x128xf32> to vector<16x128xf32>
      %47 = arith.mulf %44, %46 : vector<16x128xf32>
      %c0_29 = arith.constant 0 : index
      %c0_30 = arith.constant 0 : index
      %48 = vector.load %arg8[%c0_29, %c0_30] : memref<1x128xf32, #tpu.memory_space<vmem>>, vector<1x128xf32>
      %49 = vector.broadcast %48 : vector<1x128xf32> to vector<16x128xf32>
      %50 = arith.addf %47, %49 : vector<16x128xf32>
      %c0_31 = arith.constant 0 : index
      %c0_32 = arith.constant 0 : index
      %51 = vector.load %arg9[%c0_31, %c0_32] : memref<16x128xf32, #tpu.memory_space<vmem>>, vector<16x128xf32>
      tpu.vector_store %arg9[%c0_31, %c0_32], %50 {strides = array<i32>} : memref<16x128xf32, #tpu.memory_space<vmem>>, vector<16x128xf32>,
    } else {
    }
    return
  }
  func.func @transform_0(%arg0: i32, %arg1: i32) -> (i32, i32) {
    %c0_i32 = arith.constant 0 : i32
    %c0_i32_0 = arith.constant 0 : i32
    return %arg0, %c0_i32 : i32, i32
  }
  func.func @transform_1(%arg0: i32, %arg1: i32) -> (i32, i32) {
    %c0_i32 = arith.constant 0 : i32
    %c0_i32_0 = arith.constant 0 : i32
    return %c0_i32, %arg1 : i32, i32
  }
  func.func @transform_2(%arg0: i32, %arg1: i32) -> (i32, i32) {
    %c0_i32 = arith.constant 0 : i32
    %c0_i32_0 = arith.constant 0 : i32
    return %c0_i32, %arg1 : i32, i32
  }
  func.func @transform_3(%arg0: i32, %arg1: i32) -> (i32, i32) {
    %c0_i32 = arith.constant 0 : i32
    %c0_i32_0 = arith.constant 0 : i32
    return %arg1, %c0_i32 : i32, i32
  }
  func.func @transform_4(%arg0: i32, %arg1: i32) -> (i32, i32) {
    %c0_i32 = arith.constant 0 : i32
    %c0_i32_0 = arith.constant 0 : i32
    %c0_i32_1 = arith.constant 0 : i32
    return %c0_i32, %c0_i32_0 : i32, i32
  }
  func.func @transform_5(%arg0: i32, %arg1: i32) -> (i32, i32) {
    %c0_i32 = arith.constant 0 : i32
    %c0_i32_0 = arith.constant 0 : i32
    %c0_i32_1 = arith.constant 0 : i32
    return %c0_i32, %c0_i32_0 : i32, i32
  }
  func.func @transform_6(%arg0: i32, %arg1: i32) -> (i32, i32) {
    %c0_i32 = arith.constant 0 : i32
    %c0_i32_0 = arith.constant 0 : i32
    %c0_i32_1 = arith.constant 0 : i32
    return %c0_i32, %c0_i32_0 : i32, i32
  }
  func.func @transform_7(%arg0: i32, %arg1: i32) -> (i32, i32) {
    %c0_i32 = arith.constant 0 : i32
    %c0_i32_0 = arith.constant 0 : i32
    return %arg0, %c0_i32 : i32, i32
  }
}

</mosaic_0001>

<llo_original>
// kernel: transformer_lm_forward.13
$region0: #{transformer_lm_forward.13}
  #allocation0 [shape = 'u32[]', space=smem, size = 0x4, offset = 0x4, fixed_abs, tag = 'smem constant byte address 0x4 - core index']
  #allocation1 [shape = 'u32[144,128]{1,0:T(1,128)}', space=vmem, size = 0x12000, scoped, tag = 'internal scratch']
  %s0 = inlined_call_operand.vmem [shape: f32[16,128], index: 0, kind: input, shape index: {}]
  %s1 = inlined_call_operand.vmem [shape: bf16[128,256], index: 1, kind: input, shape index: {}]
  %s2 = inlined_call_operand.vmem [shape: f32[1,256], index: 2, kind: input, shape index: {}]
  %s3 = inlined_call_operand.hbm [shape: f32[16,256], index: 3, kind: output, shape index: {}]
  %s4 = sld [smem:[#allocation0]]
  $region22: #{transformer_lm_forward.13} parent=0
    _
  %s6 = ssub.s32 1, %s4
  %s7 = scalar_select 0, %s6, %s4
  $region1: #{transformer_lm_forward.13} parent=0
    #allocation2 [shape = 'u8[16384]{0}', space=vmem, size = 0x4000, scoped, tag = 'output window, operand 0, single buffered']
    #allocation3 [shape = 's32[1]{0}', space=sflag, size = 0x4, scoped, tag = 'scoped memory for transformer_lm_forward.13']
    %8 = vsyncpa [#allocation3], 0
    // Predicated region
    $region2: #{transformer_lm_forward.13} parent=1 // pred_check
      _
    $region3: #{transformer_lm_forward.13} parent=1 // pred_check_branch
      %10 = sbr.rel (0) target = $region5
    $region4: #{transformer_lm_forward.13} parent=1 // pred_region
      _
    $region5: #{transformer_lm_forward.13} parent=1 // pred_fallthru
      _
    // Predicated region
    $region6: #{transformer_lm_forward.13} parent=1 // pred_check
      _
    $region7: #{transformer_lm_forward.13} parent=1 // pred_check_branch
      %12 = sbr.rel (0) target = $region9
    $region8: #{transformer_lm_forward.13} parent=1 // pred_region
      _
    $region9: #{transformer_lm_forward.13} parent=1 // pred_fallthru
      _
    // Predicated region
    $region10: #{transformer_lm_forward.13} parent=1 // pred_check
      _
    $region11: #{transformer_lm_forward.13} parent=1 // pred_check_branch
      %14 = sbr.rel (0) target = $region13
    $region12: #{transformer_lm_forward.13} parent=1 // pred_region
      _
    $region13: #{transformer_lm_forward.13} parent=1 // pred_fallthru
      _
    %v16 = vld [vmem:[%s0] sm:$0xff]
    %v17 = vld [vmem:[%s0 + $0x8] sm:$0xff]
    %v18 = vpack.c.bf16 %v17, %v16
    %v19 = vld [vmem:[%s1] sm:$0xff]
    %v20 = vld [vmem:[%s1 + $0x8] sm:$0xff]
    %v21 = vld [vmem:[%s1 + $0x10] sm:$0xff]
    %v22 = vld [vmem:[%s1 + $0x18] sm:$0xff]
    %v23 = vld [vmem:[%s1 + $0x20] sm:$0xff]
    %v24 = vld [vmem:[%s1 + $0x28] sm:$0xff]
    %v25 = vld [vmem:[%s1 + $0x30] sm:$0xff]
    %v26 = vld [vmem:[%s1 + $0x38] sm:$0xff]
    %v27 = vld [vmem:[%s1 + $0x40] sm:$0xff]
    %v28 = vld [vmem:[%s1 + $0x48] sm:$0xff]
    %v29 = vld [vmem:[%s1 + $0x50] sm:$0xff]
    %v30 = vld [vmem:[%s1 + $0x58] sm:$0xff]
    %v31 = vld [vmem:[%s1 + $0x60] sm:$0xff]
    %v32 = vld [vmem:[%s1 + $0x68] sm:$0xff]
    %v33 = vld [vmem:[%s1 + $0x70] sm:$0xff]
    %v34 = vld [vmem:[%s1 + $0x78] sm:$0xff]
    %v35 = vld [vmem:[%s2] sm:$0x3]
    %v37 = vlaneseq
    %v38 = vshrl.u32 %v37, 7
    %v39 = vsub.s32 0, %v38
    %v40 = vrot.slane %v35, %v39
    %v41 = vlaneseq
    %v42 = vshrl.u32 %v41, 7
    %v43 = vsub.s32 1, %v42
    %v44 = vrot.slane %v35, %v43
    %v63 = vunpack.c.l.b16 %v19
    %v64 = vunpack.c.h.b16 %v19
    %v65 = vunpack.c.l.b16 %v20
    %v66 = vunpack.c.h.b16 %v20
    %v67 = vunpack.c.l.b16 %v21
    %v68 = vunpack.c.h.b16 %v21
    %v69 = vunpack.c.l.b16 %v22
    %v70 = vunpack.c.h.b16 %v22
    %v71 = vunpack.c.l.b16 %v23
    %v72 = vunpack.c.h.b16 %v23
    %v73 = vunpack.c.l.b16 %v24
    %v74 = vunpack.c.h.b16 %v24
    %v75 = vunpack.c.l.b16 %v25
    %v76 = vunpack.c.h.b16 %v25
    %v77 = vunpack.c.l.b16 %v26
    %v78 = vunpack.c.h.b16 %v26
    %v79 = vunpack.c.l.b16 %v27
    %v80 = vunpack.c.h.b16 %v27
    %v81 = vunpack.c.l.b16 %v28
    %v82 = vunpack.c.h.b16 %v28
    %v83 = vunpack.c.l.b16 %v29
    %v84 = vunpack.c.h.b16 %v29
    %v85 = vunpack.c.l.b16 %v30
    %v86 = vunpack.c.h.b16 %v30
    %v87 = vunpack.c.l.b16 %v31
    %v88 = vunpack.c.h.b16 %v31
    %v89 = vunpack.c.l.b16 %v32
    %v90 = vunpack.c.h.b16 %v32
    %v91 = vunpack.c.l.b16 %v33
    %v92 = vunpack.c.h.b16 %v33
    %v93 = vunpack.c.l.b16 %v34
    %v94 = vunpack.c.h.b16 %v34
    %v95 = vpack.c.b16 %v65, %v63
    %v96 = vpack.c.b16 %v66, %v64
    %v97 = vpack.c.b16 %v69, %v67
    %v98 = vpack.c.b16 %v70, %v68
    %v99 = vpack.c.b16 %v73, %v71
    %v100 = vpack.c.b16 %v74, %v72
    %v101 = vpack.c.b16 %v77, %v75
    %v102 = vpack.c.b16 %v78, %v76
    %v103 = vpack.c.b16 %v81, %v79
    %v104 = vpack.c.b16 %v82, %v80
    %v105 = vpack.c.b16 %v85, %v83
    %v106 = vpack.c.b16 %v86, %v84
    %v107 = vpack.c.b16 %v89, %v87
    %v108 = vpack.c.b16 %v90, %v88
    %v109 = vpack.c.b16 %v93, %v91
    %v110 = vpack.c.b16 %v94, %v92
    %127 = vmatprep.subr.bf16.mxu0 %v96
    %128 = vmatpush1.bf16.msra.mxu0 %v95
    %129 = vmatprep.subr.bf16.mxu0 %v98
    %130 = vmatpush1.bf16.msra.mxu0 %v97
    %131 = vmatprep.subr.bf16.mxu0 %v100
    %132 = vmatpush1.bf16.msra.mxu0 %v99
    %133 = vmatprep.subr.bf16.mxu0 %v102
    %134 = vmatpush1.bf16.msra.mxu0 %v101
    %135 = vmatprep.subr.bf16.mxu0 %v104
    %136 = vmatpush1.bf16.msra.mxu0 %v103
    %137 = vmatprep.subr.bf16.mxu0 %v106
    %138 = vmatpush1.bf16.msra.mxu0 %v105
    %139 = vmatprep.subr.bf16.mxu0 %v108
    %140 = vmatpush1.bf16.msra.mxu0 %v107
    %141 = vmatprep.subr.bf16.mxu0 %v110
    %142 = vmatpush1.bf16.msra.mxu0 %v109
    %143 = vmatprep.subr.bf16.mxu0 0
    %144 = vmatpush1.bf16.msra.mxu0 0
    %145 = vmatprep.subr.bf16.mxu0 0
    %146 = vmatpush1.bf16.msra.mxu0 0
    %147 = vmatprep.subr.bf16.mxu0 0
    %148 = vmatpush1.bf16.msra.mxu0 0
    %149 = vmatprep.subr.bf16.mxu0 0
    %150 = vmatpush1.bf16.msra.mxu0 0
    %151 = vmatprep.subr.bf16.mxu0 0
    %152 = vmatpush1.bf16.msra.mxu0 0
    %153 = vmatprep.subr.bf16.mxu0 0
    %154 = vmatpush1.bf16.msra.mxu0 0
    %155 = vmatprep.subr.bf16.mxu0 0
    %156 = vmatpush1.bf16.msra.mxu0 0
    %157 = vmatprep.subr.bf16.mxu0 0
    %158 = vmatpush1.bf16.msra.mxu0 0
    %159 = vmatprep.mubr.bf16.mxu0 0
    %160 = vmatmul.mubr.bf16.gmra.mrb[0].mxu0 %v18
    %v161 = vpop.f32.mrb[0].mxu0
    %v162 = vadd.f32 %v40, %v161
    %v163 = vpop.f32.mrb[0].mxu0
    %v164 = vadd.f32 %v44, %v163
    %v165 = vpop.f32.mrb[0].mxu0
    %v166 = vadd.f32 %v40, %v165
    %v167 = vpop.f32.mrb[0].mxu0
    %v168 = vadd.f32 %v44, %v167
    %169 = vdwg.mxu0
    %170 = vst [vmem:[#allocation2] sm:$0xff] %v162
    %171 = vst [vmem:[#allocation2 + $0x8] sm:$0xff] %v164
    %172 = vst [vmem:[#allocation2 + $0x10] sm:$0xff] %v166
    %173 = vst [vmem:[#allocation2 + $0x18] sm:$0xff] %v168
    // Predicated region
    $region14: #{transformer_lm_forward.13} parent=1 // pred_check
      _
    $region15: #{transformer_lm_forward.13} parent=1 // pred_check_branch
      %175 = sbr.rel (0) target = $region17
    $region16: #{transformer_lm_forward.13} parent=1 // pred_region
      %s177 = ssub.s32 512, 512
      %178 = vsyncadd [#allocation3], %s177
      %s179 = sshll.u32 [#allocation2], 4
      %s180 = int_to_ptr.vmem [resolvable:$true] %s179
      %185 = dma.vmem_to_hbm [thread:$0]  %s180, 512, %s3, [#allocation3], 256, 256, 16
    $region17: #{transformer_lm_forward.13} parent=1 // pred_fallthru
      _
    // Predicated region
    $region18: #{transformer_lm_forward.13} parent=1 // pred_check
      _
    $region19: #{transformer_lm_forward.13} parent=1 // pred_check_branch
      %187 = sbr.rel (0) target = $region21
    $region20: #{transformer_lm_forward.13} parent=1 // pred_region
      %188 = dma.done [#allocation3], 512
    $region21: #{transformer_lm_forward.13} parent=1 // pred_fallthru
      _
    %189 = vsyncpa [#allocation3], 1

// kernel: transformer_lm_forward.9
$region0: #{transformer_lm_forward.9}
  #allocation0 [shape = 'u32[]', space=smem, size = 0x4, offset = 0x4, fixed_abs, tag = 'smem constant byte address 0x4 - core index']
  #allocation1 [shape = 'u32[144,128]{1,0:T(1,128)}', space=vmem, size = 0x12000, scoped, tag = 'internal scratch']
  #allocation2 [shape = 'f32[16,128]{1,0:T(8,128)}', space=vmem, size = 0x2000, scoped, tag = 'scratch operand']
  %s0 = inlined_call_operand.vmem [shape: f32[16,128], index: 0, kind: input, shape index: {}]
  %s1 = inlined_call_operand.vmem [shape: bf16[128,256], index: 1, kind: input, shape index: {}]
  %s2 = inlined_call_operand.vmem [shape: f32[1,256], index: 2, kind: input, shape index: {}]
  %s3 = inlined_call_operand.vmem [shape: bf16[256,128], index: 3, kind: input, shape index: {}]
  %s4 = inlined_call_operand.vmem [shape: f32[1,128], index: 4, kind: input, shape index: {}]
  %s5 = inlined_call_operand.vmem [shape: f32[1,128], index: 5, kind: input, shape index: {}]
  %s6 = inlined_call_operand.vmem [shape: f32[1,128], index: 6, kind: input, shape index: {}]
  %s7 = inlined_call_operand.vmem [shape: f32[16,128], index: 7, kind: output, shape index: {}]
  %s8 = sld [smem:[#allocation0]]
  $region46: #{transformer_lm_forward.9} parent=0
    _
  %s10 = ssub.s32 1, %s8
  %s11 = scalar_select 0, %s10, %s8
  // Predicated region
  $region2: #{transformer_lm_forward.9} parent=0 // pred_check
    _
  $region3: #{transformer_lm_forward.9} parent=0 // pred_check_branch
    %13 = sbr.rel (0) target = $region5
  $region4: #{transformer_lm_forward.9} parent=0 // pred_region
    _
  $region5: #{transformer_lm_forward.9} parent=0 // pred_fallthru
    _
  // Predicated region
  $region6: #{transformer_lm_forward.9} parent=0 // pred_check
    _
  $region7: #{transformer_lm_forward.9} parent=0 // pred_check_branch
    %15 = sbr.rel (0) target = $region9
  $region8: #{transformer_lm_forward.9} parent=0 // pred_region
    _
  $region9: #{transformer_lm_forward.9} parent=0 // pred_fallthru
    _
  // Predicated region
  $region10: #{transformer_lm_forward.9} parent=0 // pred_check
    _
  $region11: #{transformer_lm_forward.9} parent=0 // pred_check_branch
    %17 = sbr.rel (0) target = $region13
  $region12: #{transformer_lm_forward.9} parent=0 // pred_region
    _
  $region13: #{transformer_lm_forward.9} parent=0 // pred_fallthru
    _
  // Predicated region
  $region14: #{transformer_lm_forward.9} parent=0 // pred_check
    _
  $region15: #{transformer_lm_forward.9} parent=0 // pred_check_branch
    %19 = sbr.rel (0) target = $region17
  $region16: #{transformer_lm_forward.9} parent=0 // pred_region
    _
  $region17: #{transformer_lm_forward.9} parent=0 // pred_fallthru
    _
  // Predicated region
  $region18: #{transformer_lm_forward.9} parent=0 // pred_check
    _
  $region19: #{transformer_lm_forward.9} parent=0 // pred_check_branch
    %21 = sbr.rel (0) target = $region21
  $region20: #{transformer_lm_forward.9} parent=0 // pred_region
    _
  $region21: #{transformer_lm_forward.9} parent=0 // pred_fallthru
    _
  // Predicated region
  $region22: #{transformer_lm_forward.9} parent=0 // pred_check
    _
  $region23: #{transformer_lm_forward.9} parent=0 // pred_check_branch
    %23 = sbr.rel (0) target = $region25
  $region24: #{transformer_lm_forward.9} parent=0 // pred_region
    _
  $region25: #{transformer_lm_forward.9} parent=0 // pred_fallthru
    _
  // Predicated region
  $region26: #{transformer_lm_forward.9} parent=0 // pred_check
    _
  $region27: #{transformer_lm_forward.9} parent=0 // pred_check_branch
    %25 = sbr.rel (0) target = $region29
  $region28: #{transformer_lm_forward.9} parent=0 // pred_region
    _
  $region29: #{transformer_lm_forward.9} parent=0 // pred_fallthru
    _
  %p27 = scmp.eq.s32.totalorder 0, 0
  // Predicated region
  $region30: #{transformer_lm_forward.9} parent=0 // pred_check
    %p28 = pneg %p27
  $region31: #{transformer_lm_forward.9} parent=0 // pred_check_branch
    %30 = sbr.rel (%p28) target = $region33
  $region32: #{transformer_lm_forward.9} parent=0 // pred_region
    %31 = vst [vmem:[#allocation2] sm:$0xff] 0.0
    %32 = vst [vmem:[#allocation2 + $0x8] sm:$0xff] 0.0
  $region33: #{transformer_lm_forward.9} parent=0 // pred_fallthru
    _
  %v33 = vld [vmem:[%s0] sm:$0xff]
  %v34 = vld [vmem:[%s0 + $0x8] sm:$0xff]
  %v35 = vpack.c.bf16 %v34, %v33
  %v36 = vld [vmem:[%s1] sm:$0xff]
  %v37 = vld [vmem:[%s1 + $0x8] sm:$0xff]
  %v38 = vld [vmem:[%s1 + $0x10] sm:$0xff]
  %v39 = vld [vmem:[%s1 + $0x18] sm:$0xff]
  %v40 = vld [vmem:[%s1 + $0x20] sm:$0xff]
  %v41 = vld [vmem:[%s1 + $0x28] sm:$0xff]
  %v42 = vld [vmem:[%s1 + $0x30] sm:$0xff]
  %v43 = vld [vmem:[%s1 + $0x38] sm:$0xff]
  %v44 = vld [vmem:[%s1 + $0x40] sm:$0xff]
  %v45 = vld [vmem:[%s1 + $0x48] sm:$0xff]
  %v46 = vld [vmem:[%s1 + $0x50] sm:$0xff]
  %v47 = vld [vmem:[%s1 + $0x58] sm:$0xff]
  %v48 = vld [vmem:[%s1 + $0x60] sm:$0xff]
  %v49 = vld [vmem:[%s1 + $0x68] sm:$0xff]
  %v50 = vld [vmem:[%s1 + $0x70] sm:$0xff]
  %v51 = vld [vmem:[%s1 + $0x78] sm:$0xff]
  %v52 = vld [vmem:[%s2] sm:$0x3]
  %v54 = vlaneseq
  %v55 = vshrl.u32 %v54, 7
  %v56 = vsub.s32 0, %v55
  %v57 = vrot.slane %v52, %v56
  %v58 = vlaneseq
  %v59 = vshrl.u32 %v58, 7
  %v60 = vsub.s32 1, %v59
  %v61 = vrot.slane %v52, %v60
  %v80 = vunpack.c.l.b16 %v36
  %v81 = vunpack.c.h.b16 %v36
  %v82 = vunpack.c.l.b16 %v37
  %v83 = vunpack.c.h.b16 %v37
  %v84 = vunpack.c.l.b16 %v38
  %v85 = vunpack.c.h.b16 %v38
  %v86 = vunpack.c.l.b16 %v39
  %v87 = vunpack.c.h.b16 %v39
  %v88 = vunpack.c.l.b16 %v40
  %v89 = vunpack.c.h.b16 %v40
  %v90 = vunpack.c.l.b16 %v41
  %v91 = vunpack.c.h.b16 %v41
  %v92 = vunpack.c.l.b16 %v42
  %v93 = vunpack.c.h.b16 %v42
  %v94 = vunpack.c.l.b16 %v43
  %v95 = vunpack.c.h.b16 %v43
  %v96 = vunpack.c.l.b16 %v44
  %v97 = vunpack.c.h.b16 %v44
  %v98 = vunpack.c.l.b16 %v45
  %v99 = vunpack.c.h.b16 %v45
  %v100 = vunpack.c.l.b16 %v46
  %v101 = vunpack.c.h.b16 %v46
  %v102 = vunpack.c.l.b16 %v47
  %v103 = vunpack.c.h.b16 %v47
  %v104 = vunpack.c.l.b16 %v48
  %v105 = vunpack.c.h.b16 %v48
  %v106 = vunpack.c.l.b16 %v49
  %v107 = vunpack.c.h.b16 %v49
  %v108 = vunpack.c.l.b16 %v50
  %v109 = vunpack.c.h.b16 %v50
  %v110 = vunpack.c.l.b16 %v51
  %v111 = vunpack.c.h.b16 %v51
  %v112 = vpack.c.b16 %v82, %v80
  %v113 = vpack.c.b16 %v83, %v81
  %v114 = vpack.c.b16 %v86, %v84
  %v115 = vpack.c.b16 %v87, %v85
  %v116 = vpack.c.b16 %v90, %v88
  %v117 = vpack.c.b16 %v91, %v89
  %v118 = vpack.c.b16 %v94, %v92
  %v119 = vpack.c.b16 %v95, %v93
  %v120 = vpack.c.b16 %v98, %v96
  %v121 = vpack.c.b16 %v99, %v97
  %v122 = vpack.c.b16 %v102, %v100
  %v123 = vpack.c.b16 %v103, %v101
  %v124 = vpack.c.b16 %v106, %v104
  %v125 = vpack.c.b16 %v107, %v105
  %v126 = vpack.c.b16 %v110, %v108
  %v127 = vpack.c.b16 %v111, %v109
  %144 = vmatprep.subr.bf16.mxu0 %v113
  %145 = vmatpush1.bf16.msra.mxu0 %v112
  %146 = vmatprep.subr.bf16.mxu0 %v115
  %147 = vmatpush1.bf16.msra.mxu0 %v114
  %148 = vmatprep.subr.bf16.mxu0 %v117
  %149 = vmatpush1.bf16.msra.mxu0 %v116
  %150 = vmatprep.subr.bf16.mxu0 %v119
  %151 = vmatpush1.bf16.msra.mxu0 %v118
  %152 = vmatprep.subr.bf16.mxu0 %v121
  %153 = vmatpush1.bf16.msra.mxu0 %v120
  %154 = vmatprep.subr.bf16.mxu0 %v123
  %155 = vmatpush1.bf16.msra.mxu0 %v122
  %156 = vmatprep.subr.bf16.mxu0 %v125
  %157 = vmatpush1.bf16.msra.mxu0 %v124
  %158 = vmatprep.subr.bf16.mxu0 %v127
  %159 = vmatpush1.bf16.msra.mxu0 %v126
  %160 = vmatprep.subr.bf16.mxu0 0
  %161 = vmatpush1.bf16.msra.mxu0 0
  %162 = vmatprep.subr.bf16.mxu0 0
  %163 = vmatpush1.bf16.msra.mxu0 0
  %164 = vmatprep.subr.bf16.mxu0 0
  %165 = vmatpush1.bf16.msra.mxu0 0
  %166 = vmatprep.subr.bf16.mxu0 0
  %167 = vmatpush1.bf16.msra.mxu0 0
  %168 = vmatprep.subr.bf16.mxu0 0
  %169 = vmatpush1.bf16.msra.mxu0 0
  %170 = vmatprep.subr.bf16.mxu0 0
  %171 = vmatpush1.bf16.msra.mxu0 0
  %172 = vmatprep.subr.bf16.mxu0 0
  %173 = vmatpush1.bf16.msra.mxu0 0
  %174 = vmatprep.subr.bf16.mxu0 0
  %175 = vmatpush1.bf16.msra.mxu0 0
  %176 = vmatprep.mubr.bf16.mxu0 0
  %177 = vmatmul.mubr.bf16.gmra.mrb[0].mxu0 %v35
  %v178 = vpop.f32.mrb[0].mxu0
  %v179 = vadd.f32 %v57, %v178
  %v180 = vpop.f32.mrb[0].mxu0
  %v181 = vadd.f32 %v61, %v180
  %v182 = vpop.f32.mrb[0].mxu0
  %v183 = vadd.f32 %v57, %v182
  %v184 = vpop.f32.mrb[0].mxu0
  %v185 = vadd.f32 %v61, %v184
  %186 = vdwg.mxu0
  %v187 = vmax.f32 %v179, 0.0
  %v188 = vmax.f32 %v181, 0.0
  %v189 = vmax.f32 %v183, 0.0
  %v190 = vmax.f32 %v185, 0.0
  %v191 = vpack.c.bf16 %v189, %v187
  %v192 = vpack.c.bf16 %v190, %v188
  %v193 = vld [vmem:[#allocation2] sm:$0xff]
  %v194 = vld [vmem:[#allocation2 + $0x8] sm:$0xff]
  %v195 = vld [vmem:[%s3] sm:$0xf]
  %v196 = vld [vmem:[%s3 + $0x4] sm:$0xf]
  %v197 = vld [vmem:[%s3 + $0x8] sm:$0xf]
  %v198 = vld [vmem:[%s3 + $0xc] sm:$0xf]
  %v199 = vld [vmem:[%s3 + $0x10] sm:$0xf]
  %v200 = vld [vmem:[%s3 + $0x14] sm:$0xf]
  %v201 = vld [vmem:[%s3 + $0x18] sm:$0xf]
  %v202 = vld [vmem:[%s3 + $0x1c] sm:$0xf]
  %v203 = vld [vmem:[%s3 + $0x20] sm:$0xf]
  %v204 = vld [vmem:[%s3 + $0x24] sm:$0xf]
  %v205 = vld [vmem:[%s3 + $0x28] sm:$0xf]
  %v206 = vld [vmem:[%s3 + $0x2c] sm:$0xf]
  %v207 = vld [vmem:[%s3 + $0x30] sm:$0xf]
  %v208 = vld [vmem:[%s3 + $0x34] sm:$0xf]
  %v209 = vld [vmem:[%s3 + $0x38] sm:$0xf]
  %v210 = vld [vmem:[%s3 + $0x3c] sm:$0xf]
  %v211 = vld [vmem:[%s3 + $0x40] sm:$0xf]
  %v212 = vld [vmem:[%s3 + $0x44] sm:$0xf]
  %v213 = vld [vmem:[%s3 + $0x48] sm:$0xf]
  %v214 = vld [vmem:[%s3 + $0x4c] sm:$0xf]
  %v215 = vld [vmem:[%s3 + $0x50] sm:$0xf]
  %v216 = vld [vmem:[%s3 + $0x54] sm:$0xf]
  %v217 = vld [vmem:[%s3 + $0x58] sm:$0xf]
  %v218 = vld [vmem:[%s3 + $0x5c] sm:$0xf]
  %v219 = vld [vmem:[%s3 + $0x60] sm:$0xf]
  %v220 = vld [vmem:[%s3 + $0x64] sm:$0xf]
  %v221 = vld [vmem:[%s3 + $0x68] sm:$0xf]
  %v222 = vld [vmem:[%s3 + $0x6c] sm:$0xf]
  %v223 = vld [vmem:[%s3 + $0x70] sm:$0xf]
  %v224 = vld [vmem:[%s3 + $0x74] sm:$0xf]
  %v225 = vld [vmem:[%s3 + $0x78] sm:$0xf]
  %v226 = vld [vmem:[%s3 + $0x7c] sm:$0xf]
  %v259 = vunpack.c.l.b16 %v195
  %v260 = vunpack.c.l.b16 %v196
  %v261 = vunpack.c.l.b16 %v197
  %v262 = vunpack.c.l.b16 %v198
  %v263 = vunpack.c.l.b16 %v199
  %v264 = vunpack.c.l.b16 %v200
  %v265 = vunpack.c.l.b16 %v201
  %v266 = vunpack.c.l.b16 %v202
  %v267 = vunpack.c.l.b16 %v203
  %v268 = vunpack.c.l.b16 %v204
  %v269 = vunpack.c.l.b16 %v205
  %v270 = vunpack.c.l.b16 %v206
  %v271 = vunpack.c.l.b16 %v207
  %v272 = vunpack.c.l.b16 %v208
  %v273 = vunpack.c.l.b16 %v209
  %v274 = vunpack.c.l.b16 %v210
  %v275 = vunpack.c.l.b16 %v211
  %v276 = vunpack.c.l.b16 %v212
  %v277 = vunpack.c.l.b16 %v213
  %v278 = vunpack.c.l.b16 %v214
  %v279 = vunpack.c.l.b16 %v215
  %v280 = vunpack.c.l.b16 %v216
  %v281 = vunpack.c.l.b16 %v217
  %v282 = vunpack.c.l.b16 %v218
  %v283 = vunpack.c.l.b16 %v219
  %v284 = vunpack.c.l.b16 %v220
  %v285 = vunpack.c.l.b16 %v221
  %v286 = vunpack.c.l.b16 %v222
  %v287 = vunpack.c.l.b16 %v223
  %v288 = vunpack.c.l.b16 %v224
  %v289 = vunpack.c.l.b16 %v225
  %v290 = vunpack.c.l.b16 %v226
  %v291 = vpack.c.b16 %v260, %v259
  %v292 = vpack.c.b16 %v262, %v261
  %v293 = vpack.c.b16 %v264, %v263
  %v294 = vpack.c.b16 %v266, %v265
  %v295 = vpack.c.b16 %v268, %v267
  %v296 = vpack.c.b16 %v270, %v269
  %v297 = vpack.c.b16 %v272, %v271
  %v298 = vpack.c.b16 %v274, %v273
  %v299 = vpack.c.b16 %v276, %v275
  %v300 = vpack.c.b16 %v278, %v277
  %v301 = vpack.c.b16 %v280, %v279
  %v302 = vpack.c.b16 %v282, %v281
  %v303 = vpack.c.b16 %v284, %v283
  %v304 = vpack.c.b16 %v286, %v285
  %v305 = vpack.c.b16 %v288, %v287
  %v306 = vpack.c.b16 %v290, %v289
  %323 = vmatprep.subr.bf16.mxu0 0
  %324 = vmatpush1.bf16.msra.mxu0 %v291
  %325 = vmatprep.subr.bf16.mxu0 0
  %326 = vmatpush1.bf16.msra.mxu0 %v292
  %327 = vmatprep.subr.bf16.mxu0 0
  %328 = vmatpush1.bf16.msra.mxu0 %v293
  %329 = vmatprep.subr.bf16.mxu0 0
  %330 = vmatpush1.bf16.msra.mxu0 %v294
  %331 = vmatprep.subr.bf16.mxu0 0
  %332 = vmatpush1.bf16.msra.mxu0 %v295
  %333 = vmatprep.subr.bf16.mxu0 0
  %334 = vmatpush1.bf16.msra.mxu0 %v296
  %335 = vmatprep.subr.bf16.mxu0 0
  %336 = vmatpush1.bf16.msra.mxu0 %v297
  %337 = vmatprep.subr.bf16.mxu0 0
  %338 = vmatpush1.bf16.msra.mxu0 %v298
  %339 = vmatprep.subr.bf16.mxu0 0
  %340 = vmatpush1.bf16.msra.mxu0 %v299
  %341 = vmatprep.subr.bf16.mxu0 0
  %342 = vmatpush1.bf16.msra.mxu0 %v300
  %343 = vmatprep.subr.bf16.mxu0 0
  %344 = vmatpush1.bf16.msra.mxu0 %v301
  %345 = vmatprep.subr.bf16.mxu0 0
  %346 = vmatpush1.bf16.msra.mxu0 %v302
  %347 = vmatprep.subr.bf16.mxu0 0
  %348 = vmatpush1.bf16.msra.mxu0 %v303
  %349 = vmatprep.subr.bf16.mxu0 0
  %350 = vmatpush1.bf16.msra.mxu0 %v304
  %351 = vmatprep.subr.bf16.mxu0 0
  %352 = vmatpush1.bf16.msra.mxu0 %v305
  %353 = vmatprep.subr.bf16.mxu0 0
  %354 = vmatpush1.bf16.msra.mxu0 %v306
  %355 = vmatprep.mubr.bf16.mxu0 %v192
  %356 = vmatmul.mubr.bf16.gmra.mrb[0].mxu0 %v191
  %v357 = vpop.f32.mrb[0].mxu0
  %v358 = vadd.f32 0.0, %v357
  %v359 = vpop.f32.mrb[0].mxu0
  %v360 = vpop.f32.mrb[0].mxu0
  %v361 = vadd.f32 0.0, %v360
  %v362 = vpop.f32.mrb[0].mxu0
  %363 = vdwg.mxu0
  %v364 = vadd.f32 %v193, %v358
  %v365 = vadd.f32 %v194, %v361
  %366 = vst [vmem:[#allocation2] sm:$0xff] %v364
  %367 = vst [vmem:[#allocation2 + $0x8] sm:$0xff] %v365
  // Predicated region
  $region34: #{transformer_lm_forward.9} parent=0 // pred_check
    %p368 = pneg %p27
  $region35: #{transformer_lm_forward.9} parent=0 // pred_check_branch
    %370 = sbr.rel (%p368) target = $region37
  $region36: #{transformer_lm_forward.9} parent=0 // pred_region
    %v371 = vld [vmem:[%s0] sm:$0xff]
    %v372 = vld [vmem:[%s0 + $0x8] sm:$0xff]
    %v373 = vld [vmem:[#allocation2] sm:$0xff]
    %v374 = vld [vmem:[#allocation2 + $0x8] sm:$0xff]
    %v375 = vadd.f32 %v371, %v373
    %v376 = vadd.f32 %v372, %v374
    %v377 = vld [vmem:[%s4] sm:$0x1]
    %v379 = vlaneseq
    %v380 = vshrl.u32 %v379, 7
    %v381 = vsub.s32 0, %v380
    %v382 = vrot.slane %v377, %v381
    %v384 = vadd.f32 %v375, %v382
    %v385 = vadd.f32 %v376, %v382
    %386 = vadd.xlane.f32.xlu0 %v384
    %v387 = vpop.xlane.xlu0 %386
    %388 = vadd.xlane.f32.xlu0 %v385
    %v389 = vpop.xlane.xlu0 %388
    %v390 = vrcp.pop 128.0
    %v391 = vmul.f32 %v387, %v390
    %v392 = vmul.f32 %v389, %v390
    %v393 = vsub.f32 %v384, %v391
    %v394 = vsub.f32 %v385, %v392
    %v395 = vmul.f32 %v393, %v393
    %v396 = vmul.f32 %v394, %v394
    %397 = vadd.xlane.f32.xlu0 %v395
    %v398 = vpop.xlane.xlu0 %397
    %399 = vadd.xlane.f32.xlu0 %v396
    %v400 = vpop.xlane.xlu0 %399
    %v401 = vmul.f32 %v398, %v390
    %v402 = vmul.f32 %v400, %v390
    %v403 = vadd.f32 %v401, 1e-05
    %v404 = vadd.f32 %v402, 1e-05
    %v405 = vrsqrt.pop %v403
    %v406 = vrsqrt.pop %v404
    %v407 = vmul.f32 %v393, %v405
    %v408 = vmul.f32 %v394, %v406
    %v409 = vld [vmem:[%s5] sm:$0x1]
    %v411 = vlaneseq
    %v412 = vshrl.u32 %v411, 7
    %v413 = vsub.s32 0, %v412
    %v414 = vrot.slane %v409, %v413
    %v416 = vmul.f32 %v407, %v414
    %v417 = vmul.f32 %v408, %v414
    %v418 = vld [vmem:[%s6] sm:$0x1]
    %v420 = vlaneseq
    %v421 = vshrl.u32 %v420, 7
    %v422 = vsub.s32 0, %v421
    %v423 = vrot.slane %v418, %v422
    %v425 = vadd.f32 %v416, %v423
    %v426 = vadd.f32 %v417, %v423
    %427 = vst [vmem:[%s7] sm:$0xff] %v425
    %428 = vst [vmem:[%s7 + $0x8] sm:$0xff] %v426
  $region37: #{transformer_lm_forward.9} parent=0 // pred_fallthru
    _
  // Predicated region
  $region38: #{transformer_lm_forward.9} parent=0 // pred_check
    _
  $region39: #{transformer_lm_forward.9} parent=0 // pred_check_branch
    %430 = sbr.rel (0) target = $region41
  $region40: #{transformer_lm_forward.9} parent=0 // pred_region
    _
  $region41: #{transformer_lm_forward.9} parent=0 // pred_fallthru
    _
  // Predicated region
  $region42: #{transformer_lm_forward.9} parent=0 // pred_check
    _
  $region43: #{transformer_lm_forward.9} parent=0 // pred_check_branch
    %432 = sbr.rel (0) target = $region45
  $region44: #{transformer_lm_forward.9} parent=0 // pred_region
    _
  $region45: #{transformer_lm_forward.9} parent=0 // pred_fallthru
    _

// kernel: transformer_lm_forward.8
$region0: #{transformer_lm_forward.8}
  #allocation0 [shape = 'u32[]', space=smem, size = 0x4, offset = 0x4, fixed_abs, tag = 'smem constant byte address 0x4 - core index']
  #allocation1 [shape = 'u32[144,128]{1,0:T(1,128)}', space=vmem, size = 0x12000, scoped, tag = 'internal scratch']
  %s0 = inlined_call_operand.vmem [shape: f32[2,8,128], index: 0, kind: input, shape index: {}]
  %s1 = inlined_call_operand.vmem [shape: f32[2,12,128], index: 1, kind: input, shape index: {}]
  %s2 = inlined_call_operand.vmem [shape: bf16[128,128], index: 2, kind: input, shape index: {}]
  %s3 = inlined_call_operand.vmem [shape: f32[1,128], index: 3, kind: input, shape index: {}]
  %s4 = inlined_call_operand.vmem [shape: bf16[128,256], index: 4, kind: input, shape index: {}]
  %s5 = inlined_call_operand.vmem [shape: f32[1,256], index: 5, kind: input, shape index: {}]
  %s6 = inlined_call_operand.vmem [shape: bf16[128,128], index: 6, kind: input, shape index: {}]
  %s7 = inlined_call_operand.vmem [shape: f32[1,128], index: 7, kind: input, shape index: {}]
  %s8 = inlined_call_operand.vmem [shape: f32[1,128], index: 8, kind: input, shape index: {}]
  %s9 = inlined_call_operand.vmem [shape: f32[1,128], index: 9, kind: input, shape index: {}]
  %s10 = inlined_call_operand.vmem [shape: f32[2,8,128], index: 10, kind: output, shape index: {}]
  %s11 = sld [smem:[#allocation0]]
  $region73: #{transformer_lm_forward.8} parent=0
    _
  %s13 = ssub.s32 1, %s11
  %s14 = scalar_select 0, %s13, %s11
  loop: start=0, step=1, limit=4
  $region2: #{transformer_lm_forward.8} parent=0 // loop_pre_header
    _
  $region3: #{transformer_lm_forward.8} parent=0 // loop_header
    %s16 = sphi 0, %s20
    %p17 = scmp.ge.s32.totalorder %s16, 4
    %s23 = sphi 0, %s35
    %s24 = sphi 0, %s31
    %s25 = sphi 0, %s23
    %s26 = sphi 0, %s24
    %s27 = sphi 0, %s25
    %s28 = sphi 0, %s26
    %s40 = sphi 0, %s42
    %s43 = sphi 0, %s40
    %s44 = sphi 0, %s43
    %s60 = sphi 0, %s44
    %s66 = sphi 0, %s68
    %s69 = sphi 0, %s66
    %s70 = sphi 0, %s69
    %s86 = sphi 0, %s70
    %s90 = sphi 0, %s90
    %s92 = sphi 0, %s90
    %s93 = sphi 0, %s92
    %s107 = sphi 0, %s93
    %s111 = sphi 0, %s111
    %s113 = sphi 0, %s111
    %s114 = sphi 0, %s113
    %s128 = sphi 0, %s114
    %s132 = sphi 0, %s132
    %s134 = sphi 0, %s132
    %s135 = sphi 0, %s134
    %s149 = sphi 0, %s135
    %s153 = sphi 0, %s153
    %s155 = sphi 0, %s153
    %s156 = sphi 0, %s155
    %s170 = sphi 0, %s156
    %s174 = sphi 0, %s174
    %s176 = sphi 0, %s174
    %s177 = sphi 0, %s176
    %s191 = sphi 0, %s177
    %s195 = sphi 0, %s195
    %s197 = sphi 0, %s195
    %s198 = sphi 0, %s197
    %s212 = sphi 0, %s198
    %s216 = sphi 0, %s216
    %s218 = sphi 0, %s216
    %s219 = sphi 0, %s218
    %s233 = sphi 0, %s219
    %s237 = sphi 0, %s237
    %s239 = sphi 0, %s237
    %s240 = sphi 0, %s239
    %s254 = sphi 0, %s240
    %s262 = sphi 0, %s264
    %s265 = sphi 0, %s262
    %s266 = sphi 0, %s265
    %s282 = sphi 0, %s266
  $region4: #{transformer_lm_forward.8} parent=0 // loop_header_branch
    %19 = sbr.rel (%p17) target = $region8
  $region5: #{transformer_lm_forward.8} parent=0 // loop_body
    %s21 = ssub.s32 %s16, 1
    %s22 = ssub.s32 %s16, 2
    %s29 = sadd.s32 1, %s24
    %p30 = scmp.ge.s32.totalorder %s29, 1
    %s31 = scalar_select %p30, 0, %s29
    %s32 = sadd.s32 1, %s23
    %s33 = scalar_select %p30, %s32, %s23
    %p34 = scmp.ge.s32.totalorder %s33, 2
    %s35 = scalar_select %p34, 0, %s33
    %s36 = ssub.s32 %s23, %s35
    %s37 = ssub.s32 %s24, %s31
    %s38 = sor.u32 %s36, %s37
    %p39 = scmp.eq.s32.totalorder %s38, 0
    %s41 = sadd.s32 %s40, 1
    %s42 = scalar_select %p39, %s40, %s41
    %p45 = pneg %p39
    %p46 = scmp.eq.s32.totalorder %s16, 1
    %p47 = por %p45, %p46
    %p48 = scmp.ne.s32.totalorder %s40, %s43
    %p49 = scmp.eq.s32.totalorder %s16, 0
    %p50 = por %p48, %p49
    %p51 = scmp.ne.s32.totalorder %s40, %s43
    %p52 = scmp.eq.s32.totalorder %s21, 1
    %p53 = por %p51, %p52
    %p54 = scmp.ne.s32.totalorder %s43, %s44
    %p55 = scmp.eq.s32.totalorder %s21, 0
    %p56 = por %p54, %p55
    %p57 = scmp.ne.s32.totalorder %s43, %s44
    %p58 = scmp.eq.s32.totalorder %s22, 1
    %p59 = por %p57, %p58
    %p61 = scmp.ne.s32.totalorder %s44, %s60
    %p62 = scmp.eq.s32.totalorder %s22, 0
    %p63 = por %p61, %p62
    %s64 = ssub.s32 %s23, %s35
    %p65 = scmp.eq.s32.totalorder %s64, 0
    %s67 = sadd.s32 %s66, 1
    %s68 = scalar_select %p65, %s66, %s67
    %p71 = pneg %p65
    %p72 = scmp.eq.s32.totalorder %s16, 1
    %p73 = por %p71, %p72
    %p74 = scmp.ne.s32.totalorder %s66, %s69
    %p75 = scmp.eq.s32.totalorder %s16, 0
    %p76 = por %p74, %p75
    %p77 = scmp.ne.s32.totalorder %s66, %s69
    %p78 = scmp.eq.s32.totalorder %s21, 1
    %p79 = por %p77, %p78
    %p80 = scmp.ne.s32.totalorder %s69, %s70
    %p81 = scmp.eq.s32.totalorder %s21, 0
    %p82 = por %p80, %p81
    %p83 = scmp.ne.s32.totalorder %s69, %s70
    %p84 = scmp.eq.s32.totalorder %s22, 1
    %p85 = por %p83, %p84
    %p87 = scmp.ne.s32.totalorder %s70, %s86
    %p88 = scmp.eq.s32.totalorder %s22, 0
    %p89 = por %p87, %p88
    %s91 = sadd.s32 %s90, 1
    %p94 = scmp.eq.s32.totalorder %s16, 1
    %p95 = scmp.ne.s32.totalorder %s90, %s92
    %p96 = scmp.eq.s32.totalorder %s16, 0
    %p97 = por %p95, %p96
    %p98 = scmp.ne.s32.totalorder %s90, %s92
    %p99 = scmp.eq.s32.totalorder %s21, 1
    %p100 = por %p98, %p99
    %p101 = scmp.ne.s32.totalorder %s92, %s93
    %p102 = scmp.eq.s32.totalorder %s21, 0
    %p103 = por %p101, %p102
    %p104 = scmp.ne.s32.totalorder %s92, %s93
    %p105 = scmp.eq.s32.totalorder %s22, 1
    %p106 = por %p104, %p105
    %p108 = scmp.ne.s32.totalorder %s93, %s107
    %p109 = scmp.eq.s32.totalorder %s22, 0
    %p110 = por %p108, %p109
    %s112 = sadd.s32 %s111, 1
    %p115 = scmp.eq.s32.totalorder %s16, 1
    %p116 = scmp.ne.s32.totalorder %s111, %s113
    %p117 = scmp.eq.s32.totalorder %s16, 0
    %p118 = por %p116, %p117
    %p119 = scmp.ne.s32.totalorder %s111, %s113
    %p120 = scmp.eq.s32.totalorder %s21, 1
    %p121 = por %p119, %p120
    %p122 = scmp.ne.s32.totalorder %s113, %s114
    %p123 = scmp.eq.s32.totalorder %s21, 0
    %p124 = por %p122, %p123
    %p125 = scmp.ne.s32.totalorder %s113, %s114
    %p126 = scmp.eq.s32.totalorder %s22, 1
    %p127 = por %p125, %p126
    %p129 = scmp.ne.s32.totalorder %s114, %s128
    %p130 = scmp.eq.s32.totalorder %s22, 0
    %p131 = por %p129, %p130
    %s133 = sadd.s32 %s132, 1
    %p136 = scmp.eq.s32.totalorder %s16, 1
    %p137 = scmp.ne.s32.totalorder %s132, %s134
    %p138 = scmp.eq.s32.totalorder %s16, 0
    %p139 = por %p137, %p138
    %p140 = scmp.ne.s32.totalorder %s132, %s134
    %p141 = scmp.eq.s32.totalorder %s21, 1
    %p142 = por %p140, %p141
    %p143 = scmp.ne.s32.totalorder %s134, %s135
    %p144 = scmp.eq.s32.totalorder %s21, 0
    %p145 = por %p143, %p144
    %p146 = scmp.ne.s32.totalorder %s134, %s135
    %p147 = scmp.eq.s32.totalorder %s22, 1
    %p148 = por %p146, %p147
    %p150 = scmp.ne.s32.totalorder %s135, %s149
    %p151 = scmp.eq.s32.totalorder %s22, 0
    %p152 = por %p150, %p151
    %s154 = sadd.s32 %s153, 1
    %p157 = scmp.eq.s32.totalorder %s16, 1
    %p158 = scmp.ne.s32.totalorder %s153, %s155
    %p159 = scmp.eq.s32.totalorder %s16, 0
    %p160 = por %p158, %p159
    %p161 = scmp.ne.s32.totalorder %s153, %s155
    %p162 = scmp.eq.s32.totalorder %s21, 1
    %p163 = por %p161, %p162
    %p164 = scmp.ne.s32.totalorder %s155, %s156
    %p165 = scmp.eq.s32.totalorder %s21, 0
    %p166 = por %p164, %p165
    %p167 = scmp.ne.s32.totalorder %s155, %s156
    %p168 = scmp.eq.s32.totalorder %s22, 1
    %p169 = por %p167, %p168
    %p171 = scmp.ne.s32.totalorder %s156, %s170
    %p172 = scmp.eq.s32.totalorder %s22, 0
    %p173 = por %p171, %p172
    %s175 = sadd.s32 %s174, 1
    %p178 = scmp.eq.s32.totalorder %s16, 1
    %p179 = scmp.ne.s32.totalorder %s174, %s176
    %p180 = scmp.eq.s32.totalorder %s16, 0
    %p181 = por %p179, %p180
    %p182 = scmp.ne.s32.totalorder %s174, %s176
    %p183 = scmp.eq.s32.totalorder %s21, 1
    %p184 = por %p182, %p183
    %p185 = scmp.ne.s32.totalorder %s176, %s177
    %p186 = scmp.eq.s32.totalorder %s21, 0
    %p187 = por %p185, %p186
    %p188 = scmp.ne.s32.totalorder %s176, %s177
    %p189 = scmp.eq.s32.totalorder %s22, 1
    %p190 = por %p188, %p189
    %p192 = scmp.ne.s32.totalorder %s177, %s191
    %p193 = scmp.eq.s32.totalorder %s22, 0
    %p194 = por %p192, %p193
    %s196 = sadd.s32 %s195, 1
    %p199 = scmp.eq.s32.totalorder %s16, 1
    %p200 = scmp.ne.s32.totalorder %s195, %s197
    %p201 = scmp.eq.s32.totalorder %s16, 0
    %p202 = por %p200, %p201
    %p203 = scmp.ne.s32.totalorder %s195, %s197
    %p204 = scmp.eq.s32.totalorder %s21, 1
    %p205 = por %p203, %p204
    %p206 = scmp.ne.s32.totalorder %s197, %s198
    %p207 = scmp.eq.s32.totalorder %s21, 0
    %p208 = por %p206, %p207
    %p209 = scmp.ne.s32.totalorder %s197, %s198
    %p210 = scmp.eq.s32.totalorder %s22, 1
    %p211 = por %p209, %p210
    %p213 = scmp.ne.s32.totalorder %s198, %s212
    %p214 = scmp.eq.s32.totalorder %s22, 0
    %p215 = por %p213, %p214
    %s217 = sadd.s32 %s216, 1
    %p220 = scmp.eq.s32.totalorder %s16, 1
    %p221 = scmp.ne.s32.totalorder %s216, %s218
    %p222 = scmp.eq.s32.totalorder %s16, 0
    %p223 = por %p221, %p222
    %p224 = scmp.ne.s32.totalorder %s216, %s218
    %p225 = scmp.eq.s32.totalorder %s21, 1
    %p226 = por %p224, %p225
    %p227 = scmp.ne.s32.totalorder %s218, %s219
    %p228 = scmp.eq.s32.totalorder %s21, 0
    %p229 = por %p227, %p228
    %p230 = scmp.ne.s32.totalorder %s218, %s219
    %p231 = scmp.eq.s32.totalorder %s22, 1
    %p232 = por %p230, %p231
    %p234 = scmp.ne.s32.totalorder %s219, %s233
    %p235 = scmp.eq.s32.totalorder %s22, 0
    %p236 = por %p234, %p235
    %s238 = sadd.s32 %s237, 1
    %p241 = scmp.eq.s32.totalorder %s16, 1
    %p242 = scmp.ne.s32.totalorder %s237, %s239
    %p243 = scmp.eq.s32.totalorder %s16, 0
    %p244 = por %p242, %p243
    %p245 = scmp.ne.s32.totalorder %s237, %s239
    %p246 = scmp.eq.s32.totalorder %s21, 1
    %p247 = por %p245, %p246
    %p248 = scmp.ne.s32.totalorder %s239, %s240
    %p249 = scmp.eq.s32.totalorder %s21, 0
    %p250 = por %p248, %p249
    %p251 = scmp.ne.s32.totalorder %s239, %s240
    %p252 = scmp.eq.s32.totalorder %s22, 1
    %p253 = por %p251, %p252
    %p255 = scmp.ne.s32.totalorder %s240, %s254
    %p256 = scmp.eq.s32.totalorder %s22, 0
    %p257 = por %p255, %p256
    %s258 = ssub.s32 %s23, %s35
    %s259 = ssub.s32 %s24, %s31
    %s260 = sor.u32 %s258, %s259
    %p261 = scmp.eq.s32.totalorder %s260, 0
    %s263 = sadd.s32 %s262, 1
    %s264 = scalar_select %p261, %s262, %s263
    %p267 = pneg %p261
    %p268 = scmp.eq.s32.totalorder %s16, 1
    %p269 = por %p267, %p268
    %p270 = scmp.ne.s32.totalorder %s262, %s265
    %p271 = scmp.eq.s32.totalorder %s16, 0
    %p272 = por %p270, %p271
    %p273 = scmp.ne.s32.totalorder %s262, %s265
    %p274 = scmp.eq.s32.totalorder %s21, 1
    %p275 = por %p273, %p274
    %p276 = scmp.ne.s32.totalorder %s265, %s266
    %p277 = scmp.eq.s32.totalorder %s21, 0
    %p278 = por %p276, %p277
    %p279 = scmp.ne.s32.totalorder %s265, %s266
    %p280 = scmp.eq.s32.totalorder %s22, 1
    %p281 = por %p279, %p280
    %p283 = scmp.ne.s32.totalorder %s266, %s282
    %p284 = scmp.eq.s32.totalorder %s22, 0
    %p285 = por %p283, %p284
    %p286 = scmp.le.s32.totalorder 1, %s16
    %p287 = scmp.lt.s32.totalorder %s16, 3
    %p288 = pnand %p286, %p287
    %p289 = pneg %p288
    // Predicated region
    $region9: #{transformer_lm_forward.8} parent=5 // pred_check
      _
    $region10: #{transformer_lm_forward.8} parent=5 // pred_check_branch
      %291 = sbr.rel (%p288) target = $region12
    $region11: #{transformer_lm_forward.8} parent=5 // pred_region
      %s292 = ssub.s32 %s16, 1
      // Predicated region
      $region13: #{transformer_lm_forward.8} parent=11 // pred_check
        %p293 = pneg %p103
      $region14: #{transformer_lm_forward.8} parent=11 // pred_check_branch
        %295 = sbr.rel (%p293) target = $region16
      $region15: #{transformer_lm_forward.8} parent=11 // pred_region
        _
      $region16: #{transformer_lm_forward.8} parent=11 // pred_fallthru
        _
      // Predicated region
      $region17: #{transformer_lm_forward.8} parent=11 // pred_check
        %p296 = pneg %p124
      $region18: #{transformer_lm_forward.8} parent=11 // pred_check_branch
        %298 = sbr.rel (%p296) target = $region20
      $region19: #{transformer_lm_forward.8} parent=11 // pred_region
        _
      $region20: #{transformer_lm_forward.8} parent=11 // pred_fallthru
        _
      // Predicated region
      $region21: #{transformer_lm_forward.8} parent=11 // pred_check
        %p299 = pneg %p145
      $region22: #{transformer_lm_forward.8} parent=11 // pred_check_branch
        %301 = sbr.rel (%p299) target = $region24
      $region23: #{transformer_lm_forward.8} parent=11 // pred_region
        _
      $region24: #{transformer_lm_forward.8} parent=11 // pred_fallthru
        _
      // Predicated region
      $region25: #{transformer_lm_forward.8} parent=11 // pred_check
        %p302 = pneg %p166
      $region26: #{transformer_lm_forward.8} parent=11 // pred_check_branch
        %304 = sbr.rel (%p302) target = $region28
      $region27: #{transformer_lm_forward.8} parent=11 // pred_region
        _
      $region28: #{transformer_lm_forward.8} parent=11 // pred_fallthru
        _
      // Predicated region
      $region29: #{transformer_lm_forward.8} parent=11 // pred_check
        %p305 = pneg %p187
      $region30: #{transformer_lm_forward.8} parent=11 // pred_check_branch
        %307 = sbr.rel (%p305) target = $region32
      $region31: #{transformer_lm_forward.8} parent=11 // pred_region
        _
      $region32: #{transformer_lm_forward.8} parent=11 // pred_fallthru
        _
      // Predicated region
      $region33: #{transformer_lm_forward.8} parent=11 // pred_check
        %p308 = pneg %p208
      $region34: #{transformer_lm_forward.8} parent=11 // pred_check_branch
        %310 = sbr.rel (%p308) target = $region36
      $region35: #{transformer_lm_forward.8} parent=11 // pred_region
        _
      $region36: #{transformer_lm_forward.8} parent=11 // pred_fallthru
        _
      // Predicated region
      $region37: #{transformer_lm_forward.8} parent=11 // pred_check
        %p311 = pneg %p229
      $region38: #{transformer_lm_forward.8} parent=11 // pred_check_branch
        %313 = sbr.rel (%p311) target = $region40
      $region39: #{transformer_lm_forward.8} parent=11 // pred_region
        _
      $region40: #{transformer_lm_forward.8} parent=11 // pred_fallthru
        _
      // Predicated region
      $region41: #{transformer_lm_forward.8} parent=11 // pred_check
        %p314 = pneg %p250
      $region42: #{transformer_lm_forward.8} parent=11 // pred_check_branch
        %316 = sbr.rel (%p314) target = $region44
      $region43: #{transformer_lm_forward.8} parent=11 // pred_region
        _
      $region44: #{transformer_lm_forward.8} parent=11 // pred_fallthru
        _
    $region12: #{transformer_lm_forward.8} parent=5 // pred_fallthru
      _
    %p317 = scmp.lt.s32.totalorder %s16, 2
    // Predicated region
    $region45: #{transformer_lm_forward.8} parent=5 // pred_check
      %p318 = pneg %p317
    $region46: #{transformer_lm_forward.8} parent=5 // pred_check_branch
      %320 = sbr.rel (%p318) target = $region48
    $region47: #{transformer_lm_forward.8} parent=5 // pred_region
      // Predicated region
      $region49: #{transformer_lm_forward.8} parent=47 // pred_check
        %p321 = pneg %p50
      $region50: #{transformer_lm_forward.8} parent=47 // pred_check_branch
        %323 = sbr.rel (%p321) target = $region52
      $region51: #{transformer_lm_forward.8} parent=47 // pred_region
        %p324 = scmp.lt.s32.totalorder %s23, 1
        %s325 = scalar_select %p324, %s23, 1
        %p326 = scmp.lt.s32.totalorder %s24, 0
        %s327 = scalar_select %p326, %s24, 0
        %s328 = sadd.s32 %s327, %s325
        %s329 = smul.addr %s328, 8
        %s330 = scalar_lea.vmem %s0, %s329
      $region52: #{transformer_lm_forward.8} parent=47 // pred_fallthru
        _
      // Predicated region
      $region53: #{transformer_lm_forward.8} parent=47 // pred_check
        %p331 = pneg %p76
      $region54: #{transformer_lm_forward.8} parent=47 // pred_check_branch
        %333 = sbr.rel (%p331) target = $region56
      $region55: #{transformer_lm_forward.8} parent=47 // pred_region
        %p334 = scmp.lt.s32.totalorder %s23, 1
        %s335 = scalar_select %p334, %s23, 1
        %s336 = smul.addr %s335, 2
        %s337 = smul.addr %s336, 8
        %s338 = scalar_lea.vmem %s1, %s337
      $region56: #{transformer_lm_forward.8} parent=47 // pred_fallthru
        _
    $region48: #{transformer_lm_forward.8} parent=5 // pred_fallthru
      _
    %p339 = scmp.le.s32.totalorder 1, %s16
    %p340 = scmp.lt.s32.totalorder %s16, 3
    %p341 = pnand %p339, %p340
    %p342 = pneg %p341
    // Predicated region
    $region57: #{transformer_lm_forward.8} parent=5 // pred_check
      _
    $region58: #{transformer_lm_forward.8} parent=5 // pred_check_branch
      %344 = sbr.rel (%p341) target = $region60
    $region59: #{transformer_lm_forward.8} parent=5 // pred_region
      %s345 = ssub.s32 %s16, 1
      %p346 = scmp.lt.s32.totalorder %s25, 1
      %s347 = scalar_select %p346, %s25, 1
      %p348 = scmp.lt.s32.totalorder %s26, 0
      %s349 = scalar_select %p348, %s26, 0
      %s350 = sadd.s32 %s349, %s347
      %s351 = smul.addr %s350, 8
      %s352 = scalar_lea.vmem %s0, %s351
      %p353 = pneg %p56
      %p354 = pneg %p53
      %p355 = scmp.lt.s32.totalorder %s25, 1
      %s356 = scalar_select %p355, %s25, 1
      %s357 = smul.addr %s356, 2
      %s358 = smul.addr %s357, 8
      %s359 = scalar_lea.vmem %s1, %s358
      %p360 = pneg %p82
      %p361 = pneg %p79
      %p362 = pneg %p103
      %p363 = pneg %p100
      %p364 = pneg %p124
      %p365 = pneg %p121
      %p366 = pneg %p145
      %p367 = pneg %p142
      %p368 = pneg %p166
      %p369 = pneg %p163
      %p370 = pneg %p187
      %p371 = pneg %p184
      %p372 = pneg %p208
      %p373 = pneg %p205
      %p374 = pneg %p229
      %p375 = pneg %p226
      %p376 = pneg %p250
      %p377 = pneg %p247
      %p378 = pneg %p278
      %p379 = pneg %p275
      %p380 = scmp.lt.s32.totalorder %s25, 1
      %s381 = scalar_select %p380, %s25, 1
      %p382 = scmp.lt.s32.totalorder %s26, 0
      %s383 = scalar_select %p382, %s26, 0
      %s384 = sadd.s32 %s383, %s381
      %s385 = smul.addr %s384, 8
      %s386 = scalar_lea.vmem %s10, %s385
      %p387 = scmp.lt.s32.totalorder %s25, 1
      %s388 = scalar_select %p387, %s25, 1
      %p389 = scmp.lt.s32.totalorder %s26, 0
      %s390 = scalar_select %p389, %s26, 0
      %s391 = sadd.s32 %s390, %s388
      %s392 = smul.addr %s391, 8
      %s393 = scalar_lea.vmem %s0, %s392
      %p394 = scmp.lt.s32.totalorder %s25, 1
      %s395 = scalar_select %p394, %s25, 1
      %s396 = smul.addr %s395, 2
      %s397 = smul.addr %s396, 8
      %s398 = scalar_lea.vmem %s1, %s397
      %p399 = scmp.lt.s32.totalorder %s25, 1
      %s400 = scalar_select %p399, %s25, 1
      %p401 = scmp.lt.s32.totalorder %s26, 0
      %s402 = scalar_select %p401, %s26, 0
      %s403 = sadd.s32 %s402, %s400
      %s404 = smul.addr %s403, 8
      %s405 = scalar_lea.vmem %s10, %s404
      %v407 = vld [vmem:[%s393] sm:$0xff]
      %v408 = vld [vmem:[%s398] sm:$0xff]
      %v409 = vld [vmem:[%s398 + $0x8] sm:$0xf]
      %v410 = vpack.c.bf16 %v407, %v407
      %v411 = vpack.c.bf16 %v409, %v408
      %v412 = vld [vmem:[%s2] sm:$0xf]
      %v413 = vld [vmem:[%s2 + $0x4] sm:$0xf]
      %v414 = vld [vmem:[%s2 + $0x8] sm:$0xf]
      %v415 = vld [vmem:[%s2 + $0xc] sm:$0xf]
      %v416 = vld [vmem:[%s2 + $0x10] sm:$0xf]
      %v417 = vld [vmem:[%s2 + $0x14] sm:$0xf]
      %v418 = vld [vmem:[%s2 + $0x18] sm:$0xf]
      %v419 = vld [vmem:[%s2 + $0x1c] sm:$0xf]
      %v420 = vld [vmem:[%s2 + $0x20] sm:$0xf]
      %v421 = vld [vmem:[%s2 + $0x24] sm:$0xf]
      %v422 = vld [vmem:[%s2 + $0x28] sm:$0xf]
      %v423 = vld [vmem:[%s2 + $0x2c] sm:$0xf]
      %v424 = vld [vmem:[%s2 + $0x30] sm:$0xf]
      %v425 = vld [vmem:[%s2 + $0x34] sm:$0xf]
      %v426 = vld [vmem:[%s2 + $0x38] sm:$0xf]
      %v427 = vld [vmem:[%s2 + $0x3c] sm:$0xf]
      %v428 = vld [vmem:[%s3] sm:$0x1]
      %v430 = vlaneseq
      %v431 = vshrl.u32 %v430, 7
      %v432 = vsub.s32 0, %v431
      %v433 = vrot.slane %v428, %v432
      %v451 = vunpack.c.l.b16 %v412
      %v452 = vunpack.c.l.b16 %v413
      %v453 = vunpack.c.l.b16 %v414
      %v454 = vunpack.c.l.b16 %v415
      %v455 = vunpack.c.l.b16 %v416
      %v456 = vunpack.c.l.b16 %v417
      %v457 = vunpack.c.l.b16 %v418
      %v458 = vunpack.c.l.b16 %v419
      %v459 = vunpack.c.l.b16 %v420
      %v460 = vunpack.c.l.b16 %v421
      %v461 = vunpack.c.l.b16 %v422
      %v462 = vunpack.c.l.b16 %v423
      %v463 = vunpack.c.l.b16 %v424
      %v464 = vunpack.c.l.b16 %v425
      %v465 = vunpack.c.l.b16 %v426
      %v466 = vunpack.c.l.b16 %v427
      %v467 = vpack.c.b16 %v452, %v451
      %v468 = vpack.c.b16 %v454, %v453
      %v469 = vpack.c.b16 %v456, %v455
      %v470 = vpack.c.b16 %v458, %v457
      %v471 = vpack.c.b16 %v460, %v459
      %v472 = vpack.c.b16 %v462, %v461
      %v473 = vpack.c.b16 %v464, %v463
      %v474 = vpack.c.b16 %v466, %v465
      %483 = vmatprep.subr.bf16.mxu0 0
      %484 = vmatpush1.bf16.msra.mxu0 %v467
      %485 = vmatprep.subr.bf16.mxu0 0
      %486 = vmatpush1.bf16.msra.mxu0 %v468
      %487 = vmatprep.subr.bf16.mxu0 0
      %488 = vmatpush1.bf16.msra.mxu0 %v469
      %489 = vmatprep.subr.bf16.mxu0 0
      %490 = vmatpush1.bf16.msra.mxu0 %v470
      %491 = vmatprep.subr.bf16.mxu0 0
      %492 = vmatpush1.bf16.msra.mxu0 %v471
      %493 = vmatprep.subr.bf16.mxu0 0
      %494 = vmatpush1.bf16.msra.mxu0 %v472
      %495 = vmatprep.subr.bf16.mxu0 0
      %496 = vmatpush1.bf16.msra.mxu0 %v473
      %497 = vmatprep.subr.bf16.mxu0 0
      %498 = vmatpush1.bf16.msra.mxu0 %v474
      %499 = vmatprep.subr.bf16.mxu0 0
      %500 = vmatpush1.bf16.msra.mxu0 0
      %501 = vmatprep.subr.bf16.mxu0 0
      %502 = vmatpush1.bf16.msra.mxu0 0
      %503 = vmatprep.subr.bf16.mxu0 0
      %504 = vmatpush1.bf16.msra.mxu0 0
      %505 = vmatprep.subr.bf16.mxu0 0
      %506 = vmatpush1.bf16.msra.mxu0 0
      %507 = vmatprep.subr.bf16.mxu0 0
      %508 = vmatpush1.bf16.msra.mxu0 0
      %509 = vmatprep.subr.bf16.mxu0 0
      %510 = vmatpush1.bf16.msra.mxu0 0
      %511 = vmatprep.subr.bf16.mxu0 0
      %512 = vmatpush1.bf16.msra.mxu0 0
      %513 = vmatprep.subr.bf16.mxu0 0
      %514 = vmatpush1.bf16.msra.mxu0 0
      %515 = vmatprep.mubr.bf16.mxu0 0
      %516 = vmatmul.mubr.bf16.gmra.mrb[0].mxu0 %v410
      %v517 = vpop.f32.mrb[0].mxu0
      %v518 = vadd.f32 %v433, %v517
      %v519 = vpop.f32.mrb[0].mxu0
      %v520 = vpop.f32.mrb[0].mxu0
      %v521 = vpop.f32.mrb[0].mxu0
      %522 = vdwg.mxu0
      %v523 = vld [vmem:[%s4] sm:$0xff]
      %v524 = vld [vmem:[%s4 + $0x8] sm:$0xff]
      %v525 = vld [vmem:[%s4 + $0x10] sm:$0xff]
      %v526 = vld [vmem:[%s4 + $0x18] sm:$0xff]
      %v527 = vld [vmem:[%s4 + $0x20] sm:$0xff]
      %v528 = vld [vmem:[%s4 + $0x28] sm:$0xff]
      %v529 = vld [vmem:[%s4 + $0x30] sm:$0xff]
      %v530 = vld [vmem:[%s4 + $0x38] sm:$0xff]
      %v531 = vld [vmem:[%s4 + $0x40] sm:$0xff]
      %v532 = vld [vmem:[%s4 + $0x48] sm:$0xff]
      %v533 = vld [vmem:[%s4 + $0x50] sm:$0xff]
      %v534 = vld [vmem:[%s4 + $0x58] sm:$0xff]
      %v535 = vld [vmem:[%s4 + $0x60] sm:$0xff]
      %v536 = vld [vmem:[%s4 + $0x68] sm:$0xff]
      %v537 = vld [vmem:[%s4 + $0x70] sm:$0xff]
      %v538 = vld [vmem:[%s4 + $0x78] sm:$0xff]
      %v539 = vld [vmem:[%s5] sm:$0x3]
      %v541 = vlaneseq
      %v542 = vshrl.u32 %v541, 7
      %v543 = vsub.s32 0, %v542
      %v544 = vrot.slane %v539, %v543
      %v545 = vlaneseq
      %v546 = vshrl.u32 %v545, 7
      %v547 = vsub.s32 1, %v546
      %v548 = vrot.slane %v539, %v547
      %v567 = vunpack.c.l.b16 %v523
      %v568 = vunpack.c.h.b16 %v523
      %v569 = vunpack.c.l.b16 %v524
      %v570 = vunpack.c.h.b16 %v524
      %v571 = vunpack.c.l.b16 %v525
      %v572 = vunpack.c.h.b16 %v525
      %v573 = vunpack.c.l.b16 %v526
      %v574 = vunpack.c.h.b16 %v526
      %v575 = vunpack.c.l.b16 %v527
      %v576 = vunpack.c.h.b16 %v527
      %v577 = vunpack.c.l.b16 %v528
      %v578 = vunpack.c.h.b16 %v528
      %v579 = vunpack.c.l.b16 %v529
      %v580 = vunpack.c.h.b16 %v529
      %v581 = vunpack.c.l.b16 %v530
      %v582 = vunpack.c.h.b16 %v530
      %v583 = vunpack.c.l.b16 %v531
      %v584 = vunpack.c.h.b16 %v531
      %v585 = vunpack.c.l.b16 %v532
      %v586 = vunpack.c.h.b16 %v532
      %v587 = vunpack.c.l.b16 %v533
      %v588 = vunpack.c.h.b16 %v533
      %v589 = vunpack.c.l.b16 %v534
      %v590 = vunpack.c.h.b16 %v534
      %v591 = vunpack.c.l.b16 %v535
      %v592 = vunpack.c.h.b16 %v535
      %v593 = vunpack.c.l.b16 %v536
      %v594 = vunpack.c.h.b16 %v536
      %v595 = vunpack.c.l.b16 %v537
      %v596 = vunpack.c.h.b16 %v537
      %v597 = vunpack.c.l.b16 %v538
      %v598 = vunpack.c.h.b16 %v538
      %v599 = vpack.c.b16 %v569, %v567
      %v600 = vpack.c.b16 %v570, %v568
      %v601 = vpack.c.b16 %v573, %v571
      %v602 = vpack.c.b16 %v574, %v572
      %v603 = vpack.c.b16 %v577, %v575
      %v604 = vpack.c.b16 %v578, %v576
      %v605 = vpack.c.b16 %v581, %v579
      %v606 = vpack.c.b16 %v582, %v580
      %v607 = vpack.c.b16 %v585, %v583
      %v608 = vpack.c.b16 %v586, %v584
      %v609 = vpack.c.b16 %v589, %v587
      %v610 = vpack.c.b16 %v590, %v588
      %v611 = vpack.c.b16 %v593, %v591
      %v612 = vpack.c.b16 %v594, %v592
      %v613 = vpack.c.b16 %v597, %v595
      %v614 = vpack.c.b16 %v598, %v596
      %631 = vmatprep.subr.bf16.mxu0 %v600
      %632 = vmatpush1.bf16.msra.mxu0 %v599
      %633 = vmatprep.subr.bf16.mxu0 %v602
      %634 = vmatpush1.bf16.msra.mxu0 %v601
      %635 = vmatprep.subr.bf16.mxu0 %v604
      %636 = vmatpush1.bf16.msra.mxu0 %v603
      %637 = vmatprep.subr.bf16.mxu0 %v606
      %638 = vmatpush1.bf16.msra.mxu0 %v605
      %639 = vmatprep.subr.bf16.mxu0 %v608
      %640 = vmatpush1.bf16.msra.mxu0 %v607
      %641 = vmatprep.subr.bf16.mxu0 %v610
      %642 = vmatpush1.bf16.msra.mxu0 %v609
      %643 = vmatprep.subr.bf16.mxu0 %v612
      %644 = vmatpush1.bf16.msra.mxu0 %v611
      %645 = vmatprep.subr.bf16.mxu0 %v614
      %646 = vmatpush1.bf16.msra.mxu0 %v613
      %647 = vmatprep.subr.bf16.mxu0 0
      %648 = vmatpush1.bf16.msra.mxu0 0
      %649 = vmatprep.subr.bf16.mxu0 0
      %650 = vmatpush1.bf16.msra.mxu0 0
      %651 = vmatprep.subr.bf16.mxu0 0
      %652 = vmatpush1.bf16.msra.mxu0 0
      %653 = vmatprep.subr.bf16.mxu0 0
      %654 = vmatpush1.bf16.msra.mxu0 0
      %655 = vmatprep.subr.bf16.mxu0 0
      %656 = vmatpush1.bf16.msra.mxu0 0
      %657 = vmatprep.subr.bf16.mxu0 0
      %658 = vmatpush1.bf16.msra.mxu0 0
      %659 = vmatprep.subr.bf16.mxu0 0
      %660 = vmatpush1.bf16.msra.mxu0 0
      %661 = vmatprep.subr.bf16.mxu0 0
      %662 = vmatpush1.bf16.msra.mxu0 0
      %663 = vmatprep.mubr.bf16.mxu0 0
      %664 = vmatmul.mubr.bf16.gmra.mrb[0].mxu0 %v411
      %v665 = vpop.f32.mrb[0].mxu0
      %v666 = vadd.f32 %v544, %v665
      %v667 = vpop.f32.mrb[0].mxu0
      %v668 = vadd.f32 %v548, %v667
      %v669 = vpop.f32.mrb[0].mxu0
      %v670 = vadd.f32 %v544, %v669
      %v671 = vpop.f32.mrb[0].mxu0
      %v672 = vadd.f32 %v548, %v671
      %673 = vdwg.mxu0
      %v674 = vmul.f32 %v518, 0.17677669
      %676 = vrot.lane.b32.xlu0 %v674, 96
      %v677 = vpop.permute.xlu0 %676
      %679 = vrot.lane.b32.xlu0 %v674, 64
      %v680 = vpop.permute.xlu0 %679
      %682 = vrot.lane.b32.xlu0 %v674, 32
      %v683 = vpop.permute.xlu0 %682
      %v685 = vcombine.low %v674, %v680
      %v686 = vcombine.high %v674, %v680
      %v688 = vunpack.c.l.s4 1983009808
      %v689 = vunpack.c.0.s8 %v688
      %v690 = vlaneseq
      %v691 = vshrl.u32 %v690, 7
      %v692 = vsub.s32 %v689, %v691
      %v693 = vrot.slane %v685, %v692
      %v695 = vunpack.c.l.s4 1983009808
      %v696 = vunpack.c.0.s8 %v695
      %v697 = vlaneseq
      %v698 = vshrl.u32 %v697, 7
      %v699 = vsub.s32 %v696, %v698
      %v700 = vrot.slane %v686, %v699
      %v701 = vcombine.low %v677, %v683
      %v702 = vcombine.high %v677, %v683
      %v704 = vunpack.c.l.s4 1983009808
      %v705 = vunpack.c.0.s8 %v704
      %v706 = vlaneseq
      %v707 = vshrl.u32 %v706, 7
      %v708 = vsub.s32 %v705, %v707
      %v709 = vrot.slane %v701, %v708
      %v711 = vunpack.c.l.s4 1983009808
      %v712 = vunpack.c.0.s8 %v711
      %v713 = vlaneseq
      %v714 = vshrl.u32 %v713, 7
      %v715 = vsub.s32 %v712, %v714
      %v716 = vrot.slane %v702, %v715
      %v717 = vcombine.low %v693, %v709
      %v718 = vcombine.high %v693, %v709
      %v720 = vunpack.c.l.s4 1934713408
      %v721 = vunpack.c.0.s8 %v720
      %v722 = vlaneseq
      %v723 = vshrl.u32 %v722, 7
      %v724 = vsub.s32 %v721, %v723
      %v725 = vrot.slane %v717, %v724
      %v727 = vunpack.c.l.s4 1934713408
      %v728 = vunpack.c.0.s8 %v727
      %v729 = vlaneseq
      %v730 = vshrl.u32 %v729, 7
      %v731 = vsub.s32 %v728, %v730
      %v732 = vrot.slane %v718, %v731
      %v733 = vcombine.low %v700, %v716
      %v734 = vcombine.high %v700, %v716
      %v736 = vunpack.c.l.s4 1934713408
      %v737 = vunpack.c.0.s8 %v736
      %v738 = vlaneseq
      %v739 = vshrl.u32 %v738, 7
      %v740 = vsub.s32 %v737, %v739
      %v741 = vrot.slane %v733, %v740
      %v743 = vunpack.c.l.s4 1934713408
      %v744 = vunpack.c.0.s8 %v743
      %v745 = vlaneseq
      %v746 = vshrl.u32 %v745, 7
      %v747 = vsub.s32 %v744, %v746
      %v748 = vrot.slane %v734, %v747
      %v749 = vcombine.high %v725, 0.0
      %v750 = vcombine.high %v732, 0.0
      %v751 = vcombine.high %v741, 0.0
      %v752 = vcombine.high %v748, 0.0
      %v753 = vpack.c.bf16 %v725, %v725
      %v754 = vpack.c.bf16 %v749, %v749
      %v755 = vpack.c.bf16 %v732, %v732
      %v756 = vpack.c.bf16 %v750, %v750
      %v757 = vpack.c.bf16 %v741, %v741
      %v758 = vpack.c.bf16 %v751, %v751
      %v759 = vpack.c.bf16 %v748, %v748
      %v760 = vpack.c.bf16 %v752, %v752
      %763 = vrot.lane.b32.xlu0 %v666, 96
      %v764 = vpop.permute.xlu0 %763
      %765 = vrot.lane.b32.xlu0 %v670, 96
      %v766 = vpop.permute.xlu0 %765
      %769 = vrot.lane.b32.xlu0 %v666, 64
      %v770 = vpop.permute.xlu0 %769
      %771 = vrot.lane.b32.xlu0 %v670, 64
      %v772 = vpop.permute.xlu0 %771
      %775 = vrot.lane.b32.xlu0 %v666, 32
      %v776 = vpop.permute.xlu0 %775
      %777 = vrot.lane.b32.xlu0 %v670, 32
      %v778 = vpop.permute.xlu0 %777
      %v781 = vcombine.low %v666, %v770
      %v782 = vcombine.high %v666, %v770
      %v784 = vunpack.c.l.s4 1983009808
      %v785 = vunpack.c.0.s8 %v784
      %v786 = vlaneseq
      %v787 = vshrl.u32 %v786, 7
      %v788 = vsub.s32 %v785, %v787
      %v789 = vrot.slane %v781, %v788
      %v791 = vunpack.c.l.s4 1983009808
      %v792 = vunpack.c.0.s8 %v791
      %v793 = vlaneseq
      %v794 = vshrl.u32 %v793, 7
      %v795 = vsub.s32 %v792, %v794
      %v796 = vrot.slane %v782, %v795
      %v797 = vcombine.low %v764, %v776
      %v798 = vcombine.high %v764, %v776
      %v800 = vunpack.c.l.s4 1983009808
      %v801 = vunpack.c.0.s8 %v800
      %v802 = vlaneseq
      %v803 = vshrl.u32 %v802, 7
      %v804 = vsub.s32 %v801, %v803
      %v805 = vrot.slane %v797, %v804
      %v807 = vunpack.c.l.s4 1983009808
      %v808 = vunpack.c.0.s8 %v807
      %v809 = vlaneseq
      %v810 = vshrl.u32 %v809, 7
      %v811 = vsub.s32 %v808, %v810
      %v812 = vrot.slane %v798, %v811
      %v813 = vcombine.low %v789, %v805
      %v814 = vcombine.high %v789, %v805
      %v816 = vunpack.c.l.s4 1934713408
      %v817 = vunpack.c.0.s8 %v816
      %v818 = vlaneseq
      %v819 = vshrl.u32 %v818, 7
      %v820 = vsub.s32 %v817, %v819
      %v821 = vrot.slane %v813, %v820
      %v823 = vunpack.c.l.s4 1934713408
      %v824 = vunpack.c.0.s8 %v823
      %v825 = vlaneseq
      %v826 = vshrl.u32 %v825, 7
      %v827 = vsub.s32 %v824, %v826
      %v828 = vrot.slane %v814, %v827
      %v829 = vcombine.low %v796, %v812
      %v830 = vcombine.high %v796, %v812
      %v832 = vunpack.c.l.s4 1934713408
      %v833 = vunpack.c.0.s8 %v832
      %v834 = vlaneseq
      %v835 = vshrl.u32 %v834, 7
      %v836 = vsub.s32 %v833, %v835
      %v837 = vrot.slane %v829, %v836
      %v839 = vunpack.c.l.s4 1934713408
      %v840 = vunpack.c.0.s8 %v839
      %v841 = vlaneseq
      %v842 = vshrl.u32 %v841, 7
      %v843 = vsub.s32 %v840, %v842
      %v844 = vrot.slane %v830, %v843
      %v845 = vcombine.high %v821, 0.0
      %v846 = vcombine.high %v828, 0.0
      %v847 = vcombine.high %v837, 0.0
      %v848 = vcombine.high %v844, 0.0
      %v849 = vcombine.low %v670, %v772
      %v851 = vunpack.c.l.s4 1983009808
      %v852 = vunpack.c.0.s8 %v851
      %v853 = vlaneseq
      %v854 = vshrl.u32 %v853, 7
      %v855 = vsub.s32 %v852, %v854
      %v856 = vrot.slane %v849, %v855
      %v857 = vcombine.low %v766, %v778
      %v859 = vunpack.c.l.s4 1983009808
      %v860 = vunpack.c.0.s8 %v859
      %v861 = vlaneseq
      %v862 = vshrl.u32 %v861, 7
      %v863 = vsub.s32 %v860, %v862
      %v864 = vrot.slane %v857, %v863
      %v865 = vcombine.low %v856, %v864
      %v866 = vcombine.high %v856, %v864
      %v868 = vunpack.c.l.s4 1934713408
      %v869 = vunpack.c.0.s8 %v868
      %v870 = vlaneseq
      %v871 = vshrl.u32 %v870, 7
      %v872 = vsub.s32 %v869, %v871
      %v873 = vrot.slane %v865, %v872
      %v875 = vunpack.c.l.s4 1934713408
      %v876 = vunpack.c.0.s8 %v875
      %v877 = vlaneseq
      %v878 = vshrl.u32 %v877, 7
      %v879 = vsub.s32 %v876, %v878
      %v880 = vrot.slane %v866, %v879
      %v881 = vcombine.high %v873, 0.0
      %v882 = vcombine.high %v880, 0.0
      %v883 = vpack.c.bf16 %v821, %v821
      %v884 = vpack.c.bf16 %v845, %v845
      %v885 = vpack.c.bf16 %v828, %v828
      %v886 = vpack.c.bf16 %v846, %v846
      %v887 = vpack.c.bf16 %v837, %v837
      %v888 = vpack.c.bf16 %v847, %v847
      %v889 = vpack.c.bf16 %v844, %v844
      %v890 = vpack.c.bf16 %v848, %v848
      %v891 = vpack.c.bf16 %v873, %v873
      %v892 = vpack.c.bf16 %v881, %v881
      %v893 = vpack.c.bf16 %v880, %v880
      %v894 = vpack.c.bf16 %v882, %v882
      %897 = vrot.lane.b32.xlu0 %v668, 96
      %v898 = vpop.permute.xlu0 %897
      %899 = vrot.lane.b32.xlu0 %v672, 96
      %v900 = vpop.permute.xlu0 %899
      %903 = vrot.lane.b32.xlu0 %v668, 64
      %v904 = vpop.permute.xlu0 %903
      %905 = vrot.lane.b32.xlu0 %v672, 64
      %v906 = vpop.permute.xlu0 %905
      %909 = vrot.lane.b32.xlu0 %v668, 32
      %v910 = vpop.permute.xlu0 %909
      %911 = vrot.lane.b32.xlu0 %v672, 32
      %v912 = vpop.permute.xlu0 %911
      %v915 = vcombine.low %v668, %v904
      %v916 = vcombine.high %v668, %v904
      %v918 = vunpack.c.l.s4 1983009808
      %v919 = vunpack.c.0.s8 %v918
      %v920 = vlaneseq
      %v921 = vshrl.u32 %v920, 7
      %v922 = vsub.s32 %v919, %v921
      %v923 = vrot.slane %v915, %v922
      %v925 = vunpack.c.l.s4 1983009808
      %v926 = vunpack.c.0.s8 %v925
      %v927 = vlaneseq
      %v928 = vshrl.u32 %v927, 7
      %v929 = vsub.s32 %v926, %v928
      %v930 = vrot.slane %v916, %v929
      %v931 = vcombine.low %v898, %v910
      %v932 = vcombine.high %v898, %v910
      %v934 = vunpack.c.l.s4 1983009808
      %v935 = vunpack.c.0.s8 %v934
      %v936 = vlaneseq
      %v937 = vshrl.u32 %v936, 7
      %v938 = vsub.s32 %v935, %v937
      %v939 = vrot.slane %v931, %v938
      %v941 = vunpack.c.l.s4 1983009808
      %v942 = vunpack.c.0.s8 %v941
      %v943 = vlaneseq
      %v944 = vshrl.u32 %v943, 7
      %v945 = vsub.s32 %v942, %v944
      %v946 = vrot.slane %v932, %v945
      %v947 = vcombine.low %v923, %v939
      %v948 = vcombine.high %v923, %v939
      %v950 = vunpack.c.l.s4 1934713408
      %v951 = vunpack.c.0.s8 %v950
      %v952 = vlaneseq
      %v953 = vshrl.u32 %v952, 7
      %v954 = vsub.s32 %v951, %v953
      %v955 = vrot.slane %v947, %v954
      %v957 = vunpack.c.l.s4 1934713408
      %v958 = vunpack.c.0.s8 %v957
      %v959 = vlaneseq
      %v960 = vshrl.u32 %v959, 7
      %v961 = vsub.s32 %v958, %v960
      %v962 = vrot.slane %v948, %v961
      %v963 = vcombine.low %v930, %v946
      %v964 = vcombine.high %v930, %v946
      %v966 = vunpack.c.l.s4 1934713408
      %v967 = vunpack.c.0.s8 %v966
      %v968 = vlaneseq
      %v969 = vshrl.u32 %v968, 7
      %v970 = vsub.s32 %v967, %v969
      %v971 = vrot.slane %v963, %v970
      %v973 = vunpack.c.l.s4 1934713408
      %v974 = vunpack.c.0.s8 %v973
      %v975 = vlaneseq
      %v976 = vshrl.u32 %v975, 7
      %v977 = vsub.s32 %v974, %v976
      %v978 = vrot.slane %v964, %v977
      %v979 = vcombine.high %v955, 0.0
      %v980 = vcombine.high %v962, 0.0
      %v981 = vcombine.high %v971, 0.0
      %v982 = vcombine.high %v978, 0.0
      %v983 = vcombine.low %v672, %v906
      %v985 = vunpack.c.l.s4 1983009808
      %v986 = vunpack.c.0.s8 %v985
      %v987 = vlaneseq
      %v988 = vshrl.u32 %v987, 7
      %v989 = vsub.s32 %v986, %v988
      %v990 = vrot.slane %v983, %v989
      %v991 = vcombine.low %v900, %v912
      %v993 = vunpack.c.l.s4 1983009808
      %v994 = vunpack.c.0.s8 %v993
      %v995 = vlaneseq
      %v996 = vshrl.u32 %v995, 7
      %v997 = vsub.s32 %v994, %v996
      %v998 = vrot.slane %v991, %v997
      %v999 = vcombine.low %v990, %v998
      %v1000 = vcombine.high %v990, %v998
      %v1002 = vunpack.c.l.s4 1934713408
      %v1003 = vunpack.c.0.s8 %v1002
      %v1004 = vlaneseq
      %v1005 = vshrl.u32 %v1004, 7
      %v1006 = vsub.s32 %v1003, %v1005
      %v1007 = vrot.slane %v999, %v1006
      %v1009 = vunpack.c.l.s4 1934713408
      %v1010 = vunpack.c.0.s8 %v1009
      %v1011 = vlaneseq
      %v1012 = vshrl.u32 %v1011, 7
      %v1013 = vsub.s32 %v1010, %v1012
      %v1014 = vrot.slane %v1000, %v1013
      %v1015 = vcombine.high %v1007, 0.0
      %v1016 = vcombine.high %v1014, 0.0
      %v1017 = vpack.c.bf16 %v955, %v955
      %v1018 = vpack.c.bf16 %v979, %v979
      %v1019 = vpack.c.bf16 %v962, %v962
      %v1020 = vpack.c.bf16 %v980, %v980
      %v1021 = vpack.c.bf16 %v971, %v971
      %v1022 = vpack.c.bf16 %v981, %v981
      %v1023 = vpack.c.bf16 %v978, %v978
      %v1024 = vpack.c.bf16 %v982, %v982
      %v1025 = vpack.c.bf16 %v1007, %v1007
      %v1026 = vpack.c.bf16 %v1015, %v1015
      %v1027 = vpack.c.bf16 %v1014, %v1014
      %v1028 = vpack.c.bf16 %v1016, %v1016
      %v1029 = vcombine.low %v753, %v757
      %v1031 = vunpack.c.l.s4 1983009808
      %v1032 = vunpack.c.0.s8 %v1031
      %v1033 = vlaneseq
      %v1034 = vshrl.u32 %v1033, 7
      %v1035 = vsub.s32 %v1032, %v1034
      %v1036 = vrot.slane %v1029, %v1035
      %v1037 = vcombine.low %v755, %v759
      %v1039 = vunpack.c.l.s4 1983009808
      %v1040 = vunpack.c.0.s8 %v1039
      %v1041 = vlaneseq
      %v1042 = vshrl.u32 %v1041, 7
      %v1043 = vsub.s32 %v1040, %v1042
      %v1044 = vrot.slane %v1037, %v1043
      %v1045 = vcombine.low %v1036, %v1044
      %v1047 = vunpack.c.l.s4 1934713408
      %v1048 = vunpack.c.0.s8 %v1047
      %v1049 = vlaneseq
      %v1050 = vshrl.u32 %v1049, 7
      %v1051 = vsub.s32 %v1048, %v1050
      %v1052 = vrot.slane %v1045, %v1051
      %v1053 = vcombine.high %v1052, 0
      %v1054 = vcombine.low %v754, %v758
      %v1056 = vunpack.c.l.s4 1983009808
      %v1057 = vunpack.c.0.s8 %v1056
      %v1058 = vlaneseq
      %v1059 = vshrl.u32 %v1058, 7
      %v1060 = vsub.s32 %v1057, %v1059
      %v1061 = vrot.slane %v1054, %v1060
      %v1062 = vcombine.low %v756, %v760
      %v1064 = vunpack.c.l.s4 1983009808
      %v1065 = vunpack.c.0.s8 %v1064
      %v1066 = vlaneseq
      %v1067 = vshrl.u32 %v1066, 7
      %v1068 = vsub.s32 %v1065, %v1067
      %v1069 = vrot.slane %v1062, %v1068
      %v1070 = vcombine.low %v1061, %v1069
      %v1072 = vunpack.c.l.s4 1934713408
      %v1073 = vunpack.c.0.s8 %v1072
      %v1074 = vlaneseq
      %v1075 = vshrl.u32 %v1074, 7
      %v1076 = vsub.s32 %v1073, %v1075
      %v1077 = vrot.slane %v1070, %v1076
      %v1078 = vcombine.high %v1077, 0
      %v1081 = vpack.i.b16 %v1077, %v1052
      %v1082 = vshrl.u32 %v1052, 16
      %v1083 = vshrl.u32 %v1077, 16
      %v1084 = vpack.i.b16 %v1083, %v1082
      %v1087 = vpack.i.b16 %v1078, %v1053
      %v1088 = vshrl.u32 %v1053, 16
      %v1089 = vshrl.u32 %v1078, 16
      %v1090 = vpack.i.b16 %v1089, %v1088
      %1091 = vxpose.xlu0.c.b16.start [1/8] %v883, 128
      %1092 = vxpose.xlu0.c.b16.cont [2/8] 0, 128
      %1093 = vxpose.xlu0.c.b16.cont [3/8] 0, 128
      %1094 = vxpose.xlu0.c.b16.cont [4/8] 0, 128
      %1095 = vxpose.xlu0.c.b16.cont [5/8] 0, 128
      %1096 = vxpose.xlu0.c.b16.cont [6/8] 0, 128
      %1097 = vxpose.xlu0.c.b16.cont [7/8] 0, 128
      %1098 = vxpose.xlu0.c.b16.end [8/8] 0, 128
      %v1099 = vpop.trf.xlu0
      %v1100 = vpop.trf.xlu0
      %v1101 = vpop.trf.xlu0
      %v1102 = vpop.trf.xlu0
      %v1103 = vpop.trf.xlu0
      %v1104 = vpop.trf.xlu0
      %v1105 = vpop.trf.xlu0
      %v1106 = vpop.trf.xlu0
      %1107 = vxpose.xlu0.c.b16.start [1/8] %v884, 128
      %1108 = vxpose.xlu0.c.b16.cont [2/8] 0, 128
      %1109 = vxpose.xlu0.c.b16.cont [3/8] 0, 128
      %1110 = vxpose.xlu0.c.b16.cont [4/8] 0, 128
      %1111 = vxpose.xlu0.c.b16.cont [5/8] 0, 128
      %1112 = vxpose.xlu0.c.b16.cont [6/8] 0, 128
      %1113 = vxpose.xlu0.c.b16.cont [7/8] 0, 128
      %1114 = vxpose.xlu0.c.b16.end [8/8] 0, 128
      %v1115 = vpop.trf.xlu0
      %v1116 = vpop.trf.xlu0
      %v1117 = vpop.trf.xlu0
      %v1118 = vpop.trf.xlu0
      %v1119 = vpop.trf.xlu0
      %v1120 = vpop.trf.xlu0
      %v1121 = vpop.trf.xlu0
      %v1122 = vpop.trf.xlu0
      %1123 = vxpose.xlu0.c.b16.start [1/8] %v885, 128
      %1124 = vxpose.xlu0.c.b16.cont [2/8] 0, 128
      %1125 = vxpose.xlu0.c.b16.cont [3/8] 0, 128
      %1126 = vxpose.xlu0.c.b16.cont [4/8] 0, 128
      %1127 = vxpose.xlu0.c.b16.cont [5/8] 0, 128
      %1128 = vxpose.xlu0.c.b16.cont [6/8] 0, 128
      %1129 = vxpose.xlu0.c.b16.cont [7/8] 0, 128
      %1130 = vxpose.xlu0.c.b16.end [8/8] 0, 128
      %v1131 = vpop.trf.xlu0
      %v1132 = vpop.trf.xlu0
      %v1133 = vpop.trf.xlu0
      %v1134 = vpop.trf.xlu0
      %v1135 = vpop.trf.xlu0
      %v1136 = vpop.trf.xlu0
      %v1137 = vpop.trf.xlu0
      %v1138 = vpop.trf.xlu0
      %1139 = vxpose.xlu0.c.b16.start [1/8] %v886, 128
      %1140 = vxpose.xlu0.c.b16.cont [2/8] 0, 128
      %1141 = vxpose.xlu0.c.b16.cont [3/8] 0, 128
      %1142 = vxpose.xlu0.c.b16.cont [4/8] 0, 128
      %1143 = vxpose.xlu0.c.b16.cont [5/8] 0, 128
      %1144 = vxpose.xlu0.c.b16.cont [6/8] 0, 128
      %1145 = vxpose.xlu0.c.b16.cont [7/8] 0, 128
      %1146 = vxpose.xlu0.c.b16.end [8/8] 0, 128
      %v1147 = vpop.trf.xlu0
      %v1148 = vpop.trf.xlu0
      %v1149 = vpop.trf.xlu0
      %v1150 = vpop.trf.xlu0
      %v1151 = vpop.trf.xlu0
      %v1152 = vpop.trf.xlu0
      %v1153 = vpop.trf.xlu0
      %v1154 = vpop.trf.xlu0
      %1155 = vxpose.xlu0.c.b16.start [1/8] %v887, 128
      %1156 = vxpose.xlu0.c.b16.cont [2/8] 0, 128
      %1157 = vxpose.xlu0.c.b16.cont [3/8] 0, 128
      %1158 = vxpose.xlu0.c.b16.cont [4/8] 0, 128
      %1159 = vxpose.xlu0.c.b16.cont [5/8] 0, 128
      %1160 = vxpose.xlu0.c.b16.cont [6/8] 0, 128
      %1161 = vxpose.xlu0.c.b16.cont [7/8] 0, 128
      %1162 = vxpose.xlu0.c.b16.end [8/8] 0, 128
      %v1163 = vpop.trf.xlu0
      %v1164 = vpop.trf.xlu0
      %v1165 = vpop.trf.xlu0
      %v1166 = vpop.trf.xlu0
      %v1167 = vpop.trf.xlu0
      %v1168 = vpop.trf.xlu0
      %v1169 = vpop.trf.xlu0
      %v1170 = vpop.trf.xlu0
      %1171 = vxpose.xlu0.c.b16.start [1/8] %v888, 128
      %1172 = vxpose.xlu0.c.b16.cont [2/8] 0, 128
      %1173 = vxpose.xlu0.c.b16.cont [3/8] 0, 128
      %1174 = vxpose.xlu0.c.b16.cont [4/8] 0, 128
      %1175 = vxpose.xlu0.c.b16.cont [5/8] 0, 128
      %1176 = vxpose.xlu0.c.b16.cont [6/8] 0, 128
      %1177 = vxpose.xlu0.c.b16.cont [7/8] 0, 128
      %1178 = vxpose.xlu0.c.b16.end [8/8] 0, 128
      %v1179 = vpop.trf.xlu0
      %v1180 = vpop.trf.xlu0
      %v1181 = vpop.trf.xlu0
      %v1182 = vpop.trf.xlu0
      %v1183 = vpop.trf.xlu0
      %v1184 = vpop.trf.xlu0
      %v1185 = vpop.trf.xlu0
      %v1186 = vpop.trf.xlu0
      %1187 = vxpose.xlu0.c.b16.start [1/8] %v889, 128
      %1188 = vxpose.xlu0.c.b16.cont [2/8] 0, 128
      %1189 = vxpose.xlu0.c.b16.cont [3/8] 0, 128
      %1190 = vxpose.xlu0.c.b16.cont [4/8] 0, 128
      %1191 = vxpose.xlu0.c.b16.cont [5/8] 0, 128
      %1192 = vxpose.xlu0.c.b16.cont [6/8] 0, 128
      %1193 = vxpose.xlu0.c.b16.cont [7/8] 0, 128
      %1194 = vxpose.xlu0.c.b16.end [8/8] 0, 128
      %v1195 = vpop.trf.xlu0
      %v1196 = vpop.trf.xlu0
      %v1197 = vpop.trf.xlu0
      %v1198 = vpop.trf.xlu0
      %v1199 = vpop.trf.xlu0
      %v1200 = vpop.trf.xlu0
      %v1201 = vpop.trf.xlu0
      %v1202 = vpop.trf.xlu0
      %1203 = vxpose.xlu0.c.b16.start [1/8] %v890, 128
      %1204 = vxpose.xlu0.c.b16.cont [2/8] 0, 128
      %1205 = vxpose.xlu0.c.b16.cont [3/8] 0, 128
      %1206 = vxpose.xlu0.c.b16.cont [4/8] 0, 128
      %1207 = vxpose.xlu0.c.b16.cont [5/8] 0, 128
      %1208 = vxpose.xlu0.c.b16.cont [6/8] 0, 128
      %1209 = vxpose.xlu0.c.b16.cont [7/8] 0, 128
      %1210 = vxpose.xlu0.c.b16.end [8/8] 0, 128
      %v1211 = vpop.trf.xlu0
      %v1212 = vpop.trf.xlu0
      %v1213 = vpop.trf.xlu0
      %v1214 = vpop.trf.xlu0
      %v1215 = vpop.trf.xlu0
      %v1216 = vpop.trf.xlu0
      %v1217 = vpop.trf.xlu0
      %v1218 = vpop.trf.xlu0
      %1219 = vxpose.xlu0.c.b16.start [1/8] %v891, 128
      %1220 = vxpose.xlu0.c.b16.cont [2/8] 0, 128
      %1221 = vxpose.xlu0.c.b16.cont [3/8] 0, 128
      %1222 = vxpose.xlu0.c.b16.cont [4/8] 0, 128
      %1223 = vxpose.xlu0.c.b16.cont [5/8] 0, 128
      %1224 = vxpose.xlu0.c.b16.cont [6/8] 0, 128
      %1225 = vxpose.xlu0.c.b16.cont [7/8] 0, 128
      %1226 = vxpose.xlu0.c.b16.end [8/8] 0, 128
      %v1227 = vpop.trf.xlu0
      %v1228 = vpop.trf.xlu0
      %v1229 = vpop.trf.xlu0
      %v1230 = vpop.trf.xlu0
      %v1231 = vpop.trf.xlu0
      %v1232 = vpop.trf.xlu0
      %v1233 = vpop.trf.xlu0
      %v1234 = vpop.trf.xlu0
      %1235 = vxpose.xlu0.c.b16.start [1/8] %v892, 128
      %1236 = vxpose.xlu0.c.b16.cont [2/8] 0, 128
      %1237 = vxpose.xlu0.c.b16.cont [3/8] 0, 128
      %1238 = vxpose.xlu0.c.b16.cont [4/8] 0, 128
      %1239 = vxpose.xlu0.c.b16.cont [5/8] 0, 128
      %1240 = vxpose.xlu0.c.b16.cont [6/8] 0, 128
      %1241 = vxpose.xlu0.c.b16.cont [7/8] 0, 128
      %1242 = vxpose.xlu0.c.b16.end [8/8] 0, 128
      %v1243 = vpop.trf.xlu0
      %v1244 = vpop.trf.xlu0
      %v1245 = vpop.trf.xlu0
      %v1246 = vpop.trf.xlu0
      %v1247 = vpop.trf.xlu0
      %v1248 = vpop.trf.xlu0
      %v1249 = vpop.trf.xlu0
      %v1250 = vpop.trf.xlu0
      %1251 = vxpose.xlu0.c.b16.start [1/8] %v893, 128
      %1252 = vxpose.xlu0.c.b16.cont [2/8] 0, 128
      %1253 = vxpose.xlu0.c.b16.cont [3/8] 0, 128
      %1254 = vxpose.xlu0.c.b16.cont [4/8] 0, 128
      %1255 = vxpose.xlu0.c.b16.cont [5/8] 0, 128
      %1256 = vxpose.xlu0.c.b16.cont [6/8] 0, 128
      %1257 = vxpose.xlu0.c.b16.cont [7/8] 0, 128
      %1258 = vxpose.xlu0.c.b16.end [8/8] 0, 128
      %v1259 = vpop.trf.xlu0
      %v1260 = vpop.trf.xlu0
      %v1261 = vpop.trf.xlu0
      %v1262 = vpop.trf.xlu0
      %v1263 = vpop.trf.xlu0
      %v1264 = vpop.trf.xlu0
      %v1265 = vpop.trf.xlu0
      %v1266 = vpop.trf.xlu0
      %1267 = vxpose.xlu0.c.b16.start [1/8] %v894, 128
      %1268 = vxpose.xlu0.c.b16.cont [2/8] 0, 128
      %1269 = vxpose.xlu0.c.b16.cont [3/8] 0, 128
      %1270 = vxpose.xlu0.c.b16.cont [4/8] 0, 128
      %1271 = vxpose.xlu0.c.b16.cont [5/8] 0, 128
      %1272 = vxpose.xlu0.c.b16.cont [6/8] 0, 128
      %1273 = vxpose.xlu0.c.b16.cont [7/8] 0, 128
      %1274 = vxpose.xlu0.c.b16.end [8/8] 0, 128
      %v1275 = vpop.trf.xlu0
      %v1276 = vpop.trf.xlu0
      %v1277 = vpop.trf.xlu0
      %v1278 = vpop.trf.xlu0
      %v1279 = vpop.trf.xlu0
      %v1280 = vpop.trf.xlu0
      %v1281 = vpop.trf.xlu0
      %v1282 = vpop.trf.xlu0
      %v1285 = vpack.i.b16 %v1115, %v1099
      %v1287 = vshrl.u32 %v1099, 16
      %v1288 = vshrl.u32 %v1115, 16
      %v1289 = vpack.i.b16 %v1288, %v1287
      %v1293 = vpack.i.b16 %v1147, %v1131
      %v1295 = vshrl.u32 %v1131, 16
      %v1296 = vshrl.u32 %v1147, 16
      %v1297 = vpack.i.b16 %v1296, %v1295
      %v1301 = vpack.i.b16 %v1179, %v1163
      %v1303 = vshrl.u32 %v1163, 16
      %v1304 = vshrl.u32 %v1179, 16
      %v1305 = vpack.i.b16 %v1304, %v1303
      %v1309 = vpack.i.b16 %v1211, %v1195
      %v1311 = vshrl.u32 %v1195, 16
      %v1312 = vshrl.u32 %v1211, 16
      %v1313 = vpack.i.b16 %v1312, %v1311
      %v1317 = vpack.i.b16 %v1243, %v1227
      %v1319 = vshrl.u32 %v1227, 16
      %v1320 = vshrl.u32 %v1243, 16
      %v1321 = vpack.i.b16 %v1320, %v1319
      %v1325 = vpack.i.b16 %v1275, %v1259
      %v1327 = vshrl.u32 %v1259, 16
      %v1328 = vshrl.u32 %v1275, 16
      %v1329 = vpack.i.b16 %v1328, %v1327
      %v1332 = vpack.i.b16 0, 0
      %v1334 = vshrl.u32 0, 16
      %v1335 = vpack.i.b16 %v1334, %v1334
      %v1339 = vpack.i.b16 %v1116, %v1100
      %v1341 = vshrl.u32 %v1100, 16
      %v1342 = vshrl.u32 %v1116, 16
      %v1343 = vpack.i.b16 %v1342, %v1341
      %v1347 = vpack.i.b16 %v1148, %v1132
      %v1349 = vshrl.u32 %v1132, 16
      %v1350 = vshrl.u32 %v1148, 16
      %v1351 = vpack.i.b16 %v1350, %v1349
      %v1355 = vpack.i.b16 %v1180, %v1164
      %v1357 = vshrl.u32 %v1164, 16
      %v1358 = vshrl.u32 %v1180, 16
      %v1359 = vpack.i.b16 %v1358, %v1357
      %v1363 = vpack.i.b16 %v1212, %v1196
      %v1365 = vshrl.u32 %v1196, 16
      %v1366 = vshrl.u32 %v1212, 16
      %v1367 = vpack.i.b16 %v1366, %v1365
      %v1371 = vpack.i.b16 %v1244, %v1228
      %v1373 = vshrl.u32 %v1228, 16
      %v1374 = vshrl.u32 %v1244, 16
      %v1375 = vpack.i.b16 %v1374, %v1373
      %v1379 = vpack.i.b16 %v1276, %v1260
      %v1381 = vshrl.u32 %v1260, 16
      %v1382 = vshrl.u32 %v1276, 16
      %v1383 = vpack.i.b16 %v1382, %v1381
      %v1385 = vcombine.low %v1285, %v1301
      %v1386 = vcombine.high %v1285, %v1301
      %v1388 = vunpack.c.l.s4 1983009808
      %v1389 = vunpack.c.0.s8 %v1388
      %v1390 = vlaneseq
      %v1391 = vshrl.u32 %v1390, 7
      %v1392 = vsub.s32 %v1389, %v1391
      %v1393 = vrot.slane %v1385, %v1392
      %v1395 = vunpack.c.l.s4 1983009808
      %v1396 = vunpack.c.0.s8 %v1395
      %v1397 = vlaneseq
      %v1398 = vshrl.u32 %v1397, 7
      %v1399 = vsub.s32 %v1396, %v1398
      %v1400 = vrot.slane %v1386, %v1399
      %v1401 = vcombine.low %v1293, %v1309
      %v1402 = vcombine.high %v1293, %v1309
      %v1404 = vunpack.c.l.s4 1983009808
      %v1405 = vunpack.c.0.s8 %v1404
      %v1406 = vlaneseq
      %v1407 = vshrl.u32 %v1406, 7
      %v1408 = vsub.s32 %v1405, %v1407
      %v1409 = vrot.slane %v1401, %v1408
      %v1411 = vunpack.c.l.s4 1983009808
      %v1412 = vunpack.c.0.s8 %v1411
      %v1413 = vlaneseq
      %v1414 = vshrl.u32 %v1413, 7
      %v1415 = vsub.s32 %v1412, %v1414
      %v1416 = vrot.slane %v1402, %v1415
      %v1417 = vcombine.high %v1317, %v1332
      %v1419 = vunpack.c.l.s4 1983009808
      %v1420 = vunpack.c.0.s8 %v1419
      %v1421 = vlaneseq
      %v1422 = vshrl.u32 %v1421, 7
      %v1423 = vsub.s32 %v1420, %v1422
      %v1424 = vrot.slane %v1317, %v1423
      %v1426 = vunpack.c.l.s4 1983009808
      %v1427 = vunpack.c.0.s8 %v1426
      %v1428 = vlaneseq
      %v1429 = vshrl.u32 %v1428, 7
      %v1430 = vsub.s32 %v1427, %v1429
      %v1431 = vrot.slane %v1417, %v1430
      %v1432 = vcombine.high %v1325, %v1332
      %v1434 = vunpack.c.l.s4 1983009808
      %v1435 = vunpack.c.0.s8 %v1434
      %v1436 = vlaneseq
      %v1437 = vshrl.u32 %v1436, 7
      %v1438 = vsub.s32 %v1435, %v1437
      %v1439 = vrot.slane %v1325, %v1438
      %v1441 = vunpack.c.l.s4 1983009808
      %v1442 = vunpack.c.0.s8 %v1441
      %v1443 = vlaneseq
      %v1444 = vshrl.u32 %v1443, 7
      %v1445 = vsub.s32 %v1442, %v1444
      %v1446 = vrot.slane %v1432, %v1445
      %v1447 = vcombine.low %v1393, %v1409
      %v1448 = vcombine.high %v1393, %v1409
      %v1450 = vunpack.c.l.s4 1934713408
      %v1451 = vunpack.c.0.s8 %v1450
      %v1452 = vlaneseq
      %v1453 = vshrl.u32 %v1452, 7
      %v1454 = vsub.s32 %v1451, %v1453
      %v1455 = vrot.slane %v1447, %v1454
      %v1457 = vunpack.c.l.s4 1934713408
      %v1458 = vunpack.c.0.s8 %v1457
      %v1459 = vlaneseq
      %v1460 = vshrl.u32 %v1459, 7
      %v1461 = vsub.s32 %v1458, %v1460
      %v1462 = vrot.slane %v1448, %v1461
      %v1463 = vcombine.low %v1400, %v1416
      %v1464 = vcombine.high %v1400, %v1416
      %v1466 = vunpack.c.l.s4 1934713408
      %v1467 = vunpack.c.0.s8 %v1466
      %v1468 = vlaneseq
      %v1469 = vshrl.u32 %v1468, 7
      %v1470 = vsub.s32 %v1467, %v1469
      %v1471 = vrot.slane %v1463, %v1470
      %v1473 = vunpack.c.l.s4 1934713408
      %v1474 = vunpack.c.0.s8 %v1473
      %v1475 = vlaneseq
      %v1476 = vshrl.u32 %v1475, 7
      %v1477 = vsub.s32 %v1474, %v1476
      %v1478 = vrot.slane %v1464, %v1477
      %v1479 = vcombine.low %v1424, %v1439
      %v1480 = vcombine.high %v1424, %v1439
      %v1482 = vunpack.c.l.s4 1934713408
      %v1483 = vunpack.c.0.s8 %v1482
      %v1484 = vlaneseq
      %v1485 = vshrl.u32 %v1484, 7
      %v1486 = vsub.s32 %v1483, %v1485
      %v1487 = vrot.slane %v1479, %v1486
      %v1489 = vunpack.c.l.s4 1934713408
      %v1490 = vunpack.c.0.s8 %v1489
      %v1491 = vlaneseq
      %v1492 = vshrl.u32 %v1491, 7
      %v1493 = vsub.s32 %v1490, %v1492
      %v1494 = vrot.slane %v1480, %v1493
      %v1495 = vcombine.low %v1431, %v1446
      %v1496 = vcombine.high %v1431, %v1446
      %v1498 = vunpack.c.l.s4 1934713408
      %v1499 = vunpack.c.0.s8 %v1498
      %v1500 = vlaneseq
      %v1501 = vshrl.u32 %v1500, 7
      %v1502 = vsub.s32 %v1499, %v1501
      %v1503 = vrot.slane %v1495, %v1502
      %v1505 = vunpack.c.l.s4 1934713408
      %v1506 = vunpack.c.0.s8 %v1505
      %v1507 = vlaneseq
      %v1508 = vshrl.u32 %v1507, 7
      %v1509 = vsub.s32 %v1506, %v1508
      %v1510 = vrot.slane %v1496, %v1509
      %v1511 = vcombine.low %v1455, %v1487
      %v1512 = vcombine.high %v1455, %v1487
      %v1513 = vcombine.low %v1462, %v1494
      %v1514 = vcombine.high %v1462, %v1494
      %v1515 = vcombine.low %v1471, %v1503
      %v1516 = vcombine.high %v1471, %v1503
      %v1517 = vcombine.low %v1478, %v1510
      %v1518 = vcombine.high %v1478, %v1510
      %v1519 = vcombine.low %v1289, %v1305
      %v1520 = vcombine.high %v1289, %v1305
      %v1522 = vunpack.c.l.s4 1983009808
      %v1523 = vunpack.c.0.s8 %v1522
      %v1524 = vlaneseq
      %v1525 = vshrl.u32 %v1524, 7
      %v1526 = vsub.s32 %v1523, %v1525
      %v1527 = vrot.slane %v1519, %v1526
      %v1529 = vunpack.c.l.s4 1983009808
      %v1530 = vunpack.c.0.s8 %v1529
      %v1531 = vlaneseq
      %v1532 = vshrl.u32 %v1531, 7
      %v1533 = vsub.s32 %v1530, %v1532
      %v1534 = vrot.slane %v1520, %v1533
      %v1535 = vcombine.low %v1297, %v1313
      %v1536 = vcombine.high %v1297, %v1313
      %v1538 = vunpack.c.l.s4 1983009808
      %v1539 = vunpack.c.0.s8 %v1538
      %v1540 = vlaneseq
      %v1541 = vshrl.u32 %v1540, 7
      %v1542 = vsub.s32 %v1539, %v1541
      %v1543 = vrot.slane %v1535, %v1542
      %v1545 = vunpack.c.l.s4 1983009808
      %v1546 = vunpack.c.0.s8 %v1545
      %v1547 = vlaneseq
      %v1548 = vshrl.u32 %v1547, 7
      %v1549 = vsub.s32 %v1546, %v1548
      %v1550 = vrot.slane %v1536, %v1549
      %v1551 = vcombine.high %v1321, %v1335
      %v1553 = vunpack.c.l.s4 1983009808
      %v1554 = vunpack.c.0.s8 %v1553
      %v1555 = vlaneseq
      %v1556 = vshrl.u32 %v1555, 7
      %v1557 = vsub.s32 %v1554, %v1556
      %v1558 = vrot.slane %v1321, %v1557
      %v1560 = vunpack.c.l.s4 1983009808
      %v1561 = vunpack.c.0.s8 %v1560
      %v1562 = vlaneseq
      %v1563 = vshrl.u32 %v1562, 7
      %v1564 = vsub.s32 %v1561, %v1563
      %v1565 = vrot.slane %v1551, %v1564
      %v1566 = vcombine.high %v1329, %v1335
      %v1568 = vunpack.c.l.s4 1983009808
      %v1569 = vunpack.c.0.s8 %v1568
      %v1570 = vlaneseq
      %v1571 = vshrl.u32 %v1570, 7
      %v1572 = vsub.s32 %v1569, %v1571
      %v1573 = vrot.slane %v1329, %v1572
      %v1575 = vunpack.c.l.s4 1983009808
      %v1576 = vunpack.c.0.s8 %v1575
      %v1577 = vlaneseq
      %v1578 = vshrl.u32 %v1577, 7
      %v1579 = vsub.s32 %v1576, %v1578
      %v1580 = vrot.slane %v1566, %v1579
      %v1581 = vcombine.low %v1527, %v1543
      %v1582 = vcombine.high %v1527, %v1543
      %v1584 = vunpack.c.l.s4 1934713408
      %v1585 = vunpack.c.0.s8 %v1584
      %v1586 = vlaneseq
      %v1587 = vshrl.u32 %v1586, 7
      %v1588 = vsub.s32 %v1585, %v1587
      %v1589 = vrot.slane %v1581, %v1588
      %v1591 = vunpack.c.l.s4 1934713408
      %v1592 = vunpack.c.0.s8 %v1591
      %v1593 = vlaneseq
      %v1594 = vshrl.u32 %v1593, 7
      %v1595 = vsub.s32 %v1592, %v1594
      %v1596 = vrot.slane %v1582, %v1595
      %v1597 = vcombine.low %v1534, %v1550
      %v1598 = vcombine.high %v1534, %v1550
      %v1600 = vunpack.c.l.s4 1934713408
      %v1601 = vunpack.c.0.s8 %v1600
      %v1602 = vlaneseq
      %v1603 = vshrl.u32 %v1602, 7
      %v1604 = vsub.s32 %v1601, %v1603
      %v1605 = vrot.slane %v1597, %v1604
      %v1607 = vunpack.c.l.s4 1934713408
      %v1608 = vunpack.c.0.s8 %v1607
      %v1609 = vlaneseq
      %v1610 = vshrl.u32 %v1609, 7
      %v1611 = vsub.s32 %v1608, %v1610
      %v1612 = vrot.slane %v1598, %v1611
      %v1613 = vcombine.low %v1558, %v1573
      %v1614 = vcombine.high %v1558, %v1573
      %v1616 = vunpack.c.l.s4 1934713408
      %v1617 = vunpack.c.0.s8 %v1616
      %v1618 = vlaneseq
      %v1619 = vshrl.u32 %v1618, 7
      %v1620 = vsub.s32 %v1617, %v1619
      %v1621 = vrot.slane %v1613, %v1620
      %v1623 = vunpack.c.l.s4 1934713408
      %v1624 = vunpack.c.0.s8 %v1623
      %v1625 = vlaneseq
      %v1626 = vshrl.u32 %v1625, 7
      %v1627 = vsub.s32 %v1624, %v1626
      %v1628 = vrot.slane %v1614, %v1627
      %v1629 = vcombine.low %v1565, %v1580
      %v1630 = vcombine.high %v1565, %v1580
      %v1632 = vunpack.c.l.s4 1934713408
      %v1633 = vunpack.c.0.s8 %v1632
      %v1634 = vlaneseq
      %v1635 = vshrl.u32 %v1634, 7
      %v1636 = vsub.s32 %v1633, %v1635
      %v1637 = vrot.slane %v1629, %v1636
      %v1639 = vunpack.c.l.s4 1934713408
      %v1640 = vunpack.c.0.s8 %v1639
      %v1641 = vlaneseq
      %v1642 = vshrl.u32 %v1641, 7
      %v1643 = vsub.s32 %v1640, %v1642
      %v1644 = vrot.slane %v1630, %v1643
      %v1645 = vcombine.low %v1589, %v1621
      %v1646 = vcombine.high %v1589, %v1621
      %v1647 = vcombine.low %v1596, %v1628
      %v1648 = vcombine.high %v1596, %v1628
      %v1649 = vcombine.low %v1605, %v1637
      %v1650 = vcombine.high %v1605, %v1637
      %v1651 = vcombine.low %v1612, %v1644
      %v1652 = vcombine.high %v1612, %v1644
      %v1653 = vcombine.low %v1339, %v1355
      %v1654 = vcombine.high %v1339, %v1355
      %v1656 = vunpack.c.l.s4 1983009808
      %v1657 = vunpack.c.0.s8 %v1656
      %v1658 = vlaneseq
      %v1659 = vshrl.u32 %v1658, 7
      %v1660 = vsub.s32 %v1657, %v1659
      %v1661 = vrot.slane %v1653, %v1660
      %v1663 = vunpack.c.l.s4 1983009808
      %v1664 = vunpack.c.0.s8 %v1663
      %v1665 = vlaneseq
      %v1666 = vshrl.u32 %v1665, 7
      %v1667 = vsub.s32 %v1664, %v1666
      %v1668 = vrot.slane %v1654, %v1667
      %v1669 = vcombine.low %v1347, %v1363
      %v1670 = vcombine.high %v1347, %v1363
      %v1672 = vunpack.c.l.s4 1983009808
      %v1673 = vunpack.c.0.s8 %v1672
      %v1674 = vlaneseq
      %v1675 = vshrl.u32 %v1674, 7
      %v1676 = vsub.s32 %v1673, %v1675
      %v1677 = vrot.slane %v1669, %v1676
      %v1679 = vunpack.c.l.s4 1983009808
      %v1680 = vunpack.c.0.s8 %v1679
      %v1681 = vlaneseq
      %v1682 = vshrl.u32 %v1681, 7
      %v1683 = vsub.s32 %v1680, %v1682
      %v1684 = vrot.slane %v1670, %v1683
      %v1685 = vcombine.high %v1371, %v1332
      %v1687 = vunpack.c.l.s4 1983009808
      %v1688 = vunpack.c.0.s8 %v1687
      %v1689 = vlaneseq
      %v1690 = vshrl.u32 %v1689, 7
      %v1691 = vsub.s32 %v1688, %v1690
      %v1692 = vrot.slane %v1371, %v1691
      %v1694 = vunpack.c.l.s4 1983009808
      %v1695 = vunpack.c.0.s8 %v1694
      %v1696 = vlaneseq
      %v1697 = vshrl.u32 %v1696, 7
      %v1698 = vsub.s32 %v1695, %v1697
      %v1699 = vrot.slane %v1685, %v1698
      %v1700 = vcombine.high %v1379, %v1332
      %v1702 = vunpack.c.l.s4 1983009808
      %v1703 = vunpack.c.0.s8 %v1702
      %v1704 = vlaneseq
      %v1705 = vshrl.u32 %v1704, 7
      %v1706 = vsub.s32 %v1703, %v1705
      %v1707 = vrot.slane %v1379, %v1706
      %v1709 = vunpack.c.l.s4 1983009808
      %v1710 = vunpack.c.0.s8 %v1709
      %v1711 = vlaneseq
      %v1712 = vshrl.u32 %v1711, 7
      %v1713 = vsub.s32 %v1710, %v1712
      %v1714 = vrot.slane %v1700, %v1713
      %v1715 = vcombine.low %v1661, %v1677
      %v1716 = vcombine.high %v1661, %v1677
      %v1718 = vunpack.c.l.s4 1934713408
      %v1719 = vunpack.c.0.s8 %v1718
      %v1720 = vlaneseq
      %v1721 = vshrl.u32 %v1720, 7
      %v1722 = vsub.s32 %v1719, %v1721
      %v1723 = vrot.slane %v1715, %v1722
      %v1725 = vunpack.c.l.s4 1934713408
      %v1726 = vunpack.c.0.s8 %v1725
      %v1727 = vlaneseq
      %v1728 = vshrl.u32 %v1727, 7
      %v1729 = vsub.s32 %v1726, %v1728
      %v1730 = vrot.slane %v1716, %v1729
      %v1731 = vcombine.low %v1668, %v1684
      %v1732 = vcombine.high %v1668, %v1684
      %v1734 = vunpack.c.l.s4 1934713408
      %v1735 = vunpack.c.0.s8 %v1734
      %v1736 = vlaneseq
      %v1737 = vshrl.u32 %v1736, 7
      %v1738 = vsub.s32 %v1735, %v1737
      %v1739 = vrot.slane %v1731, %v1738
      %v1741 = vunpack.c.l.s4 1934713408
      %v1742 = vunpack.c.0.s8 %v1741
      %v1743 = vlaneseq
      %v1744 = vshrl.u32 %v1743, 7
      %v1745 = vsub.s32 %v1742, %v1744
      %v1746 = vrot.slane %v1732, %v1745
      %v1747 = vcombine.low %v1692, %v1707
      %v1748 = vcombine.high %v1692, %v1707
      %v1750 = vunpack.c.l.s4 1934713408
      %v1751 = vunpack.c.0.s8 %v1750
      %v1752 = vlaneseq
      %v1753 = vshrl.u32 %v1752, 7
      %v1754 = vsub.s32 %v1751, %v1753
      %v1755 = vrot.slane %v1747, %v1754
      %v1757 = vunpack.c.l.s4 1934713408
      %v1758 = vunpack.c.0.s8 %v1757
      %v1759 = vlaneseq
      %v1760 = vshrl.u32 %v1759, 7
      %v1761 = vsub.s32 %v1758, %v1760
      %v1762 = vrot.slane %v1748, %v1761
      %v1763 = vcombine.low %v1699, %v1714
      %v1764 = vcombine.high %v1699, %v1714
      %v1766 = vunpack.c.l.s4 1934713408
      %v1767 = vunpack.c.0.s8 %v1766
      %v1768 = vlaneseq
      %v1769 = vshrl.u32 %v1768, 7
      %v1770 = vsub.s32 %v1767, %v1769
      %v1771 = vrot.slane %v1763, %v1770
      %v1773 = vunpack.c.l.s4 1934713408
      %v1774 = vunpack.c.0.s8 %v1773
      %v1775 = vlaneseq
      %v1776 = vshrl.u32 %v1775, 7
      %v1777 = vsub.s32 %v1774, %v1776
      %v1778 = vrot.slane %v1764, %v1777
      %v1779 = vcombine.low %v1723, %v1755
      %v1780 = vcombine.high %v1723, %v1755
      %v1781 = vcombine.low %v1730, %v1762
      %v1782 = vcombine.high %v1730, %v1762
      %v1783 = vcombine.low %v1739, %v1771
      %v1784 = vcombine.high %v1739, %v1771
      %v1785 = vcombine.low %v1746, %v1778
      %v1786 = vcombine.high %v1746, %v1778
      %v1787 = vcombine.low %v1343, %v1359
      %v1788 = vcombine.high %v1343, %v1359
      %v1790 = vunpack.c.l.s4 1983009808
      %v1791 = vunpack.c.0.s8 %v1790
      %v1792 = vlaneseq
      %v1793 = vshrl.u32 %v1792, 7
      %v1794 = vsub.s32 %v1791, %v1793
      %v1795 = vrot.slane %v1787, %v1794
      %v1797 = vunpack.c.l.s4 1983009808
      %v1798 = vunpack.c.0.s8 %v1797
      %v1799 = vlaneseq
      %v1800 = vshrl.u32 %v1799, 7
      %v1801 = vsub.s32 %v1798, %v1800
      %v1802 = vrot.slane %v1788, %v1801
      %v1803 = vcombine.low %v1351, %v1367
      %v1804 = vcombine.high %v1351, %v1367
      %v1806 = vunpack.c.l.s4 1983009808
      %v1807 = vunpack.c.0.s8 %v1806
      %v1808 = vlaneseq
      %v1809 = vshrl.u32 %v1808, 7
      %v1810 = vsub.s32 %v1807, %v1809
      %v1811 = vrot.slane %v1803, %v1810
      %v1813 = vunpack.c.l.s4 1983009808
      %v1814 = vunpack.c.0.s8 %v1813
      %v1815 = vlaneseq
      %v1816 = vshrl.u32 %v1815, 7
      %v1817 = vsub.s32 %v1814, %v1816
      %v1818 = vrot.slane %v1804, %v1817
      %v1819 = vcombine.high %v1375, %v1335
      %v1821 = vunpack.c.l.s4 1983009808
      %v1822 = vunpack.c.0.s8 %v1821
      %v1823 = vlaneseq
      %v1824 = vshrl.u32 %v1823, 7
      %v1825 = vsub.s32 %v1822, %v1824
      %v1826 = vrot.slane %v1375, %v1825
      %v1828 = vunpack.c.l.s4 1983009808
      %v1829 = vunpack.c.0.s8 %v1828
      %v1830 = vlaneseq
      %v1831 = vshrl.u32 %v1830, 7
      %v1832 = vsub.s32 %v1829, %v1831
      %v1833 = vrot.slane %v1819, %v1832
      %v1834 = vcombine.high %v1383, %v1335
      %v1836 = vunpack.c.l.s4 1983009808
      %v1837 = vunpack.c.0.s8 %v1836
      %v1838 = vlaneseq
      %v1839 = vshrl.u32 %v1838, 7
      %v1840 = vsub.s32 %v1837, %v1839
      %v1841 = vrot.slane %v1383, %v1840
      %v1843 = vunpack.c.l.s4 1983009808
      %v1844 = vunpack.c.0.s8 %v1843
      %v1845 = vlaneseq
      %v1846 = vshrl.u32 %v1845, 7
      %v1847 = vsub.s32 %v1844, %v1846
      %v1848 = vrot.slane %v1834, %v1847
      %v1849 = vcombine.low %v1795, %v1811
      %v1850 = vcombine.high %v1795, %v1811
      %v1852 = vunpack.c.l.s4 1934713408
      %v1853 = vunpack.c.0.s8 %v1852
      %v1854 = vlaneseq
      %v1855 = vshrl.u32 %v1854, 7
      %v1856 = vsub.s32 %v1853, %v1855
      %v1857 = vrot.slane %v1849, %v1856
      %v1859 = vunpack.c.l.s4 1934713408
      %v1860 = vunpack.c.0.s8 %v1859
      %v1861 = vlaneseq
      %v1862 = vshrl.u32 %v1861, 7
      %v1863 = vsub.s32 %v1860, %v1862
      %v1864 = vrot.slane %v1850, %v1863
      %v1865 = vcombine.low %v1802, %v1818
      %v1866 = vcombine.high %v1802, %v1818
      %v1868 = vunpack.c.l.s4 1934713408
      %v1869 = vunpack.c.0.s8 %v1868
      %v1870 = vlaneseq
      %v1871 = vshrl.u32 %v1870, 7
      %v1872 = vsub.s32 %v1869, %v1871
      %v1873 = vrot.slane %v1865, %v1872
      %v1875 = vunpack.c.l.s4 1934713408
      %v1876 = vunpack.c.0.s8 %v1875
      %v1877 = vlaneseq
      %v1878 = vshrl.u32 %v1877, 7
      %v1879 = vsub.s32 %v1876, %v1878
      %v1880 = vrot.slane %v1866, %v1879
      %v1881 = vcombine.low %v1826, %v1841
      %v1882 = vcombine.high %v1826, %v1841
      %v1884 = vunpack.c.l.s4 1934713408
      %v1885 = vunpack.c.0.s8 %v1884
      %v1886 = vlaneseq
      %v1887 = vshrl.u32 %v1886, 7
      %v1888 = vsub.s32 %v1885, %v1887
      %v1889 = vrot.slane %v1881, %v1888
      %v1891 = vunpack.c.l.s4 1934713408
      %v1892 = vunpack.c.0.s8 %v1891
      %v1893 = vlaneseq
      %v1894 = vshrl.u32 %v1893, 7
      %v1895 = vsub.s32 %v1892, %v1894
      %v1896 = vrot.slane %v1882, %v1895
      %v1897 = vcombine.low %v1833, %v1848
      %v1898 = vcombine.high %v1833, %v1848
      %v1900 = vunpack.c.l.s4 1934713408
      %v1901 = vunpack.c.0.s8 %v1900
      %v1902 = vlaneseq
      %v1903 = vshrl.u32 %v1902, 7
      %v1904 = vsub.s32 %v1901, %v1903
      %v1905 = vrot.slane %v1897, %v1904
      %v1907 = vunpack.c.l.s4 1934713408
      %v1908 = vunpack.c.0.s8 %v1907
      %v1909 = vlaneseq
      %v1910 = vshrl.u32 %v1909, 7
      %v1911 = vsub.s32 %v1908, %v1910
      %v1912 = vrot.slane %v1898, %v1911
      %v1913 = vcombine.low %v1857, %v1889
      %v1914 = vcombine.high %v1857, %v1889
      %v1915 = vcombine.low %v1864, %v1896
      %v1916 = vcombine.high %v1864, %v1896
      %v1917 = vcombine.low %v1873, %v1905
      %v1918 = vcombine.high %v1873, %v1905
      %v1919 = vcombine.low %v1880, %v1912
      %v1920 = vcombine.high %v1880, %v1912
      %1921 = vxpose.xlu0.c.b16.start [1/8] %v1511, 128
      %1922 = vxpose.xlu0.c.b16.cont [2/8] 0, 128
      %1923 = vxpose.xlu0.c.b16.cont [3/8] 0, 128
      %1924 = vxpose.xlu0.c.b16.cont [4/8] 0, 128
      %1925 = vxpose.xlu0.c.b16.cont [5/8] 0, 128
      %1926 = vxpose.xlu0.c.b16.cont [6/8] 0, 128
      %1927 = vxpose.xlu0.c.b16.cont [7/8] 0, 128
      %1928 = vxpose.xlu0.c.b16.end [8/8] 0, 128
      %v1929 = vpop.trf.xlu0
      %v1930 = vpop.trf.xlu0
      %v1931 = vpop.trf.xlu0
      %v1932 = vpop.trf.xlu0
      %v1933 = vpop.trf.xlu0
      %v1934 = vpop.trf.xlu0
      %v1935 = vpop.trf.xlu0
      %v1936 = vpop.trf.xlu0
      %1937 = vxpose.xlu0.c.b16.start [1/8] %v1645, 128
      %1938 = vxpose.xlu0.c.b16.cont [2/8] 0, 128
      %1939 = vxpose.xlu0.c.b16.cont [3/8] 0, 128
      %1940 = vxpose.xlu0.c.b16.cont [4/8] 0, 128
      %1941 = vxpose.xlu0.c.b16.cont [5/8] 0, 128
      %1942 = vxpose.xlu0.c.b16.cont [6/8] 0, 128
      %1943 = vxpose.xlu0.c.b16.cont [7/8] 0, 128
      %1944 = vxpose.xlu0.c.b16.end [8/8] 0, 128
      %v1945 = vpop.trf.xlu0
      %v1946 = vpop.trf.xlu0
      %v1947 = vpop.trf.xlu0
      %v1948 = vpop.trf.xlu0
      %v1949 = vpop.trf.xlu0
      %v1950 = vpop.trf.xlu0
      %v1951 = vpop.trf.xlu0
      %v1952 = vpop.trf.xlu0
      %1953 = vxpose.xlu0.c.b16.start [1/8] %v1512, 128
      %1954 = vxpose.xlu0.c.b16.cont [2/8] 0, 128
      %1955 = vxpose.xlu0.c.b16.cont [3/8] 0, 128
      %1956 = vxpose.xlu0.c.b16.cont [4/8] 0, 128
      %1957 = vxpose.xlu0.c.b16.cont [5/8] 0, 128
      %1958 = vxpose.xlu0.c.b16.cont [6/8] 0, 128
      %1959 = vxpose.xlu0.c.b16.cont [7/8] 0, 128
      %1960 = vxpose.xlu0.c.b16.end [8/8] 0, 128
      %v1961 = vpop.trf.xlu0
      %v1962 = vpop.trf.xlu0
      %v1963 = vpop.trf.xlu0
      %v1964 = vpop.trf.xlu0
      %v1965 = vpop.trf.xlu0
      %v1966 = vpop.trf.xlu0
      %v1967 = vpop.trf.xlu0
      %v1968 = vpop.trf.xlu0
      %1969 = vxpose.xlu0.c.b16.start [1/8] %v1646, 128
      %1970 = vxpose.xlu0.c.b16.cont [2/8] 0, 128
      %1971 = vxpose.xlu0.c.b16.cont [3/8] 0, 128
      %1972 = vxpose.xlu0.c.b16.cont [4/8] 0, 128
      %1973 = vxpose.xlu0.c.b16.cont [5/8] 0, 128
      %1974 = vxpose.xlu0.c.b16.cont [6/8] 0, 128
      %1975 = vxpose.xlu0.c.b16.cont [7/8] 0, 128
      %1976 = vxpose.xlu0.c.b16.end [8/8] 0, 128
      %v1977 = vpop.trf.xlu0
      %v1978 = vpop.trf.xlu0
      %v1979 = vpop.trf.xlu0
      %v1980 = vpop.trf.xlu0
      %v1981 = vpop.trf.xlu0
      %v1982 = vpop.trf.xlu0
      %v1983 = vpop.trf.xlu0
      %v1984 = vpop.trf.xlu0
      %1985 = vxpose.xlu0.c.b16.start [1/8] %v1513, 128
      %1986 = vxpose.xlu0.c.b16.cont [2/8] 0, 128
      %1987 = vxpose.xlu0.c.b16.cont [3/8] 0, 128
      %1988 = vxpose.xlu0.c.b16.cont [4/8] 0, 128
      %1989 = vxpose.xlu0.c.b16.cont [5/8] 0, 128
      %1990 = vxpose.xlu0.c.b16.cont [6/8] 0, 128
      %1991 = vxpose.xlu0.c.b16.cont [7/8] 0, 128
      %1992 = vxpose.xlu0.c.b16.end [8/8] 0, 128
      %v1993 = vpop.trf.xlu0
      %v1994 = vpop.trf.xlu0
      %v1995 = vpop.trf.xlu0
      %v1996 = vpop.trf.xlu0
      %v1997 = vpop.trf.xlu0
      %v1998 = vpop.trf.xlu0
      %v1999 = vpop.trf.xlu0
      %v2000 = vpop.trf.xlu0
      %2001 = vxpose.xlu0.c.b16.start [1/8] %v1647, 128
      %2002 = vxpose.xlu0.c.b16.cont [2/8] 0, 128
      %2003 = vxpose.xlu0.c.b16.cont [3/8] 0, 128
      %2004 = vxpose.xlu0.c.b16.cont [4/8] 0, 128
      %2005 = vxpose.xlu0.c.b16.cont [5/8] 0, 128
      %2006 = vxpose.xlu0.c.b16.cont [6/8] 0, 128
      %2007 = vxpose.xlu0.c.b16.cont [7/8] 0, 128
      %2008 = vxpose.xlu0.c.b16.end [8/8] 0, 128
      %v2009 = vpop.trf.xlu0
      %v2010 = vpop.trf.xlu0
      %v2011 = vpop.trf.xlu0
      %v2012 = vpop.trf.xlu0
      %v2013 = vpop.trf.xlu0
      %v2014 = vpop.trf.xlu0
      %v2015 = vpop.trf.xlu0
      %v2016 = vpop.trf.xlu0
      %2017 = vxpose.xlu0.c.b16.start [1/8] %v1514, 128
      %2018 = vxpose.xlu0.c.b16.cont [2/8] 0, 128
      %2019 = vxpose.xlu0.c.b16.cont [3/8] 0, 128
      %2020 = vxpose.xlu0.c.b16.cont [4/8] 0, 128
      %2021 = vxpose.xlu0.c.b16.cont [5/8] 0, 128
      %2022 = vxpose.xlu0.c.b16.cont [6/8] 0, 128
      %2023 = vxpose.xlu0.c.b16.cont [7/8] 0, 128
      %2024 = vxpose.xlu0.c.b16.end [8/8] 0, 128
      %v2025 = vpop.trf.xlu0
      %v2026 = vpop.trf.xlu0
      %v2027 = vpop.trf.xlu0
      %v2028 = vpop.trf.xlu0
      %v2029 = vpop.trf.xlu0
      %v2030 = vpop.trf.xlu0
      %v2031 = vpop.trf.xlu0
      %v2032 = vpop.trf.xlu0
      %2033 = vxpose.xlu0.c.b16.start [1/8] %v1648, 128
      %2034 = vxpose.xlu0.c.b16.cont [2/8] 0, 128
      %2035 = vxpose.xlu0.c.b16.cont [3/8] 0, 128
      %2036 = vxpose.xlu0.c.b16.cont [4/8] 0, 128
      %2037 = vxpose.xlu0.c.b16.cont [5/8] 0, 128
      %2038 = vxpose.xlu0.c.b16.cont [6/8] 0, 128
      %2039 = vxpose.xlu0.c.b16.cont [7/8] 0, 128
      %2040 = vxpose.xlu0.c.b16.end [8/8] 0, 128
      %v2041 = vpop.trf.xlu0
      %v2042 = vpop.trf.xlu0
      %v2043 = vpop.trf.xlu0
      %v2044 = vpop.trf.xlu0
      %v2045 = vpop.trf.xlu0
      %v2046 = vpop.trf.xlu0
      %v2047 = vpop.trf.xlu0
      %v2048 = vpop.trf.xlu0
      %2049 = vxpose.xlu0.c.b16.start [1/8] %v1515, 128
      %2050 = vxpose.xlu0.c.b16.cont [2/8] 0, 128
      %2051 = vxpose.xlu0.c.b16.cont [3/8] 0, 128
      %2052 = vxpose.xlu0.c.b16.cont [4/8] 0, 128
      %2053 = vxpose.xlu0.c.b16.cont [5/8] 0, 128
      %2054 = vxpose.xlu0.c.b16.cont [6/8] 0, 128
      %2055 = vxpose.xlu0.c.b16.cont [7/8] 0, 128
      %2056 = vxpose.xlu0.c.b16.end [8/8] 0, 128
      %v2057 = vpop.trf.xlu0
      %v2058 = vpop.trf.xlu0
      %v2059 = vpop.trf.xlu0
      %v2060 = vpop.trf.xlu0
      %v2061 = vpop.trf.xlu0
      %v2062 = vpop.trf.xlu0
      %v2063 = vpop.trf.xlu0
      %v2064 = vpop.trf.xlu0
      %2065 = vxpose.xlu0.c.b16.start [1/8] %v1649, 128
      %2066 = vxpose.xlu0.c.b16.cont [2/8] 0, 128
      %2067 = vxpose.xlu0.c.b16.cont [3/8] 0, 128
      %2068 = vxpose.xlu0.c.b16.cont [4/8] 0, 128
      %2069 = vxpose.xlu0.c.b16.cont [5/8] 0, 128
      %2070 = vxpose.xlu0.c.b16.cont [6/8] 0, 128
      %2071 = vxpose.xlu0.c.b16.cont [7/8] 0, 128
      %2072 = vxpose.xlu0.c.b16.end [8/8] 0, 128
      %v2073 = vpop.trf.xlu0
      %v2074 = vpop.trf.xlu0
      %v2075 = vpop.trf.xlu0
      %v2076 = vpop.trf.xlu0
      %v2077 = vpop.trf.xlu0
      %v2078 = vpop.trf.xlu0
      %v2079 = vpop.trf.xlu0
      %v2080 = vpop.trf.xlu0
      %2081 = vxpose.xlu0.c.b16.start [1/8] %v1516, 128
      %2082 = vxpose.xlu0.c.b16.cont [2/8] 0, 128
      %2083 = vxpose.xlu0.c.b16.cont [3/8] 0, 128
      %2084 = vxpose.xlu0.c.b16.cont [4/8] 0, 128
      %2085 = vxpose.xlu0.c.b16.cont [5/8] 0, 128
      %2086 = vxpose.xlu0.c.b16.cont [6/8] 0, 128
      %2087 = vxpose.xlu0.c.b16.cont [7/8] 0, 128
      %2088 = vxpose.xlu0.c.b16.end [8/8] 0, 128
      %v2089 = vpop.trf.xlu0
      %v2090 = vpop.trf.xlu0
      %v2091 = vpop.trf.xlu0
      %v2092 = vpop.trf.xlu0
      %v2093 = vpop.trf.xlu0
      %v2094 = vpop.trf.xlu0
      %v2095 = vpop.trf.xlu0
      %v2096 = vpop.trf.xlu0
      %2097 = vxpose.xlu0.c.b16.start [1/8] %v1650, 128
      %2098 = vxpose.xlu0.c.b16.cont [2/8] 0, 128
      %2099 = vxpose.xlu0.c.b16.cont [3/8] 0, 128
      %2100 = vxpose.xlu0.c.b16.cont [4/8] 0, 128
      %2101 = vxpose.xlu0.c.b16.cont [5/8] 0, 128
      %2102 = vxpose.xlu0.c.b16.cont [6/8] 0, 128
      %2103 = vxpose.xlu0.c.b16.cont [7/8] 0, 128
      %2104 = vxpose.xlu0.c.b16.end [8/8] 0, 128
      %v2105 = vpop.trf.xlu0
      %v2106 = vpop.trf.xlu0
      %v2107 = vpop.trf.xlu0
      %v2108 = vpop.trf.xlu0
      %v2109 = vpop.trf.xlu0
      %v2110 = vpop.trf.xlu0
      %v2111 = vpop.trf.xlu0
      %v2112 = vpop.trf.xlu0
      %2113 = vxpose.xlu0.c.b16.start [1/8] %v1517, 128
      %2114 = vxpose.xlu0.c.b16.cont [2/8] 0, 128
      %2115 = vxpose.xlu0.c.b16.cont [3/8] 0, 128
      %2116 = vxpose.xlu0.c.b16.cont [4/8] 0, 128
      %2117 = vxpose.xlu0.c.b16.cont [5/8] 0, 128
      %2118 = vxpose.xlu0.c.b16.cont [6/8] 0, 128
      %2119 = vxpose.xlu0.c.b16.cont [7/8] 0, 128
      %2120 = vxpose.xlu0.c.b16.end [8/8] 0, 128
      %v2121 = vpop.trf.xlu0
      %v2122 = vpop.trf.xlu0
      %v2123 = vpop.trf.xlu0
      %v2124 = vpop.trf.xlu0
      %v2125 = vpop.trf.xlu0
      %v2126 = vpop.trf.xlu0
      %v2127 = vpop.trf.xlu0
      %v2128 = vpop.trf.xlu0
      %2129 = vxpose.xlu0.c.b16.start [1/8] %v1651, 128
      %2130 = vxpose.xlu0.c.b16.cont [2/8] 0, 128
      %2131 = vxpose.xlu0.c.b16.cont [3/8] 0, 128
      %2132 = vxpose.xlu0.c.b16.cont [4/8] 0, 128
      %2133 = vxpose.xlu0.c.b16.cont [5/8] 0, 128
      %2134 = vxpose.xlu0.c.b16.cont [6/8] 0, 128
      %2135 = vxpose.xlu0.c.b16.cont [7/8] 0, 128
      %2136 = vxpose.xlu0.c.b16.end [8/8] 0, 128
      %v2137 = vpop.trf.xlu0
      %v2138 = vpop.trf.xlu0
      %v2139 = vpop.trf.xlu0
      %v2140 = vpop.trf.xlu0
      %v2141 = vpop.trf.xlu0
      %v2142 = vpop.trf.xlu0
      %v2143 = vpop.trf.xlu0
      %v2144 = vpop.trf.xlu0
      %2145 = vxpose.xlu0.c.b16.start [1/8] %v1518, 128
      %2146 = vxpose.xlu0.c.b16.cont [2/8] 0, 128
      %2147 = vxpose.xlu0.c.b16.cont [3/8] 0, 128
      %2148 = vxpose.xlu0.c.b16.cont [4/8] 0, 128
      %2149 = vxpose.xlu0.c.b16.cont [5/8] 0, 128
      %2150 = vxpose.xlu0.c.b16.cont [6/8] 0, 128
      %2151 = vxpose.xlu0.c.b16.cont [7/8] 0, 128
      %2152 = vxpose.xlu0.c.b16.end [8/8] 0, 128
      %v2153 = vpop.trf.xlu0
      %v2154 = vpop.trf.xlu0
      %v2155 = vpop.trf.xlu0
      %v2156 = vpop.trf.xlu0
      %v2157 = vpop.trf.xlu0
      %v2158 = vpop.trf.xlu0
      %v2159 = vpop.trf.xlu0
      %v2160 = vpop.trf.xlu0
      %2161 = vxpose.xlu0.c.b16.start [1/8] %v1652, 128
      %2162 = vxpose.xlu0.c.b16.cont [2/8] 0, 128
      %2163 = vxpose.xlu0.c.b16.cont [3/8] 0, 128
      %2164 = vxpose.xlu0.c.b16.cont [4/8] 0, 128
      %2165 = vxpose.xlu0.c.b16.cont [5/8] 0, 128
      %2166 = vxpose.xlu0.c.b16.cont [6/8] 0, 128
      %2167 = vxpose.xlu0.c.b16.cont [7/8] 0, 128
      %2168 = vxpose.xlu0.c.b16.end [8/8] 0, 128
      %v2169 = vpop.trf.xlu0
      %v2170 = vpop.trf.xlu0
      %v2171 = vpop.trf.xlu0
      %v2172 = vpop.trf.xlu0
      %v2173 = vpop.trf.xlu0
      %v2174 = vpop.trf.xlu0
      %v2175 = vpop.trf.xlu0
      %v2176 = vpop.trf.xlu0
      %2177 = vxpose.xlu0.c.b16.start [1/8] %v1779, 128
      %2178 = vxpose.xlu0.c.b16.cont [2/8] 0, 128
      %2179 = vxpose.xlu0.c.b16.cont [3/8] 0, 128
      %2180 = vxpose.xlu0.c.b16.cont [4/8] 0, 128
      %2181 = vxpose.xlu0.c.b16.cont [5/8] 0, 128
      %2182 = vxpose.xlu0.c.b16.cont [6/8] 0, 128
      %2183 = vxpose.xlu0.c.b16.cont [7/8] 0, 128
      %2184 = vxpose.xlu0.c.b16.end [8/8] 0, 128
      %v2185 = vpop.trf.xlu0
      %v2186 = vpop.trf.xlu0
      %v2187 = vpop.trf.xlu0
      %v2188 = vpop.trf.xlu0
      %v2189 = vpop.trf.xlu0
      %v2190 = vpop.trf.xlu0
      %v2191 = vpop.trf.xlu0
      %v2192 = vpop.trf.xlu0
      %2193 = vxpose.xlu0.c.b16.start [1/8] %v1913, 128
      %2194 = vxpose.xlu0.c.b16.cont [2/8] 0, 128
      %2195 = vxpose.xlu0.c.b16.cont [3/8] 0, 128
      %2196 = vxpose.xlu0.c.b16.cont [4/8] 0, 128
      %2197 = vxpose.xlu0.c.b16.cont [5/8] 0, 128
      %2198 = vxpose.xlu0.c.b16.cont [6/8] 0, 128
      %2199 = vxpose.xlu0.c.b16.cont [7/8] 0, 128
      %2200 = vxpose.xlu0.c.b16.end [8/8] 0, 128
      %v2201 = vpop.trf.xlu0
      %v2202 = vpop.trf.xlu0
      %v2203 = vpop.trf.xlu0
      %v2204 = vpop.trf.xlu0
      %v2205 = vpop.trf.xlu0
      %v2206 = vpop.trf.xlu0
      %v2207 = vpop.trf.xlu0
      %v2208 = vpop.trf.xlu0
      %2209 = vxpose.xlu0.c.b16.start [1/8] %v1780, 128
      %2210 = vxpose.xlu0.c.b16.cont [2/8] 0, 128
      %2211 = vxpose.xlu0.c.b16.cont [3/8] 0, 128
      %2212 = vxpose.xlu0.c.b16.cont [4/8] 0, 128
      %2213 = vxpose.xlu0.c.b16.cont [5/8] 0, 128
      %2214 = vxpose.xlu0.c.b16.cont [6/8] 0, 128
      %2215 = vxpose.xlu0.c.b16.cont [7/8] 0, 128
      %2216 = vxpose.xlu0.c.b16.end [8/8] 0, 128
      %v2217 = vpop.trf.xlu0
      %v2218 = vpop.trf.xlu0
      %v2219 = vpop.trf.xlu0
      %v2220 = vpop.trf.xlu0
      %v2221 = vpop.trf.xlu0
      %v2222 = vpop.trf.xlu0
      %v2223 = vpop.trf.xlu0
      %v2224 = vpop.trf.xlu0
      %2225 = vxpose.xlu0.c.b16.start [1/8] %v1914, 128
      %2226 = vxpose.xlu0.c.b16.cont [2/8] 0, 128
      %2227 = vxpose.xlu0.c.b16.cont [3/8] 0, 128
      %2228 = vxpose.xlu0.c.b16.cont [4/8] 0, 128
      %2229 = vxpose.xlu0.c.b16.cont [5/8] 0, 128
      %2230 = vxpose.xlu0.c.b16.cont [6/8] 0, 128
      %2231 = vxpose.xlu0.c.b16.cont [7/8] 0, 128
      %2232 = vxpose.xlu0.c.b16.end [8/8] 0, 128
      %v2233 = vpop.trf.xlu0
      %v2234 = vpop.trf.xlu0
      %v2235 = vpop.trf.xlu0
      %v2236 = vpop.trf.xlu0
      %v2237 = vpop.trf.xlu0
      %v2238 = vpop.trf.xlu0
      %v2239 = vpop.trf.xlu0
      %v2240 = vpop.trf.xlu0
      %2241 = vxpose.xlu0.c.b16.start [1/8] %v1781, 128
      %2242 = vxpose.xlu0.c.b16.cont [2/8] 0, 128
      %2243 = vxpose.xlu0.c.b16.cont [3/8] 0, 128
      %2244 = vxpose.xlu0.c.b16.cont [4/8] 0, 128
      %2245 = vxpose.xlu0.c.b16.cont [5/8] 0, 128
      %2246 = vxpose.xlu0.c.b16.cont [6/8] 0, 128
      %2247 = vxpose.xlu0.c.b16.cont [7/8] 0, 128
      %2248 = vxpose.xlu0.c.b16.end [8/8] 0, 128
      %v2249 = vpop.trf.xlu0
      %v2250 = vpop.trf.xlu0
      %v2251 = vpop.trf.xlu0
      %v2252 = vpop.trf.xlu0
      %v2253 = vpop.trf.xlu0
      %v2254 = vpop.trf.xlu0
      %v2255 = vpop.trf.xlu0
      %v2256 = vpop.trf.xlu0
      %2257 = vxpose.xlu0.c.b16.start [1/8] %v1915, 128
      %2258 = vxpose.xlu0.c.b16.cont [2/8] 0, 128
      %2259 = vxpose.xlu0.c.b16.cont [3/8] 0, 128
      %2260 = vxpose.xlu0.c.b16.cont [4/8] 0, 128
      %2261 = vxpose.xlu0.c.b16.cont [5/8] 0, 128
      %2262 = vxpose.xlu0.c.b16.cont [6/8] 0, 128
      %2263 = vxpose.xlu0.c.b16.cont [7/8] 0, 128
      %2264 = vxpose.xlu0.c.b16.end [8/8] 0, 128
      %v2265 = vpop.trf.xlu0
      %v2266 = vpop.trf.xlu0
      %v2267 = vpop.trf.xlu0
      %v2268 = vpop.trf.xlu0
      %v2269 = vpop.trf.xlu0
      %v2270 = vpop.trf.xlu0
      %v2271 = vpop.trf.xlu0
      %v2272 = vpop.trf.xlu0
      %2273 = vxpose.xlu0.c.b16.start [1/8] %v1782, 128
      %2274 = vxpose.xlu0.c.b16.cont [2/8] 0, 128
      %2275 = vxpose.xlu0.c.b16.cont [3/8] 0, 128
      %2276 = vxpose.xlu0.c.b16.cont [4/8] 0, 128
      %2277 = vxpose.xlu0.c.b16.cont [5/8] 0, 128
      %2278 = vxpose.xlu0.c.b16.cont [6/8] 0, 128
      %2279 = vxpose.xlu0.c.b16.cont [7/8] 0, 128
      %2280 = vxpose.xlu0.c.b16.end [8/8] 0, 128
      %v2281 = vpop.trf.xlu0
      %v2282 = vpop.trf.xlu0
      %v2283 = vpop.trf.xlu0
      %v2284 = vpop.trf.xlu0
      %v2285 = vpop.trf.xlu0
      %v2286 = vpop.trf.xlu0
      %v2287 = vpop.trf.xlu0
      %v2288 = vpop.trf.xlu0
      %2289 = vxpose.xlu0.c.b16.start [1/8] %v1916, 128
      %2290 = vxpose.xlu0.c.b16.cont [2/8] 0, 128
      %2291 = vxpose.xlu0.c.b16.cont [3/8] 0, 128
      %2292 = vxpose.xlu0.c.b16.cont [4/8] 0, 128
      %2293 = vxpose.xlu0.c.b16.cont [5/8] 0, 128
      %2294 = vxpose.xlu0.c.b16.cont [6/8] 0, 128
      %2295 = vxpose.xlu0.c.b16.cont [7/8] 0, 128
      %2296 = vxpose.xlu0.c.b16.end [8/8] 0, 128
      %v2297 = vpop.trf.xlu0
      %v2298 = vpop.trf.xlu0
      %v2299 = vpop.trf.xlu0
      %v2300 = vpop.trf.xlu0
      %v2301 = vpop.trf.xlu0
      %v2302 = vpop.trf.xlu0
      %v2303 = vpop.trf.xlu0
      %v2304 = vpop.trf.xlu0
      %2305 = vxpose.xlu0.c.b16.start [1/8] %v1783, 128
      %2306 = vxpose.xlu0.c.b16.cont [2/8] 0, 128
      %2307 = vxpose.xlu0.c.b16.cont [3/8] 0, 128
      %2308 = vxpose.xlu0.c.b16.cont [4/8] 0, 128
      %2309 = vxpose.xlu0.c.b16.cont [5/8] 0, 128
      %2310 = vxpose.xlu0.c.b16.cont [6/8] 0, 128
      %2311 = vxpose.xlu0.c.b16.cont [7/8] 0, 128
      %2312 = vxpose.xlu0.c.b16.end [8/8] 0, 128
      %v2313 = vpop.trf.xlu0
      %v2314 = vpop.trf.xlu0
      %v2315 = vpop.trf.xlu0
      %v2316 = vpop.trf.xlu0
      %v2317 = vpop.trf.xlu0
      %v2318 = vpop.trf.xlu0
      %v2319 = vpop.trf.xlu0
      %v2320 = vpop.trf.xlu0
      %2321 = vxpose.xlu0.c.b16.start [1/8] %v1917, 128
      %2322 = vxpose.xlu0.c.b16.cont [2/8] 0, 128
      %2323 = vxpose.xlu0.c.b16.cont [3/8] 0, 128
      %2324 = vxpose.xlu0.c.b16.cont [4/8] 0, 128
      %2325 = vxpose.xlu0.c.b16.cont [5/8] 0, 128
      %2326 = vxpose.xlu0.c.b16.cont [6/8] 0, 128
      %2327 = vxpose.xlu0.c.b16.cont [7/8] 0, 128
      %2328 = vxpose.xlu0.c.b16.end [8/8] 0, 128
      %v2329 = vpop.trf.xlu0
      %v2330 = vpop.trf.xlu0
      %v2331 = vpop.trf.xlu0
      %v2332 = vpop.trf.xlu0
      %v2333 = vpop.trf.xlu0
      %v2334 = vpop.trf.xlu0
      %v2335 = vpop.trf.xlu0
      %v2336 = vpop.trf.xlu0
      %2337 = vxpose.xlu0.c.b16.start [1/8] %v1784, 128
      %2338 = vxpose.xlu0.c.b16.cont [2/8] 0, 128
      %2339 = vxpose.xlu0.c.b16.cont [3/8] 0, 128
      %2340 = vxpose.xlu0.c.b16.cont [4/8] 0, 128
      %2341 = vxpose.xlu0.c.b16.cont [5/8] 0, 128
      %2342 = vxpose.xlu0.c.b16.cont [6/8] 0, 128
      %2343 = vxpose.xlu0.c.b16.cont [7/8] 0, 128
      %2344 = vxpose.xlu0.c.b16.end [8/8] 0, 128
      %v2345 = vpop.trf.xlu0
      %v2346 = vpop.trf.xlu0
      %v2347 = vpop.trf.xlu0
      %v2348 = vpop.trf.xlu0
      %v2349 = vpop.trf.xlu0
      %v2350 = vpop.trf.xlu0
      %v2351 = vpop.trf.xlu0
      %v2352 = vpop.trf.xlu0
      %2353 = vxpose.xlu0.c.b16.start [1/8] %v1918, 128
      %2354 = vxpose.xlu0.c.b16.cont [2/8] 0, 128
      %2355 = vxpose.xlu0.c.b16.cont [3/8] 0, 128
      %2356 = vxpose.xlu0.c.b16.cont [4/8] 0, 128
      %2357 = vxpose.xlu0.c.b16.cont [5/8] 0, 128
      %2358 = vxpose.xlu0.c.b16.cont [6/8] 0, 128
      %2359 = vxpose.xlu0.c.b16.cont [7/8] 0, 128
      %2360 = vxpose.xlu0.c.b16.end [8/8] 0, 128
      %v2361 = vpop.trf.xlu0
      %v2362 = vpop.trf.xlu0
      %v2363 = vpop.trf.xlu0
      %v2364 = vpop.trf.xlu0
      %v2365 = vpop.trf.xlu0
      %v2366 = vpop.trf.xlu0
      %v2367 = vpop.trf.xlu0
      %v2368 = vpop.trf.xlu0
      %2369 = vxpose.xlu0.c.b16.start [1/8] %v1785, 128
      %2370 = vxpose.xlu0.c.b16.cont [2/8] 0, 128
      %2371 = vxpose.xlu0.c.b16.cont [3/8] 0, 128
      %2372 = vxpose.xlu0.c.b16.cont [4/8] 0, 128
      %2373 = vxpose.xlu0.c.b16.cont [5/8] 0, 128
      %2374 = vxpose.xlu0.c.b16.cont [6/8] 0, 128
      %2375 = vxpose.xlu0.c.b16.cont [7/8] 0, 128
      %2376 = vxpose.xlu0.c.b16.end [8/8] 0, 128
      %v2377 = vpop.trf.xlu0
      %v2378 = vpop.trf.xlu0
      %v2379 = vpop.trf.xlu0
      %v2380 = vpop.trf.xlu0
      %v2381 = vpop.trf.xlu0
      %v2382 = vpop.trf.xlu0
      %v2383 = vpop.trf.xlu0
      %v2384 = vpop.trf.xlu0
      %2385 = vxpose.xlu0.c.b16.start [1/8] %v1919, 128
      %2386 = vxpose.xlu0.c.b16.cont [2/8] 0, 128
      %2387 = vxpose.xlu0.c.b16.cont [3/8] 0, 128
      %2388 = vxpose.xlu0.c.b16.cont [4/8] 0, 128
      %2389 = vxpose.xlu0.c.b16.cont [5/8] 0, 128
      %2390 = vxpose.xlu0.c.b16.cont [6/8] 0, 128
      %2391 = vxpose.xlu0.c.b16.cont [7/8] 0, 128
      %2392 = vxpose.xlu0.c.b16.end [8/8] 0, 128
      %v2393 = vpop.trf.xlu0
      %v2394 = vpop.trf.xlu0
      %v2395 = vpop.trf.xlu0
      %v2396 = vpop.trf.xlu0
      %v2397 = vpop.trf.xlu0
      %v2398 = vpop.trf.xlu0
      %v2399 = vpop.trf.xlu0
      %v2400 = vpop.trf.xlu0
      %2401 = vxpose.xlu0.c.b16.start [1/8] %v1786, 128
      %2402 = vxpose.xlu0.c.b16.cont [2/8] 0, 128
      %2403 = vxpose.xlu0.c.b16.cont [3/8] 0, 128
      %2404 = vxpose.xlu0.c.b16.cont [4/8] 0, 128
      %2405 = vxpose.xlu0.c.b16.cont [5/8] 0, 128
      %2406 = vxpose.xlu0.c.b16.cont [6/8] 0, 128
      %2407 = vxpose.xlu0.c.b16.cont [7/8] 0, 128
      %2408 = vxpose.xlu0.c.b16.end [8/8] 0, 128
      %v2409 = vpop.trf.xlu0
      %v2410 = vpop.trf.xlu0
      %v2411 = vpop.trf.xlu0
      %v2412 = vpop.trf.xlu0
      %v2413 = vpop.trf.xlu0
      %v2414 = vpop.trf.xlu0
      %v2415 = vpop.trf.xlu0
      %v2416 = vpop.trf.xlu0
      %2417 = vxpose.xlu0.c.b16.start [1/8] %v1920, 128
      %2418 = vxpose.xlu0.c.b16.cont [2/8] 0, 128
      %2419 = vxpose.xlu0.c.b16.cont [3/8] 0, 128
      %2420 = vxpose.xlu0.c.b16.cont [4/8] 0, 128
      %2421 = vxpose.xlu0.c.b16.cont [5/8] 0, 128
      %2422 = vxpose.xlu0.c.b16.cont [6/8] 0, 128
      %2423 = vxpose.xlu0.c.b16.cont [7/8] 0, 128
      %2424 = vxpose.xlu0.c.b16.end [8/8] 0, 128
      %v2425 = vpop.trf.xlu0
      %v2426 = vpop.trf.xlu0
      %v2427 = vpop.trf.xlu0
      %v2428 = vpop.trf.xlu0
      %v2429 = vpop.trf.xlu0
      %v2430 = vpop.trf.xlu0
      %v2431 = vpop.trf.xlu0
      %v2432 = vpop.trf.xlu0
      %v2433 = vcombine.low %v1929, %v1993
      %v2435 = vunpack.c.l.s4 1983009808
      %v2436 = vunpack.c.0.s8 %v2435
      %v2437 = vlaneseq
      %v2438 = vshrl.u32 %v2437, 7
      %v2439 = vsub.s32 %v2436, %v2438
      %v2440 = vrot.slane %v2433, %v2439
      %v2441 = vcombine.low %v1961, %v2025
      %v2443 = vunpack.c.l.s4 1983009808
      %v2444 = vunpack.c.0.s8 %v2443
      %v2445 = vlaneseq
      %v2446 = vshrl.u32 %v2445, 7
      %v2447 = vsub.s32 %v2444, %v2446
      %v2448 = vrot.slane %v2441, %v2447
      %v2449 = vcombine.low %v2057, %v2121
      %v2451 = vunpack.c.l.s4 1983009808
      %v2452 = vunpack.c.0.s8 %v2451
      %v2453 = vlaneseq
      %v2454 = vshrl.u32 %v2453, 7
      %v2455 = vsub.s32 %v2452, %v2454
      %v2456 = vrot.slane %v2449, %v2455
      %v2457 = vcombine.low %v2089, %v2153
      %v2459 = vunpack.c.l.s4 1983009808
      %v2460 = vunpack.c.0.s8 %v2459
      %v2461 = vlaneseq
      %v2462 = vshrl.u32 %v2461, 7
      %v2463 = vsub.s32 %v2460, %v2462
      %v2464 = vrot.slane %v2457, %v2463
      %v2465 = vcombine.low %v2440, %v2448
      %v2467 = vunpack.c.l.s4 1934713408
      %v2468 = vunpack.c.0.s8 %v2467
      %v2469 = vlaneseq
      %v2470 = vshrl.u32 %v2469, 7
      %v2471 = vsub.s32 %v2468, %v2470
      %v2472 = vrot.slane %v2465, %v2471
      %v2473 = vcombine.low %v2456, %v2464
      %v2475 = vunpack.c.l.s4 1934713408
      %v2476 = vunpack.c.0.s8 %v2475
      %v2477 = vlaneseq
      %v2478 = vshrl.u32 %v2477, 7
      %v2479 = vsub.s32 %v2476, %v2478
      %v2480 = vrot.slane %v2473, %v2479
      %v2481 = vcombine.low %v2472, %v2480
      %v2482 = vcombine.high %v2472, %v2480
      %v2483 = vcombine.low %v1945, %v2009
      %v2485 = vunpack.c.l.s4 1983009808
      %v2486 = vunpack.c.0.s8 %v2485
      %v2487 = vlaneseq
      %v2488 = vshrl.u32 %v2487, 7
      %v2489 = vsub.s32 %v2486, %v2488
      %v2490 = vrot.slane %v2483, %v2489
      %v2491 = vcombine.low %v1977, %v2041
      %v2493 = vunpack.c.l.s4 1983009808
      %v2494 = vunpack.c.0.s8 %v2493
      %v2495 = vlaneseq
      %v2496 = vshrl.u32 %v2495, 7
      %v2497 = vsub.s32 %v2494, %v2496
      %v2498 = vrot.slane %v2491, %v2497
      %v2499 = vcombine.low %v2073, %v2137
      %v2501 = vunpack.c.l.s4 1983009808
      %v2502 = vunpack.c.0.s8 %v2501
      %v2503 = vlaneseq
      %v2504 = vshrl.u32 %v2503, 7
      %v2505 = vsub.s32 %v2502, %v2504
      %v2506 = vrot.slane %v2499, %v2505
      %v2507 = vcombine.low %v2105, %v2169
      %v2509 = vunpack.c.l.s4 1983009808
      %v2510 = vunpack.c.0.s8 %v2509
      %v2511 = vlaneseq
      %v2512 = vshrl.u32 %v2511, 7
      %v2513 = vsub.s32 %v2510, %v2512
      %v2514 = vrot.slane %v2507, %v2513
      %v2515 = vcombine.low %v2490, %v2498
      %v2517 = vunpack.c.l.s4 1934713408
      %v2518 = vunpack.c.0.s8 %v2517
      %v2519 = vlaneseq
      %v2520 = vshrl.u32 %v2519, 7
      %v2521 = vsub.s32 %v2518, %v2520
      %v2522 = vrot.slane %v2515, %v2521
      %v2523 = vcombine.low %v2506, %v2514
      %v2525 = vunpack.c.l.s4 1934713408
      %v2526 = vunpack.c.0.s8 %v2525
      %v2527 = vlaneseq
      %v2528 = vshrl.u32 %v2527, 7
      %v2529 = vsub.s32 %v2526, %v2528
      %v2530 = vrot.slane %v2523, %v2529
      %v2531 = vcombine.low %v2522, %v2530
      %v2532 = vcombine.high %v2522, %v2530
      %v2533 = vcombine.low %v2185, %v2249
      %v2535 = vunpack.c.l.s4 1983009808
      %v2536 = vunpack.c.0.s8 %v2535
      %v2537 = vlaneseq
      %v2538 = vshrl.u32 %v2537, 7
      %v2539 = vsub.s32 %v2536, %v2538
      %v2540 = vrot.slane %v2533, %v2539
      %v2541 = vcombine.low %v2217, %v2281
      %v2543 = vunpack.c.l.s4 1983009808
      %v2544 = vunpack.c.0.s8 %v2543
      %v2545 = vlaneseq
      %v2546 = vshrl.u32 %v2545, 7
      %v2547 = vsub.s32 %v2544, %v2546
      %v2548 = vrot.slane %v2541, %v2547
      %v2549 = vcombine.low %v2313, %v2377
      %v2551 = vunpack.c.l.s4 1983009808
      %v2552 = vunpack.c.0.s8 %v2551
      %v2553 = vlaneseq
      %v2554 = vshrl.u32 %v2553, 7
      %v2555 = vsub.s32 %v2552, %v2554
      %v2556 = vrot.slane %v2549, %v2555
      %v2557 = vcombine.low %v2345, %v2409
      %v2559 = vunpack.c.l.s4 1983009808
      %v2560 = vunpack.c.0.s8 %v2559
      %v2561 = vlaneseq
      %v2562 = vshrl.u32 %v2561, 7
      %v2563 = vsub.s32 %v2560, %v2562
      %v2564 = vrot.slane %v2557, %v2563
      %v2565 = vcombine.low %v2540, %v2548
      %v2567 = vunpack.c.l.s4 1934713408
      %v2568 = vunpack.c.0.s8 %v2567
      %v2569 = vlaneseq
      %v2570 = vshrl.u32 %v2569, 7
      %v2571 = vsub.s32 %v2568, %v2570
      %v2572 = vrot.slane %v2565, %v2571
      %v2573 = vcombine.low %v2556, %v2564
      %v2575 = vunpack.c.l.s4 1934713408
      %v2576 = vunpack.c.0.s8 %v2575
      %v2577 = vlaneseq
      %v2578 = vshrl.u32 %v2577, 7
      %v2579 = vsub.s32 %v2576, %v2578
      %v2580 = vrot.slane %v2573, %v2579
      %v2581 = vcombine.low %v2572, %v2580
      %v2582 = vcombine.high %v2572, %v2580
      %v2583 = vcombine.low %v2201, %v2265
      %v2585 = vunpack.c.l.s4 1983009808
      %v2586 = vunpack.c.0.s8 %v2585
      %v2587 = vlaneseq
      %v2588 = vshrl.u32 %v2587, 7
      %v2589 = vsub.s32 %v2586, %v2588
      %v2590 = vrot.slane %v2583, %v2589
      %v2591 = vcombine.low %v2233, %v2297
      %v2593 = vunpack.c.l.s4 1983009808
      %v2594 = vunpack.c.0.s8 %v2593
      %v2595 = vlaneseq
      %v2596 = vshrl.u32 %v2595, 7
      %v2597 = vsub.s32 %v2594, %v2596
      %v2598 = vrot.slane %v2591, %v2597
      %v2599 = vcombine.low %v2329, %v2393
      %v2601 = vunpack.c.l.s4 1983009808
      %v2602 = vunpack.c.0.s8 %v2601
      %v2603 = vlaneseq
      %v2604 = vshrl.u32 %v2603, 7
      %v2605 = vsub.s32 %v2602, %v2604
      %v2606 = vrot.slane %v2599, %v2605
      %v2607 = vcombine.low %v2361, %v2425
      %v2609 = vunpack.c.l.s4 1983009808
      %v2610 = vunpack.c.0.s8 %v2609
      %v2611 = vlaneseq
      %v2612 = vshrl.u32 %v2611, 7
      %v2613 = vsub.s32 %v2610, %v2612
      %v2614 = vrot.slane %v2607, %v2613
      %v2615 = vcombine.low %v2590, %v2598
      %v2617 = vunpack.c.l.s4 1934713408
      %v2618 = vunpack.c.0.s8 %v2617
      %v2619 = vlaneseq
      %v2620 = vshrl.u32 %v2619, 7
      %v2621 = vsub.s32 %v2618, %v2620
      %v2622 = vrot.slane %v2615, %v2621
      %v2623 = vcombine.low %v2606, %v2614
      %v2625 = vunpack.c.l.s4 1934713408
      %v2626 = vunpack.c.0.s8 %v2625
      %v2627 = vlaneseq
      %v2628 = vshrl.u32 %v2627, 7
      %v2629 = vsub.s32 %v2626, %v2628
      %v2630 = vrot.slane %v2623, %v2629
      %v2631 = vcombine.low %v2622, %v2630
      %v2632 = vcombine.high %v2622, %v2630
      %v2635 = vpack.i.b16 %v2531, %v2481
      %v2637 = vshrl.u32 %v2481, 16
      %v2638 = vshrl.u32 %v2531, 16
      %v2639 = vpack.i.b16 %v2638, %v2637
      %v2643 = vpack.i.b16 %v2532, %v2482
      %v2645 = vshrl.u32 %v2482, 16
      %v2646 = vshrl.u32 %v2532, 16
      %v2647 = vpack.i.b16 %v2646, %v2645
      %v2651 = vpack.i.b16 %v2631, %v2581
      %v2653 = vshrl.u32 %v2581, 16
      %v2654 = vshrl.u32 %v2631, 16
      %v2655 = vpack.i.b16 %v2654, %v2653
      %v2659 = vpack.i.b16 %v2632, %v2582
      %v2661 = vshrl.u32 %v2582, 16
      %v2662 = vshrl.u32 %v2632, 16
      %v2663 = vpack.i.b16 %v2662, %v2661
      %vm2665 = vcmask 261120
      %v2667 = vsel %vm2665, %v1081, 0
      %2669 = vmatprep.subr.bf16.mxu0 0
      %2670 = vmatpush1.bf16.msra.mxu0 %v2635
      %2671 = vmatprep.subr.bf16.mxu0 0
      %2672 = vmatpush1.bf16.msra.mxu0 %v2651
      %2673 = vmatprep.subr.bf16.mxu0 0
      %2674 = vmatpush1.bf16.msra.mxu0 0
      %2675 = vmatprep.subr.bf16.mxu0 0
      %2676 = vmatpush1.bf16.msra.mxu0 0
      %2677 = vmatprep.subr.bf16.mxu0 0
      %2678 = vmatpush1.bf16.msra.mxu0 0
      %2679 = vmatprep.subr.bf16.mxu0 0
      %2680 = vmatpush1.bf16.msra.mxu0 0
      %2681 = vmatprep.subr.bf16.mxu0 0
      %2682 = vmatpush1.bf16.msra.mxu0 0
      %2683 = vmatprep.subr.bf16.mxu0 0
      %2684 = vmatpush1.bf16.msra.mxu0 0
      %2685 = vmatprep.subr.bf16.mxu0 0
      %2686 = vmatpush1.bf16.msra.mxu0 0
      %2687 = vmatprep.subr.bf16.mxu0 0
      %2688 = vmatpush1.bf16.msra.mxu0 0
      %2689 = vmatprep.subr.bf16.mxu0 0
      %2690 = vmatpush1.bf16.msra.mxu0 0
      %2691 = vmatprep.subr.bf16.mxu0 0
      %2692 = vmatpush1.bf16.msra.mxu0 0
      %2693 = vmatprep.subr.bf16.mxu0 0
      %2694 = vmatpush1.bf16.msra.mxu0 0
      %2695 = vmatprep.subr.bf16.mxu0 0
      %2696 = vmatpush1.bf16.msra.mxu0 0
      %2697 = vmatprep.subr.bf16.mxu0 0
      %2698 = vmatpush1.bf16.msra.mxu0 0
      %2699 = vmatprep.subr.bf16.mxu0 0
      %2700 = vmatpush1.bf16.msra.mxu0 0
      %2701 = vmatprep.mubr.bf16.mxu0 0
      %2702 = vmatmul.mubr.bf16.gmra.mrb[0].mxu0 %v2667
      %v2703 = vpop.f32.mrb[0].mxu0
      %v2704 = vadd.f32 0.0, %v2703
      %v2705 = vpop.f32.mrb[0].mxu0
      %v2706 = vpop.f32.mrb[0].mxu0
      %v2707 = vpop.f32.mrb[0].mxu0
      %2708 = vdwg.mxu0
      %v2710 = vsel %vm2665, %v1084, 0
      %2712 = vmatprep.subr.bf16.mxu0 0
      %2713 = vmatpush1.bf16.msra.mxu0 %v2639
      %2714 = vmatprep.subr.bf16.mxu0 0
      %2715 = vmatpush1.bf16.msra.mxu0 %v2655
      %2716 = vmatprep.subr.bf16.mxu0 0
      %2717 = vmatpush1.bf16.msra.mxu0 0
      %2718 = vmatprep.subr.bf16.mxu0 0
      %2719 = vmatpush1.bf16.msra.mxu0 0
      %2720 = vmatprep.subr.bf16.mxu0 0
      %2721 = vmatpush1.bf16.msra.mxu0 0
      %2722 = vmatprep.subr.bf16.mxu0 0
      %2723 = vmatpush1.bf16.msra.mxu0 0
      %2724 = vmatprep.subr.bf16.mxu0 0
      %2725 = vmatpush1.bf16.msra.mxu0 0
      %2726 = vmatprep.subr.bf16.mxu0 0
      %2727 = vmatpush1.bf16.msra.mxu0 0
      %2728 = vmatprep.subr.bf16.mxu0 0
      %2729 = vmatpush1.bf16.msra.mxu0 0
      %2730 = vmatprep.subr.bf16.mxu0 0
      %2731 = vmatpush1.bf16.msra.mxu0 0
      %2732 = vmatprep.subr.bf16.mxu0 0
      %2733 = vmatpush1.bf16.msra.mxu0 0
      %2734 = vmatprep.subr.bf16.mxu0 0
      %2735 = vmatpush1.bf16.msra.mxu0 0
      %2736 = vmatprep.subr.bf16.mxu0 0
      %2737 = vmatpush1.bf16.msra.mxu0 0
      %2738 = vmatprep.subr.bf16.mxu0 0
      %2739 = vmatpush1.bf16.msra.mxu0 0
      %2740 = vmatprep.subr.bf16.mxu0 0
      %2741 = vmatpush1.bf16.msra.mxu0 0
      %2742 = vmatprep.subr.bf16.mxu0 0
      %2743 = vmatpush1.bf16.msra.mxu0 0
      %2744 = vmatprep.mubr.bf16.mxu0 0
      %2745 = vmatmul.mubr.bf16.gmra.mrb[0].mxu0 %v2710
      %v2746 = vpop.f32.mrb[0].mxu0
      %v2747 = vadd.f32 0.0, %v2746
      %v2748 = vpop.f32.mrb[0].mxu0
      %v2749 = vpop.f32.mrb[0].mxu0
      %v2750 = vpop.f32.mrb[0].mxu0
      %2751 = vdwg.mxu0
      %v2753 = vsel %vm2665, %v1087, 0
      %2755 = vmatprep.subr.bf16.mxu0 0
      %2756 = vmatpush1.bf16.msra.mxu0 %v2643
      %2757 = vmatprep.subr.bf16.mxu0 0
      %2758 = vmatpush1.bf16.msra.mxu0 %v2659
      %2759 = vmatprep.subr.bf16.mxu0 0
      %2760 = vmatpush1.bf16.msra.mxu0 0
      %2761 = vmatprep.subr.bf16.mxu0 0
      %2762 = vmatpush1.bf16.msra.mxu0 0
      %2763 = vmatprep.subr.bf16.mxu0 0
      %2764 = vmatpush1.bf16.msra.mxu0 0
      %2765 = vmatprep.subr.bf16.mxu0 0
      %2766 = vmatpush1.bf16.msra.mxu0 0
      %2767 = vmatprep.subr.bf16.mxu0 0
      %2768 = vmatpush1.bf16.msra.mxu0 0
      %2769 = vmatprep.subr.bf16.mxu0 0
      %2770 = vmatpush1.bf16.msra.mxu0 0
      %2771 = vmatprep.subr.bf16.mxu0 0
      %2772 = vmatpush1.bf16.msra.mxu0 0
      %2773 = vmatprep.subr.bf16.mxu0 0
      %2774 = vmatpush1.bf16.msra.mxu0 0
      %2775 = vmatprep.subr.bf16.mxu0 0
      %2776 = vmatpush1.bf16.msra.mxu0 0
      %2777 = vmatprep.subr.bf16.mxu0 0
      %2778 = vmatpush1.bf16.msra.mxu0 0
      %2779 = vmatprep.subr.bf16.mxu0 0
      %2780 = vmatpush1.bf16.msra.mxu0 0
      %2781 = vmatprep.subr.bf16.mxu0 0
      %2782 = vmatpush1.bf16.msra.mxu0 0
      %2783 = vmatprep.subr.bf16.mxu0 0
      %2784 = vmatpush1.bf16.msra.mxu0 0
      %2785 = vmatprep.subr.bf16.mxu0 0
      %2786 = vmatpush1.bf16.msra.mxu0 0
      %2787 = vmatprep.mubr.bf16.mxu0 0
      %2788 = vmatmul.mubr.bf16.gmra.mrb[0].mxu0 %v2753
      %v2789 = vpop.f32.mrb[0].mxu0
      %v2790 = vadd.f32 0.0, %v2789
      %v2791 = vpop.f32.mrb[0].mxu0
      %v2792 = vpop.f32.mrb[0].mxu0
      %v2793 = vpop.f32.mrb[0].mxu0
      %2794 = vdwg.mxu0
      %v2796 = vsel %vm2665, %v1090, 0
      %2798 = vmatprep.subr.bf16.mxu0 0
      %2799 = vmatpush1.bf16.msra.mxu0 %v2647
      %2800 = vmatprep.subr.bf16.mxu0 0
      %2801 = vmatpush1.bf16.msra.mxu0 %v2663
      %2802 = vmatprep.subr.bf16.mxu0 0
      %2803 = vmatpush1.bf16.msra.mxu0 0
      %2804 = vmatprep.subr.bf16.mxu0 0
      %2805 = vmatpush1.bf16.msra.mxu0 0
      %2806 = vmatprep.subr.bf16.mxu0 0
      %2807 = vmatpush1.bf16.msra.mxu0 0
      %2808 = vmatprep.subr.bf16.mxu0 0
      %2809 = vmatpush1.bf16.msra.mxu0 0
      %2810 = vmatprep.subr.bf16.mxu0 0
      %2811 = vmatpush1.bf16.msra.mxu0 0
      %2812 = vmatprep.subr.bf16.mxu0 0
      %2813 = vmatpush1.bf16.msra.mxu0 0
      %2814 = vmatprep.subr.bf16.mxu0 0
      %2815 = vmatpush1.bf16.msra.mxu0 0
      %2816 = vmatprep.subr.bf16.mxu0 0
      %2817 = vmatpush1.bf16.msra.mxu0 0
      %2818 = vmatprep.subr.bf16.mxu0 0
      %2819 = vmatpush1.bf16.msra.mxu0 0
      %2820 = vmatprep.subr.bf16.mxu0 0
      %2821 = vmatpush1.bf16.msra.mxu0 0
      %2822 = vmatprep.subr.bf16.mxu0 0
      %2823 = vmatpush1.bf16.msra.mxu0 0
      %2824 = vmatprep.subr.bf16.mxu0 0
      %2825 = vmatpush1.bf16.msra.mxu0 0
      %2826 = vmatprep.subr.bf16.mxu0 0
      %2827 = vmatpush1.bf16.msra.mxu0 0
      %2828 = vmatprep.subr.bf16.mxu0 0
      %2829 = vmatpush1.bf16.msra.mxu0 0
      %2830 = vmatprep.mubr.bf16.mxu0 0
      %2831 = vmatmul.mubr.bf16.gmra.mrb[0].mxu0 %v2796
      %v2832 = vpop.f32.mrb[0].mxu0
      %v2833 = vadd.f32 0.0, %v2832
      %v2834 = vpop.f32.mrb[0].mxu0
      %v2835 = vpop.f32.mrb[0].mxu0
      %v2836 = vpop.f32.mrb[0].mxu0
      %2837 = vdwg.mxu0
      %vm2838 = vcmask 97280
      %v2839 = vsel %vm2838, %v2704, -inf
      %2840 = vmax.xlane.f32.xlu0 %v2839
      %v2841 = vpop.xlane.xlu0 %2840
      %v2842 = vsel %vm2838, %v2747, -inf
      %2843 = vmax.xlane.f32.xlu0 %v2842
      %v2844 = vpop.xlane.xlu0 %2843
      %v2845 = vsel %vm2838, %v2790, -inf
      %2846 = vmax.xlane.f32.xlu0 %v2845
      %v2847 = vpop.xlane.xlu0 %2846
      %v2848 = vsel %vm2838, %v2833, -inf
      %2849 = vmax.xlane.f32.xlu0 %v2848
      %v2850 = vpop.xlane.xlu0 %2849
      %v2851 = vsub.f32 %v2704, %v2841
      %v2852 = vsub.f32 %v2747, %v2844
      %v2853 = vsub.f32 %v2790, %v2847
      %v2854 = vsub.f32 %v2833, %v2850
      %v2855 = vmul.f32 %v2851, 1.442695
      %v2856 = vpow.pop %v2855
      %v2857 = vmul.f32 %v2852, 1.442695
      %v2858 = vpow.pop %v2857
      %v2859 = vmul.f32 %v2853, 1.442695
      %v2860 = vpow.pop %v2859
      %v2861 = vmul.f32 %v2854, 1.442695
      %v2862 = vpow.pop %v2861
      %v2863 = vsel %vm2838, %v2856, 0.0
      %2864 = vadd.xlane.f32.xlu0 %v2863
      %v2865 = vpop.xlane.xlu0 %2864
      %v2866 = vsel %vm2838, %v2858, 0.0
      %2867 = vadd.xlane.f32.xlu0 %v2866
      %v2868 = vpop.xlane.xlu0 %2867
      %v2869 = vsel %vm2838, %v2860, 0.0
      %2870 = vadd.xlane.f32.xlu0 %v2869
      %v2871 = vpop.xlane.xlu0 %2870
      %v2872 = vsel %vm2838, %v2862, 0.0
      %2873 = vadd.xlane.f32.xlu0 %v2872
      %v2874 = vpop.xlane.xlu0 %2873
      %v2875 = vrcp.pop %v2865
      %v2876 = vmul.f32 %v2856, %v2875
      %v2877 = vrcp.pop %v2868
      %v2878 = vmul.f32 %v2858, %v2877
      %v2879 = vrcp.pop %v2871
      %v2880 = vmul.f32 %v2860, %v2879
      %v2881 = vrcp.pop %v2874
      %v2882 = vmul.f32 %v2862, %v2881
      %v2883 = vpack.c.bf16 %v2876, %v2876
      %v2884 = vpack.c.bf16 %v2878, %v2878
      %v2885 = vpack.c.bf16 %v2880, %v2880
      %v2886 = vpack.c.bf16 %v2882, %v2882
      %2887 = vxpose.xlu0.c.b16.start [1/8] %v1017, 128
      %2888 = vxpose.xlu0.c.b16.cont [2/8] 0, 128
      %2889 = vxpose.xlu0.c.b16.cont [3/8] 0, 128
      %2890 = vxpose.xlu0.c.b16.cont [4/8] 0, 128
      %2891 = vxpose.xlu0.c.b16.cont [5/8] 0, 128
      %2892 = vxpose.xlu0.c.b16.cont [6/8] 0, 128
      %2893 = vxpose.xlu0.c.b16.cont [7/8] 0, 128
      %2894 = vxpose.xlu0.c.b16.end [8/8] 0, 128
      %v2895 = vpop.trf.xlu0
      %v2896 = vpop.trf.xlu0
      %v2897 = vpop.trf.xlu0
      %v2898 = vpop.trf.xlu0
      %v2899 = vpop.trf.xlu0
      %v2900 = vpop.trf.xlu0
      %v2901 = vpop.trf.xlu0
      %v2902 = vpop.trf.xlu0
      %2903 = vxpose.xlu0.c.b16.start [1/8] %v1018, 128
      %2904 = vxpose.xlu0.c.b16.cont [2/8] 0, 128
      %2905 = vxpose.xlu0.c.b16.cont [3/8] 0, 128
      %2906 = vxpose.xlu0.c.b16.cont [4/8] 0, 128
      %2907 = vxpose.xlu0.c.b16.cont [5/8] 0, 128
      %2908 = vxpose.xlu0.c.b16.cont [6/8] 0, 128
      %2909 = vxpose.xlu0.c.b16.cont [7/8] 0, 128
      %2910 = vxpose.xlu0.c.b16.end [8/8] 0, 128
      %v2911 = vpop.trf.xlu0
      %v2912 = vpop.trf.xlu0
      %v2913 = vpop.trf.xlu0
      %v2914 = vpop.trf.xlu0
      %v2915 = vpop.trf.xlu0
      %v2916 = vpop.trf.xlu0
      %v2917 = vpop.trf.xlu0
      %v2918 = vpop.trf.xlu0
      %2919 = vxpose.xlu0.c.b16.start [1/8] %v1019, 128
      %2920 = vxpose.xlu0.c.b16.cont [2/8] 0, 128
      %2921 = vxpose.xlu0.c.b16.cont [3/8] 0, 128
      %2922 = vxpose.xlu0.c.b16.cont [4/8] 0, 128
      %2923 = vxpose.xlu0.c.b16.cont [5/8] 0, 128
      %2924 = vxpose.xlu0.c.b16.cont [6/8] 0, 128
      %2925 = vxpose.xlu0.c.b16.cont [7/8] 0, 128
      %2926 = vxpose.xlu0.c.b16.end [8/8] 0, 128
      %v2927 = vpop.trf.xlu0
      %v2928 = vpop.trf.xlu0
      %v2929 = vpop.trf.xlu0
      %v2930 = vpop.trf.xlu0
      %v2931 = vpop.trf.xlu0
      %v2932 = vpop.trf.xlu0
      %v2933 = vpop.trf.xlu0
      %v2934 = vpop.trf.xlu0
      %2935 = vxpose.xlu0.c.b16.start [1/8] %v1020, 128
      %2936 = vxpose.xlu0.c.b16.cont [2/8] 0, 128
      %2937 = vxpose.xlu0.c.b16.cont [3/8] 0, 128
      %2938 = vxpose.xlu0.c.b16.cont [4/8] 0, 128
      %2939 = vxpose.xlu0.c.b16.cont [5/8] 0, 128
      %2940 = vxpose.xlu0.c.b16.cont [6/8] 0, 128
      %2941 = vxpose.xlu0.c.b16.cont [7/8] 0, 128
      %2942 = vxpose.xlu0.c.b16.end [8/8] 0, 128
      %v2943 = vpop.trf.xlu0
      %v2944 = vpop.trf.xlu0
      %v2945 = vpop.trf.xlu0
      %v2946 = vpop.trf.xlu0
      %v2947 = vpop.trf.xlu0
      %v2948 = vpop.trf.xlu0
      %v2949 = vpop.trf.xlu0
      %v2950 = vpop.trf.xlu0
      %2951 = vxpose.xlu0.c.b16.start [1/8] %v1021, 128
      %2952 = vxpose.xlu0.c.b16.cont [2/8] 0, 128
      %2953 = vxpose.xlu0.c.b16.cont [3/8] 0, 128
      %2954 = vxpose.xlu0.c.b16.cont [4/8] 0, 128
      %2955 = vxpose.xlu0.c.b16.cont [5/8] 0, 128
      %2956 = vxpose.xlu0.c.b16.cont [6/8] 0, 128
      %2957 = vxpose.xlu0.c.b16.cont [7/8] 0, 128
      %2958 = vxpose.xlu0.c.b16.end [8/8] 0, 128
      %v2959 = vpop.trf.xlu0
      %v2960 = vpop.trf.xlu0
      %v2961 = vpop.trf.xlu0
      %v2962 = vpop.trf.xlu0
      %v2963 = vpop.trf.xlu0
      %v2964 = vpop.trf.xlu0
      %v2965 = vpop.trf.xlu0
      %v2966 = vpop.trf.xlu0
      %2967 = vxpose.xlu0.c.b16.start [1/8] %v1022, 128
      %2968 = vxpose.xlu0.c.b16.cont [2/8] 0, 128
      %2969 = vxpose.xlu0.c.b16.cont [3/8] 0, 128
      %2970 = vxpose.xlu0.c.b16.cont [4/8] 0, 128
      %2971 = vxpose.xlu0.c.b16.cont [5/8] 0, 128
      %2972 = vxpose.xlu0.c.b16.cont [6/8] 0, 128
      %2973 = vxpose.xlu0.c.b16.cont [7/8] 0, 128
      %2974 = vxpose.xlu0.c.b16.end [8/8] 0, 128
      %v2975 = vpop.trf.xlu0
      %v2976 = vpop.trf.xlu0
      %v2977 = vpop.trf.xlu0
      %v2978 = vpop.trf.xlu0
      %v2979 = vpop.trf.xlu0
      %v2980 = vpop.trf.xlu0
      %v2981 = vpop.trf.xlu0
      %v2982 = vpop.trf.xlu0
      %2983 = vxpose.xlu0.c.b16.start [1/8] %v1023, 128
      %2984 = vxpose.xlu0.c.b16.cont [2/8] 0, 128
      %2985 = vxpose.xlu0.c.b16.cont [3/8] 0, 128
      %2986 = vxpose.xlu0.c.b16.cont [4/8] 0, 128
      %2987 = vxpose.xlu0.c.b16.cont [5/8] 0, 128
      %2988 = vxpose.xlu0.c.b16.cont [6/8] 0, 128
      %2989 = vxpose.xlu0.c.b16.cont [7/8] 0, 128
      %2990 = vxpose.xlu0.c.b16.end [8/8] 0, 128
      %v2991 = vpop.trf.xlu0
      %v2992 = vpop.trf.xlu0
      %v2993 = vpop.trf.xlu0
      %v2994 = vpop.trf.xlu0
      %v2995 = vpop.trf.xlu0
      %v2996 = vpop.trf.xlu0
      %v2997 = vpop.trf.xlu0
      %v2998 = vpop.trf.xlu0
      %2999 = vxpose.xlu0.c.b16.start [1/8] %v1024, 128
      %3000 = vxpose.xlu0.c.b16.cont [2/8] 0, 128
      %3001 = vxpose.xlu0.c.b16.cont [3/8] 0, 128
      %3002 = vxpose.xlu0.c.b16.cont [4/8] 0, 128
      %3003 = vxpose.xlu0.c.b16.cont [5/8] 0, 128
      %3004 = vxpose.xlu0.c.b16.cont [6/8] 0, 128
      %3005 = vxpose.xlu0.c.b16.cont [7/8] 0, 128
      %3006 = vxpose.xlu0.c.b16.end [8/8] 0, 128
      %v3007 = vpop.trf.xlu0
      %v3008 = vpop.trf.xlu0
      %v3009 = vpop.trf.xlu0
      %v3010 = vpop.trf.xlu0
      %v3011 = vpop.trf.xlu0
      %v3012 = vpop.trf.xlu0
      %v3013 = vpop.trf.xlu0
      %v3014 = vpop.trf.xlu0
      %3015 = vxpose.xlu0.c.b16.start [1/8] %v1025, 128
      %3016 = vxpose.xlu0.c.b16.cont [2/8] 0, 128
      %3017 = vxpose.xlu0.c.b16.cont [3/8] 0, 128
      %3018 = vxpose.xlu0.c.b16.cont [4/8] 0, 128
      %3019 = vxpose.xlu0.c.b16.cont [5/8] 0, 128
      %3020 = vxpose.xlu0.c.b16.cont [6/8] 0, 128
      %3021 = vxpose.xlu0.c.b16.cont [7/8] 0, 128
      %3022 = vxpose.xlu0.c.b16.end [8/8] 0, 128
      %v3023 = vpop.trf.xlu0
      %v3024 = vpop.trf.xlu0
      %v3025 = vpop.trf.xlu0
      %v3026 = vpop.trf.xlu0
      %v3027 = vpop.trf.xlu0
      %v3028 = vpop.trf.xlu0
      %v3029 = vpop.trf.xlu0
      %v3030 = vpop.trf.xlu0
      %3031 = vxpose.xlu0.c.b16.start [1/8] %v1026, 128
      %3032 = vxpose.xlu0.c.b16.cont [2/8] 0, 128
      %3033 = vxpose.xlu0.c.b16.cont [3/8] 0, 128
      %3034 = vxpose.xlu0.c.b16.cont [4/8] 0, 128
      %3035 = vxpose.xlu0.c.b16.cont [5/8] 0, 128
      %3036 = vxpose.xlu0.c.b16.cont [6/8] 0, 128
      %3037 = vxpose.xlu0.c.b16.cont [7/8] 0, 128
      %3038 = vxpose.xlu0.c.b16.end [8/8] 0, 128
      %v3039 = vpop.trf.xlu0
      %v3040 = vpop.trf.xlu0
      %v3041 = vpop.trf.xlu0
      %v3042 = vpop.trf.xlu0
      %v3043 = vpop.trf.xlu0
      %v3044 = vpop.trf.xlu0
      %v3045 = vpop.trf.xlu0
      %v3046 = vpop.trf.xlu0
      %3047 = vxpose.xlu0.c.b16.start [1/8] %v1027, 128
      %3048 = vxpose.xlu0.c.b16.cont [2/8] 0, 128
      %3049 = vxpose.xlu0.c.b16.cont [3/8] 0, 128
      %3050 = vxpose.xlu0.c.b16.cont [4/8] 0, 128
      %3051 = vxpose.xlu0.c.b16.cont [5/8] 0, 128
      %3052 = vxpose.xlu0.c.b16.cont [6/8] 0, 128
      %3053 = vxpose.xlu0.c.b16.cont [7/8] 0, 128
      %3054 = vxpose.xlu0.c.b16.end [8/8] 0, 128
      %v3055 = vpop.trf.xlu0
      %v3056 = vpop.trf.xlu0
      %v3057 = vpop.trf.xlu0
      %v3058 = vpop.trf.xlu0
      %v3059 = vpop.trf.xlu0
      %v3060 = vpop.trf.xlu0
      %v3061 = vpop.trf.xlu0
      %v3062 = vpop.trf.xlu0
      %3063 = vxpose.xlu0.c.b16.start [1/8] %v1028, 128
      %3064 = vxpose.xlu0.c.b16.cont [2/8] 0, 128
      %3065 = vxpose.xlu0.c.b16.cont [3/8] 0, 128
      %3066 = vxpose.xlu0.c.b16.cont [4/8] 0, 128
      %3067 = vxpose.xlu0.c.b16.cont [5/8] 0, 128
      %3068 = vxpose.xlu0.c.b16.cont [6/8] 0, 128
      %3069 = vxpose.xlu0.c.b16.cont [7/8] 0, 128
      %3070 = vxpose.xlu0.c.b16.end [8/8] 0, 128
      %v3071 = vpop.trf.xlu0
      %v3072 = vpop.trf.xlu0
      %v3073 = vpop.trf.xlu0
      %v3074 = vpop.trf.xlu0
      %v3075 = vpop.trf.xlu0
      %v3076 = vpop.trf.xlu0
      %v3077 = vpop.trf.xlu0
      %v3078 = vpop.trf.xlu0
      %v3081 = vpack.i.b16 %v2911, %v2895
      %v3083 = vshrl.u32 %v2895, 16
      %v3084 = vshrl.u32 %v2911, 16
      %v3085 = vpack.i.b16 %v3084, %v3083
      %v3089 = vpack.i.b16 %v2943, %v2927
      %v3091 = vshrl.u32 %v2927, 16
      %v3092 = vshrl.u32 %v2943, 16
      %v3093 = vpack.i.b16 %v3092, %v3091
      %v3097 = vpack.i.b16 %v2975, %v2959
      %v3099 = vshrl.u32 %v2959, 16
      %v3100 = vshrl.u32 %v2975, 16
      %v3101 = vpack.i.b16 %v3100, %v3099
      %v3105 = vpack.i.b16 %v3007, %v2991
      %v3107 = vshrl.u32 %v2991, 16
      %v3108 = vshrl.u32 %v3007, 16
      %v3109 = vpack.i.b16 %v3108, %v3107
      %v3113 = vpack.i.b16 %v3039, %v3023
      %v3115 = vshrl.u32 %v3023, 16
      %v3116 = vshrl.u32 %v3039, 16
      %v3117 = vpack.i.b16 %v3116, %v3115
      %v3121 = vpack.i.b16 %v3071, %v3055
      %v3123 = vshrl.u32 %v3055, 16
      %v3124 = vshrl.u32 %v3071, 16
      %v3125 = vpack.i.b16 %v3124, %v3123
      %v3129 = vpack.i.b16 %v2912, %v2896
      %v3131 = vshrl.u32 %v2896, 16
      %v3132 = vshrl.u32 %v2912, 16
      %v3133 = vpack.i.b16 %v3132, %v3131
      %v3137 = vpack.i.b16 %v2944, %v2928
      %v3139 = vshrl.u32 %v2928, 16
      %v3140 = vshrl.u32 %v2944, 16
      %v3141 = vpack.i.b16 %v3140, %v3139
      %v3145 = vpack.i.b16 %v2976, %v2960
      %v3147 = vshrl.u32 %v2960, 16
      %v3148 = vshrl.u32 %v2976, 16
      %v3149 = vpack.i.b16 %v3148, %v3147
      %v3153 = vpack.i.b16 %v3008, %v2992
      %v3155 = vshrl.u32 %v2992, 16
      %v3156 = vshrl.u32 %v3008, 16
      %v3157 = vpack.i.b16 %v3156, %v3155
      %v3161 = vpack.i.b16 %v3040, %v3024
      %v3163 = vshrl.u32 %v3024, 16
      %v3164 = vshrl.u32 %v3040, 16
      %v3165 = vpack.i.b16 %v3164, %v3163
      %v3169 = vpack.i.b16 %v3072, %v3056
      %v3171 = vshrl.u32 %v3056, 16
      %v3172 = vshrl.u32 %v3072, 16
      %v3173 = vpack.i.b16 %v3172, %v3171
      %v3175 = vcombine.low %v3081, %v3097
      %v3176 = vcombine.high %v3081, %v3097
      %v3178 = vunpack.c.l.s4 1983009808
      %v3179 = vunpack.c.0.s8 %v3178
      %v3180 = vlaneseq
      %v3181 = vshrl.u32 %v3180, 7
      %v3182 = vsub.s32 %v3179, %v3181
      %v3183 = vrot.slane %v3175, %v3182
      %v3185 = vunpack.c.l.s4 1983009808
      %v3186 = vunpack.c.0.s8 %v3185
      %v3187 = vlaneseq
      %v3188 = vshrl.u32 %v3187, 7
      %v3189 = vsub.s32 %v3186, %v3188
      %v3190 = vrot.slane %v3176, %v3189
      %v3191 = vcombine.low %v3089, %v3105
      %v3192 = vcombine.high %v3089, %v3105
      %v3194 = vunpack.c.l.s4 1983009808
      %v3195 = vunpack.c.0.s8 %v3194
      %v3196 = vlaneseq
      %v3197 = vshrl.u32 %v3196, 7
      %v3198 = vsub.s32 %v3195, %v3197
      %v3199 = vrot.slane %v3191, %v3198
      %v3201 = vunpack.c.l.s4 1983009808
      %v3202 = vunpack.c.0.s8 %v3201
      %v3203 = vlaneseq
      %v3204 = vshrl.u32 %v3203, 7
      %v3205 = vsub.s32 %v3202, %v3204
      %v3206 = vrot.slane %v3192, %v3205
      %v3207 = vcombine.high %v3113, %v1332
      %v3209 = vunpack.c.l.s4 1983009808
      %v3210 = vunpack.c.0.s8 %v3209
      %v3211 = vlaneseq
      %v3212 = vshrl.u32 %v3211, 7
      %v3213 = vsub.s32 %v3210, %v3212
      %v3214 = vrot.slane %v3113, %v3213
      %v3216 = vunpack.c.l.s4 1983009808
      %v3217 = vunpack.c.0.s8 %v3216
      %v3218 = vlaneseq
      %v3219 = vshrl.u32 %v3218, 7
      %v3220 = vsub.s32 %v3217, %v3219
      %v3221 = vrot.slane %v3207, %v3220
      %v3222 = vcombine.high %v3121, %v1332
      %v3224 = vunpack.c.l.s4 1983009808
      %v3225 = vunpack.c.0.s8 %v3224
      %v3226 = vlaneseq
      %v3227 = vshrl.u32 %v3226, 7
      %v3228 = vsub.s32 %v3225, %v3227
      %v3229 = vrot.slane %v3121, %v3228
      %v3231 = vunpack.c.l.s4 1983009808
      %v3232 = vunpack.c.0.s8 %v3231
      %v3233 = vlaneseq
      %v3234 = vshrl.u32 %v3233, 7
      %v3235 = vsub.s32 %v3232, %v3234
      %v3236 = vrot.slane %v3222, %v3235
      %v3237 = vcombine.low %v3183, %v3199
      %v3238 = vcombine.high %v3183, %v3199
      %v3240 = vunpack.c.l.s4 1934713408
      %v3241 = vunpack.c.0.s8 %v3240
      %v3242 = vlaneseq
      %v3243 = vshrl.u32 %v3242, 7
      %v3244 = vsub.s32 %v3241, %v3243
      %v3245 = vrot.slane %v3237, %v3244
      %v3247 = vunpack.c.l.s4 1934713408
      %v3248 = vunpack.c.0.s8 %v3247
      %v3249 = vlaneseq
      %v3250 = vshrl.u32 %v3249, 7
      %v3251 = vsub.s32 %v3248, %v3250
      %v3252 = vrot.slane %v3238, %v3251
      %v3253 = vcombine.low %v3190, %v3206
      %v3254 = vcombine.high %v3190, %v3206
      %v3256 = vunpack.c.l.s4 1934713408
      %v3257 = vunpack.c.0.s8 %v3256
      %v3258 = vlaneseq
      %v3259 = vshrl.u32 %v3258, 7
      %v3260 = vsub.s32 %v3257, %v3259
      %v3261 = vrot.slane %v3253, %v3260
      %v3263 = vunpack.c.l.s4 1934713408
      %v3264 = vunpack.c.0.s8 %v3263
      %v3265 = vlaneseq
      %v3266 = vshrl.u32 %v3265, 7
      %v3267 = vsub.s32 %v3264, %v3266
      %v3268 = vrot.slane %v3254, %v3267
      %v3269 = vcombine.low %v3214, %v3229
      %v3270 = vcombine.high %v3214, %v3229
      %v3272 = vunpack.c.l.s4 1934713408
      %v3273 = vunpack.c.0.s8 %v3272
      %v3274 = vlaneseq
      %v3275 = vshrl.u32 %v3274, 7
      %v3276 = vsub.s32 %v3273, %v3275
      %v3277 = vrot.slane %v3269, %v3276
      %v3279 = vunpack.c.l.s4 1934713408
      %v3280 = vunpack.c.0.s8 %v3279
      %v3281 = vlaneseq
      %v3282 = vshrl.u32 %v3281, 7
      %v3283 = vsub.s32 %v3280, %v3282
      %v3284 = vrot.slane %v3270, %v3283
      %v3285 = vcombine.low %v3221, %v3236
      %v3286 = vcombine.high %v3221, %v3236
      %v3288 = vunpack.c.l.s4 1934713408
      %v3289 = vunpack.c.0.s8 %v3288
      %v3290 = vlaneseq
      %v3291 = vshrl.u32 %v3290, 7
      %v3292 = vsub.s32 %v3289, %v3291
      %v3293 = vrot.slane %v3285, %v3292
      %v3295 = vunpack.c.l.s4 1934713408
      %v3296 = vunpack.c.0.s8 %v3295
      %v3297 = vlaneseq
      %v3298 = vshrl.u32 %v3297, 7
      %v3299 = vsub.s32 %v3296, %v3298
      %v3300 = vrot.slane %v3286, %v3299
      %v3301 = vcombine.low %v3245, %v3277
      %v3302 = vcombine.high %v3245, %v3277
      %v3303 = vcombine.low %v3252, %v3284
      %v3304 = vcombine.high %v3252, %v3284
      %v3305 = vcombine.low %v3261, %v3293
      %v3306 = vcombine.high %v3261, %v3293
      %v3307 = vcombine.low %v3268, %v3300
      %v3308 = vcombine.high %v3268, %v3300
      %v3309 = vcombine.low %v3085, %v3101
      %v3310 = vcombine.high %v3085, %v3101
      %v3312 = vunpack.c.l.s4 1983009808
      %v3313 = vunpack.c.0.s8 %v3312
      %v3314 = vlaneseq
      %v3315 = vshrl.u32 %v3314, 7
      %v3316 = vsub.s32 %v3313, %v3315
      %v3317 = vrot.slane %v3309, %v3316
      %v3319 = vunpack.c.l.s4 1983009808
      %v3320 = vunpack.c.0.s8 %v3319
      %v3321 = vlaneseq
      %v3322 = vshrl.u32 %v3321, 7
      %v3323 = vsub.s32 %v3320, %v3322
      %v3324 = vrot.slane %v3310, %v3323
      %v3325 = vcombine.low %v3093, %v3109
      %v3326 = vcombine.high %v3093, %v3109
      %v3328 = vunpack.c.l.s4 1983009808
      %v3329 = vunpack.c.0.s8 %v3328
      %v3330 = vlaneseq
      %v3331 = vshrl.u32 %v3330, 7
      %v3332 = vsub.s32 %v3329, %v3331
      %v3333 = vrot.slane %v3325, %v3332
      %v3335 = vunpack.c.l.s4 1983009808
      %v3336 = vunpack.c.0.s8 %v3335
      %v3337 = vlaneseq
      %v3338 = vshrl.u32 %v3337, 7
      %v3339 = vsub.s32 %v3336, %v3338
      %v3340 = vrot.slane %v3326, %v3339
      %v3341 = vcombine.high %v3117, %v1335
      %v3343 = vunpack.c.l.s4 1983009808
      %v3344 = vunpack.c.0.s8 %v3343
      %v3345 = vlaneseq
      %v3346 = vshrl.u32 %v3345, 7
      %v3347 = vsub.s32 %v3344, %v3346
      %v3348 = vrot.slane %v3117, %v3347
      %v3350 = vunpack.c.l.s4 1983009808
      %v3351 = vunpack.c.0.s8 %v3350
      %v3352 = vlaneseq
      %v3353 = vshrl.u32 %v3352, 7
      %v3354 = vsub.s32 %v3351, %v3353
      %v3355 = vrot.slane %v3341, %v3354
      %v3356 = vcombine.high %v3125, %v1335
      %v3358 = vunpack.c.l.s4 1983009808
      %v3359 = vunpack.c.0.s8 %v3358
      %v3360 = vlaneseq
      %v3361 = vshrl.u32 %v3360, 7
      %v3362 = vsub.s32 %v3359, %v3361
      %v3363 = vrot.slane %v3125, %v3362
      %v3365 = vunpack.c.l.s4 1983009808
      %v3366 = vunpack.c.0.s8 %v3365
      %v3367 = vlaneseq
      %v3368 = vshrl.u32 %v3367, 7
      %v3369 = vsub.s32 %v3366, %v3368
      %v3370 = vrot.slane %v3356, %v3369
      %v3371 = vcombine.low %v3317, %v3333
      %v3372 = vcombine.high %v3317, %v3333
      %v3374 = vunpack.c.l.s4 1934713408
      %v3375 = vunpack.c.0.s8 %v3374
      %v3376 = vlaneseq
      %v3377 = vshrl.u32 %v3376, 7
      %v3378 = vsub.s32 %v3375, %v3377
      %v3379 = vrot.slane %v3371, %v3378
      %v3381 = vunpack.c.l.s4 1934713408
      %v3382 = vunpack.c.0.s8 %v3381
      %v3383 = vlaneseq
      %v3384 = vshrl.u32 %v3383, 7
      %v3385 = vsub.s32 %v3382, %v3384
      %v3386 = vrot.slane %v3372, %v3385
      %v3387 = vcombine.low %v3324, %v3340
      %v3388 = vcombine.high %v3324, %v3340
      %v3390 = vunpack.c.l.s4 1934713408
      %v3391 = vunpack.c.0.s8 %v3390
      %v3392 = vlaneseq
      %v3393 = vshrl.u32 %v3392, 7
      %v3394 = vsub.s32 %v3391, %v3393
      %v3395 = vrot.slane %v3387, %v3394
      %v3397 = vunpack.c.l.s4 1934713408
      %v3398 = vunpack.c.0.s8 %v3397
      %v3399 = vlaneseq
      %v3400 = vshrl.u32 %v3399, 7
      %v3401 = vsub.s32 %v3398, %v3400
      %v3402 = vrot.slane %v3388, %v3401
      %v3403 = vcombine.low %v3348, %v3363
      %v3404 = vcombine.high %v3348, %v3363
      %v3406 = vunpack.c.l.s4 1934713408
      %v3407 = vunpack.c.0.s8 %v3406
      %v3408 = vlaneseq
      %v3409 = vshrl.u32 %v3408, 7
      %v3410 = vsub.s32 %v3407, %v3409
      %v3411 = vrot.slane %v3403, %v3410
      %v3413 = vunpack.c.l.s4 1934713408
      %v3414 = vunpack.c.0.s8 %v3413
      %v3415 = vlaneseq
      %v3416 = vshrl.u32 %v3415, 7
      %v3417 = vsub.s32 %v3414, %v3416
      %v3418 = vrot.slane %v3404, %v3417
      %v3419 = vcombine.low %v3355, %v3370
      %v3420 = vcombine.high %v3355, %v3370
      %v3422 = vunpack.c.l.s4 1934713408
      %v3423 = vunpack.c.0.s8 %v3422
      %v3424 = vlaneseq
      %v3425 = vshrl.u32 %v3424, 7
      %v3426 = vsub.s32 %v3423, %v3425
      %v3427 = vrot.slane %v3419, %v3426
      %v3429 = vunpack.c.l.s4 1934713408
      %v3430 = vunpack.c.0.s8 %v3429
      %v3431 = vlaneseq
      %v3432 = vshrl.u32 %v3431, 7
      %v3433 = vsub.s32 %v3430, %v3432
      %v3434 = vrot.slane %v3420, %v3433
      %v3435 = vcombine.low %v3379, %v3411
      %v3436 = vcombine.high %v3379, %v3411
      %v3437 = vcombine.low %v3386, %v3418
      %v3438 = vcombine.high %v3386, %v3418
      %v3439 = vcombine.low %v3395, %v3427
      %v3440 = vcombine.high %v3395, %v3427
      %v3441 = vcombine.low %v3402, %v3434
      %v3442 = vcombine.high %v3402, %v3434
      %v3443 = vcombine.low %v3129, %v3145
      %v3444 = vcombine.high %v3129, %v3145
      %v3446 = vunpack.c.l.s4 1983009808
      %v3447 = vunpack.c.0.s8 %v3446
      %v3448 = vlaneseq
      %v3449 = vshrl.u32 %v3448, 7
      %v3450 = vsub.s32 %v3447, %v3449
      %v3451 = vrot.slane %v3443, %v3450
      %v3453 = vunpack.c.l.s4 1983009808
      %v3454 = vunpack.c.0.s8 %v3453
      %v3455 = vlaneseq
      %v3456 = vshrl.u32 %v3455, 7
      %v3457 = vsub.s32 %v3454, %v3456
      %v3458 = vrot.slane %v3444, %v3457
      %v3459 = vcombine.low %v3137, %v3153
      %v3460 = vcombine.high %v3137, %v3153
      %v3462 = vunpack.c.l.s4 1983009808
      %v3463 = vunpack.c.0.s8 %v3462
      %v3464 = vlaneseq
      %v3465 = vshrl.u32 %v3464, 7
      %v3466 = vsub.s32 %v3463, %v3465
      %v3467 = vrot.slane %v3459, %v3466
      %v3469 = vunpack.c.l.s4 1983009808
      %v3470 = vunpack.c.0.s8 %v3469
      %v3471 = vlaneseq
      %v3472 = vshrl.u32 %v3471, 7
      %v3473 = vsub.s32 %v3470, %v3472
      %v3474 = vrot.slane %v3460, %v3473
      %v3475 = vcombine.high %v3161, %v1332
      %v3477 = vunpack.c.l.s4 1983009808
      %v3478 = vunpack.c.0.s8 %v3477
      %v3479 = vlaneseq
      %v3480 = vshrl.u32 %v3479, 7
      %v3481 = vsub.s32 %v3478, %v3480
      %v3482 = vrot.slane %v3161, %v3481
      %v3484 = vunpack.c.l.s4 1983009808
      %v3485 = vunpack.c.0.s8 %v3484
      %v3486 = vlaneseq
      %v3487 = vshrl.u32 %v3486, 7
      %v3488 = vsub.s32 %v3485, %v3487
      %v3489 = vrot.slane %v3475, %v3488
      %v3490 = vcombine.high %v3169, %v1332
      %v3492 = vunpack.c.l.s4 1983009808
      %v3493 = vunpack.c.0.s8 %v3492
      %v3494 = vlaneseq
      %v3495 = vshrl.u32 %v3494, 7
      %v3496 = vsub.s32 %v3493, %v3495
      %v3497 = vrot.slane %v3169, %v3496
      %v3499 = vunpack.c.l.s4 1983009808
      %v3500 = vunpack.c.0.s8 %v3499
      %v3501 = vlaneseq
      %v3502 = vshrl.u32 %v3501, 7
      %v3503 = vsub.s32 %v3500, %v3502
      %v3504 = vrot.slane %v3490, %v3503
      %v3505 = vcombine.low %v3451, %v3467
      %v3506 = vcombine.high %v3451, %v3467
      %v3508 = vunpack.c.l.s4 1934713408
      %v3509 = vunpack.c.0.s8 %v3508
      %v3510 = vlaneseq
      %v3511 = vshrl.u32 %v3510, 7
      %v3512 = vsub.s32 %v3509, %v3511
      %v3513 = vrot.slane %v3505, %v3512
      %v3515 = vunpack.c.l.s4 1934713408
      %v3516 = vunpack.c.0.s8 %v3515
      %v3517 = vlaneseq
      %v3518 = vshrl.u32 %v3517, 7
      %v3519 = vsub.s32 %v3516, %v3518
      %v3520 = vrot.slane %v3506, %v3519
      %v3521 = vcombine.low %v3458, %v3474
      %v3522 = vcombine.high %v3458, %v3474
      %v3524 = vunpack.c.l.s4 1934713408
      %v3525 = vunpack.c.0.s8 %v3524
      %v3526 = vlaneseq
      %v3527 = vshrl.u32 %v3526, 7
      %v3528 = vsub.s32 %v3525, %v3527
      %v3529 = vrot.slane %v3521, %v3528
      %v3531 = vunpack.c.l.s4 1934713408
      %v3532 = vunpack.c.0.s8 %v3531
      %v3533 = vlaneseq
      %v3534 = vshrl.u32 %v3533, 7
      %v3535 = vsub.s32 %v3532, %v3534
      %v3536 = vrot.slane %v3522, %v3535
      %v3537 = vcombine.low %v3482, %v3497
      %v3538 = vcombine.high %v3482, %v3497
      %v3540 = vunpack.c.l.s4 1934713408
      %v3541 = vunpack.c.0.s8 %v3540
      %v3542 = vlaneseq
      %v3543 = vshrl.u32 %v3542, 7
      %v3544 = vsub.s32 %v3541, %v3543
      %v3545 = vrot.slane %v3537, %v3544
      %v3547 = vunpack.c.l.s4 1934713408
      %v3548 = vunpack.c.0.s8 %v3547
      %v3549 = vlaneseq
      %v3550 = vshrl.u32 %v3549, 7
      %v3551 = vsub.s32 %v3548, %v3550
      %v3552 = vrot.slane %v3538, %v3551
      %v3553 = vcombine.low %v3489, %v3504
      %v3554 = vcombine.high %v3489, %v3504
      %v3556 = vunpack.c.l.s4 1934713408
      %v3557 = vunpack.c.0.s8 %v3556
      %v3558 = vlaneseq
      %v3559 = vshrl.u32 %v3558, 7
      %v3560 = vsub.s32 %v3557, %v3559
      %v3561 = vrot.slane %v3553, %v3560
      %v3563 = vunpack.c.l.s4 1934713408
      %v3564 = vunpack.c.0.s8 %v3563
      %v3565 = vlaneseq
      %v3566 = vshrl.u32 %v3565, 7
      %v3567 = vsub.s32 %v3564, %v3566
      %v3568 = vrot.slane %v3554, %v3567
      %v3569 = vcombine.low %v3513, %v3545
      %v3570 = vcombine.high %v3513, %v3545
      %v3571 = vcombine.low %v3520, %v3552
      %v3572 = vcombine.high %v3520, %v3552
      %v3573 = vcombine.low %v3529, %v3561
      %v3574 = vcombine.high %v3529, %v3561
      %v3575 = vcombine.low %v3536, %v3568
      %v3576 = vcombine.high %v3536, %v3568
      %v3577 = vcombine.low %v3133, %v3149
      %v3578 = vcombine.high %v3133, %v3149
      %v3580 = vunpack.c.l.s4 1983009808
      %v3581 = vunpack.c.0.s8 %v3580
      %v3582 = vlaneseq
      %v3583 = vshrl.u32 %v3582, 7
      %v3584 = vsub.s32 %v3581, %v3583
      %v3585 = vrot.slane %v3577, %v3584
      %v3587 = vunpack.c.l.s4 1983009808
      %v3588 = vunpack.c.0.s8 %v3587
      %v3589 = vlaneseq
      %v3590 = vshrl.u32 %v3589, 7
      %v3591 = vsub.s32 %v3588, %v3590
      %v3592 = vrot.slane %v3578, %v3591
      %v3593 = vcombine.low %v3141, %v3157
      %v3594 = vcombine.high %v3141, %v3157
      %v3596 = vunpack.c.l.s4 1983009808
      %v3597 = vunpack.c.0.s8 %v3596
      %v3598 = vlaneseq
      %v3599 = vshrl.u32 %v3598, 7
      %v3600 = vsub.s32 %v3597, %v3599
      %v3601 = vrot.slane %v3593, %v3600
      %v3603 = vunpack.c.l.s4 1983009808
      %v3604 = vunpack.c.0.s8 %v3603
      %v3605 = vlaneseq
      %v3606 = vshrl.u32 %v3605, 7
      %v3607 = vsub.s32 %v3604, %v3606
      %v3608 = vrot.slane %v3594, %v3607
      %v3609 = vcombine.high %v3165, %v1335
      %v3611 = vunpack.c.l.s4 1983009808
      %v3612 = vunpack.c.0.s8 %v3611
      %v3613 = vlaneseq
      %v3614 = vshrl.u32 %v3613, 7
      %v3615 = vsub.s32 %v3612, %v3614
      %v3616 = vrot.slane %v3165, %v3615
      %v3618 = vunpack.c.l.s4 1983009808
      %v3619 = vunpack.c.0.s8 %v3618
      %v3620 = vlaneseq
      %v3621 = vshrl.u32 %v3620, 7
      %v3622 = vsub.s32 %v3619, %v3621
      %v3623 = vrot.slane %v3609, %v3622
      %v3624 = vcombine.high %v3173, %v1335
      %v3626 = vunpack.c.l.s4 1983009808
      %v3627 = vunpack.c.0.s8 %v3626
      %v3628 = vlaneseq
      %v3629 = vshrl.u32 %v3628, 7
      %v3630 = vsub.s32 %v3627, %v3629
      %v3631 = vrot.slane %v3173, %v3630
      %v3633 = vunpack.c.l.s4 1983009808
      %v3634 = vunpack.c.0.s8 %v3633
      %v3635 = vlaneseq
      %v3636 = vshrl.u32 %v3635, 7
      %v3637 = vsub.s32 %v3634, %v3636
      %v3638 = vrot.slane %v3624, %v3637
      %v3639 = vcombine.low %v3585, %v3601
      %v3640 = vcombine.high %v3585, %v3601
      %v3642 = vunpack.c.l.s4 1934713408
      %v3643 = vunpack.c.0.s8 %v3642
      %v3644 = vlaneseq
      %v3645 = vshrl.u32 %v3644, 7
      %v3646 = vsub.s32 %v3643, %v3645
      %v3647 = vrot.slane %v3639, %v3646
      %v3649 = vunpack.c.l.s4 1934713408
      %v3650 = vunpack.c.0.s8 %v3649
      %v3651 = vlaneseq
      %v3652 = vshrl.u32 %v3651, 7
      %v3653 = vsub.s32 %v3650, %v3652
      %v3654 = vrot.slane %v3640, %v3653
      %v3655 = vcombine.low %v3592, %v3608
      %v3656 = vcombine.high %v3592, %v3608
      %v3658 = vunpack.c.l.s4 1934713408
      %v3659 = vunpack.c.0.s8 %v3658
      %v3660 = vlaneseq
      %v3661 = vshrl.u32 %v3660, 7
      %v3662 = vsub.s32 %v3659, %v3661
      %v3663 = vrot.slane %v3655, %v3662
      %v3665 = vunpack.c.l.s4 1934713408
      %v3666 = vunpack.c.0.s8 %v3665
      %v3667 = vlaneseq
      %v3668 = vshrl.u32 %v3667, 7
      %v3669 = vsub.s32 %v3666, %v3668
      %v3670 = vrot.slane %v3656, %v3669
      %v3671 = vcombine.low %v3616, %v3631
      %v3672 = vcombine.high %v3616, %v3631
      %v3674 = vunpack.c.l.s4 1934713408
      %v3675 = vunpack.c.0.s8 %v3674
      %v3676 = vlaneseq
      %v3677 = vshrl.u32 %v3676, 7
      %v3678 = vsub.s32 %v3675, %v3677
      %v3679 = vrot.slane %v3671, %v3678
      %v3681 = vunpack.c.l.s4 1934713408
      %v3682 = vunpack.c.0.s8 %v3681
      %v3683 = vlaneseq
      %v3684 = vshrl.u32 %v3683, 7
      %v3685 = vsub.s32 %v3682, %v3684
      %v3686 = vrot.slane %v3672, %v3685
      %v3687 = vcombine.low %v3623, %v3638
      %v3688 = vcombine.high %v3623, %v3638
      %v3690 = vunpack.c.l.s4 1934713408
      %v3691 = vunpack.c.0.s8 %v3690
      %v3692 = vlaneseq
      %v3693 = vshrl.u32 %v3692, 7
      %v3694 = vsub.s32 %v3691, %v3693
      %v3695 = vrot.slane %v3687, %v3694
      %v3697 = vunpack.c.l.s4 1934713408
      %v3698 = vunpack.c.0.s8 %v3697
      %v3699 = vlaneseq
      %v3700 = vshrl.u32 %v3699, 7
      %v3701 = vsub.s32 %v3698, %v3700
      %v3702 = vrot.slane %v3688, %v3701
      %v3703 = vcombine.low %v3647, %v3679
      %v3704 = vcombine.high %v3647, %v3679
      %v3705 = vcombine.low %v3654, %v3686
      %v3706 = vcombine.high %v3654, %v3686
      %v3707 = vcombine.low %v3663, %v3695
      %v3708 = vcombine.high %v3663, %v3695
      %v3709 = vcombine.low %v3670, %v3702
      %v3710 = vcombine.high %v3670, %v3702
      %3711 = vxpose.xlu0.c.b16.start [1/8] %v3301, 128
      %3712 = vxpose.xlu0.c.b16.cont [2/8] 0, 128
      %3713 = vxpose.xlu0.c.b16.cont [3/8] 0, 128
      %3714 = vxpose.xlu0.c.b16.cont [4/8] 0, 128
      %3715 = vxpose.xlu0.c.b16.cont [5/8] 0, 128
      %3716 = vxpose.xlu0.c.b16.cont [6/8] 0, 128
      %3717 = vxpose.xlu0.c.b16.cont [7/8] 0, 128
      %3718 = vxpose.xlu0.c.b16.end [8/8] 0, 128
      %v3719 = vpop.trf.xlu0
      %v3720 = vpop.trf.xlu0
      %v3721 = vpop.trf.xlu0
      %v3722 = vpop.trf.xlu0
      %v3723 = vpop.trf.xlu0
      %v3724 = vpop.trf.xlu0
      %v3725 = vpop.trf.xlu0
      %v3726 = vpop.trf.xlu0
      %3727 = vxpose.xlu0.c.b16.start [1/8] %v3435, 128
      %3728 = vxpose.xlu0.c.b16.cont [2/8] 0, 128
      %3729 = vxpose.xlu0.c.b16.cont [3/8] 0, 128
      %3730 = vxpose.xlu0.c.b16.cont [4/8] 0, 128
      %3731 = vxpose.xlu0.c.b16.cont [5/8] 0, 128
      %3732 = vxpose.xlu0.c.b16.cont [6/8] 0, 128
      %3733 = vxpose.xlu0.c.b16.cont [7/8] 0, 128
      %3734 = vxpose.xlu0.c.b16.end [8/8] 0, 128
      %v3735 = vpop.trf.xlu0
      %v3736 = vpop.trf.xlu0
      %v3737 = vpop.trf.xlu0
      %v3738 = vpop.trf.xlu0
      %v3739 = vpop.trf.xlu0
      %v3740 = vpop.trf.xlu0
      %v3741 = vpop.trf.xlu0
      %v3742 = vpop.trf.xlu0
      %3743 = vxpose.xlu0.c.b16.start [1/8] %v3302, 128
      %3744 = vxpose.xlu0.c.b16.cont [2/8] 0, 128
      %3745 = vxpose.xlu0.c.b16.cont [3/8] 0, 128
      %3746 = vxpose.xlu0.c.b16.cont [4/8] 0, 128
      %3747 = vxpose.xlu0.c.b16.cont [5/8] 0, 128
      %3748 = vxpose.xlu0.c.b16.cont [6/8] 0, 128
      %3749 = vxpose.xlu0.c.b16.cont [7/8] 0, 128
      %3750 = vxpose.xlu0.c.b16.end [8/8] 0, 128
      %v3751 = vpop.trf.xlu0
      %v3752 = vpop.trf.xlu0
      %v3753 = vpop.trf.xlu0
      %v3754 = vpop.trf.xlu0
      %v3755 = vpop.trf.xlu0
      %v3756 = vpop.trf.xlu0
      %v3757 = vpop.trf.xlu0
      %v3758 = vpop.trf.xlu0
      %3759 = vxpose.xlu0.c.b16.start [1/8] %v3436, 128
      %3760 = vxpose.xlu0.c.b16.cont [2/8] 0, 128
      %3761 = vxpose.xlu0.c.b16.cont [3/8] 0, 128
      %3762 = vxpose.xlu0.c.b16.cont [4/8] 0, 128
      %3763 = vxpose.xlu0.c.b16.cont [5/8] 0, 128
      %3764 = vxpose.xlu0.c.b16.cont [6/8] 0, 128
      %3765 = vxpose.xlu0.c.b16.cont [7/8] 0, 128
      %3766 = vxpose.xlu0.c.b16.end [8/8] 0, 128
      %v3767 = vpop.trf.xlu0
      %v3768 = vpop.trf.xlu0
      %v3769 = vpop.trf.xlu0
      %v3770 = vpop.trf.xlu0
      %v3771 = vpop.trf.xlu0
      %v3772 = vpop.trf.xlu0
      %v3773 = vpop.trf.xlu0
      %v3774 = vpop.trf.xlu0
      %3775 = vxpose.xlu0.c.b16.start [1/8] %v3303, 128
      %3776 = vxpose.xlu0.c.b16.cont [2/8] 0, 128
      %3777 = vxpose.xlu0.c.b16.cont [3/8] 0, 128
      %3778 = vxpose.xlu0.c.b16.cont [4/8] 0, 128
      %3779 = vxpose.xlu0.c.b16.cont [5/8] 0, 128
      %3780 = vxpose.xlu0.c.b16.cont [6/8] 0, 128
      %3781 = vxpose.xlu0.c.b16.cont [7/8] 0, 128
      %3782 = vxpose.xlu0.c.b16.end [8/8] 0, 128
      %v3783 = vpop.trf.xlu0
      %v3784 = vpop.trf.xlu0
      %v3785 = vpop.trf.xlu0
      %v3786 = vpop.trf.xlu0
      %v3787 = vpop.trf.xlu0
      %v3788 = vpop.trf.xlu0
      %v3789 = vpop.trf.xlu0
      %v3790 = vpop.trf.xlu0
      %3791 = vxpose.xlu0.c.b16.start [1/8] %v3437, 128
      %3792 = vxpose.xlu0.c.b16.cont [2/8] 0, 128
      %3793 = vxpose.xlu0.c.b16.cont [3/8] 0, 128
      %3794 = vxpose.xlu0.c.b16.cont [4/8] 0, 128
      %3795 = vxpose.xlu0.c.b16.cont [5/8] 0, 128
      %3796 = vxpose.xlu0.c.b16.cont [6/8] 0, 128
      %3797 = vxpose.xlu0.c.b16.cont [7/8] 0, 128
      %3798 = vxpose.xlu0.c.b16.end [8/8] 0, 128
      %v3799 = vpop.trf.xlu0
      %v3800 = vpop.trf.xlu0
      %v3801 = vpop.trf.xlu0
      %v3802 = vpop.trf.xlu0
      %v3803 = vpop.trf.xlu0
      %v3804 = vpop.trf.xlu0
      %v3805 = vpop.trf.xlu0
      %v3806 = vpop.trf.xlu0
      %3807 = vxpose.xlu0.c.b16.start [1/8] %v3304, 128
      %3808 = vxpose.xlu0.c.b16.cont [2/8] 0, 128
      %3809 = vxpose.xlu0.c.b16.cont [3/8] 0, 128
      %3810 = vxpose.xlu0.c.b16.cont [4/8] 0, 128
      %3811 = vxpose.xlu0.c.b16.cont [5/8] 0, 128
      %3812 = vxpose.xlu0.c.b16.cont [6/8] 0, 128
      %3813 = vxpose.xlu0.c.b16.cont [7/8] 0, 128
      %3814 = vxpose.xlu0.c.b16.end [8/8] 0, 128
      %v3815 = vpop.trf.xlu0
      %v3816 = vpop.trf.xlu0
      %v3817 = vpop.trf.xlu0
      %v3818 = vpop.trf.xlu0
      %v3819 = vpop.trf.xlu0
      %v3820 = vpop.trf.xlu0
      %v3821 = vpop.trf.xlu0
      %v3822 = vpop.trf.xlu0
      %3823 = vxpose.xlu0.c.b16.start [1/8] %v3438, 128
      %3824 = vxpose.xlu0.c.b16.cont [2/8] 0, 128
      %3825 = vxpose.xlu0.c.b16.cont [3/8] 0, 128
      %3826 = vxpose.xlu0.c.b16.cont [4/8] 0, 128
      %3827 = vxpose.xlu0.c.b16.cont [5/8] 0, 128
      %3828 = vxpose.xlu0.c.b16.cont [6/8] 0, 128
      %3829 = vxpose.xlu0.c.b16.cont [7/8] 0, 128
      %3830 = vxpose.xlu0.c.b16.end [8/8] 0, 128
      %v3831 = vpop.trf.xlu0
      %v3832 = vpop.trf.xlu0
      %v3833 = vpop.trf.xlu0
      %v3834 = vpop.trf.xlu0
      %v3835 = vpop.trf.xlu0
      %v3836 = vpop.trf.xlu0
      %v3837 = vpop.trf.xlu0
      %v3838 = vpop.trf.xlu0
      %3839 = vxpose.xlu0.c.b16.start [1/8] %v3305, 128
      %3840 = vxpose.xlu0.c.b16.cont [2/8] 0, 128
      %3841 = vxpose.xlu0.c.b16.cont [3/8] 0, 128
      %3842 = vxpose.xlu0.c.b16.cont [4/8] 0, 128
      %3843 = vxpose.xlu0.c.b16.cont [5/8] 0, 128
      %3844 = vxpose.xlu0.c.b16.cont [6/8] 0, 128
      %3845 = vxpose.xlu0.c.b16.cont [7/8] 0, 128
      %3846 = vxpose.xlu0.c.b16.end [8/8] 0, 128
      %v3847 = vpop.trf.xlu0
      %v3848 = vpop.trf.xlu0
      %v3849 = vpop.trf.xlu0
      %v3850 = vpop.trf.xlu0
      %v3851 = vpop.trf.xlu0
      %v3852 = vpop.trf.xlu0
      %v3853 = vpop.trf.xlu0
      %v3854 = vpop.trf.xlu0
      %3855 = vxpose.xlu0.c.b16.start [1/8] %v3439, 128
      %3856 = vxpose.xlu0.c.b16.cont [2/8] 0, 128
      %3857 = vxpose.xlu0.c.b16.cont [3/8] 0, 128
      %3858 = vxpose.xlu0.c.b16.cont [4/8] 0, 128
      %3859 = vxpose.xlu0.c.b16.cont [5/8] 0, 128
      %3860 = vxpose.xlu0.c.b16.cont [6/8] 0, 128
      %3861 = vxpose.xlu0.c.b16.cont [7/8] 0, 128
      %3862 = vxpose.xlu0.c.b16.end [8/8] 0, 128
      %v3863 = vpop.trf.xlu0
      %v3864 = vpop.trf.xlu0
      %v3865 = vpop.trf.xlu0
      %v3866 = vpop.trf.xlu0
      %v3867 = vpop.trf.xlu0
      %v3868 = vpop.trf.xlu0
      %v3869 = vpop.trf.xlu0
      %v3870 = vpop.trf.xlu0
      %3871 = vxpose.xlu0.c.b16.start [1/8] %v3306, 128
      %3872 = vxpose.xlu0.c.b16.cont [2/8] 0, 128
      %3873 = vxpose.xlu0.c.b16.cont [3/8] 0, 128
      %3874 = vxpose.xlu0.c.b16.cont [4/8] 0, 128
      %3875 = vxpose.xlu0.c.b16.cont [5/8] 0, 128
      %3876 = vxpose.xlu0.c.b16.cont [6/8] 0, 128
      %3877 = vxpose.xlu0.c.b16.cont [7/8] 0, 128
      %3878 = vxpose.xlu0.c.b16.end [8/8] 0, 128
      %v3879 = vpop.trf.xlu0
      %v3880 = vpop.trf.xlu0
      %v3881 = vpop.trf.xlu0
      %v3882 = vpop.trf.xlu0
      %v3883 = vpop.trf.xlu0
      %v3884 = vpop.trf.xlu0
      %v3885 = vpop.trf.xlu0
      %v3886 = vpop.trf.xlu0
      %3887 = vxpose.xlu0.c.b16.start [1/8] %v3440, 128
      %3888 = vxpose.xlu0.c.b16.cont [2/8] 0, 128
      %3889 = vxpose.xlu0.c.b16.cont [3/8] 0, 128
      %3890 = vxpose.xlu0.c.b16.cont [4/8] 0, 128
      %3891 = vxpose.xlu0.c.b16.cont [5/8] 0, 128
      %3892 = vxpose.xlu0.c.b16.cont [6/8] 0, 128
      %3893 = vxpose.xlu0.c.b16.cont [7/8] 0, 128
      %3894 = vxpose.xlu0.c.b16.end [8/8] 0, 128
      %v3895 = vpop.trf.xlu0
      %v3896 = vpop.trf.xlu0
      %v3897 = vpop.trf.xlu0
      %v3898 = vpop.trf.xlu0
      %v3899 = vpop.trf.xlu0
      %v3900 = vpop.trf.xlu0
      %v3901 = vpop.trf.xlu0
      %v3902 = vpop.trf.xlu0
      %3903 = vxpose.xlu0.c.b16.start [1/8] %v3307, 128
      %3904 = vxpose.xlu0.c.b16.cont [2/8] 0, 128
      %3905 = vxpose.xlu0.c.b16.cont [3/8] 0, 128
      %3906 = vxpose.xlu0.c.b16.cont [4/8] 0, 128
      %3907 = vxpose.xlu0.c.b16.cont [5/8] 0, 128
      %3908 = vxpose.xlu0.c.b16.cont [6/8] 0, 128
      %3909 = vxpose.xlu0.c.b16.cont [7/8] 0, 128
      %3910 = vxpose.xlu0.c.b16.end [8/8] 0, 128
      %v3911 = vpop.trf.xlu0
      %v3912 = vpop.trf.xlu0
      %v3913 = vpop.trf.xlu0
      %v3914 = vpop.trf.xlu0
      %v3915 = vpop.trf.xlu0
      %v3916 = vpop.trf.xlu0
      %v3917 = vpop.trf.xlu0
      %v3918 = vpop.trf.xlu0
      %3919 = vxpose.xlu0.c.b16.start [1/8] %v3441, 128
      %3920 = vxpose.xlu0.c.b16.cont [2/8] 0, 128
      %3921 = vxpose.xlu0.c.b16.cont [3/8] 0, 128
      %3922 = vxpose.xlu0.c.b16.cont [4/8] 0, 128
      %3923 = vxpose.xlu0.c.b16.cont [5/8] 0, 128
      %3924 = vxpose.xlu0.c.b16.cont [6/8] 0, 128
      %3925 = vxpose.xlu0.c.b16.cont [7/8] 0, 128
      %3926 = vxpose.xlu0.c.b16.end [8/8] 0, 128
      %v3927 = vpop.trf.xlu0
      %v3928 = vpop.trf.xlu0
      %v3929 = vpop.trf.xlu0
      %v3930 = vpop.trf.xlu0
      %v3931 = vpop.trf.xlu0
      %v3932 = vpop.trf.xlu0
      %v3933 = vpop.trf.xlu0
      %v3934 = vpop.trf.xlu0
      %3935 = vxpose.xlu0.c.b16.start [1/8] %v3308, 128
      %3936 = vxpose.xlu0.c.b16.cont [2/8] 0, 128
      %3937 = vxpose.xlu0.c.b16.cont [3/8] 0, 128
      %3938 = vxpose.xlu0.c.b16.cont [4/8] 0, 128
      %3939 = vxpose.xlu0.c.b16.cont [5/8] 0, 128
      %3940 = vxpose.xlu0.c.b16.cont [6/8] 0, 128
      %3941 = vxpose.xlu0.c.b16.cont [7/8] 0, 128
      %3942 = vxpose.xlu0.c.b16.end [8/8] 0, 128
      %v3943 = vpop.trf.xlu0
      %v3944 = vpop.trf.xlu0
      %v3945 = vpop.trf.xlu0
      %v3946 = vpop.trf.xlu0
      %v3947 = vpop.trf.xlu0
      %v3948 = vpop.trf.xlu0
      %v3949 = vpop.trf.xlu0
      %v3950 = vpop.trf.xlu0
      %3951 = vxpose.xlu0.c.b16.start [1/8] %v3442, 128
      %3952 = vxpose.xlu0.c.b16.cont [2/8] 0, 128
      %3953 = vxpose.xlu0.c.b16.cont [3/8] 0, 128
      %3954 = vxpose.xlu0.c.b16.cont [4/8] 0, 128
      %3955 = vxpose.xlu0.c.b16.cont [5/8] 0, 128
      %3956 = vxpose.xlu0.c.b16.cont [6/8] 0, 128
      %3957 = vxpose.xlu0.c.b16.cont [7/8] 0, 128
      %3958 = vxpose.xlu0.c.b16.end [8/8] 0, 128
      %v3959 = vpop.trf.xlu0
      %v3960 = vpop.trf.xlu0
      %v3961 = vpop.trf.xlu0
      %v3962 = vpop.trf.xlu0
      %v3963 = vpop.trf.xlu0
      %v3964 = vpop.trf.xlu0
      %v3965 = vpop.trf.xlu0
      %v3966 = vpop.trf.xlu0
      %3967 = vxpose.xlu0.c.b16.start [1/8] %v3569, 128
      %3968 = vxpose.xlu0.c.b16.cont [2/8] 0, 128
      %3969 = vxpose.xlu0.c.b16.cont [3/8] 0, 128
      %3970 = vxpose.xlu0.c.b16.cont [4/8] 0, 128
      %3971 = vxpose.xlu0.c.b16.cont [5/8] 0, 128
      %3972 = vxpose.xlu0.c.b16.cont [6/8] 0, 128
      %3973 = vxpose.xlu0.c.b16.cont [7/8] 0, 128
      %3974 = vxpose.xlu0.c.b16.end [8/8] 0, 128
      %v3975 = vpop.trf.xlu0
      %v3976 = vpop.trf.xlu0
      %v3977 = vpop.trf.xlu0
      %v3978 = vpop.trf.xlu0
      %v3979 = vpop.trf.xlu0
      %v3980 = vpop.trf.xlu0
      %v3981 = vpop.trf.xlu0
      %v3982 = vpop.trf.xlu0
      %3983 = vxpose.xlu0.c.b16.start [1/8] %v3703, 128
      %3984 = vxpose.xlu0.c.b16.cont [2/8] 0, 128
      %3985 = vxpose.xlu0.c.b16.cont [3/8] 0, 128
      %3986 = vxpose.xlu0.c.b16.cont [4/8] 0, 128
      %3987 = vxpose.xlu0.c.b16.cont [5/8] 0, 128
      %3988 = vxpose.xlu0.c.b16.cont [6/8] 0, 128
      %3989 = vxpose.xlu0.c.b16.cont [7/8] 0, 128
      %3990 = vxpose.xlu0.c.b16.end [8/8] 0, 128
      %v3991 = vpop.trf.xlu0
      %v3992 = vpop.trf.xlu0
      %v3993 = vpop.trf.xlu0
      %v3994 = vpop.trf.xlu0
      %v3995 = vpop.trf.xlu0
      %v3996 = vpop.trf.xlu0
      %v3997 = vpop.trf.xlu0
      %v3998 = vpop.trf.xlu0
      %3999 = vxpose.xlu0.c.b16.start [1/8] %v3570, 128
      %4000 = vxpose.xlu0.c.b16.cont [2/8] 0, 128
      %4001 = vxpose.xlu0.c.b16.cont [3/8] 0, 128
      %4002 = vxpose.xlu0.c.b16.cont [4/8] 0, 128
      %4003 = vxpose.xlu0.c.b16.cont [5/8] 0, 128
      %4004 = vxpose.xlu0.c.b16.cont [6/8] 0, 128
      %4005 = vxpose.xlu0.c.b16.cont [7/8] 0, 128
      %4006 = vxpose.xlu0.c.b16.end [8/8] 0, 128
      %v4007 = vpop.trf.xlu0
      %v4008 = vpop.trf.xlu0
      %v4009 = vpop.trf.xlu0
      %v4010 = vpop.trf.xlu0
      %v4011 = vpop.trf.xlu0
      %v4012 = vpop.trf.xlu0
      %v4013 = vpop.trf.xlu0
      %v4014 = vpop.trf.xlu0
      %4015 = vxpose.xlu0.c.b16.start [1/8] %v3704, 128
      %4016 = vxpose.xlu0.c.b16.cont [2/8] 0, 128
      %4017 = vxpose.xlu0.c.b16.cont [3/8] 0, 128
      %4018 = vxpose.xlu0.c.b16.cont [4/8] 0, 128
      %4019 = vxpose.xlu0.c.b16.cont [5/8] 0, 128
      %4020 = vxpose.xlu0.c.b16.cont [6/8] 0, 128
      %4021 = vxpose.xlu0.c.b16.cont [7/8] 0, 128
      %4022 = vxpose.xlu0.c.b16.end [8/8] 0, 128
      %v4023 = vpop.trf.xlu0
      %v4024 = vpop.trf.xlu0
      %v4025 = vpop.trf.xlu0
      %v4026 = vpop.trf.xlu0
      %v4027 = vpop.trf.xlu0
      %v4028 = vpop.trf.xlu0
      %v4029 = vpop.trf.xlu0
      %v4030 = vpop.trf.xlu0
      %4031 = vxpose.xlu0.c.b16.start [1/8] %v3571, 128
      %4032 = vxpose.xlu0.c.b16.cont [2/8] 0, 128
      %4033 = vxpose.xlu0.c.b16.cont [3/8] 0, 128
      %4034 = vxpose.xlu0.c.b16.cont [4/8] 0, 128
      %4035 = vxpose.xlu0.c.b16.cont [5/8] 0, 128
      %4036 = vxpose.xlu0.c.b16.cont [6/8] 0, 128
      %4037 = vxpose.xlu0.c.b16.cont [7/8] 0, 128
      %4038 = vxpose.xlu0.c.b16.end [8/8] 0, 128
      %v4039 = vpop.trf.xlu0
      %v4040 = vpop.trf.xlu0
      %v4041 = vpop.trf.xlu0
      %v4042 = vpop.trf.xlu0
      %v4043 = vpop.trf.xlu0
      %v4044 = vpop.trf.xlu0
      %v4045 = vpop.trf.xlu0
      %v4046 = vpop.trf.xlu0
      %4047 = vxpose.xlu0.c.b16.start [1/8] %v3705, 128
      %4048 = vxpose.xlu0.c.b16.cont [2/8] 0, 128
      %4049 = vxpose.xlu0.c.b16.cont [3/8] 0, 128
      %4050 = vxpose.xlu0.c.b16.cont [4/8] 0, 128
      %4051 = vxpose.xlu0.c.b16.cont [5/8] 0, 128
      %4052 = vxpose.xlu0.c.b16.cont [6/8] 0, 128
      %4053 = vxpose.xlu0.c.b16.cont [7/8] 0, 128
      %4054 = vxpose.xlu0.c.b16.end [8/8] 0, 128
      %v4055 = vpop.trf.xlu0
      %v4056 = vpop.trf.xlu0
      %v4057 = vpop.trf.xlu0
      %v4058 = vpop.trf.xlu0
      %v4059 = vpop.trf.xlu0
      %v4060 = vpop.trf.xlu0
      %v4061 = vpop.trf.xlu0
      %v4062 = vpop.trf.xlu0
      %4063 = vxpose.xlu0.c.b16.start [1/8] %v3572, 128
      %4064 = vxpose.xlu0.c.b16.cont [2/8] 0, 128
      %4065 = vxpose.xlu0.c.b16.cont [3/8] 0, 128
      %4066 = vxpose.xlu0.c.b16.cont [4/8] 0, 128
      %4067 = vxpose.xlu0.c.b16.cont [5/8] 0, 128
      %4068 = vxpose.xlu0.c.b16.cont [6/8] 0, 128
      %4069 = vxpose.xlu0.c.b16.cont [7/8] 0, 128
      %4070 = vxpose.xlu0.c.b16.end [8/8] 0, 128
      %v4071 = vpop.trf.xlu0
      %v4072 = vpop.trf.xlu0
      %v4073 = vpop.trf.xlu0
      %v4074 = vpop.trf.xlu0
      %v4075 = vpop.trf.xlu0
      %v4076 = vpop.trf.xlu0
      %v4077 = vpop.trf.xlu0
      %v4078 = vpop.trf.xlu0
      %4079 = vxpose.xlu0.c.b16.start [1/8] %v3706, 128
      %4080 = vxpose.xlu0.c.b16.cont [2/8] 0, 128
      %4081 = vxpose.xlu0.c.b16.cont [3/8] 0, 128
      %4082 = vxpose.xlu0.c.b16.cont [4/8] 0, 128
      %4083 = vxpose.xlu0.c.b16.cont [5/8] 0, 128
      %4084 = vxpose.xlu0.c.b16.cont [6/8] 0, 128
      %4085 = vxpose.xlu0.c.b16.cont [7/8] 0, 128
      %4086 = vxpose.xlu0.c.b16.end [8/8] 0, 128
      %v4087 = vpop.trf.xlu0
      %v4088 = vpop.trf.xlu0
      %v4089 = vpop.trf.xlu0
      %v4090 = vpop.trf.xlu0
      %v4091 = vpop.trf.xlu0
      %v4092 = vpop.trf.xlu0
      %v4093 = vpop.trf.xlu0
      %v4094 = vpop.trf.xlu0
      %4095 = vxpose.xlu0.c.b16.start [1/8] %v3573, 128
      %4096 = vxpose.xlu0.c.b16.cont [2/8] 0, 128
      %4097 = vxpose.xlu0.c.b16.cont [3/8] 0, 128
      %4098 = vxpose.xlu0.c.b16.cont [4/8] 0, 128
      %4099 = vxpose.xlu0.c.b16.cont [5/8] 0, 128
      %4100 = vxpose.xlu0.c.b16.cont [6/8] 0, 128
      %4101 = vxpose.xlu0.c.b16.cont [7/8] 0, 128
      %4102 = vxpose.xlu0.c.b16.end [8/8] 0, 128
      %v4103 = vpop.trf.xlu0
      %v4104 = vpop.trf.xlu0
      %v4105 = vpop.trf.xlu0
      %v4106 = vpop.trf.xlu0
      %v4107 = vpop.trf.xlu0
      %v4108 = vpop.trf.xlu0
      %v4109 = vpop.trf.xlu0
      %v4110 = vpop.trf.xlu0
      %4111 = vxpose.xlu0.c.b16.start [1/8] %v3707, 128
      %4112 = vxpose.xlu0.c.b16.cont [2/8] 0, 128
      %4113 = vxpose.xlu0.c.b16.cont [3/8] 0, 128
      %4114 = vxpose.xlu0.c.b16.cont [4/8] 0, 128
      %4115 = vxpose.xlu0.c.b16.cont [5/8] 0, 128
      %4116 = vxpose.xlu0.c.b16.cont [6/8] 0, 128
      %4117 = vxpose.xlu0.c.b16.cont [7/8] 0, 128
      %4118 = vxpose.xlu0.c.b16.end [8/8] 0, 128
      %v4119 = vpop.trf.xlu0
      %v4120 = vpop.trf.xlu0
      %v4121 = vpop.trf.xlu0
      %v4122 = vpop.trf.xlu0
      %v4123 = vpop.trf.xlu0
      %v4124 = vpop.trf.xlu0
      %v4125 = vpop.trf.xlu0
      %v4126 = vpop.trf.xlu0
      %4127 = vxpose.xlu0.c.b16.start [1/8] %v3574, 128
      %4128 = vxpose.xlu0.c.b16.cont [2/8] 0, 128
      %4129 = vxpose.xlu0.c.b16.cont [3/8] 0, 128
      %4130 = vxpose.xlu0.c.b16.cont [4/8] 0, 128
      %4131 = vxpose.xlu0.c.b16.cont [5/8] 0, 128
      %4132 = vxpose.xlu0.c.b16.cont [6/8] 0, 128
      %4133 = vxpose.xlu0.c.b16.cont [7/8] 0, 128
      %4134 = vxpose.xlu0.c.b16.end [8/8] 0, 128
      %v4135 = vpop.trf.xlu0
      %v4136 = vpop.trf.xlu0
      %v4137 = vpop.trf.xlu0
      %v4138 = vpop.trf.xlu0
      %v4139 = vpop.trf.xlu0
      %v4140 = vpop.trf.xlu0
      %v4141 = vpop.trf.xlu0
      %v4142 = vpop.trf.xlu0
      %4143 = vxpose.xlu0.c.b16.start [1/8] %v3708, 128
      %4144 = vxpose.xlu0.c.b16.cont [2/8] 0, 128
      %4145 = vxpose.xlu0.c.b16.cont [3/8] 0, 128
      %4146 = vxpose.xlu0.c.b16.cont [4/8] 0, 128
      %4147 = vxpose.xlu0.c.b16.cont [5/8] 0, 128
      %4148 = vxpose.xlu0.c.b16.cont [6/8] 0, 128
      %4149 = vxpose.xlu0.c.b16.cont [7/8] 0, 128
      %4150 = vxpose.xlu0.c.b16.end [8/8] 0, 128
      %v4151 = vpop.trf.xlu0
      %v4152 = vpop.trf.xlu0
      %v4153 = vpop.trf.xlu0
      %v4154 = vpop.trf.xlu0
      %v4155 = vpop.trf.xlu0
      %v4156 = vpop.trf.xlu0
      %v4157 = vpop.trf.xlu0
      %v4158 = vpop.trf.xlu0
      %4159 = vxpose.xlu0.c.b16.start [1/8] %v3575, 128
      %4160 = vxpose.xlu0.c.b16.cont [2/8] 0, 128
      %4161 = vxpose.xlu0.c.b16.cont [3/8] 0, 128
      %4162 = vxpose.xlu0.c.b16.cont [4/8] 0, 128
      %4163 = vxpose.xlu0.c.b16.cont [5/8] 0, 128
      %4164 = vxpose.xlu0.c.b16.cont [6/8] 0, 128
      %4165 = vxpose.xlu0.c.b16.cont [7/8] 0, 128
      %4166 = vxpose.xlu0.c.b16.end [8/8] 0, 128
      %v4167 = vpop.trf.xlu0
      %v4168 = vpop.trf.xlu0
      %v4169 = vpop.trf.xlu0
      %v4170 = vpop.trf.xlu0
      %v4171 = vpop.trf.xlu0
      %v4172 = vpop.trf.xlu0
      %v4173 = vpop.trf.xlu0
      %v4174 = vpop.trf.xlu0
      %4175 = vxpose.xlu0.c.b16.start [1/8] %v3709, 128
      %4176 = vxpose.xlu0.c.b16.cont [2/8] 0, 128
      %4177 = vxpose.xlu0.c.b16.cont [3/8] 0, 128
      %4178 = vxpose.xlu0.c.b16.cont [4/8] 0, 128
      %4179 = vxpose.xlu0.c.b16.cont [5/8] 0, 128
      %4180 = vxpose.xlu0.c.b16.cont [6/8] 0, 128
      %4181 = vxpose.xlu0.c.b16.cont [7/8] 0, 128
      %4182 = vxpose.xlu0.c.b16.end [8/8] 0, 128
      %v4183 = vpop.trf.xlu0
      %v4184 = vpop.trf.xlu0
      %v4185 = vpop.trf.xlu0
      %v4186 = vpop.trf.xlu0
      %v4187 = vpop.trf.xlu0
      %v4188 = vpop.trf.xlu0
      %v4189 = vpop.trf.xlu0
      %v4190 = vpop.trf.xlu0
      %4191 = vxpose.xlu0.c.b16.start [1/8] %v3576, 128
      %4192 = vxpose.xlu0.c.b16.cont [2/8] 0, 128
      %4193 = vxpose.xlu0.c.b16.cont [3/8] 0, 128
      %4194 = vxpose.xlu0.c.b16.cont [4/8] 0, 128
      %4195 = vxpose.xlu0.c.b16.cont [5/8] 0, 128
      %4196 = vxpose.xlu0.c.b16.cont [6/8] 0, 128
      %4197 = vxpose.xlu0.c.b16.cont [7/8] 0, 128
      %4198 = vxpose.xlu0.c.b16.end [8/8] 0, 128
      %v4199 = vpop.trf.xlu0
      %v4200 = vpop.trf.xlu0
      %v4201 = vpop.trf.xlu0
      %v4202 = vpop.trf.xlu0
      %v4203 = vpop.trf.xlu0
      %v4204 = vpop.trf.xlu0
      %v4205 = vpop.trf.xlu0
      %v4206 = vpop.trf.xlu0
      %4207 = vxpose.xlu0.c.b16.start [1/8] %v3710, 128
      %4208 = vxpose.xlu0.c.b16.cont [2/8] 0, 128
      %4209 = vxpose.xlu0.c.b16.cont [3/8] 0, 128
      %4210 = vxpose.xlu0.c.b16.cont [4/8] 0, 128
      %4211 = vxpose.xlu0.c.b16.cont [5/8] 0, 128
      %4212 = vxpose.xlu0.c.b16.cont [6/8] 0, 128
      %4213 = vxpose.xlu0.c.b16.cont [7/8] 0, 128
      %4214 = vxpose.xlu0.c.b16.end [8/8] 0, 128
      %v4215 = vpop.trf.xlu0
      %v4216 = vpop.trf.xlu0
      %v4217 = vpop.trf.xlu0
      %v4218 = vpop.trf.xlu0
      %v4219 = vpop.trf.xlu0
      %v4220 = vpop.trf.xlu0
      %v4221 = vpop.trf.xlu0
      %v4222 = vpop.trf.xlu0
      %v4223 = vcombine.low %v3719, %v3783
      %v4225 = vunpack.c.l.s4 1983009808
      %v4226 = vunpack.c.0.s8 %v4225
      %v4227 = vlaneseq
      %v4228 = vshrl.u32 %v4227, 7
      %v4229 = vsub.s32 %v4226, %v4228
      %v4230 = vrot.slane %v4223, %v4229
      %v4231 = vcombine.low %v3751, %v3815
      %v4233 = vunpack.c.l.s4 1983009808
      %v4234 = vunpack.c.0.s8 %v4233
      %v4235 = vlaneseq
      %v4236 = vshrl.u32 %v4235, 7
      %v4237 = vsub.s32 %v4234, %v4236
      %v4238 = vrot.slane %v4231, %v4237
      %v4239 = vcombine.low %v3847, %v3911
      %v4241 = vunpack.c.l.s4 1983009808
      %v4242 = vunpack.c.0.s8 %v4241
      %v4243 = vlaneseq
      %v4244 = vshrl.u32 %v4243, 7
      %v4245 = vsub.s32 %v4242, %v4244
      %v4246 = vrot.slane %v4239, %v4245
      %v4247 = vcombine.low %v3879, %v3943
      %v4249 = vunpack.c.l.s4 1983009808
      %v4250 = vunpack.c.0.s8 %v4249
      %v4251 = vlaneseq
      %v4252 = vshrl.u32 %v4251, 7
      %v4253 = vsub.s32 %v4250, %v4252
      %v4254 = vrot.slane %v4247, %v4253
      %v4255 = vcombine.low %v4230, %v4238
      %v4257 = vunpack.c.l.s4 1934713408
      %v4258 = vunpack.c.0.s8 %v4257
      %v4259 = vlaneseq
      %v4260 = vshrl.u32 %v4259, 7
      %v4261 = vsub.s32 %v4258, %v4260
      %v4262 = vrot.slane %v4255, %v4261
      %v4263 = vcombine.low %v4246, %v4254
      %v4265 = vunpack.c.l.s4 1934713408
      %v4266 = vunpack.c.0.s8 %v4265
      %v4267 = vlaneseq
      %v4268 = vshrl.u32 %v4267, 7
      %v4269 = vsub.s32 %v4266, %v4268
      %v4270 = vrot.slane %v4263, %v4269
      %v4271 = vcombine.low %v4262, %v4270
      %v4272 = vcombine.high %v4262, %v4270
      %v4273 = vcombine.low %v3735, %v3799
      %v4275 = vunpack.c.l.s4 1983009808
      %v4276 = vunpack.c.0.s8 %v4275
      %v4277 = vlaneseq
      %v4278 = vshrl.u32 %v4277, 7
      %v4279 = vsub.s32 %v4276, %v4278
      %v4280 = vrot.slane %v4273, %v4279
      %v4281 = vcombine.low %v3767, %v3831
      %v4283 = vunpack.c.l.s4 1983009808
      %v4284 = vunpack.c.0.s8 %v4283
      %v4285 = vlaneseq
      %v4286 = vshrl.u32 %v4285, 7
      %v4287 = vsub.s32 %v4284, %v4286
      %v4288 = vrot.slane %v4281, %v4287
      %v4289 = vcombine.low %v3863, %v3927
      %v4291 = vunpack.c.l.s4 1983009808
      %v4292 = vunpack.c.0.s8 %v4291
      %v4293 = vlaneseq
      %v4294 = vshrl.u32 %v4293, 7
      %v4295 = vsub.s32 %v4292, %v4294
      %v4296 = vrot.slane %v4289, %v4295
      %v4297 = vcombine.low %v3895, %v3959
      %v4299 = vunpack.c.l.s4 1983009808
      %v4300 = vunpack.c.0.s8 %v4299
      %v4301 = vlaneseq
      %v4302 = vshrl.u32 %v4301, 7
      %v4303 = vsub.s32 %v4300, %v4302
      %v4304 = vrot.slane %v4297, %v4303
      %v4305 = vcombine.low %v4280, %v4288
      %v4307 = vunpack.c.l.s4 1934713408
      %v4308 = vunpack.c.0.s8 %v4307
      %v4309 = vlaneseq
      %v4310 = vshrl.u32 %v4309, 7
      %v4311 = vsub.s32 %v4308, %v4310
      %v4312 = vrot.slane %v4305, %v4311
      %v4313 = vcombine.low %v4296, %v4304
      %v4315 = vunpack.c.l.s4 1934713408
      %v4316 = vunpack.c.0.s8 %v4315
      %v4317 = vlaneseq
      %v4318 = vshrl.u32 %v4317, 7
      %v4319 = vsub.s32 %v4316, %v4318
      %v4320 = vrot.slane %v4313, %v4319
      %v4321 = vcombine.low %v4312, %v4320
      %v4322 = vcombine.high %v4312, %v4320
      %v4323 = vcombine.low %v3975, %v4039
      %v4325 = vunpack.c.l.s4 1983009808
      %v4326 = vunpack.c.0.s8 %v4325
      %v4327 = vlaneseq
      %v4328 = vshrl.u32 %v4327, 7
      %v4329 = vsub.s32 %v4326, %v4328
      %v4330 = vrot.slane %v4323, %v4329
      %v4331 = vcombine.low %v4007, %v4071
      %v4333 = vunpack.c.l.s4 1983009808
      %v4334 = vunpack.c.0.s8 %v4333
      %v4335 = vlaneseq
      %v4336 = vshrl.u32 %v4335, 7
      %v4337 = vsub.s32 %v4334, %v4336
      %v4338 = vrot.slane %v4331, %v4337
      %v4339 = vcombine.low %v4103, %v4167
      %v4341 = vunpack.c.l.s4 1983009808
      %v4342 = vunpack.c.0.s8 %v4341
      %v4343 = vlaneseq
      %v4344 = vshrl.u32 %v4343, 7
      %v4345 = vsub.s32 %v4342, %v4344
      %v4346 = vrot.slane %v4339, %v4345
      %v4347 = vcombine.low %v4135, %v4199
      %v4349 = vunpack.c.l.s4 1983009808
      %v4350 = vunpack.c.0.s8 %v4349
      %v4351 = vlaneseq
      %v4352 = vshrl.u32 %v4351, 7
      %v4353 = vsub.s32 %v4350, %v4352
      %v4354 = vrot.slane %v4347, %v4353
      %v4355 = vcombine.low %v4330, %v4338
      %v4357 = vunpack.c.l.s4 1934713408
      %v4358 = vunpack.c.0.s8 %v4357
      %v4359 = vlaneseq
      %v4360 = vshrl.u32 %v4359, 7
      %v4361 = vsub.s32 %v4358, %v4360
      %v4362 = vrot.slane %v4355, %v4361
      %v4363 = vcombine.low %v4346, %v4354
      %v4365 = vunpack.c.l.s4 1934713408
      %v4366 = vunpack.c.0.s8 %v4365
      %v4367 = vlaneseq
      %v4368 = vshrl.u32 %v4367, 7
      %v4369 = vsub.s32 %v4366, %v4368
      %v4370 = vrot.slane %v4363, %v4369
      %v4371 = vcombine.low %v4362, %v4370
      %v4372 = vcombine.high %v4362, %v4370
      %v4373 = vcombine.low %v3991, %v4055
      %v4375 = vunpack.c.l.s4 1983009808
      %v4376 = vunpack.c.0.s8 %v4375
      %v4377 = vlaneseq
      %v4378 = vshrl.u32 %v4377, 7
      %v4379 = vsub.s32 %v4376, %v4378
      %v4380 = vrot.slane %v4373, %v4379
      %v4381 = vcombine.low %v4023, %v4087
      %v4383 = vunpack.c.l.s4 1983009808
      %v4384 = vunpack.c.0.s8 %v4383
      %v4385 = vlaneseq
      %v4386 = vshrl.u32 %v4385, 7
      %v4387 = vsub.s32 %v4384, %v4386
      %v4388 = vrot.slane %v4381, %v4387
      %v4389 = vcombine.low %v4119, %v4183
      %v4391 = vunpack.c.l.s4 1983009808
      %v4392 = vunpack.c.0.s8 %v4391
      %v4393 = vlaneseq
      %v4394 = vshrl.u32 %v4393, 7
      %v4395 = vsub.s32 %v4392, %v4394
      %v4396 = vrot.slane %v4389, %v4395
      %v4397 = vcombine.low %v4151, %v4215
      %v4399 = vunpack.c.l.s4 1983009808
      %v4400 = vunpack.c.0.s8 %v4399
      %v4401 = vlaneseq
      %v4402 = vshrl.u32 %v4401, 7
      %v4403 = vsub.s32 %v4400, %v4402
      %v4404 = vrot.slane %v4397, %v4403
      %v4405 = vcombine.low %v4380, %v4388
      %v4407 = vunpack.c.l.s4 1934713408
      %v4408 = vunpack.c.0.s8 %v4407
      %v4409 = vlaneseq
      %v4410 = vshrl.u32 %v4409, 7
      %v4411 = vsub.s32 %v4408, %v4410
      %v4412 = vrot.slane %v4405, %v4411
      %v4413 = vcombine.low %v4396, %v4404
      %v4415 = vunpack.c.l.s4 1934713408
      %v4416 = vunpack.c.0.s8 %v4415
      %v4417 = vlaneseq
      %v4418 = vshrl.u32 %v4417, 7
      %v4419 = vsub.s32 %v4416, %v4418
      %v4420 = vrot.slane %v4413, %v4419
      %v4421 = vcombine.low %v4412, %v4420
      %v4422 = vcombine.high %v4412, %v4420
      %v4425 = vpack.i.b16 %v4321, %v4271
      %v4426 = vshrl.u32 %v4271, 16
      %v4427 = vshrl.u32 %v4321, 16
      %v4428 = vpack.i.b16 %v4427, %v4426
      %v4431 = vpack.i.b16 %v4322, %v4272
      %v4432 = vshrl.u32 %v4272, 16
      %v4433 = vshrl.u32 %v4322, 16
      %v4434 = vpack.i.b16 %v4433, %v4432
      %v4437 = vpack.i.b16 %v4421, %v4371
      %v4438 = vshrl.u32 %v4371, 16
      %v4439 = vshrl.u32 %v4421, 16
      %v4440 = vpack.i.b16 %v4439, %v4438
      %v4443 = vpack.i.b16 %v4422, %v4372
      %v4444 = vshrl.u32 %v4372, 16
      %v4445 = vshrl.u32 %v4422, 16
      %v4446 = vpack.i.b16 %v4445, %v4444
      %v4448 = vsel %vm2838, %v4425, 0
      %v4451 = vsel %vm2838, %v4437, 0
      %v4454 = vsel %vm2838, %v2883, 0
      %4456 = vmatprep.subr.bf16.mxu0 0
      %4457 = vmatpush1.bf16.xpose.msra.mxu0 %v4454
      %4458 = vmatprep.subr.bf16.mxu0 0
      %4459 = vmatpush1.bf16.xpose.msra.mxu0 0
      %4460 = vmatprep.subr.bf16.mxu0 0
      %4461 = vmatpush1.bf16.xpose.msra.mxu0 0
      %4462 = vmatprep.subr.bf16.mxu0 0
      %4463 = vmatpush1.bf16.xpose.msra.mxu0 0
      %4464 = vmatprep.subr.bf16.mxu0 0
      %4465 = vmatpush1.bf16.xpose.msra.mxu0 0
      %4466 = vmatprep.subr.bf16.mxu0 0
      %4467 = vmatpush1.bf16.xpose.msra.mxu0 0
      %4468 = vmatprep.subr.bf16.mxu0 0
      %4469 = vmatpush1.bf16.xpose.msra.mxu0 0
      %4470 = vmatprep.subr.bf16.mxu0 0
      %4471 = vmatpush1.bf16.xpose.msra.mxu0 0
      %4472 = vmatprep.subr.bf16.mxu0 0
      %4473 = vmatpush1.bf16.xpose.msra.mxu0 0
      %4474 = vmatprep.subr.bf16.mxu0 0
      %4475 = vmatpush1.bf16.xpose.msra.mxu0 0
      %4476 = vmatprep.subr.bf16.mxu0 0
      %4477 = vmatpush1.bf16.xpose.msra.mxu0 0
      %4478 = vmatprep.subr.bf16.mxu0 0
      %4479 = vmatpush1.bf16.xpose.msra.mxu0 0
      %4480 = vmatprep.subr.bf16.mxu0 0
      %4481 = vmatpush1.bf16.xpose.msra.mxu0 0
      %4482 = vmatprep.subr.bf16.mxu0 0
      %4483 = vmatpush1.bf16.xpose.msra.mxu0 0
      %4484 = vmatprep.subr.bf16.mxu0 0
      %4485 = vmatpush1.bf16.xpose.msra.mxu0 0
      %4486 = vmatprep.subr.bf16.mxu0 0
      %4487 = vmatpush1.bf16.xpose.msra.mxu0 0
      %4488 = vmatprep.mubr.bf16.mxu0 0
      %4489 = vmatmul.mubr.bf16.gmra.mrb[0].mxu0 %v4448
      %v4490 = vpop.f32.mrb[0].mxu0
      %v4491 = vadd.f32 0.0, %v4490
      %v4492 = vpop.f32.mrb[0].mxu0
      %v4493 = vpop.f32.mrb[0].mxu0
      %v4494 = vadd.f32 0.0, %v4493
      %v4495 = vpop.f32.mrb[0].mxu0
      %4496 = vmatprep.mubr.bf16.mxu0 0
      %4497 = vmatmul.mubr.bf16.gmra.mrb[0].mxu0 %v4451
      %v4498 = vpop.f32.mrb[0].mxu0
      %v4499 = vadd.f32 0.0, %v4498
      %v4500 = vpop.f32.mrb[0].mxu0
      %v4501 = vpop.f32.mrb[0].mxu0
      %v4502 = vadd.f32 0.0, %v4501
      %v4503 = vpop.f32.mrb[0].mxu0
      %4504 = vdwg.mxu0
      %v4506 = vsel %vm2838, %v4428, 0
      %v4509 = vsel %vm2838, %v4440, 0
      %v4512 = vsel %vm2838, %v2884, 0
      %4514 = vmatprep.subr.bf16.mxu0 0
      %4515 = vmatpush1.bf16.xpose.msra.mxu0 %v4512
      %4516 = vmatprep.subr.bf16.mxu0 0
      %4517 = vmatpush1.bf16.xpose.msra.mxu0 0
      %4518 = vmatprep.subr.bf16.mxu0 0
      %4519 = vmatpush1.bf16.xpose.msra.mxu0 0
      %4520 = vmatprep.subr.bf16.mxu0 0
      %4521 = vmatpush1.bf16.xpose.msra.mxu0 0
      %4522 = vmatprep.subr.bf16.mxu0 0
      %4523 = vmatpush1.bf16.xpose.msra.mxu0 0
      %4524 = vmatprep.subr.bf16.mxu0 0
      %4525 = vmatpush1.bf16.xpose.msra.mxu0 0
      %4526 = vmatprep.subr.bf16.mxu0 0
      %4527 = vmatpush1.bf16.xpose.msra.mxu0 0
      %4528 = vmatprep.subr.bf16.mxu0 0
      %4529 = vmatpush1.bf16.xpose.msra.mxu0 0
      %4530 = vmatprep.subr.bf16.mxu0 0
      %4531 = vmatpush1.bf16.xpose.msra.mxu0 0
      %4532 = vmatprep.subr.bf16.mxu0 0
      %4533 = vmatpush1.bf16.xpose.msra.mxu0 0
      %4534 = vmatprep.subr.bf16.mxu0 0
      %4535 = vmatpush1.bf16.xpose.msra.mxu0 0
      %4536 = vmatprep.subr.bf16.mxu0 0
      %4537 = vmatpush1.bf16.xpose.msra.mxu0 0
      %4538 = vmatprep.subr.bf16.mxu0 0
      %4539 = vmatpush1.bf16.xpose.msra.mxu0 0
      %4540 = vmatprep.subr.bf16.mxu0 0
      %4541 = vmatpush1.bf16.xpose.msra.mxu0 0
      %4542 = vmatprep.subr.bf16.mxu0 0
      %4543 = vmatpush1.bf16.xpose.msra.mxu0 0
      %4544 = vmatprep.subr.bf16.mxu0 0
      %4545 = vmatpush1.bf16.xpose.msra.mxu0 0
      %4546 = vmatprep.mubr.bf16.mxu0 0
      %4547 = vmatmul.mubr.bf16.gmra.mrb[0].mxu0 %v4506
      %v4548 = vpop.f32.mrb[0].mxu0
      %v4549 = vadd.f32 0.0, %v4548
      %v4550 = vpop.f32.mrb[0].mxu0
      %v4551 = vpop.f32.mrb[0].mxu0
      %v4552 = vadd.f32 0.0, %v4551
      %v4553 = vpop.f32.mrb[0].mxu0
      %4554 = vmatprep.mubr.bf16.mxu0 0
      %4555 = vmatmul.mubr.bf16.gmra.mrb[0].mxu0 %v4509
      %v4556 = vpop.f32.mrb[0].mxu0
      %v4557 = vadd.f32 0.0, %v4556
      %v4558 = vpop.f32.mrb[0].mxu0
      %v4559 = vpop.f32.mrb[0].mxu0
      %v4560 = vadd.f32 0.0, %v4559
      %v4561 = vpop.f32.mrb[0].mxu0
      %4562 = vdwg.mxu0
      %v4564 = vsel %vm2838, %v4431, 0
      %v4567 = vsel %vm2838, %v4443, 0
      %v4570 = vsel %vm2838, %v2885, 0
      %4572 = vmatprep.subr.bf16.mxu0 0
      %4573 = vmatpush1.bf16.xpose.msra.mxu0 %v4570
      %4574 = vmatprep.subr.bf16.mxu0 0
      %4575 = vmatpush1.bf16.xpose.msra.mxu0 0
      %4576 = vmatprep.subr.bf16.mxu0 0
      %4577 = vmatpush1.bf16.xpose.msra.mxu0 0
      %4578 = vmatprep.subr.bf16.mxu0 0
      %4579 = vmatpush1.bf16.xpose.msra.mxu0 0
      %4580 = vmatprep.subr.bf16.mxu0 0
      %4581 = vmatpush1.bf16.xpose.msra.mxu0 0
      %4582 = vmatprep.subr.bf16.mxu0 0
      %4583 = vmatpush1.bf16.xpose.msra.mxu0 0
      %4584 = vmatprep.subr.bf16.mxu0 0
      %4585 = vmatpush1.bf16.xpose.msra.mxu0 0
      %4586 = vmatprep.subr.bf16.mxu0 0
      %4587 = vmatpush1.bf16.xpose.msra.mxu0 0
      %4588 = vmatprep.subr.bf16.mxu0 0
      %4589 = vmatpush1.bf16.xpose.msra.mxu0 0
      %4590 = vmatprep.subr.bf16.mxu0 0
      %4591 = vmatpush1.bf16.xpose.msra.mxu0 0
      %4592 = vmatprep.subr.bf16.mxu0 0
      %4593 = vmatpush1.bf16.xpose.msra.mxu0 0
      %4594 = vmatprep.subr.bf16.mxu0 0
      %4595 = vmatpush1.bf16.xpose.msra.mxu0 0
      %4596 = vmatprep.subr.bf16.mxu0 0
      %4597 = vmatpush1.bf16.xpose.msra.mxu0 0
      %4598 = vmatprep.subr.bf16.mxu0 0
      %4599 = vmatpush1.bf16.xpose.msra.mxu0 0
      %4600 = vmatprep.subr.bf16.mxu0 0
      %4601 = vmatpush1.bf16.xpose.msra.mxu0 0
      %4602 = vmatprep.subr.bf16.mxu0 0
      %4603 = vmatpush1.bf16.xpose.msra.mxu0 0
      %4604 = vmatprep.mubr.bf16.mxu0 0
      %4605 = vmatmul.mubr.bf16.gmra.mrb[0].mxu0 %v4564
      %v4606 = vpop.f32.mrb[0].mxu0
      %v4607 = vadd.f32 0.0, %v4606
      %v4608 = vpop.f32.mrb[0].mxu0
      %v4609 = vpop.f32.mrb[0].mxu0
      %v4610 = vadd.f32 0.0, %v4609
      %v4611 = vpop.f32.mrb[0].mxu0
      %4612 = vmatprep.mubr.bf16.mxu0 0
      %4613 = vmatmul.mubr.bf16.gmra.mrb[0].mxu0 %v4567
      %v4614 = vpop.f32.mrb[0].mxu0
      %v4615 = vadd.f32 0.0, %v4614
      %v4616 = vpop.f32.mrb[0].mxu0
      %v4617 = vpop.f32.mrb[0].mxu0
      %v4618 = vadd.f32 0.0, %v4617
      %v4619 = vpop.f32.mrb[0].mxu0
      %4620 = vdwg.mxu0
      %v4622 = vsel %vm2838, %v4434, 0
      %v4625 = vsel %vm2838, %v4446, 0
      %v4628 = vsel %vm2838, %v2886, 0
      %4630 = vmatprep.subr.bf16.mxu0 0
      %4631 = vmatpush1.bf16.xpose.msra.mxu0 %v4628
      %4632 = vmatprep.subr.bf16.mxu0 0
      %4633 = vmatpush1.bf16.xpose.msra.mxu0 0
      %4634 = vmatprep.subr.bf16.mxu0 0
      %4635 = vmatpush1.bf16.xpose.msra.mxu0 0
      %4636 = vmatprep.subr.bf16.mxu0 0
      %4637 = vmatpush1.bf16.xpose.msra.mxu0 0
      %4638 = vmatprep.subr.bf16.mxu0 0
      %4639 = vmatpush1.bf16.xpose.msra.mxu0 0
      %4640 = vmatprep.subr.bf16.mxu0 0
      %4641 = vmatpush1.bf16.xpose.msra.mxu0 0
      %4642 = vmatprep.subr.bf16.mxu0 0
      %4643 = vmatpush1.bf16.xpose.msra.mxu0 0
      %4644 = vmatprep.subr.bf16.mxu0 0
      %4645 = vmatpush1.bf16.xpose.msra.mxu0 0
      %4646 = vmatprep.subr.bf16.mxu0 0
      %4647 = vmatpush1.bf16.xpose.msra.mxu0 0
      %4648 = vmatprep.subr.bf16.mxu0 0
      %4649 = vmatpush1.bf16.xpose.msra.mxu0 0
      %4650 = vmatprep.subr.bf16.mxu0 0
      %4651 = vmatpush1.bf16.xpose.msra.mxu0 0
      %4652 = vmatprep.subr.bf16.mxu0 0
      %4653 = vmatpush1.bf16.xpose.msra.mxu0 0
      %4654 = vmatprep.subr.bf16.mxu0 0
      %4655 = vmatpush1.bf16.xpose.msra.mxu0 0
      %4656 = vmatprep.subr.bf16.mxu0 0
      %4657 = vmatpush1.bf16.xpose.msra.mxu0 0
      %4658 = vmatprep.subr.bf16.mxu0 0
      %4659 = vmatpush1.bf16.xpose.msra.mxu0 0
      %4660 = vmatprep.subr.bf16.mxu0 0
      %4661 = vmatpush1.bf16.xpose.msra.mxu0 0
      %4662 = vmatprep.mubr.bf16.mxu0 0
      %4663 = vmatmul.mubr.bf16.gmra.mrb[0].mxu0 %v4622
      %v4664 = vpop.f32.mrb[0].mxu0
      %v4665 = vadd.f32 0.0, %v4664
      %v4666 = vpop.f32.mrb[0].mxu0
      %v4667 = vpop.f32.mrb[0].mxu0
      %v4668 = vadd.f32 0.0, %v4667
      %v4669 = vpop.f32.mrb[0].mxu0
      %4670 = vmatprep.mubr.bf16.mxu0 0
      %4671 = vmatmul.mubr.bf16.gmra.mrb[0].mxu0 %v4625
      %v4672 = vpop.f32.mrb[0].mxu0
      %v4673 = vadd.f32 0.0, %v4672
      %v4674 = vpop.f32.mrb[0].mxu0
      %v4675 = vpop.f32.mrb[0].mxu0
      %v4676 = vadd.f32 0.0, %v4675
      %v4677 = vpop.f32.mrb[0].mxu0
      %4678 = vdwg.mxu0
      %4679 = vxpose.xlu0.b32.start [1/16] %v4491, 128
      %4680 = vxpose.xlu0.b32.cont [2/16] %v4494, 128
      %4681 = vxpose.xlu0.b32.cont [3/16] %v4499, 128
      %4682 = vxpose.xlu0.b32.cont [4/16] %v4502, 128
      %4683 = vxpose.xlu0.b32.cont [5/16] 0.0, 128
      %4684 = vxpose.xlu0.b32.cont [6/16] 0.0, 128
      %4685 = vxpose.xlu0.b32.cont [7/16] 0.0, 128
      %4686 = vxpose.xlu0.b32.cont [8/16] 0.0, 128
      %4687 = vxpose.xlu0.b32.cont [9/16] 0.0, 128
      %4688 = vxpose.xlu0.b32.cont [10/16] 0.0, 128
      %4689 = vxpose.xlu0.b32.cont [11/16] 0.0, 128
      %4690 = vxpose.xlu0.b32.cont [12/16] 0.0, 128
      %4691 = vxpose.xlu0.b32.cont [13/16] 0.0, 128
      %4692 = vxpose.xlu0.b32.cont [14/16] 0.0, 128
      %4693 = vxpose.xlu0.b32.cont [15/16] 0.0, 128
      %4694 = vxpose.xlu0.b32.end [16/16] 0.0, 128
      %v4695 = vpop.trf.xlu0
      %v4696 = vpop.trf.xlu0
      %v4697 = vpop.trf.xlu0
      %v4698 = vpop.trf.xlu0
      %v4699 = vpop.trf.xlu0
      %v4700 = vpop.trf.xlu0
      %v4701 = vpop.trf.xlu0
      %v4702 = vpop.trf.xlu0
      %v4703 = vpop.trf.xlu0
      %v4704 = vpop.trf.xlu0
      %v4705 = vpop.trf.xlu0
      %v4706 = vpop.trf.xlu0
      %v4707 = vpop.trf.xlu0
      %v4708 = vpop.trf.xlu0
      %v4709 = vpop.trf.xlu0
      %v4710 = vpop.trf.xlu0
      %4711 = vxpose.xlu0.b32.start [1/16] %v4549, 128
      %4712 = vxpose.xlu0.b32.cont [2/16] %v4552, 128
      %4713 = vxpose.xlu0.b32.cont [3/16] %v4557, 128
      %4714 = vxpose.xlu0.b32.cont [4/16] %v4560, 128
      %4715 = vxpose.xlu0.b32.cont [5/16] 0.0, 128
      %4716 = vxpose.xlu0.b32.cont [6/16] 0.0, 128
      %4717 = vxpose.xlu0.b32.cont [7/16] 0.0, 128
      %4718 = vxpose.xlu0.b32.cont [8/16] 0.0, 128
      %4719 = vxpose.xlu0.b32.cont [9/16] 0.0, 128
      %4720 = vxpose.xlu0.b32.cont [10/16] 0.0, 128
      %4721 = vxpose.xlu0.b32.cont [11/16] 0.0, 128
      %4722 = vxpose.xlu0.b32.cont [12/16] 0.0, 128
      %4723 = vxpose.xlu0.b32.cont [13/16] 0.0, 128
      %4724 = vxpose.xlu0.b32.cont [14/16] 0.0, 128
      %4725 = vxpose.xlu0.b32.cont [15/16] 0.0, 128
      %4726 = vxpose.xlu0.b32.end [16/16] 0.0, 128
      %v4727 = vpop.trf.xlu0
      %v4728 = vpop.trf.xlu0
      %v4729 = vpop.trf.xlu0
      %v4730 = vpop.trf.xlu0
      %v4731 = vpop.trf.xlu0
      %v4732 = vpop.trf.xlu0
      %v4733 = vpop.trf.xlu0
      %v4734 = vpop.trf.xlu0
      %v4735 = vpop.trf.xlu0
      %v4736 = vpop.trf.xlu0
      %v4737 = vpop.trf.xlu0
      %v4738 = vpop.trf.xlu0
      %v4739 = vpop.trf.xlu0
      %v4740 = vpop.trf.xlu0
      %v4741 = vpop.trf.xlu0
      %v4742 = vpop.trf.xlu0
      %4743 = vxpose.xlu0.b32.start [1/16] %v4607, 128
      %4744 = vxpose.xlu0.b32.cont [2/16] %v4610, 128
      %4745 = vxpose.xlu0.b32.cont [3/16] %v4615, 128
      %4746 = vxpose.xlu0.b32.cont [4/16] %v4618, 128
      %4747 = vxpose.xlu0.b32.cont [5/16] 0.0, 128
      %4748 = vxpose.xlu0.b32.cont [6/16] 0.0, 128
      %4749 = vxpose.xlu0.b32.cont [7/16] 0.0, 128
      %4750 = vxpose.xlu0.b32.cont [8/16] 0.0, 128
      %4751 = vxpose.xlu0.b32.cont [9/16] 0.0, 128
      %4752 = vxpose.xlu0.b32.cont [10/16] 0.0, 128
      %4753 = vxpose.xlu0.b32.cont [11/16] 0.0, 128
      %4754 = vxpose.xlu0.b32.cont [12/16] 0.0, 128
      %4755 = vxpose.xlu0.b32.cont [13/16] 0.0, 128
      %4756 = vxpose.xlu0.b32.cont [14/16] 0.0, 128
      %4757 = vxpose.xlu0.b32.cont [15/16] 0.0, 128
      %4758 = vxpose.xlu0.b32.end [16/16] 0.0, 128
      %v4759 = vpop.trf.xlu0
      %v4760 = vpop.trf.xlu0
      %v4761 = vpop.trf.xlu0
      %v4762 = vpop.trf.xlu0
      %v4763 = vpop.trf.xlu0
      %v4764 = vpop.trf.xlu0
      %v4765 = vpop.trf.xlu0
      %v4766 = vpop.trf.xlu0
      %v4767 = vpop.trf.xlu0
      %v4768 = vpop.trf.xlu0
      %v4769 = vpop.trf.xlu0
      %v4770 = vpop.trf.xlu0
      %v4771 = vpop.trf.xlu0
      %v4772 = vpop.trf.xlu0
      %v4773 = vpop.trf.xlu0
      %v4774 = vpop.trf.xlu0
      %4775 = vxpose.xlu0.b32.start [1/16] %v4665, 128
      %4776 = vxpose.xlu0.b32.cont [2/16] %v4668, 128
      %4777 = vxpose.xlu0.b32.cont [3/16] %v4673, 128
      %4778 = vxpose.xlu0.b32.cont [4/16] %v4676, 128
      %4779 = vxpose.xlu0.b32.cont [5/16] 0.0, 128
      %4780 = vxpose.xlu0.b32.cont [6/16] 0.0, 128
      %4781 = vxpose.xlu0.b32.cont [7/16] 0.0, 128
      %4782 = vxpose.xlu0.b32.cont [8/16] 0.0, 128
      %4783 = vxpose.xlu0.b32.cont [9/16] 0.0, 128
      %4784 = vxpose.xlu0.b32.cont [10/16] 0.0, 128
      %4785 = vxpose.xlu0.b32.cont [11/16] 0.0, 128
      %4786 = vxpose.xlu0.b32.cont [12/16] 0.0, 128
      %4787 = vxpose.xlu0.b32.cont [13/16] 0.0, 128
      %4788 = vxpose.xlu0.b32.cont [14/16] 0.0, 128
      %4789 = vxpose.xlu0.b32.cont [15/16] 0.0, 128
      %4790 = vxpose.xlu0.b32.end [16/16] 0.0, 128
      %v4791 = vpop.trf.xlu0
      %v4792 = vpop.trf.xlu0
      %v4793 = vpop.trf.xlu0
      %v4794 = vpop.trf.xlu0
      %v4795 = vpop.trf.xlu0
      %v4796 = vpop.trf.xlu0
      %v4797 = vpop.trf.xlu0
      %v4798 = vpop.trf.xlu0
      %v4799 = vpop.trf.xlu0
      %v4800 = vpop.trf.xlu0
      %v4801 = vpop.trf.xlu0
      %v4802 = vpop.trf.xlu0
      %v4803 = vpop.trf.xlu0
      %v4804 = vpop.trf.xlu0
      %v4805 = vpop.trf.xlu0
      %v4806 = vpop.trf.xlu0
      %v4807 = vcombine.low %v4695, %v4759
      %v4808 = vcombine.high %v4695, %v4759
      %v4810 = vunpack.c.l.s4 1983009808
      %v4811 = vunpack.c.0.s8 %v4810
      %v4812 = vlaneseq
      %v4813 = vshrl.u32 %v4812, 7
      %v4814 = vsub.s32 %v4811, %v4813
      %v4815 = vrot.slane %v4807, %v4814
      %v4817 = vunpack.c.l.s4 1983009808
      %v4818 = vunpack.c.0.s8 %v4817
      %v4819 = vlaneseq
      %v4820 = vshrl.u32 %v4819, 7
      %v4821 = vsub.s32 %v4818, %v4820
      %v4822 = vrot.slane %v4808, %v4821
      %v4823 = vcombine.low %v4727, %v4791
      %v4824 = vcombine.high %v4727, %v4791
      %v4826 = vunpack.c.l.s4 1983009808
      %v4827 = vunpack.c.0.s8 %v4826
      %v4828 = vlaneseq
      %v4829 = vshrl.u32 %v4828, 7
      %v4830 = vsub.s32 %v4827, %v4829
      %v4831 = vrot.slane %v4823, %v4830
      %v4833 = vunpack.c.l.s4 1983009808
      %v4834 = vunpack.c.0.s8 %v4833
      %v4835 = vlaneseq
      %v4836 = vshrl.u32 %v4835, 7
      %v4837 = vsub.s32 %v4834, %v4836
      %v4838 = vrot.slane %v4824, %v4837
      %v4839 = vcombine.low %v4815, %v4831
      %v4840 = vcombine.high %v4815, %v4831
      %v4842 = vunpack.c.l.s4 1934713408
      %v4843 = vunpack.c.0.s8 %v4842
      %v4844 = vlaneseq
      %v4845 = vshrl.u32 %v4844, 7
      %v4846 = vsub.s32 %v4843, %v4845
      %v4847 = vrot.slane %v4839, %v4846
      %v4849 = vunpack.c.l.s4 1934713408
      %v4850 = vunpack.c.0.s8 %v4849
      %v4851 = vlaneseq
      %v4852 = vshrl.u32 %v4851, 7
      %v4853 = vsub.s32 %v4850, %v4852
      %v4854 = vrot.slane %v4840, %v4853
      %v4855 = vcombine.low %v4822, %v4838
      %v4856 = vcombine.high %v4822, %v4838
      %v4858 = vunpack.c.l.s4 1934713408
      %v4859 = vunpack.c.0.s8 %v4858
      %v4860 = vlaneseq
      %v4861 = vshrl.u32 %v4860, 7
      %v4862 = vsub.s32 %v4859, %v4861
      %v4863 = vrot.slane %v4855, %v4862
      %v4865 = vunpack.c.l.s4 1934713408
      %v4866 = vunpack.c.0.s8 %v4865
      %v4867 = vlaneseq
      %v4868 = vshrl.u32 %v4867, 7
      %v4869 = vsub.s32 %v4866, %v4868
      %v4870 = vrot.slane %v4856, %v4869
      %v4871 = vcombine.high %v4847, 0.0
      %v4872 = vcombine.high %v4854, 0.0
      %v4873 = vcombine.high %v4863, 0.0
      %v4874 = vcombine.high %v4870, 0.0
      %v4875 = vcombine.low %v4847, %v4854
      %v4877 = vunpack.c.l.s4 1983009808
      %v4878 = vunpack.c.0.s8 %v4877
      %v4879 = vlaneseq
      %v4880 = vshrl.u32 %v4879, 7
      %v4881 = vsub.s32 %v4878, %v4880
      %v4882 = vrot.slane %v4875, %v4881
      %v4883 = vcombine.low %v4871, %v4872
      %v4885 = vunpack.c.l.s4 1983009808
      %v4886 = vunpack.c.0.s8 %v4885
      %v4887 = vlaneseq
      %v4888 = vshrl.u32 %v4887, 7
      %v4889 = vsub.s32 %v4886, %v4888
      %v4890 = vrot.slane %v4883, %v4889
      %v4891 = vcombine.low %v4863, %v4870
      %v4893 = vunpack.c.l.s4 1983009808
      %v4894 = vunpack.c.0.s8 %v4893
      %v4895 = vlaneseq
      %v4896 = vshrl.u32 %v4895, 7
      %v4897 = vsub.s32 %v4894, %v4896
      %v4898 = vrot.slane %v4891, %v4897
      %v4899 = vcombine.low %v4873, %v4874
      %v4901 = vunpack.c.l.s4 1983009808
      %v4902 = vunpack.c.0.s8 %v4901
      %v4903 = vlaneseq
      %v4904 = vshrl.u32 %v4903, 7
      %v4905 = vsub.s32 %v4902, %v4904
      %v4906 = vrot.slane %v4899, %v4905
      %v4907 = vcombine.low %v4882, %v4890
      %v4908 = vcombine.high %v4882, %v4890
      %v4910 = vunpack.c.l.s4 1934713408
      %v4911 = vunpack.c.0.s8 %v4910
      %v4912 = vlaneseq
      %v4913 = vshrl.u32 %v4912, 7
      %v4914 = vsub.s32 %v4911, %v4913
      %v4915 = vrot.slane %v4907, %v4914
      %v4917 = vunpack.c.l.s4 1934713408
      %v4918 = vunpack.c.0.s8 %v4917
      %v4919 = vlaneseq
      %v4920 = vshrl.u32 %v4919, 7
      %v4921 = vsub.s32 %v4918, %v4920
      %v4922 = vrot.slane %v4908, %v4921
      %v4923 = vcombine.low %v4898, %v4906
      %v4924 = vcombine.high %v4898, %v4906
      %v4926 = vunpack.c.l.s4 1934713408
      %v4927 = vunpack.c.0.s8 %v4926
      %v4928 = vlaneseq
      %v4929 = vshrl.u32 %v4928, 7
      %v4930 = vsub.s32 %v4927, %v4929
      %v4931 = vrot.slane %v4923, %v4930
      %v4933 = vunpack.c.l.s4 1934713408
      %v4934 = vunpack.c.0.s8 %v4933
      %v4935 = vlaneseq
      %v4936 = vshrl.u32 %v4935, 7
      %v4937 = vsub.s32 %v4934, %v4936
      %v4938 = vrot.slane %v4924, %v4937
      %v4939 = vcombine.low %v4915, %v4931
      %v4940 = vcombine.high %v4915, %v4931
      %v4941 = vcombine.low %v4922, %v4938
      %v4942 = vcombine.high %v4922, %v4938
      %4944 = vrot.lane.b32.xlu0 %v4940, 32
      %v4945 = vpop.permute.xlu0 %4944
      %4948 = vrot.lane.b32.xlu0 %v4941, 64
      %v4949 = vpop.permute.xlu0 %4948
      %4952 = vrot.lane.b32.xlu0 %v4942, 96
      %v4953 = vpop.permute.xlu0 %4952
      %v4955 = vsel %vm2665, %v4939, %v4945
      %vm4956 = vcmask 523264
      %v4957 = vsel %vm4956, %v4955, %v4949
      %vm4958 = vcmask 785408
      %v4959 = vsel %vm4958, %v4957, %v4953
      %v4960 = vpack.c.bf16 %v4959, %v4959
      %v4961 = vld [vmem:[%s6] sm:$0xf]
      %v4962 = vld [vmem:[%s6 + $0x4] sm:$0xf]
      %v4963 = vld [vmem:[%s6 + $0x8] sm:$0xf]
      %v4964 = vld [vmem:[%s6 + $0xc] sm:$0xf]
      %v4965 = vld [vmem:[%s6 + $0x10] sm:$0xf]
      %v4966 = vld [vmem:[%s6 + $0x14] sm:$0xf]
      %v4967 = vld [vmem:[%s6 + $0x18] sm:$0xf]
      %v4968 = vld [vmem:[%s6 + $0x1c] sm:$0xf]
      %v4969 = vld [vmem:[%s6 + $0x20] sm:$0xf]
      %v4970 = vld [vmem:[%s6 + $0x24] sm:$0xf]
      %v4971 = vld [vmem:[%s6 + $0x28] sm:$0xf]
      %v4972 = vld [vmem:[%s6 + $0x2c] sm:$0xf]
      %v4973 = vld [vmem:[%s6 + $0x30] sm:$0xf]
      %v4974 = vld [vmem:[%s6 + $0x34] sm:$0xf]
      %v4975 = vld [vmem:[%s6 + $0x38] sm:$0xf]
      %v4976 = vld [vmem:[%s6 + $0x3c] sm:$0xf]
      %v4977 = vld [vmem:[%s7] sm:$0x1]
      %v4979 = vlaneseq
      %v4980 = vshrl.u32 %v4979, 7
      %v4981 = vsub.s32 0, %v4980
      %v4982 = vrot.slane %v4977, %v4981
      %v5000 = vunpack.c.l.b16 %v4961
      %v5001 = vunpack.c.l.b16 %v4962
      %v5002 = vunpack.c.l.b16 %v4963
      %v5003 = vunpack.c.l.b16 %v4964
      %v5004 = vunpack.c.l.b16 %v4965
      %v5005 = vunpack.c.l.b16 %v4966
      %v5006 = vunpack.c.l.b16 %v4967
      %v5007 = vunpack.c.l.b16 %v4968
      %v5008 = vunpack.c.l.b16 %v4969
      %v5009 = vunpack.c.l.b16 %v4970
      %v5010 = vunpack.c.l.b16 %v4971
      %v5011 = vunpack.c.l.b16 %v4972
      %v5012 = vunpack.c.l.b16 %v4973
      %v5013 = vunpack.c.l.b16 %v4974
      %v5014 = vunpack.c.l.b16 %v4975
      %v5015 = vunpack.c.l.b16 %v4976
      %v5016 = vpack.c.b16 %v5001, %v5000
      %v5017 = vpack.c.b16 %v5003, %v5002
      %v5018 = vpack.c.b16 %v5005, %v5004
      %v5019 = vpack.c.b16 %v5007, %v5006
      %v5020 = vpack.c.b16 %v5009, %v5008
      %v5021 = vpack.c.b16 %v5011, %v5010
      %v5022 = vpack.c.b16 %v5013, %v5012
      %v5023 = vpack.c.b16 %v5015, %v5014
      %5032 = vmatprep.subr.bf16.mxu0 0
      %5033 = vmatpush1.bf16.msra.mxu0 %v5016
      %5034 = vmatprep.subr.bf16.mxu0 0
      %5035 = vmatpush1.bf16.msra.mxu0 %v5017
      %5036 = vmatprep.subr.bf16.mxu0 0
      %5037 = vmatpush1.bf16.msra.mxu0 %v5018
      %5038 = vmatprep.subr.bf16.mxu0 0
      %5039 = vmatpush1.bf16.msra.mxu0 %v5019
      %5040 = vmatprep.subr.bf16.mxu0 0
      %5041 = vmatpush1.bf16.msra.mxu0 %v5020
      %5042 = vmatprep.subr.bf16.mxu0 0
      %5043 = vmatpush1.bf16.msra.mxu0 %v5021
      %5044 = vmatprep.subr.bf16.mxu0 0
      %5045 = vmatpush1.bf16.msra.mxu0 %v5022
      %5046 = vmatprep.subr.bf16.mxu0 0
      %5047 = vmatpush1.bf16.msra.mxu0 %v5023
      %5048 = vmatprep.subr.bf16.mxu0 0
      %5049 = vmatpush1.bf16.msra.mxu0 0
      %5050 = vmatprep.subr.bf16.mxu0 0
      %5051 = vmatpush1.bf16.msra.mxu0 0
      %5052 = vmatprep.subr.bf16.mxu0 0
      %5053 = vmatpush1.bf16.msra.mxu0 0
      %5054 = vmatprep.subr.bf16.mxu0 0
      %5055 = vmatpush1.bf16.msra.mxu0 0
      %5056 = vmatprep.subr.bf16.mxu0 0
      %5057 = vmatpush1.bf16.msra.mxu0 0
      %5058 = vmatprep.subr.bf16.mxu0 0
      %5059 = vmatpush1.bf16.msra.mxu0 0
      %5060 = vmatprep.subr.bf16.mxu0 0
      %5061 = vmatpush1.bf16.msra.mxu0 0
      %5062 = vmatprep.subr.bf16.mxu0 0
      %5063 = vmatpush1.bf16.msra.mxu0 0
      %5064 = vmatprep.mubr.bf16.mxu0 0
      %5065 = vmatmul.mubr.bf16.gmra.mrb[0].mxu0 %v4960
      %v5066 = vpop.f32.mrb[0].mxu0
      %v5067 = vadd.f32 %v4982, %v5066
      %v5068 = vpop.f32.mrb[0].mxu0
      %v5069 = vpop.f32.mrb[0].mxu0
      %v5070 = vpop.f32.mrb[0].mxu0
      %5071 = vdwg.mxu0
      %v5072 = vadd.f32 %v407, %v5067
      %5073 = vadd.xlane.f32.xlu0 %v5072
      %v5074 = vpop.xlane.xlu0 %5073
      %v5075 = vrcp.pop 128.0
      %v5076 = vmul.f32 %v5074, %v5075
      %v5077 = vsub.f32 %v5072, %v5076
      %v5078 = vmul.f32 %v5077, %v5077
      %5079 = vadd.xlane.f32.xlu0 %v5078
      %v5080 = vpop.xlane.xlu0 %5079
      %v5081 = vmul.f32 %v5080, %v5075
      %v5082 = vadd.f32 %v5081, 1e-05
      %v5083 = vrsqrt.pop %v5082
      %v5084 = vmul.f32 %v5077, %v5083
      %v5085 = vld [vmem:[%s8] sm:$0x1]
      %v5087 = vlaneseq
      %v5088 = vshrl.u32 %v5087, 7
      %v5089 = vsub.s32 0, %v5088
      %v5090 = vrot.slane %v5085, %v5089
      %v5092 = vmul.f32 %v5084, %v5090
      %v5093 = vld [vmem:[%s9] sm:$0x1]
      %v5095 = vlaneseq
      %v5096 = vshrl.u32 %v5095, 7
      %v5097 = vsub.s32 0, %v5096
      %v5098 = vrot.slane %v5093, %v5097
      %v5100 = vadd.f32 %v5092, %v5098
      %5101 = vst [vmem:[%s405] sm:$0xff] %v5100
      %p5102 = scmp.lt.s32.totalorder %s25, 1
      %s5103 = scalar_select %p5102, %s25, 1
      %p5104 = scmp.lt.s32.totalorder %s26, 0
      %s5105 = scalar_select %p5104, %s26, 0
      %s5106 = sadd.s32 %s5105, %s5103
      %s5107 = smul.addr %s5106, 8
      %s5108 = scalar_lea.vmem %s10, %s5107
      // Predicated region
      $region61: #{transformer_lm_forward.8} parent=59 // pred_check
        %p5109 = pneg %p275
      $region62: #{transformer_lm_forward.8} parent=59 // pred_check_branch
        %5111 = sbr.rel (%p5109) target = $region64
      $region63: #{transformer_lm_forward.8} parent=59 // pred_region
        _
      $region64: #{transformer_lm_forward.8} parent=59 // pred_fallthru
        _
    $region60: #{transformer_lm_forward.8} parent=5 // pred_fallthru
      _
    %p5112 = scmp.le.s32.totalorder 2, %s16
    // Predicated region
    $region65: #{transformer_lm_forward.8} parent=5 // pred_check
      %p5113 = pneg %p5112
    $region66: #{transformer_lm_forward.8} parent=5 // pred_check_branch
      %5115 = sbr.rel (%p5113) target = $region68
    $region67: #{transformer_lm_forward.8} parent=5 // pred_region
      %s5116 = ssub.s32 %s16, 2
      // Predicated region
      $region69: #{transformer_lm_forward.8} parent=67 // pred_check
        %p5117 = pneg %p281
      $region70: #{transformer_lm_forward.8} parent=67 // pred_check_branch
        %5119 = sbr.rel (%p5117) target = $region72
      $region71: #{transformer_lm_forward.8} parent=67 // pred_region
        %p5120 = scmp.lt.s32.totalorder %s27, 1
        %s5121 = scalar_select %p5120, %s27, 1
        %p5122 = scmp.lt.s32.totalorder %s28, 0
        %s5123 = scalar_select %p5122, %s28, 0
        %s5124 = sadd.s32 %s5123, %s5121
        %s5125 = smul.addr %s5124, 8
        %s5126 = scalar_lea.vmem %s10, %s5125
      $region72: #{transformer_lm_forward.8} parent=67 // pred_fallthru
        _
    $region68: #{transformer_lm_forward.8} parent=5 // pred_fallthru
      _
  $region6: #{transformer_lm_forward.8} parent=0 // loop_footer
    %s20 = sadd.s32 1, %s16
  $region7: #{transformer_lm_forward.8} parent=0 // loop_footer_branch
    %15 = sbr.rel target = $region3
  $region8: #{transformer_lm_forward.8} parent=0 // loop_exit
    _

// kernel: transformer_lm_forward.7
$region0: #{transformer_lm_forward.7}
  #allocation0 [shape = 'u32[]', space=smem, size = 0x4, offset = 0x4, fixed_abs, tag = 'smem constant byte address 0x4 - core index']
  #allocation1 [shape = 'u32[144,128]{1,0:T(1,128)}', space=vmem, size = 0x12000, scoped, tag = 'internal scratch']
  %s0 = inlined_call_operand.vmem [shape: f32[2,8,128], index: 0, kind: input, shape index: {}, may-alias: {0,1}]
  %s1 = inlined_call_operand.vmem [shape: f32[2,8,128], index: 1, kind: input, shape index: {}, may-alias: {0,1}]
  %s2 = inlined_call_operand.vmem [shape: bf16[128,128], index: 2, kind: input, shape index: {}]
  %s3 = inlined_call_operand.vmem [shape: f32[1,128], index: 3, kind: input, shape index: {}]
  %s4 = inlined_call_operand.vmem [shape: bf16[128,256], index: 4, kind: input, shape index: {}]
  %s5 = inlined_call_operand.vmem [shape: f32[1,256], index: 5, kind: input, shape index: {}]
  %s6 = inlined_call_operand.vmem [shape: bf16[128,128], index: 6, kind: input, shape index: {}]
  %s7 = inlined_call_operand.vmem [shape: f32[1,128], index: 7, kind: input, shape index: {}]
  %s8 = inlined_call_operand.vmem [shape: f32[1,128], index: 8, kind: input, shape index: {}]
  %s9 = inlined_call_operand.vmem [shape: f32[1,128], index: 9, kind: input, shape index: {}]
  %s10 = inlined_call_operand.vmem [shape: f32[2,8,128], index: 10, kind: output, shape index: {}]
  %s11 = sld [smem:[#allocation0]]
  $region73: #{transformer_lm_forward.7} parent=0
    _
  %s13 = ssub.s32 1, %s11
  %s14 = scalar_select 0, %s13, %s11
  loop: start=0, step=1, limit=4
  $region2: #{transformer_lm_forward.7} parent=0 // loop_pre_header
    _
  $region3: #{transformer_lm_forward.7} parent=0 // loop_header
    %s16 = sphi 0, %s20
    %p17 = scmp.ge.s32.totalorder %s16, 4
    %s23 = sphi 0, %s35
    %s24 = sphi 0, %s31
    %s25 = sphi 0, %s23
    %s26 = sphi 0, %s24
    %s27 = sphi 0, %s25
    %s28 = sphi 0, %s26
    %s40 = sphi 0, %s42
    %s43 = sphi 0, %s40
    %s44 = sphi 0, %s43
    %s60 = sphi 0, %s44
    %s66 = sphi 0, %s68
    %s69 = sphi 0, %s66
    %s70 = sphi 0, %s69
    %s86 = sphi 0, %s70
    %s90 = sphi 0, %s90
    %s92 = sphi 0, %s90
    %s93 = sphi 0, %s92
    %s107 = sphi 0, %s93
    %s111 = sphi 0, %s111
    %s113 = sphi 0, %s111
    %s114 = sphi 0, %s113
    %s128 = sphi 0, %s114
    %s132 = sphi 0, %s132
    %s134 = sphi 0, %s132
    %s135 = sphi 0, %s134
    %s149 = sphi 0, %s135
    %s153 = sphi 0, %s153
    %s155 = sphi 0, %s153
    %s156 = sphi 0, %s155
    %s170 = sphi 0, %s156
    %s174 = sphi 0, %s174
    %s176 = sphi 0, %s174
    %s177 = sphi 0, %s176
    %s191 = sphi 0, %s177
    %s195 = sphi 0, %s195
    %s197 = sphi 0, %s195
    %s198 = sphi 0, %s197
    %s212 = sphi 0, %s198
    %s216 = sphi 0, %s216
    %s218 = sphi 0, %s216
    %s219 = sphi 0, %s218
    %s233 = sphi 0, %s219
    %s237 = sphi 0, %s237
    %s239 = sphi 0, %s237
    %s240 = sphi 0, %s239
    %s254 = sphi 0, %s240
    %s262 = sphi 0, %s264
    %s265 = sphi 0, %s262
    %s266 = sphi 0, %s265
    %s282 = sphi 0, %s266
  $region4: #{transformer_lm_forward.7} parent=0 // loop_header_branch
    %19 = sbr.rel (%p17) target = $region8
  $region5: #{transformer_lm_forward.7} parent=0 // loop_body
    %s21 = ssub.s32 %s16, 1
    %s22 = ssub.s32 %s16, 2
    %s29 = sadd.s32 1, %s24
    %p30 = scmp.ge.s32.totalorder %s29, 1
    %s31 = scalar_select %p30, 0, %s29
    %s32 = sadd.s32 1, %s23
    %s33 = scalar_select %p30, %s32, %s23
    %p34 = scmp.ge.s32.totalorder %s33, 2
    %s35 = scalar_select %p34, 0, %s33
    %s36 = ssub.s32 %s23, %s35
    %s37 = ssub.s32 %s24, %s31
    %s38 = sor.u32 %s36, %s37
    %p39 = scmp.eq.s32.totalorder %s38, 0
    %s41 = sadd.s32 %s40, 1
    %s42 = scalar_select %p39, %s40, %s41
    %p45 = pneg %p39
    %p46 = scmp.eq.s32.totalorder %s16, 1
    %p47 = por %p45, %p46
    %p48 = scmp.ne.s32.totalorder %s40, %s43
    %p49 = scmp.eq.s32.totalorder %s16, 0
    %p50 = por %p48, %p49
    %p51 = scmp.ne.s32.totalorder %s40, %s43
    %p52 = scmp.eq.s32.totalorder %s21, 1
    %p53 = por %p51, %p52
    %p54 = scmp.ne.s32.totalorder %s43, %s44
    %p55 = scmp.eq.s32.totalorder %s21, 0
    %p56 = por %p54, %p55
    %p57 = scmp.ne.s32.totalorder %s43, %s44
    %p58 = scmp.eq.s32.totalorder %s22, 1
    %p59 = por %p57, %p58
    %p61 = scmp.ne.s32.totalorder %s44, %s60
    %p62 = scmp.eq.s32.totalorder %s22, 0
    %p63 = por %p61, %p62
    %s64 = ssub.s32 %s23, %s35
    %p65 = scmp.eq.s32.totalorder %s64, 0
    %s67 = sadd.s32 %s66, 1
    %s68 = scalar_select %p65, %s66, %s67
    %p71 = pneg %p65
    %p72 = scmp.eq.s32.totalorder %s16, 1
    %p73 = por %p71, %p72
    %p74 = scmp.ne.s32.totalorder %s66, %s69
    %p75 = scmp.eq.s32.totalorder %s16, 0
    %p76 = por %p74, %p75
    %p77 = scmp.ne.s32.totalorder %s66, %s69
    %p78 = scmp.eq.s32.totalorder %s21, 1
    %p79 = por %p77, %p78
    %p80 = scmp.ne.s32.totalorder %s69, %s70
    %p81 = scmp.eq.s32.totalorder %s21, 0
    %p82 = por %p80, %p81
    %p83 = scmp.ne.s32.totalorder %s69, %s70
    %p84 = scmp.eq.s32.totalorder %s22, 1
    %p85 = por %p83, %p84
    %p87 = scmp.ne.s32.totalorder %s70, %s86
    %p88 = scmp.eq.s32.totalorder %s22, 0
    %p89 = por %p87, %p88
    %s91 = sadd.s32 %s90, 1
    %p94 = scmp.eq.s32.totalorder %s16, 1
    %p95 = scmp.ne.s32.totalorder %s90, %s92
    %p96 = scmp.eq.s32.totalorder %s16, 0
    %p97 = por %p95, %p96
    %p98 = scmp.ne.s32.totalorder %s90, %s92
    %p99 = scmp.eq.s32.totalorder %s21, 1
    %p100 = por %p98, %p99
    %p101 = scmp.ne.s32.totalorder %s92, %s93
    %p102 = scmp.eq.s32.totalorder %s21, 0
    %p103 = por %p101, %p102
    %p104 = scmp.ne.s32.totalorder %s92, %s93
    %p105 = scmp.eq.s32.totalorder %s22, 1
    %p106 = por %p104, %p105
    %p108 = scmp.ne.s32.totalorder %s93, %s107
    %p109 = scmp.eq.s32.totalorder %s22, 0
    %p110 = por %p108, %p109
    %s112 = sadd.s32 %s111, 1
    %p115 = scmp.eq.s32.totalorder %s16, 1
    %p116 = scmp.ne.s32.totalorder %s111, %s113
    %p117 = scmp.eq.s32.totalorder %s16, 0
    %p118 = por %p116, %p117
    %p119 = scmp.ne.s32.totalorder %s111, %s113
    %p120 = scmp.eq.s32.totalorder %s21, 1
    %p121 = por %p119, %p120
    %p122 = scmp.ne.s32.totalorder %s113, %s114
    %p123 = scmp.eq.s32.totalorder %s21, 0
    %p124 = por %p122, %p123
    %p125 = scmp.ne.s32.totalorder %s113, %s114
    %p126 = scmp.eq.s32.totalorder %s22, 1
    %p127 = por %p125, %p126
    %p129 = scmp.ne.s32.totalorder %s114, %s128
    %p130 = scmp.eq.s32.totalorder %s22, 0
    %p131 = por %p129, %p130
    %s133 = sadd.s32 %s132, 1
    %p136 = scmp.eq.s32.totalorder %s16, 1
    %p137 = scmp.ne.s32.totalorder %s132, %s134
    %p138 = scmp.eq.s32.totalorder %s16, 0
    %p139 = por %p137, %p138
    %p140 = scmp.ne.s32.totalorder %s132, %s134
    %p141 = scmp.eq.s32.totalorder %s21, 1
    %p142 = por %p140, %p141
    %p143 = scmp.ne.s32.totalorder %s134, %s135
    %p144 = scmp.eq.s32.totalorder %s21, 0
    %p145 = por %p143, %p144
    %p146 = scmp.ne.s32.totalorder %s134, %s135
    %p147 = scmp.eq.s32.totalorder %s22, 1
    %p148 = por %p146, %p147
    %p150 = scmp.ne.s32.totalorder %s135, %s149
    %p151 = scmp.eq.s32.totalorder %s22, 0
    %p152 = por %p150, %p151
    %s154 = sadd.s32 %s153, 1
    %p157 = scmp.eq.s32.totalorder %s16, 1
    %p158 = scmp.ne.s32.totalorder %s153, %s155
    %p159 = scmp.eq.s32.totalorder %s16, 0
    %p160 = por %p158, %p159
    %p161 = scmp.ne.s32.totalorder %s153, %s155
    %p162 = scmp.eq.s32.totalorder %s21, 1
    %p163 = por %p161, %p162
    %p164 = scmp.ne.s32.totalorder %s155, %s156
    %p165 = scmp.eq.s32.totalorder %s21, 0
    %p166 = por %p164, %p165
    %p167 = scmp.ne.s32.totalorder %s155, %s156
    %p168 = scmp.eq.s32.totalorder %s22, 1
    %p169 = por %p167, %p168
    %p171 = scmp.ne.s32.totalorder %s156, %s170
    %p172 = scmp.eq.s32.totalorder %s22, 0
    %p173 = por %p171, %p172
    %s175 = sadd.s32 %s174, 1
    %p178 = scmp.eq.s32.totalorder %s16, 1
    %p179 = scmp.ne.s32.totalorder %s174, %s176
    %p180 = scmp.eq.s32.totalorder %s16, 0
    %p181 = por %p179, %p180
    %p182 = scmp.ne.s32.totalorder %s174, %s176
    %p183 = scmp.eq.s32.totalorder %s21, 1
    %p184 = por %p182, %p183
    %p185 = scmp.ne.s32.totalorder %s176, %s177
    %p186 = scmp.eq.s32.totalorder %s21, 0
    %p187 = por %p185, %p186
    %p188 = scmp.ne.s32.totalorder %s176, %s177
    %p189 = scmp.eq.s32.totalorder %s22, 1
    %p190 = por %p188, %p189
    %p192 = scmp.ne.s32.totalorder %s177, %s191
    %p193 = scmp.eq.s32.totalorder %s22, 0
    %p194 = por %p192, %p193
    %s196 = sadd.s32 %s195, 1
    %p199 = scmp.eq.s32.totalorder %s16, 1
    %p200 = scmp.ne.s32.totalorder %s195, %s197
    %p201 = scmp.eq.s32.totalorder %s16, 0
    %p202 = por %p200, %p201
    %p203 = scmp.ne.s32.totalorder %s195, %s197
    %p204 = scmp.eq.s32.totalorder %s21, 1
    %p205 = por %p203, %p204
    %p206 = scmp.ne.s32.totalorder %s197, %s198
    %p207 = scmp.eq.s32.totalorder %s21, 0
    %p208 = por %p206, %p207
    %p209 = scmp.ne.s32.totalorder %s197, %s198
    %p210 = scmp.eq.s32.totalorder %s22, 1
    %p211 = por %p209, %p210
    %p213 = scmp.ne.s32.totalorder %s198, %s212
    %p214 = scmp.eq.s32.totalorder %s22, 0
    %p215 = por %p213, %p214
    %s217 = sadd.s32 %s216, 1
    %p220 = scmp.eq.s32.totalorder %s16, 1
    %p221 = scmp.ne.s32.totalorder %s216, %s218
    %p222 = scmp.eq.s32.totalorder %s16, 0
    %p223 = por %p221, %p222
    %p224 = scmp.ne.s32.totalorder %s216, %s218
    %p225 = scmp.eq.s32.totalorder %s21, 1
    %p226 = por %p224, %p225
    %p227 = scmp.ne.s32.totalorder %s218, %s219
    %p228 = scmp.eq.s32.totalorder %s21, 0
    %p229 = por %p227, %p228
    %p230 = scmp.ne.s32.totalorder %s218, %s219
    %p231 = scmp.eq.s32.totalorder %s22, 1
    %p232 = por %p230, %p231
    %p234 = scmp.ne.s32.totalorder %s219, %s233
    %p235 = scmp.eq.s32.totalorder %s22, 0
    %p236 = por %p234, %p235
    %s238 = sadd.s32 %s237, 1
    %p241 = scmp.eq.s32.totalorder %s16, 1
    %p242 = scmp.ne.s32.totalorder %s237, %s239
    %p243 = scmp.eq.s32.totalorder %s16, 0
    %p244 = por %p242, %p243
    %p245 = scmp.ne.s32.totalorder %s237, %s239
    %p246 = scmp.eq.s32.totalorder %s21, 1
    %p247 = por %p245, %p246
    %p248 = scmp.ne.s32.totalorder %s239, %s240
    %p249 = scmp.eq.s32.totalorder %s21, 0
    %p250 = por %p248, %p249
    %p251 = scmp.ne.s32.totalorder %s239, %s240
    %p252 = scmp.eq.s32.totalorder %s22, 1
    %p253 = por %p251, %p252
    %p255 = scmp.ne.s32.totalorder %s240, %s254
    %p256 = scmp.eq.s32.totalorder %s22, 0
    %p257 = por %p255, %p256
    %s258 = ssub.s32 %s23, %s35
    %s259 = ssub.s32 %s24, %s31
    %s260 = sor.u32 %s258, %s259
    %p261 = scmp.eq.s32.totalorder %s260, 0
    %s263 = sadd.s32 %s262, 1
    %s264 = scalar_select %p261, %s262, %s263
    %p267 = pneg %p261
    %p268 = scmp.eq.s32.totalorder %s16, 1
    %p269 = por %p267, %p268
    %p270 = scmp.ne.s32.totalorder %s262, %s265
    %p271 = scmp.eq.s32.totalorder %s16, 0
    %p272 = por %p270, %p271
    %p273 = scmp.ne.s32.totalorder %s262, %s265
    %p274 = scmp.eq.s32.totalorder %s21, 1
    %p275 = por %p273, %p274
    %p276 = scmp.ne.s32.totalorder %s265, %s266
    %p277 = scmp.eq.s32.totalorder %s21, 0
    %p278 = por %p276, %p277
    %p279 = scmp.ne.s32.totalorder %s265, %s266
    %p280 = scmp.eq.s32.totalorder %s22, 1
    %p281 = por %p279, %p280
    %p283 = scmp.ne.s32.totalorder %s266, %s282
    %p284 = scmp.eq.s32.totalorder %s22, 0
    %p285 = por %p283, %p284
    %p286 = scmp.le.s32.totalorder 1, %s16
    %p287 = scmp.lt.s32.totalorder %s16, 3
    %p288 = pnand %p286, %p287
    %p289 = pneg %p288
    // Predicated region
    $region9: #{transformer_lm_forward.7} parent=5 // pred_check
      _
    $region10: #{transformer_lm_forward.7} parent=5 // pred_check_branch
      %291 = sbr.rel (%p288) target = $region12
    $region11: #{transformer_lm_forward.7} parent=5 // pred_region
      %s292 = ssub.s32 %s16, 1
      // Predicated region
      $region13: #{transformer_lm_forward.7} parent=11 // pred_check
        %p293 = pneg %p103
      $region14: #{transformer_lm_forward.7} parent=11 // pred_check_branch
        %295 = sbr.rel (%p293) target = $region16
      $region15: #{transformer_lm_forward.7} parent=11 // pred_region
        _
      $region16: #{transformer_lm_forward.7} parent=11 // pred_fallthru
        _
      // Predicated region
      $region17: #{transformer_lm_forward.7} parent=11 // pred_check
        %p296 = pneg %p124
      $region18: #{transformer_lm_forward.7} parent=11 // pred_check_branch
        %298 = sbr.rel (%p296) target = $region20
      $region19: #{transformer_lm_forward.7} parent=11 // pred_region
        _
      $region20: #{transformer_lm_forward.7} parent=11 // pred_fallthru
        _
      // Predicated region
      $region21: #{transformer_lm_forward.7} parent=11 // pred_check
        %p299 = pneg %p145
      $region22: #{transformer_lm_forward.7} parent=11 // pred_check_branch
        %301 = sbr.rel (%p299) target = $region24
      $region23: #{transformer_lm_forward.7} parent=11 // pred_region
        _
      $region24: #{transformer_lm_forward.7} parent=11 // pred_fallthru
        _
      // Predicated region
      $region25: #{transformer_lm_forward.7} parent=11 // pred_check
        %p302 = pneg %p166
      $region26: #{transformer_lm_forward.7} parent=11 // pred_check_branch
        %304 = sbr.rel (%p302) target = $region28
      $region27: #{transformer_lm_forward.7} parent=11 // pred_region
        _
      $region28: #{transformer_lm_forward.7} parent=11 // pred_fallthru
        _
      // Predicated region
      $region29: #{transformer_lm_forward.7} parent=11 // pred_check
        %p305 = pneg %p187
      $region30: #{transformer_lm_forward.7} parent=11 // pred_check_branch
        %307 = sbr.rel (%p305) target = $region32
      $region31: #{transformer_lm_forward.7} parent=11 // pred_region
        _
      $region32: #{transformer_lm_forward.7} parent=11 // pred_fallthru
        _
      // Predicated region
      $region33: #{transformer_lm_forward.7} parent=11 // pred_check
        %p308 = pneg %p208
      $region34: #{transformer_lm_forward.7} parent=11 // pred_check_branch
        %310 = sbr.rel (%p308) target = $region36
      $region35: #{transformer_lm_forward.7} parent=11 // pred_region
        _
      $region36: #{transformer_lm_forward.7} parent=11 // pred_fallthru
        _
      // Predicated region
      $region37: #{transformer_lm_forward.7} parent=11 // pred_check
        %p311 = pneg %p229
      $region38: #{transformer_lm_forward.7} parent=11 // pred_check_branch
        %313 = sbr.rel (%p311) target = $region40
      $region39: #{transformer_lm_forward.7} parent=11 // pred_region
        _
      $region40: #{transformer_lm_forward.7} parent=11 // pred_fallthru
        _
      // Predicated region
      $region41: #{transformer_lm_forward.7} parent=11 // pred_check
        %p314 = pneg %p250
      $region42: #{transformer_lm_forward.7} parent=11 // pred_check_branch
        %316 = sbr.rel (%p314) target = $region44
      $region43: #{transformer_lm_forward.7} parent=11 // pred_region
        _
      $region44: #{transformer_lm_forward.7} parent=11 // pred_fallthru
        _
    $region12: #{transformer_lm_forward.7} parent=5 // pred_fallthru
      _
    %p317 = scmp.lt.s32.totalorder %s16, 2
    // Predicated region
    $region45: #{transformer_lm_forward.7} parent=5 // pred_check
      %p318 = pneg %p317
    $region46: #{transformer_lm_forward.7} parent=5 // pred_check_branch
      %320 = sbr.rel (%p318) target = $region48
    $region47: #{transformer_lm_forward.7} parent=5 // pred_region
      // Predicated region
      $region49: #{transformer_lm_forward.7} parent=47 // pred_check
        %p321 = pneg %p50
      $region50: #{transformer_lm_forward.7} parent=47 // pred_check_branch
        %323 = sbr.rel (%p321) target = $region52
      $region51: #{transformer_lm_forward.7} parent=47 // pred_region
        %p324 = scmp.lt.s32.totalorder %s23, 1
        %s325 = scalar_select %p324, %s23, 1
        %p326 = scmp.lt.s32.totalorder %s24, 0
        %s327 = scalar_select %p326, %s24, 0
        %s328 = sadd.s32 %s327, %s325
        %s329 = smul.addr %s328, 8
        %s330 = scalar_lea.vmem %s0, %s329
      $region52: #{transformer_lm_forward.7} parent=47 // pred_fallthru
        _
      // Predicated region
      $region53: #{transformer_lm_forward.7} parent=47 // pred_check
        %p331 = pneg %p76
      $region54: #{transformer_lm_forward.7} parent=47 // pred_check_branch
        %333 = sbr.rel (%p331) target = $region56
      $region55: #{transformer_lm_forward.7} parent=47 // pred_region
        %p334 = scmp.lt.s32.totalorder %s23, 1
        %s335 = scalar_select %p334, %s23, 1
        %s336 = smul.addr %s335, 8
        %s337 = scalar_lea.vmem %s1, %s336
      $region56: #{transformer_lm_forward.7} parent=47 // pred_fallthru
        _
    $region48: #{transformer_lm_forward.7} parent=5 // pred_fallthru
      _
    %p338 = scmp.le.s32.totalorder 1, %s16
    %p339 = scmp.lt.s32.totalorder %s16, 3
    %p340 = pnand %p338, %p339
    %p341 = pneg %p340
    // Predicated region
    $region57: #{transformer_lm_forward.7} parent=5 // pred_check
      _
    $region58: #{transformer_lm_forward.7} parent=5 // pred_check_branch
      %343 = sbr.rel (%p340) target = $region60
    $region59: #{transformer_lm_forward.7} parent=5 // pred_region
      %s344 = ssub.s32 %s16, 1
      %p345 = scmp.lt.s32.totalorder %s25, 1
      %s346 = scalar_select %p345, %s25, 1
      %p347 = scmp.lt.s32.totalorder %s26, 0
      %s348 = scalar_select %p347, %s26, 0
      %s349 = sadd.s32 %s348, %s346
      %s350 = smul.addr %s349, 8
      %s351 = scalar_lea.vmem %s0, %s350
      %p352 = pneg %p56
      %p353 = pneg %p53
      %p354 = scmp.lt.s32.totalorder %s25, 1
      %s355 = scalar_select %p354, %s25, 1
      %s356 = smul.addr %s355, 8
      %s357 = scalar_lea.vmem %s1, %s356
      %p358 = pneg %p82
      %p359 = pneg %p79
      %p360 = pneg %p103
      %p361 = pneg %p100
      %p362 = pneg %p124
      %p363 = pneg %p121
      %p364 = pneg %p145
      %p365 = pneg %p142
      %p366 = pneg %p166
      %p367 = pneg %p163
      %p368 = pneg %p187
      %p369 = pneg %p184
      %p370 = pneg %p208
      %p371 = pneg %p205
      %p372 = pneg %p229
      %p373 = pneg %p226
      %p374 = pneg %p250
      %p375 = pneg %p247
      %p376 = pneg %p278
      %p377 = pneg %p275
      %p378 = scmp.lt.s32.totalorder %s25, 1
      %s379 = scalar_select %p378, %s25, 1
      %p380 = scmp.lt.s32.totalorder %s26, 0
      %s381 = scalar_select %p380, %s26, 0
      %s382 = sadd.s32 %s381, %s379
      %s383 = smul.addr %s382, 8
      %s384 = scalar_lea.vmem %s10, %s383
      %p385 = scmp.lt.s32.totalorder %s25, 1
      %s386 = scalar_select %p385, %s25, 1
      %p387 = scmp.lt.s32.totalorder %s26, 0
      %s388 = scalar_select %p387, %s26, 0
      %s389 = sadd.s32 %s388, %s386
      %s390 = smul.addr %s389, 8
      %s391 = scalar_lea.vmem %s0, %s390
      %p392 = scmp.lt.s32.totalorder %s25, 1
      %s393 = scalar_select %p392, %s25, 1
      %s394 = smul.addr %s393, 8
      %s395 = scalar_lea.vmem %s1, %s394
      %p396 = scmp.lt.s32.totalorder %s25, 1
      %s397 = scalar_select %p396, %s25, 1
      %p398 = scmp.lt.s32.totalorder %s26, 0
      %s399 = scalar_select %p398, %s26, 0
      %s400 = sadd.s32 %s399, %s397
      %s401 = smul.addr %s400, 8
      %s402 = scalar_lea.vmem %s10, %s401
      %v404 = vld [vmem:[%s391] sm:$0xff]
      %v405 = vld [vmem:[%s395] sm:$0xff]
      %v406 = vpack.c.bf16 %v404, %v404
      %v407 = vpack.c.bf16 %v405, %v405
      %v408 = vld [vmem:[%s2] sm:$0xf]
      %v409 = vld [vmem:[%s2 + $0x4] sm:$0xf]
      %v410 = vld [vmem:[%s2 + $0x8] sm:$0xf]
      %v411 = vld [vmem:[%s2 + $0xc] sm:$0xf]
      %v412 = vld [vmem:[%s2 + $0x10] sm:$0xf]
      %v413 = vld [vmem:[%s2 + $0x14] sm:$0xf]
      %v414 = vld [vmem:[%s2 + $0x18] sm:$0xf]
      %v415 = vld [vmem:[%s2 + $0x1c] sm:$0xf]
      %v416 = vld [vmem:[%s2 + $0x20] sm:$0xf]
      %v417 = vld [vmem:[%s2 + $0x24] sm:$0xf]
      %v418 = vld [vmem:[%s2 + $0x28] sm:$0xf]
      %v419 = vld [vmem:[%s2 + $0x2c] sm:$0xf]
      %v420 = vld [vmem:[%s2 + $0x30] sm:$0xf]
      %v421 = vld [vmem:[%s2 + $0x34] sm:$0xf]
      %v422 = vld [vmem:[%s2 + $0x38] sm:$0xf]
      %v423 = vld [vmem:[%s2 + $0x3c] sm:$0xf]
      %v424 = vld [vmem:[%s3] sm:$0x1]
      %v426 = vlaneseq
      %v427 = vshrl.u32 %v426, 7
      %v428 = vsub.s32 0, %v427
      %v429 = vrot.slane %v424, %v428
      %v447 = vunpack.c.l.b16 %v408
      %v448 = vunpack.c.l.b16 %v409
      %v449 = vunpack.c.l.b16 %v410
      %v450 = vunpack.c.l.b16 %v411
      %v451 = vunpack.c.l.b16 %v412
      %v452 = vunpack.c.l.b16 %v413
      %v453 = vunpack.c.l.b16 %v414
      %v454 = vunpack.c.l.b16 %v415
      %v455 = vunpack.c.l.b16 %v416
      %v456 = vunpack.c.l.b16 %v417
      %v457 = vunpack.c.l.b16 %v418
      %v458 = vunpack.c.l.b16 %v419
      %v459 = vunpack.c.l.b16 %v420
      %v460 = vunpack.c.l.b16 %v421
      %v461 = vunpack.c.l.b16 %v422
      %v462 = vunpack.c.l.b16 %v423
      %v463 = vpack.c.b16 %v448, %v447
      %v464 = vpack.c.b16 %v450, %v449
      %v465 = vpack.c.b16 %v452, %v451
      %v466 = vpack.c.b16 %v454, %v453
      %v467 = vpack.c.b16 %v456, %v455
      %v468 = vpack.c.b16 %v458, %v457
      %v469 = vpack.c.b16 %v460, %v459
      %v470 = vpack.c.b16 %v462, %v461
      %479 = vmatprep.subr.bf16.mxu0 0
      %480 = vmatpush1.bf16.msra.mxu0 %v463
      %481 = vmatprep.subr.bf16.mxu0 0
      %482 = vmatpush1.bf16.msra.mxu0 %v464
      %483 = vmatprep.subr.bf16.mxu0 0
      %484 = vmatpush1.bf16.msra.mxu0 %v465
      %485 = vmatprep.subr.bf16.mxu0 0
      %486 = vmatpush1.bf16.msra.mxu0 %v466
      %487 = vmatprep.subr.bf16.mxu0 0
      %488 = vmatpush1.bf16.msra.mxu0 %v467
      %489 = vmatprep.subr.bf16.mxu0 0
      %490 = vmatpush1.bf16.msra.mxu0 %v468
      %491 = vmatprep.subr.bf16.mxu0 0
      %492 = vmatpush1.bf16.msra.mxu0 %v469
      %493 = vmatprep.subr.bf16.mxu0 0
      %494 = vmatpush1.bf16.msra.mxu0 %v470
      %495 = vmatprep.subr.bf16.mxu0 0
      %496 = vmatpush1.bf16.msra.mxu0 0
      %497 = vmatprep.subr.bf16.mxu0 0
      %498 = vmatpush1.bf16.msra.mxu0 0
      %499 = vmatprep.subr.bf16.mxu0 0
      %500 = vmatpush1.bf16.msra.mxu0 0
      %501 = vmatprep.subr.bf16.mxu0 0
      %502 = vmatpush1.bf16.msra.mxu0 0
      %503 = vmatprep.subr.bf16.mxu0 0
      %504 = vmatpush1.bf16.msra.mxu0 0
      %505 = vmatprep.subr.bf16.mxu0 0
      %506 = vmatpush1.bf16.msra.mxu0 0
      %507 = vmatprep.subr.bf16.mxu0 0
      %508 = vmatpush1.bf16.msra.mxu0 0
      %509 = vmatprep.subr.bf16.mxu0 0
      %510 = vmatpush1.bf16.msra.mxu0 0
      %511 = vmatprep.mubr.bf16.mxu0 0
      %512 = vmatmul.mubr.bf16.gmra.mrb[0].mxu0 %v406
      %v513 = vpop.f32.mrb[0].mxu0
      %v514 = vadd.f32 %v429, %v513
      %v515 = vpop.f32.mrb[0].mxu0
      %v516 = vpop.f32.mrb[0].mxu0
      %v517 = vpop.f32.mrb[0].mxu0
      %518 = vdwg.mxu0
      %v519 = vld [vmem:[%s4] sm:$0xff]
      %v520 = vld [vmem:[%s4 + $0x8] sm:$0xff]
      %v521 = vld [vmem:[%s4 + $0x10] sm:$0xff]
      %v522 = vld [vmem:[%s4 + $0x18] sm:$0xff]
      %v523 = vld [vmem:[%s4 + $0x20] sm:$0xff]
      %v524 = vld [vmem:[%s4 + $0x28] sm:$0xff]
      %v525 = vld [vmem:[%s4 + $0x30] sm:$0xff]
      %v526 = vld [vmem:[%s4 + $0x38] sm:$0xff]
      %v527 = vld [vmem:[%s4 + $0x40] sm:$0xff]
      %v528 = vld [vmem:[%s4 + $0x48] sm:$0xff]
      %v529 = vld [vmem:[%s4 + $0x50] sm:$0xff]
      %v530 = vld [vmem:[%s4 + $0x58] sm:$0xff]
      %v531 = vld [vmem:[%s4 + $0x60] sm:$0xff]
      %v532 = vld [vmem:[%s4 + $0x68] sm:$0xff]
      %v533 = vld [vmem:[%s4 + $0x70] sm:$0xff]
      %v534 = vld [vmem:[%s4 + $0x78] sm:$0xff]
      %v535 = vld [vmem:[%s5] sm:$0x3]
      %v537 = vlaneseq
      %v538 = vshrl.u32 %v537, 7
      %v539 = vsub.s32 0, %v538
      %v540 = vrot.slane %v535, %v539
      %v541 = vlaneseq
      %v542 = vshrl.u32 %v541, 7
      %v543 = vsub.s32 1, %v542
      %v544 = vrot.slane %v535, %v543
      %v563 = vunpack.c.l.b16 %v519
      %v564 = vunpack.c.h.b16 %v519
      %v565 = vunpack.c.l.b16 %v520
      %v566 = vunpack.c.h.b16 %v520
      %v567 = vunpack.c.l.b16 %v521
      %v568 = vunpack.c.h.b16 %v521
      %v569 = vunpack.c.l.b16 %v522
      %v570 = vunpack.c.h.b16 %v522
      %v571 = vunpack.c.l.b16 %v523
      %v572 = vunpack.c.h.b16 %v523
      %v573 = vunpack.c.l.b16 %v524
      %v574 = vunpack.c.h.b16 %v524
      %v575 = vunpack.c.l.b16 %v525
      %v576 = vunpack.c.h.b16 %v525
      %v577 = vunpack.c.l.b16 %v526
      %v578 = vunpack.c.h.b16 %v526
      %v579 = vunpack.c.l.b16 %v527
      %v580 = vunpack.c.h.b16 %v527
      %v581 = vunpack.c.l.b16 %v528
      %v582 = vunpack.c.h.b16 %v528
      %v583 = vunpack.c.l.b16 %v529
      %v584 = vunpack.c.h.b16 %v529
      %v585 = vunpack.c.l.b16 %v530
      %v586 = vunpack.c.h.b16 %v530
      %v587 = vunpack.c.l.b16 %v531
      %v588 = vunpack.c.h.b16 %v531
      %v589 = vunpack.c.l.b16 %v532
      %v590 = vunpack.c.h.b16 %v532
      %v591 = vunpack.c.l.b16 %v533
      %v592 = vunpack.c.h.b16 %v533
      %v593 = vunpack.c.l.b16 %v534
      %v594 = vunpack.c.h.b16 %v534
      %v595 = vpack.c.b16 %v565, %v563
      %v596 = vpack.c.b16 %v566, %v564
      %v597 = vpack.c.b16 %v569, %v567
      %v598 = vpack.c.b16 %v570, %v568
      %v599 = vpack.c.b16 %v573, %v571
      %v600 = vpack.c.b16 %v574, %v572
      %v601 = vpack.c.b16 %v577, %v575
      %v602 = vpack.c.b16 %v578, %v576
      %v603 = vpack.c.b16 %v581, %v579
      %v604 = vpack.c.b16 %v582, %v580
      %v605 = vpack.c.b16 %v585, %v583
      %v606 = vpack.c.b16 %v586, %v584
      %v607 = vpack.c.b16 %v589, %v587
      %v608 = vpack.c.b16 %v590, %v588
      %v609 = vpack.c.b16 %v593, %v591
      %v610 = vpack.c.b16 %v594, %v592
      %627 = vmatprep.subr.bf16.mxu0 %v596
      %628 = vmatpush1.bf16.msra.mxu0 %v595
      %629 = vmatprep.subr.bf16.mxu0 %v598
      %630 = vmatpush1.bf16.msra.mxu0 %v597
      %631 = vmatprep.subr.bf16.mxu0 %v600
      %632 = vmatpush1.bf16.msra.mxu0 %v599
      %633 = vmatprep.subr.bf16.mxu0 %v602
      %634 = vmatpush1.bf16.msra.mxu0 %v601
      %635 = vmatprep.subr.bf16.mxu0 %v604
      %636 = vmatpush1.bf16.msra.mxu0 %v603
      %637 = vmatprep.subr.bf16.mxu0 %v606
      %638 = vmatpush1.bf16.msra.mxu0 %v605
      %639 = vmatprep.subr.bf16.mxu0 %v608
      %640 = vmatpush1.bf16.msra.mxu0 %v607
      %641 = vmatprep.subr.bf16.mxu0 %v610
      %642 = vmatpush1.bf16.msra.mxu0 %v609
      %643 = vmatprep.subr.bf16.mxu0 0
      %644 = vmatpush1.bf16.msra.mxu0 0
      %645 = vmatprep.subr.bf16.mxu0 0
      %646 = vmatpush1.bf16.msra.mxu0 0
      %647 = vmatprep.subr.bf16.mxu0 0
      %648 = vmatpush1.bf16.msra.mxu0 0
      %649 = vmatprep.subr.bf16.mxu0 0
      %650 = vmatpush1.bf16.msra.mxu0 0
      %651 = vmatprep.subr.bf16.mxu0 0
      %652 = vmatpush1.bf16.msra.mxu0 0
      %653 = vmatprep.subr.bf16.mxu0 0
      %654 = vmatpush1.bf16.msra.mxu0 0
      %655 = vmatprep.subr.bf16.mxu0 0
      %656 = vmatpush1.bf16.msra.mxu0 0
      %657 = vmatprep.subr.bf16.mxu0 0
      %658 = vmatpush1.bf16.msra.mxu0 0
      %659 = vmatprep.mubr.bf16.mxu0 0
      %660 = vmatmul.mubr.bf16.gmra.mrb[0].mxu0 %v407
      %v661 = vpop.f32.mrb[0].mxu0
      %v662 = vadd.f32 %v540, %v661
      %v663 = vpop.f32.mrb[0].mxu0
      %v664 = vadd.f32 %v544, %v663
      %v665 = vpop.f32.mrb[0].mxu0
      %v666 = vpop.f32.mrb[0].mxu0
      %667 = vdwg.mxu0
      %v668 = vmul.f32 %v514, 0.17677669
      %670 = vrot.lane.b32.xlu0 %v668, 96
      %v671 = vpop.permute.xlu0 %670
      %673 = vrot.lane.b32.xlu0 %v668, 64
      %v674 = vpop.permute.xlu0 %673
      %676 = vrot.lane.b32.xlu0 %v668, 32
      %v677 = vpop.permute.xlu0 %676
      %v679 = vcombine.low %v668, %v674
      %v680 = vcombine.high %v668, %v674
      %v682 = vunpack.c.l.s4 1983009808
      %v683 = vunpack.c.0.s8 %v682
      %v684 = vlaneseq
      %v685 = vshrl.u32 %v684, 7
      %v686 = vsub.s32 %v683, %v685
      %v687 = vrot.slane %v679, %v686
      %v689 = vunpack.c.l.s4 1983009808
      %v690 = vunpack.c.0.s8 %v689
      %v691 = vlaneseq
      %v692 = vshrl.u32 %v691, 7
      %v693 = vsub.s32 %v690, %v692
      %v694 = vrot.slane %v680, %v693
      %v695 = vcombine.low %v671, %v677
      %v696 = vcombine.high %v671, %v677
      %v698 = vunpack.c.l.s4 1983009808
      %v699 = vunpack.c.0.s8 %v698
      %v700 = vlaneseq
      %v701 = vshrl.u32 %v700, 7
      %v702 = vsub.s32 %v699, %v701
      %v703 = vrot.slane %v695, %v702
      %v705 = vunpack.c.l.s4 1983009808
      %v706 = vunpack.c.0.s8 %v705
      %v707 = vlaneseq
      %v708 = vshrl.u32 %v707, 7
      %v709 = vsub.s32 %v706, %v708
      %v710 = vrot.slane %v696, %v709
      %v711 = vcombine.low %v687, %v703
      %v712 = vcombine.high %v687, %v703
      %v714 = vunpack.c.l.s4 1934713408
      %v715 = vunpack.c.0.s8 %v714
      %v716 = vlaneseq
      %v717 = vshrl.u32 %v716, 7
      %v718 = vsub.s32 %v715, %v717
      %v719 = vrot.slane %v711, %v718
      %v721 = vunpack.c.l.s4 1934713408
      %v722 = vunpack.c.0.s8 %v721
      %v723 = vlaneseq
      %v724 = vshrl.u32 %v723, 7
      %v725 = vsub.s32 %v722, %v724
      %v726 = vrot.slane %v712, %v725
      %v727 = vcombine.low %v694, %v710
      %v728 = vcombine.high %v694, %v710
      %v730 = vunpack.c.l.s4 1934713408
      %v731 = vunpack.c.0.s8 %v730
      %v732 = vlaneseq
      %v733 = vshrl.u32 %v732, 7
      %v734 = vsub.s32 %v731, %v733
      %v735 = vrot.slane %v727, %v734
      %v737 = vunpack.c.l.s4 1934713408
      %v738 = vunpack.c.0.s8 %v737
      %v739 = vlaneseq
      %v740 = vshrl.u32 %v739, 7
      %v741 = vsub.s32 %v738, %v740
      %v742 = vrot.slane %v728, %v741
      %v743 = vcombine.high %v719, 0.0
      %v744 = vcombine.high %v726, 0.0
      %v745 = vcombine.high %v735, 0.0
      %v746 = vcombine.high %v742, 0.0
      %v747 = vpack.c.bf16 %v719, %v719
      %v748 = vpack.c.bf16 %v743, %v743
      %v749 = vpack.c.bf16 %v726, %v726
      %v750 = vpack.c.bf16 %v744, %v744
      %v751 = vpack.c.bf16 %v735, %v735
      %v752 = vpack.c.bf16 %v745, %v745
      %v753 = vpack.c.bf16 %v742, %v742
      %v754 = vpack.c.bf16 %v746, %v746
      %756 = vrot.lane.b32.xlu0 %v662, 96
      %v757 = vpop.permute.xlu0 %756
      %759 = vrot.lane.b32.xlu0 %v662, 64
      %v760 = vpop.permute.xlu0 %759
      %762 = vrot.lane.b32.xlu0 %v662, 32
      %v763 = vpop.permute.xlu0 %762
      %v765 = vcombine.low %v662, %v760
      %v766 = vcombine.high %v662, %v760
      %v768 = vunpack.c.l.s4 1983009808
      %v769 = vunpack.c.0.s8 %v768
      %v770 = vlaneseq
      %v771 = vshrl.u32 %v770, 7
      %v772 = vsub.s32 %v769, %v771
      %v773 = vrot.slane %v765, %v772
      %v775 = vunpack.c.l.s4 1983009808
      %v776 = vunpack.c.0.s8 %v775
      %v777 = vlaneseq
      %v778 = vshrl.u32 %v777, 7
      %v779 = vsub.s32 %v776, %v778
      %v780 = vrot.slane %v766, %v779
      %v781 = vcombine.low %v757, %v763
      %v782 = vcombine.high %v757, %v763
      %v784 = vunpack.c.l.s4 1983009808
      %v785 = vunpack.c.0.s8 %v784
      %v786 = vlaneseq
      %v787 = vshrl.u32 %v786, 7
      %v788 = vsub.s32 %v785, %v787
      %v789 = vrot.slane %v781, %v788
      %v791 = vunpack.c.l.s4 1983009808
      %v792 = vunpack.c.0.s8 %v791
      %v793 = vlaneseq
      %v794 = vshrl.u32 %v793, 7
      %v795 = vsub.s32 %v792, %v794
      %v796 = vrot.slane %v782, %v795
      %v797 = vcombine.low %v773, %v789
      %v798 = vcombine.high %v773, %v789
      %v800 = vunpack.c.l.s4 1934713408
      %v801 = vunpack.c.0.s8 %v800
      %v802 = vlaneseq
      %v803 = vshrl.u32 %v802, 7
      %v804 = vsub.s32 %v801, %v803
      %v805 = vrot.slane %v797, %v804
      %v807 = vunpack.c.l.s4 1934713408
      %v808 = vunpack.c.0.s8 %v807
      %v809 = vlaneseq
      %v810 = vshrl.u32 %v809, 7
      %v811 = vsub.s32 %v808, %v810
      %v812 = vrot.slane %v798, %v811
      %v813 = vcombine.low %v780, %v796
      %v814 = vcombine.high %v780, %v796
      %v816 = vunpack.c.l.s4 1934713408
      %v817 = vunpack.c.0.s8 %v816
      %v818 = vlaneseq
      %v819 = vshrl.u32 %v818, 7
      %v820 = vsub.s32 %v817, %v819
      %v821 = vrot.slane %v813, %v820
      %v823 = vunpack.c.l.s4 1934713408
      %v824 = vunpack.c.0.s8 %v823
      %v825 = vlaneseq
      %v826 = vshrl.u32 %v825, 7
      %v827 = vsub.s32 %v824, %v826
      %v828 = vrot.slane %v814, %v827
      %v829 = vcombine.high %v805, 0.0
      %v830 = vcombine.high %v812, 0.0
      %v831 = vcombine.high %v821, 0.0
      %v832 = vcombine.high %v828, 0.0
      %v833 = vpack.c.bf16 %v805, %v805
      %v834 = vpack.c.bf16 %v829, %v829
      %v835 = vpack.c.bf16 %v812, %v812
      %v836 = vpack.c.bf16 %v830, %v830
      %v837 = vpack.c.bf16 %v821, %v821
      %v838 = vpack.c.bf16 %v831, %v831
      %v839 = vpack.c.bf16 %v828, %v828
      %v840 = vpack.c.bf16 %v832, %v832
      %842 = vrot.lane.b32.xlu0 %v664, 96
      %v843 = vpop.permute.xlu0 %842
      %845 = vrot.lane.b32.xlu0 %v664, 64
      %v846 = vpop.permute.xlu0 %845
      %848 = vrot.lane.b32.xlu0 %v664, 32
      %v849 = vpop.permute.xlu0 %848
      %v851 = vcombine.low %v664, %v846
      %v852 = vcombine.high %v664, %v846
      %v854 = vunpack.c.l.s4 1983009808
      %v855 = vunpack.c.0.s8 %v854
      %v856 = vlaneseq
      %v857 = vshrl.u32 %v856, 7
      %v858 = vsub.s32 %v855, %v857
      %v859 = vrot.slane %v851, %v858
      %v861 = vunpack.c.l.s4 1983009808
      %v862 = vunpack.c.0.s8 %v861
      %v863 = vlaneseq
      %v864 = vshrl.u32 %v863, 7
      %v865 = vsub.s32 %v862, %v864
      %v866 = vrot.slane %v852, %v865
      %v867 = vcombine.low %v843, %v849
      %v868 = vcombine.high %v843, %v849
      %v870 = vunpack.c.l.s4 1983009808
      %v871 = vunpack.c.0.s8 %v870
      %v872 = vlaneseq
      %v873 = vshrl.u32 %v872, 7
      %v874 = vsub.s32 %v871, %v873
      %v875 = vrot.slane %v867, %v874
      %v877 = vunpack.c.l.s4 1983009808
      %v878 = vunpack.c.0.s8 %v877
      %v879 = vlaneseq
      %v880 = vshrl.u32 %v879, 7
      %v881 = vsub.s32 %v878, %v880
      %v882 = vrot.slane %v868, %v881
      %v883 = vcombine.low %v859, %v875
      %v884 = vcombine.high %v859, %v875
      %v886 = vunpack.c.l.s4 1934713408
      %v887 = vunpack.c.0.s8 %v886
      %v888 = vlaneseq
      %v889 = vshrl.u32 %v888, 7
      %v890 = vsub.s32 %v887, %v889
      %v891 = vrot.slane %v883, %v890
      %v893 = vunpack.c.l.s4 1934713408
      %v894 = vunpack.c.0.s8 %v893
      %v895 = vlaneseq
      %v896 = vshrl.u32 %v895, 7
      %v897 = vsub.s32 %v894, %v896
      %v898 = vrot.slane %v884, %v897
      %v899 = vcombine.low %v866, %v882
      %v900 = vcombine.high %v866, %v882
      %v902 = vunpack.c.l.s4 1934713408
      %v903 = vunpack.c.0.s8 %v902
      %v904 = vlaneseq
      %v905 = vshrl.u32 %v904, 7
      %v906 = vsub.s32 %v903, %v905
      %v907 = vrot.slane %v899, %v906
      %v909 = vunpack.c.l.s4 1934713408
      %v910 = vunpack.c.0.s8 %v909
      %v911 = vlaneseq
      %v912 = vshrl.u32 %v911, 7
      %v913 = vsub.s32 %v910, %v912
      %v914 = vrot.slane %v900, %v913
      %v915 = vcombine.high %v891, 0.0
      %v916 = vcombine.high %v898, 0.0
      %v917 = vcombine.high %v907, 0.0
      %v918 = vcombine.high %v914, 0.0
      %v919 = vpack.c.bf16 %v891, %v891
      %v920 = vpack.c.bf16 %v915, %v915
      %v921 = vpack.c.bf16 %v898, %v898
      %v922 = vpack.c.bf16 %v916, %v916
      %v923 = vpack.c.bf16 %v907, %v907
      %v924 = vpack.c.bf16 %v917, %v917
      %v925 = vpack.c.bf16 %v914, %v914
      %v926 = vpack.c.bf16 %v918, %v918
      %v927 = vcombine.low %v747, %v751
      %v929 = vunpack.c.l.s4 1983009808
      %v930 = vunpack.c.0.s8 %v929
      %v931 = vlaneseq
      %v932 = vshrl.u32 %v931, 7
      %v933 = vsub.s32 %v930, %v932
      %v934 = vrot.slane %v927, %v933
      %v935 = vcombine.low %v749, %v753
      %v937 = vunpack.c.l.s4 1983009808
      %v938 = vunpack.c.0.s8 %v937
      %v939 = vlaneseq
      %v940 = vshrl.u32 %v939, 7
      %v941 = vsub.s32 %v938, %v940
      %v942 = vrot.slane %v935, %v941
      %v943 = vcombine.low %v934, %v942
      %v945 = vunpack.c.l.s4 1934713408
      %v946 = vunpack.c.0.s8 %v945
      %v947 = vlaneseq
      %v948 = vshrl.u32 %v947, 7
      %v949 = vsub.s32 %v946, %v948
      %v950 = vrot.slane %v943, %v949
      %v951 = vcombine.high %v950, 0
      %v952 = vcombine.low %v748, %v752
      %v954 = vunpack.c.l.s4 1983009808
      %v955 = vunpack.c.0.s8 %v954
      %v956 = vlaneseq
      %v957 = vshrl.u32 %v956, 7
      %v958 = vsub.s32 %v955, %v957
      %v959 = vrot.slane %v952, %v958
      %v960 = vcombine.low %v750, %v754
      %v962 = vunpack.c.l.s4 1983009808
      %v963 = vunpack.c.0.s8 %v962
      %v964 = vlaneseq
      %v965 = vshrl.u32 %v964, 7
      %v966 = vsub.s32 %v963, %v965
      %v967 = vrot.slane %v960, %v966
      %v968 = vcombine.low %v959, %v967
      %v970 = vunpack.c.l.s4 1934713408
      %v971 = vunpack.c.0.s8 %v970
      %v972 = vlaneseq
      %v973 = vshrl.u32 %v972, 7
      %v974 = vsub.s32 %v971, %v973
      %v975 = vrot.slane %v968, %v974
      %v976 = vcombine.high %v975, 0
      %v979 = vpack.i.b16 %v975, %v950
      %v980 = vshrl.u32 %v950, 16
      %v981 = vshrl.u32 %v975, 16
      %v982 = vpack.i.b16 %v981, %v980
      %v985 = vpack.i.b16 %v976, %v951
      %v986 = vshrl.u32 %v951, 16
      %v987 = vshrl.u32 %v976, 16
      %v988 = vpack.i.b16 %v987, %v986
      %989 = vxpose.xlu0.c.b16.start [1/8] %v833, 128
      %990 = vxpose.xlu0.c.b16.cont [2/8] 0, 128
      %991 = vxpose.xlu0.c.b16.cont [3/8] 0, 128
      %992 = vxpose.xlu0.c.b16.cont [4/8] 0, 128
      %993 = vxpose.xlu0.c.b16.cont [5/8] 0, 128
      %994 = vxpose.xlu0.c.b16.cont [6/8] 0, 128
      %995 = vxpose.xlu0.c.b16.cont [7/8] 0, 128
      %996 = vxpose.xlu0.c.b16.end [8/8] 0, 128
      %v997 = vpop.trf.xlu0
      %v998 = vpop.trf.xlu0
      %v999 = vpop.trf.xlu0
      %v1000 = vpop.trf.xlu0
      %v1001 = vpop.trf.xlu0
      %v1002 = vpop.trf.xlu0
      %v1003 = vpop.trf.xlu0
      %v1004 = vpop.trf.xlu0
      %1005 = vxpose.xlu0.c.b16.start [1/8] %v834, 128
      %1006 = vxpose.xlu0.c.b16.cont [2/8] 0, 128
      %1007 = vxpose.xlu0.c.b16.cont [3/8] 0, 128
      %1008 = vxpose.xlu0.c.b16.cont [4/8] 0, 128
      %1009 = vxpose.xlu0.c.b16.cont [5/8] 0, 128
      %1010 = vxpose.xlu0.c.b16.cont [6/8] 0, 128
      %1011 = vxpose.xlu0.c.b16.cont [7/8] 0, 128
      %1012 = vxpose.xlu0.c.b16.end [8/8] 0, 128
      %v1013 = vpop.trf.xlu0
      %v1014 = vpop.trf.xlu0
      %v1015 = vpop.trf.xlu0
      %v1016 = vpop.trf.xlu0
      %v1017 = vpop.trf.xlu0
      %v1018 = vpop.trf.xlu0
      %v1019 = vpop.trf.xlu0
      %v1020 = vpop.trf.xlu0
      %1021 = vxpose.xlu0.c.b16.start [1/8] %v835, 128
      %1022 = vxpose.xlu0.c.b16.cont [2/8] 0, 128
      %1023 = vxpose.xlu0.c.b16.cont [3/8] 0, 128
      %1024 = vxpose.xlu0.c.b16.cont [4/8] 0, 128
      %1025 = vxpose.xlu0.c.b16.cont [5/8] 0, 128
      %1026 = vxpose.xlu0.c.b16.cont [6/8] 0, 128
      %1027 = vxpose.xlu0.c.b16.cont [7/8] 0, 128
      %1028 = vxpose.xlu0.c.b16.end [8/8] 0, 128
      %v1029 = vpop.trf.xlu0
      %v1030 = vpop.trf.xlu0
      %v1031 = vpop.trf.xlu0
      %v1032 = vpop.trf.xlu0
      %v1033 = vpop.trf.xlu0
      %v1034 = vpop.trf.xlu0
      %v1035 = vpop.trf.xlu0
      %v1036 = vpop.trf.xlu0
      %1037 = vxpose.xlu0.c.b16.start [1/8] %v836, 128
      %1038 = vxpose.xlu0.c.b16.cont [2/8] 0, 128
      %1039 = vxpose.xlu0.c.b16.cont [3/8] 0, 128
      %1040 = vxpose.xlu0.c.b16.cont [4/8] 0, 128
      %1041 = vxpose.xlu0.c.b16.cont [5/8] 0, 128
      %1042 = vxpose.xlu0.c.b16.cont [6/8] 0, 128
      %1043 = vxpose.xlu0.c.b16.cont [7/8] 0, 128
      %1044 = vxpose.xlu0.c.b16.end [8/8] 0, 128
      %v1045 = vpop.trf.xlu0
      %v1046 = vpop.trf.xlu0
      %v1047 = vpop.trf.xlu0
      %v1048 = vpop.trf.xlu0
      %v1049 = vpop.trf.xlu0
      %v1050 = vpop.trf.xlu0
      %v1051 = vpop.trf.xlu0
      %v1052 = vpop.trf.xlu0
      %1053 = vxpose.xlu0.c.b16.start [1/8] %v837, 128
      %1054 = vxpose.xlu0.c.b16.cont [2/8] 0, 128
      %1055 = vxpose.xlu0.c.b16.cont [3/8] 0, 128
      %1056 = vxpose.xlu0.c.b16.cont [4/8] 0, 128
      %1057 = vxpose.xlu0.c.b16.cont [5/8] 0, 128
      %1058 = vxpose.xlu0.c.b16.cont [6/8] 0, 128
      %1059 = vxpose.xlu0.c.b16.cont [7/8] 0, 128
      %1060 = vxpose.xlu0.c.b16.end [8/8] 0, 128
      %v1061 = vpop.trf.xlu0
      %v1062 = vpop.trf.xlu0
      %v1063 = vpop.trf.xlu0
      %v1064 = vpop.trf.xlu0
      %v1065 = vpop.trf.xlu0
      %v1066 = vpop.trf.xlu0
      %v1067 = vpop.trf.xlu0
      %v1068 = vpop.trf.xlu0
      %1069 = vxpose.xlu0.c.b16.start [1/8] %v838, 128
      %1070 = vxpose.xlu0.c.b16.cont [2/8] 0, 128
      %1071 = vxpose.xlu0.c.b16.cont [3/8] 0, 128
      %1072 = vxpose.xlu0.c.b16.cont [4/8] 0, 128
      %1073 = vxpose.xlu0.c.b16.cont [5/8] 0, 128
      %1074 = vxpose.xlu0.c.b16.cont [6/8] 0, 128
      %1075 = vxpose.xlu0.c.b16.cont [7/8] 0, 128
      %1076 = vxpose.xlu0.c.b16.end [8/8] 0, 128
      %v1077 = vpop.trf.xlu0
      %v1078 = vpop.trf.xlu0
      %v1079 = vpop.trf.xlu0
      %v1080 = vpop.trf.xlu0
      %v1081 = vpop.trf.xlu0
      %v1082 = vpop.trf.xlu0
      %v1083 = vpop.trf.xlu0
      %v1084 = vpop.trf.xlu0
      %1085 = vxpose.xlu0.c.b16.start [1/8] %v839, 128
      %1086 = vxpose.xlu0.c.b16.cont [2/8] 0, 128
      %1087 = vxpose.xlu0.c.b16.cont [3/8] 0, 128
      %1088 = vxpose.xlu0.c.b16.cont [4/8] 0, 128
      %1089 = vxpose.xlu0.c.b16.cont [5/8] 0, 128
      %1090 = vxpose.xlu0.c.b16.cont [6/8] 0, 128
      %1091 = vxpose.xlu0.c.b16.cont [7/8] 0, 128
      %1092 = vxpose.xlu0.c.b16.end [8/8] 0, 128
      %v1093 = vpop.trf.xlu0
      %v1094 = vpop.trf.xlu0
      %v1095 = vpop.trf.xlu0
      %v1096 = vpop.trf.xlu0
      %v1097 = vpop.trf.xlu0
      %v1098 = vpop.trf.xlu0
      %v1099 = vpop.trf.xlu0
      %v1100 = vpop.trf.xlu0
      %1101 = vxpose.xlu0.c.b16.start [1/8] %v840, 128
      %1102 = vxpose.xlu0.c.b16.cont [2/8] 0, 128
      %1103 = vxpose.xlu0.c.b16.cont [3/8] 0, 128
      %1104 = vxpose.xlu0.c.b16.cont [4/8] 0, 128
      %1105 = vxpose.xlu0.c.b16.cont [5/8] 0, 128
      %1106 = vxpose.xlu0.c.b16.cont [6/8] 0, 128
      %1107 = vxpose.xlu0.c.b16.cont [7/8] 0, 128
      %1108 = vxpose.xlu0.c.b16.end [8/8] 0, 128
      %v1109 = vpop.trf.xlu0
      %v1110 = vpop.trf.xlu0
      %v1111 = vpop.trf.xlu0
      %v1112 = vpop.trf.xlu0
      %v1113 = vpop.trf.xlu0
      %v1114 = vpop.trf.xlu0
      %v1115 = vpop.trf.xlu0
      %v1116 = vpop.trf.xlu0
      %v1119 = vpack.i.b16 %v1013, %v997
      %v1121 = vshrl.u32 %v997, 16
      %v1122 = vshrl.u32 %v1013, 16
      %v1123 = vpack.i.b16 %v1122, %v1121
      %v1127 = vpack.i.b16 %v1045, %v1029
      %v1129 = vshrl.u32 %v1029, 16
      %v1130 = vshrl.u32 %v1045, 16
      %v1131 = vpack.i.b16 %v1130, %v1129
      %v1135 = vpack.i.b16 %v1077, %v1061
      %v1137 = vshrl.u32 %v1061, 16
      %v1138 = vshrl.u32 %v1077, 16
      %v1139 = vpack.i.b16 %v1138, %v1137
      %v1143 = vpack.i.b16 %v1109, %v1093
      %v1145 = vshrl.u32 %v1093, 16
      %v1146 = vshrl.u32 %v1109, 16
      %v1147 = vpack.i.b16 %v1146, %v1145
      %v1151 = vpack.i.b16 %v1014, %v998
      %v1153 = vshrl.u32 %v998, 16
      %v1154 = vshrl.u32 %v1014, 16
      %v1155 = vpack.i.b16 %v1154, %v1153
      %v1159 = vpack.i.b16 %v1046, %v1030
      %v1161 = vshrl.u32 %v1030, 16
      %v1162 = vshrl.u32 %v1046, 16
      %v1163 = vpack.i.b16 %v1162, %v1161
      %v1167 = vpack.i.b16 %v1078, %v1062
      %v1169 = vshrl.u32 %v1062, 16
      %v1170 = vshrl.u32 %v1078, 16
      %v1171 = vpack.i.b16 %v1170, %v1169
      %v1175 = vpack.i.b16 %v1110, %v1094
      %v1177 = vshrl.u32 %v1094, 16
      %v1178 = vshrl.u32 %v1110, 16
      %v1179 = vpack.i.b16 %v1178, %v1177
      %v1181 = vcombine.low %v1119, %v1135
      %v1182 = vcombine.high %v1119, %v1135
      %v1184 = vunpack.c.l.s4 1983009808
      %v1185 = vunpack.c.0.s8 %v1184
      %v1186 = vlaneseq
      %v1187 = vshrl.u32 %v1186, 7
      %v1188 = vsub.s32 %v1185, %v1187
      %v1189 = vrot.slane %v1181, %v1188
      %v1191 = vunpack.c.l.s4 1983009808
      %v1192 = vunpack.c.0.s8 %v1191
      %v1193 = vlaneseq
      %v1194 = vshrl.u32 %v1193, 7
      %v1195 = vsub.s32 %v1192, %v1194
      %v1196 = vrot.slane %v1182, %v1195
      %v1197 = vcombine.low %v1127, %v1143
      %v1198 = vcombine.high %v1127, %v1143
      %v1200 = vunpack.c.l.s4 1983009808
      %v1201 = vunpack.c.0.s8 %v1200
      %v1202 = vlaneseq
      %v1203 = vshrl.u32 %v1202, 7
      %v1204 = vsub.s32 %v1201, %v1203
      %v1205 = vrot.slane %v1197, %v1204
      %v1207 = vunpack.c.l.s4 1983009808
      %v1208 = vunpack.c.0.s8 %v1207
      %v1209 = vlaneseq
      %v1210 = vshrl.u32 %v1209, 7
      %v1211 = vsub.s32 %v1208, %v1210
      %v1212 = vrot.slane %v1198, %v1211
      %v1213 = vcombine.low %v1189, %v1205
      %v1214 = vcombine.high %v1189, %v1205
      %v1216 = vunpack.c.l.s4 1934713408
      %v1217 = vunpack.c.0.s8 %v1216
      %v1218 = vlaneseq
      %v1219 = vshrl.u32 %v1218, 7
      %v1220 = vsub.s32 %v1217, %v1219
      %v1221 = vrot.slane %v1213, %v1220
      %v1223 = vunpack.c.l.s4 1934713408
      %v1224 = vunpack.c.0.s8 %v1223
      %v1225 = vlaneseq
      %v1226 = vshrl.u32 %v1225, 7
      %v1227 = vsub.s32 %v1224, %v1226
      %v1228 = vrot.slane %v1214, %v1227
      %v1229 = vcombine.low %v1196, %v1212
      %v1230 = vcombine.high %v1196, %v1212
      %v1232 = vunpack.c.l.s4 1934713408
      %v1233 = vunpack.c.0.s8 %v1232
      %v1234 = vlaneseq
      %v1235 = vshrl.u32 %v1234, 7
      %v1236 = vsub.s32 %v1233, %v1235
      %v1237 = vrot.slane %v1229, %v1236
      %v1239 = vunpack.c.l.s4 1934713408
      %v1240 = vunpack.c.0.s8 %v1239
      %v1241 = vlaneseq
      %v1242 = vshrl.u32 %v1241, 7
      %v1243 = vsub.s32 %v1240, %v1242
      %v1244 = vrot.slane %v1230, %v1243
      %v1245 = vcombine.high %v1221, 0
      %v1246 = vcombine.high %v1228, 0
      %v1247 = vcombine.high %v1237, 0
      %v1248 = vcombine.high %v1244, 0
      %v1249 = vcombine.low %v1123, %v1139
      %v1250 = vcombine.high %v1123, %v1139
      %v1252 = vunpack.c.l.s4 1983009808
      %v1253 = vunpack.c.0.s8 %v1252
      %v1254 = vlaneseq
      %v1255 = vshrl.u32 %v1254, 7
      %v1256 = vsub.s32 %v1253, %v1255
      %v1257 = vrot.slane %v1249, %v1256
      %v1259 = vunpack.c.l.s4 1983009808
      %v1260 = vunpack.c.0.s8 %v1259
      %v1261 = vlaneseq
      %v1262 = vshrl.u32 %v1261, 7
      %v1263 = vsub.s32 %v1260, %v1262
      %v1264 = vrot.slane %v1250, %v1263
      %v1265 = vcombine.low %v1131, %v1147
      %v1266 = vcombine.high %v1131, %v1147
      %v1268 = vunpack.c.l.s4 1983009808
      %v1269 = vunpack.c.0.s8 %v1268
      %v1270 = vlaneseq
      %v1271 = vshrl.u32 %v1270, 7
      %v1272 = vsub.s32 %v1269, %v1271
      %v1273 = vrot.slane %v1265, %v1272
      %v1275 = vunpack.c.l.s4 1983009808
      %v1276 = vunpack.c.0.s8 %v1275
      %v1277 = vlaneseq
      %v1278 = vshrl.u32 %v1277, 7
      %v1279 = vsub.s32 %v1276, %v1278
      %v1280 = vrot.slane %v1266, %v1279
      %v1281 = vcombine.low %v1257, %v1273
      %v1282 = vcombine.high %v1257, %v1273
      %v1284 = vunpack.c.l.s4 1934713408
      %v1285 = vunpack.c.0.s8 %v1284
      %v1286 = vlaneseq
      %v1287 = vshrl.u32 %v1286, 7
      %v1288 = vsub.s32 %v1285, %v1287
      %v1289 = vrot.slane %v1281, %v1288
      %v1291 = vunpack.c.l.s4 1934713408
      %v1292 = vunpack.c.0.s8 %v1291
      %v1293 = vlaneseq
      %v1294 = vshrl.u32 %v1293, 7
      %v1295 = vsub.s32 %v1292, %v1294
      %v1296 = vrot.slane %v1282, %v1295
      %v1297 = vcombine.low %v1264, %v1280
      %v1298 = vcombine.high %v1264, %v1280
      %v1300 = vunpack.c.l.s4 1934713408
      %v1301 = vunpack.c.0.s8 %v1300
      %v1302 = vlaneseq
      %v1303 = vshrl.u32 %v1302, 7
      %v1304 = vsub.s32 %v1301, %v1303
      %v1305 = vrot.slane %v1297, %v1304
      %v1307 = vunpack.c.l.s4 1934713408
      %v1308 = vunpack.c.0.s8 %v1307
      %v1309 = vlaneseq
      %v1310 = vshrl.u32 %v1309, 7
      %v1311 = vsub.s32 %v1308, %v1310
      %v1312 = vrot.slane %v1298, %v1311
      %v1313 = vcombine.high %v1289, 0
      %v1314 = vcombine.high %v1296, 0
      %v1315 = vcombine.high %v1305, 0
      %v1316 = vcombine.high %v1312, 0
      %v1317 = vcombine.low %v1151, %v1167
      %v1318 = vcombine.high %v1151, %v1167
      %v1320 = vunpack.c.l.s4 1983009808
      %v1321 = vunpack.c.0.s8 %v1320
      %v1322 = vlaneseq
      %v1323 = vshrl.u32 %v1322, 7
      %v1324 = vsub.s32 %v1321, %v1323
      %v1325 = vrot.slane %v1317, %v1324
      %v1327 = vunpack.c.l.s4 1983009808
      %v1328 = vunpack.c.0.s8 %v1327
      %v1329 = vlaneseq
      %v1330 = vshrl.u32 %v1329, 7
      %v1331 = vsub.s32 %v1328, %v1330
      %v1332 = vrot.slane %v1318, %v1331
      %v1333 = vcombine.low %v1159, %v1175
      %v1334 = vcombine.high %v1159, %v1175
      %v1336 = vunpack.c.l.s4 1983009808
      %v1337 = vunpack.c.0.s8 %v1336
      %v1338 = vlaneseq
      %v1339 = vshrl.u32 %v1338, 7
      %v1340 = vsub.s32 %v1337, %v1339
      %v1341 = vrot.slane %v1333, %v1340
      %v1343 = vunpack.c.l.s4 1983009808
      %v1344 = vunpack.c.0.s8 %v1343
      %v1345 = vlaneseq
      %v1346 = vshrl.u32 %v1345, 7
      %v1347 = vsub.s32 %v1344, %v1346
      %v1348 = vrot.slane %v1334, %v1347
      %v1349 = vcombine.low %v1325, %v1341
      %v1350 = vcombine.high %v1325, %v1341
      %v1352 = vunpack.c.l.s4 1934713408
      %v1353 = vunpack.c.0.s8 %v1352
      %v1354 = vlaneseq
      %v1355 = vshrl.u32 %v1354, 7
      %v1356 = vsub.s32 %v1353, %v1355
      %v1357 = vrot.slane %v1349, %v1356
      %v1359 = vunpack.c.l.s4 1934713408
      %v1360 = vunpack.c.0.s8 %v1359
      %v1361 = vlaneseq
      %v1362 = vshrl.u32 %v1361, 7
      %v1363 = vsub.s32 %v1360, %v1362
      %v1364 = vrot.slane %v1350, %v1363
      %v1365 = vcombine.low %v1332, %v1348
      %v1366 = vcombine.high %v1332, %v1348
      %v1368 = vunpack.c.l.s4 1934713408
      %v1369 = vunpack.c.0.s8 %v1368
      %v1370 = vlaneseq
      %v1371 = vshrl.u32 %v1370, 7
      %v1372 = vsub.s32 %v1369, %v1371
      %v1373 = vrot.slane %v1365, %v1372
      %v1375 = vunpack.c.l.s4 1934713408
      %v1376 = vunpack.c.0.s8 %v1375
      %v1377 = vlaneseq
      %v1378 = vshrl.u32 %v1377, 7
      %v1379 = vsub.s32 %v1376, %v1378
      %v1380 = vrot.slane %v1366, %v1379
      %v1381 = vcombine.high %v1357, 0
      %v1382 = vcombine.high %v1364, 0
      %v1383 = vcombine.high %v1373, 0
      %v1384 = vcombine.high %v1380, 0
      %v1385 = vcombine.low %v1155, %v1171
      %v1386 = vcombine.high %v1155, %v1171
      %v1388 = vunpack.c.l.s4 1983009808
      %v1389 = vunpack.c.0.s8 %v1388
      %v1390 = vlaneseq
      %v1391 = vshrl.u32 %v1390, 7
      %v1392 = vsub.s32 %v1389, %v1391
      %v1393 = vrot.slane %v1385, %v1392
      %v1395 = vunpack.c.l.s4 1983009808
      %v1396 = vunpack.c.0.s8 %v1395
      %v1397 = vlaneseq
      %v1398 = vshrl.u32 %v1397, 7
      %v1399 = vsub.s32 %v1396, %v1398
      %v1400 = vrot.slane %v1386, %v1399
      %v1401 = vcombine.low %v1163, %v1179
      %v1402 = vcombine.high %v1163, %v1179
      %v1404 = vunpack.c.l.s4 1983009808
      %v1405 = vunpack.c.0.s8 %v1404
      %v1406 = vlaneseq
      %v1407 = vshrl.u32 %v1406, 7
      %v1408 = vsub.s32 %v1405, %v1407
      %v1409 = vrot.slane %v1401, %v1408
      %v1411 = vunpack.c.l.s4 1983009808
      %v1412 = vunpack.c.0.s8 %v1411
      %v1413 = vlaneseq
      %v1414 = vshrl.u32 %v1413, 7
      %v1415 = vsub.s32 %v1412, %v1414
      %v1416 = vrot.slane %v1402, %v1415
      %v1417 = vcombine.low %v1393, %v1409
      %v1418 = vcombine.high %v1393, %v1409
      %v1420 = vunpack.c.l.s4 1934713408
      %v1421 = vunpack.c.0.s8 %v1420
      %v1422 = vlaneseq
      %v1423 = vshrl.u32 %v1422, 7
      %v1424 = vsub.s32 %v1421, %v1423
      %v1425 = vrot.slane %v1417, %v1424
      %v1427 = vunpack.c.l.s4 1934713408
      %v1428 = vunpack.c.0.s8 %v1427
      %v1429 = vlaneseq
      %v1430 = vshrl.u32 %v1429, 7
      %v1431 = vsub.s32 %v1428, %v1430
      %v1432 = vrot.slane %v1418, %v1431
      %v1433 = vcombine.low %v1400, %v1416
      %v1434 = vcombine.high %v1400, %v1416
      %v1436 = vunpack.c.l.s4 1934713408
      %v1437 = vunpack.c.0.s8 %v1436
      %v1438 = vlaneseq
      %v1439 = vshrl.u32 %v1438, 7
      %v1440 = vsub.s32 %v1437, %v1439
      %v1441 = vrot.slane %v1433, %v1440
      %v1443 = vunpack.c.l.s4 1934713408
      %v1444 = vunpack.c.0.s8 %v1443
      %v1445 = vlaneseq
      %v1446 = vshrl.u32 %v1445, 7
      %v1447 = vsub.s32 %v1444, %v1446
      %v1448 = vrot.slane %v1434, %v1447
      %v1449 = vcombine.high %v1425, 0
      %v1450 = vcombine.high %v1432, 0
      %v1451 = vcombine.high %v1441, 0
      %v1452 = vcombine.high %v1448, 0
      %1453 = vxpose.xlu0.c.b16.start [1/8] %v1221, 128
      %1454 = vxpose.xlu0.c.b16.cont [2/8] 0, 128
      %1455 = vxpose.xlu0.c.b16.cont [3/8] 0, 128
      %1456 = vxpose.xlu0.c.b16.cont [4/8] 0, 128
      %1457 = vxpose.xlu0.c.b16.cont [5/8] 0, 128
      %1458 = vxpose.xlu0.c.b16.cont [6/8] 0, 128
      %1459 = vxpose.xlu0.c.b16.cont [7/8] 0, 128
      %1460 = vxpose.xlu0.c.b16.end [8/8] 0, 128
      %v1461 = vpop.trf.xlu0
      %v1462 = vpop.trf.xlu0
      %v1463 = vpop.trf.xlu0
      %v1464 = vpop.trf.xlu0
      %v1465 = vpop.trf.xlu0
      %v1466 = vpop.trf.xlu0
      %v1467 = vpop.trf.xlu0
      %v1468 = vpop.trf.xlu0
      %1469 = vxpose.xlu0.c.b16.start [1/8] %v1289, 128
      %1470 = vxpose.xlu0.c.b16.cont [2/8] 0, 128
      %1471 = vxpose.xlu0.c.b16.cont [3/8] 0, 128
      %1472 = vxpose.xlu0.c.b16.cont [4/8] 0, 128
      %1473 = vxpose.xlu0.c.b16.cont [5/8] 0, 128
      %1474 = vxpose.xlu0.c.b16.cont [6/8] 0, 128
      %1475 = vxpose.xlu0.c.b16.cont [7/8] 0, 128
      %1476 = vxpose.xlu0.c.b16.end [8/8] 0, 128
      %v1477 = vpop.trf.xlu0
      %v1478 = vpop.trf.xlu0
      %v1479 = vpop.trf.xlu0
      %v1480 = vpop.trf.xlu0
      %v1481 = vpop.trf.xlu0
      %v1482 = vpop.trf.xlu0
      %v1483 = vpop.trf.xlu0
      %v1484 = vpop.trf.xlu0
      %1485 = vxpose.xlu0.c.b16.start [1/8] %v1245, 128
      %1486 = vxpose.xlu0.c.b16.cont [2/8] 0, 128
      %1487 = vxpose.xlu0.c.b16.cont [3/8] 0, 128
      %1488 = vxpose.xlu0.c.b16.cont [4/8] 0, 128
      %1489 = vxpose.xlu0.c.b16.cont [5/8] 0, 128
      %1490 = vxpose.xlu0.c.b16.cont [6/8] 0, 128
      %1491 = vxpose.xlu0.c.b16.cont [7/8] 0, 128
      %1492 = vxpose.xlu0.c.b16.end [8/8] 0, 128
      %v1493 = vpop.trf.xlu0
      %v1494 = vpop.trf.xlu0
      %v1495 = vpop.trf.xlu0
      %v1496 = vpop.trf.xlu0
      %v1497 = vpop.trf.xlu0
      %v1498 = vpop.trf.xlu0
      %v1499 = vpop.trf.xlu0
      %v1500 = vpop.trf.xlu0
      %1501 = vxpose.xlu0.c.b16.start [1/8] %v1313, 128
      %1502 = vxpose.xlu0.c.b16.cont [2/8] 0, 128
      %1503 = vxpose.xlu0.c.b16.cont [3/8] 0, 128
      %1504 = vxpose.xlu0.c.b16.cont [4/8] 0, 128
      %1505 = vxpose.xlu0.c.b16.cont [5/8] 0, 128
      %1506 = vxpose.xlu0.c.b16.cont [6/8] 0, 128
      %1507 = vxpose.xlu0.c.b16.cont [7/8] 0, 128
      %1508 = vxpose.xlu0.c.b16.end [8/8] 0, 128
      %v1509 = vpop.trf.xlu0
      %v1510 = vpop.trf.xlu0
      %v1511 = vpop.trf.xlu0
      %v1512 = vpop.trf.xlu0
      %v1513 = vpop.trf.xlu0
      %v1514 = vpop.trf.xlu0
      %v1515 = vpop.trf.xlu0
      %v1516 = vpop.trf.xlu0
      %1517 = vxpose.xlu0.c.b16.start [1/8] %v1228, 128
      %1518 = vxpose.xlu0.c.b16.cont [2/8] 0, 128
      %1519 = vxpose.xlu0.c.b16.cont [3/8] 0, 128
      %1520 = vxpose.xlu0.c.b16.cont [4/8] 0, 128
      %1521 = vxpose.xlu0.c.b16.cont [5/8] 0, 128
      %1522 = vxpose.xlu0.c.b16.cont [6/8] 0, 128
      %1523 = vxpose.xlu0.c.b16.cont [7/8] 0, 128
      %1524 = vxpose.xlu0.c.b16.end [8/8] 0, 128
      %v1525 = vpop.trf.xlu0
      %v1526 = vpop.trf.xlu0
      %v1527 = vpop.trf.xlu0
      %v1528 = vpop.trf.xlu0
      %v1529 = vpop.trf.xlu0
      %v1530 = vpop.trf.xlu0
      %v1531 = vpop.trf.xlu0
      %v1532 = vpop.trf.xlu0
      %1533 = vxpose.xlu0.c.b16.start [1/8] %v1296, 128
      %1534 = vxpose.xlu0.c.b16.cont [2/8] 0, 128
      %1535 = vxpose.xlu0.c.b16.cont [3/8] 0, 128
      %1536 = vxpose.xlu0.c.b16.cont [4/8] 0, 128
      %1537 = vxpose.xlu0.c.b16.cont [5/8] 0, 128
      %1538 = vxpose.xlu0.c.b16.cont [6/8] 0, 128
      %1539 = vxpose.xlu0.c.b16.cont [7/8] 0, 128
      %1540 = vxpose.xlu0.c.b16.end [8/8] 0, 128
      %v1541 = vpop.trf.xlu0
      %v1542 = vpop.trf.xlu0
      %v1543 = vpop.trf.xlu0
      %v1544 = vpop.trf.xlu0
      %v1545 = vpop.trf.xlu0
      %v1546 = vpop.trf.xlu0
      %v1547 = vpop.trf.xlu0
      %v1548 = vpop.trf.xlu0
      %1549 = vxpose.xlu0.c.b16.start [1/8] %v1246, 128
      %1550 = vxpose.xlu0.c.b16.cont [2/8] 0, 128
      %1551 = vxpose.xlu0.c.b16.cont [3/8] 0, 128
      %1552 = vxpose.xlu0.c.b16.cont [4/8] 0, 128
      %1553 = vxpose.xlu0.c.b16.cont [5/8] 0, 128
      %1554 = vxpose.xlu0.c.b16.cont [6/8] 0, 128
      %1555 = vxpose.xlu0.c.b16.cont [7/8] 0, 128
      %1556 = vxpose.xlu0.c.b16.end [8/8] 0, 128
      %v1557 = vpop.trf.xlu0
      %v1558 = vpop.trf.xlu0
      %v1559 = vpop.trf.xlu0
      %v1560 = vpop.trf.xlu0
      %v1561 = vpop.trf.xlu0
      %v1562 = vpop.trf.xlu0
      %v1563 = vpop.trf.xlu0
      %v1564 = vpop.trf.xlu0
      %1565 = vxpose.xlu0.c.b16.start [1/8] %v1314, 128
      %1566 = vxpose.xlu0.c.b16.cont [2/8] 0, 128
      %1567 = vxpose.xlu0.c.b16.cont [3/8] 0, 128
      %1568 = vxpose.xlu0.c.b16.cont [4/8] 0, 128
      %1569 = vxpose.xlu0.c.b16.cont [5/8] 0, 128
      %1570 = vxpose.xlu0.c.b16.cont [6/8] 0, 128
      %1571 = vxpose.xlu0.c.b16.cont [7/8] 0, 128
      %1572 = vxpose.xlu0.c.b16.end [8/8] 0, 128
      %v1573 = vpop.trf.xlu0
      %v1574 = vpop.trf.xlu0
      %v1575 = vpop.trf.xlu0
      %v1576 = vpop.trf.xlu0
      %v1577 = vpop.trf.xlu0
      %v1578 = vpop.trf.xlu0
      %v1579 = vpop.trf.xlu0
      %v1580 = vpop.trf.xlu0
      %1581 = vxpose.xlu0.c.b16.start [1/8] %v1237, 128
      %1582 = vxpose.xlu0.c.b16.cont [2/8] 0, 128
      %1583 = vxpose.xlu0.c.b16.cont [3/8] 0, 128
      %1584 = vxpose.xlu0.c.b16.cont [4/8] 0, 128
      %1585 = vxpose.xlu0.c.b16.cont [5/8] 0, 128
      %1586 = vxpose.xlu0.c.b16.cont [6/8] 0, 128
      %1587 = vxpose.xlu0.c.b16.cont [7/8] 0, 128
      %1588 = vxpose.xlu0.c.b16.end [8/8] 0, 128
      %v1589 = vpop.trf.xlu0
      %v1590 = vpop.trf.xlu0
      %v1591 = vpop.trf.xlu0
      %v1592 = vpop.trf.xlu0
      %v1593 = vpop.trf.xlu0
      %v1594 = vpop.trf.xlu0
      %v1595 = vpop.trf.xlu0
      %v1596 = vpop.trf.xlu0
      %1597 = vxpose.xlu0.c.b16.start [1/8] %v1305, 128
      %1598 = vxpose.xlu0.c.b16.cont [2/8] 0, 128
      %1599 = vxpose.xlu0.c.b16.cont [3/8] 0, 128
      %1600 = vxpose.xlu0.c.b16.cont [4/8] 0, 128
      %1601 = vxpose.xlu0.c.b16.cont [5/8] 0, 128
      %1602 = vxpose.xlu0.c.b16.cont [6/8] 0, 128
      %1603 = vxpose.xlu0.c.b16.cont [7/8] 0, 128
      %1604 = vxpose.xlu0.c.b16.end [8/8] 0, 128
      %v1605 = vpop.trf.xlu0
      %v1606 = vpop.trf.xlu0
      %v1607 = vpop.trf.xlu0
      %v1608 = vpop.trf.xlu0
      %v1609 = vpop.trf.xlu0
      %v1610 = vpop.trf.xlu0
      %v1611 = vpop.trf.xlu0
      %v1612 = vpop.trf.xlu0
      %1613 = vxpose.xlu0.c.b16.start [1/8] %v1247, 128
      %1614 = vxpose.xlu0.c.b16.cont [2/8] 0, 128
      %1615 = vxpose.xlu0.c.b16.cont [3/8] 0, 128
      %1616 = vxpose.xlu0.c.b16.cont [4/8] 0, 128
      %1617 = vxpose.xlu0.c.b16.cont [5/8] 0, 128
      %1618 = vxpose.xlu0.c.b16.cont [6/8] 0, 128
      %1619 = vxpose.xlu0.c.b16.cont [7/8] 0, 128
      %1620 = vxpose.xlu0.c.b16.end [8/8] 0, 128
      %v1621 = vpop.trf.xlu0
      %v1622 = vpop.trf.xlu0
      %v1623 = vpop.trf.xlu0
      %v1624 = vpop.trf.xlu0
      %v1625 = vpop.trf.xlu0
      %v1626 = vpop.trf.xlu0
      %v1627 = vpop.trf.xlu0
      %v1628 = vpop.trf.xlu0
      %1629 = vxpose.xlu0.c.b16.start [1/8] %v1315, 128
      %1630 = vxpose.xlu0.c.b16.cont [2/8] 0, 128
      %1631 = vxpose.xlu0.c.b16.cont [3/8] 0, 128
      %1632 = vxpose.xlu0.c.b16.cont [4/8] 0, 128
      %1633 = vxpose.xlu0.c.b16.cont [5/8] 0, 128
      %1634 = vxpose.xlu0.c.b16.cont [6/8] 0, 128
      %1635 = vxpose.xlu0.c.b16.cont [7/8] 0, 128
      %1636 = vxpose.xlu0.c.b16.end [8/8] 0, 128
      %v1637 = vpop.trf.xlu0
      %v1638 = vpop.trf.xlu0
      %v1639 = vpop.trf.xlu0
      %v1640 = vpop.trf.xlu0
      %v1641 = vpop.trf.xlu0
      %v1642 = vpop.trf.xlu0
      %v1643 = vpop.trf.xlu0
      %v1644 = vpop.trf.xlu0
      %1645 = vxpose.xlu0.c.b16.start [1/8] %v1244, 128
      %1646 = vxpose.xlu0.c.b16.cont [2/8] 0, 128
      %1647 = vxpose.xlu0.c.b16.cont [3/8] 0, 128
      %1648 = vxpose.xlu0.c.b16.cont [4/8] 0, 128
      %1649 = vxpose.xlu0.c.b16.cont [5/8] 0, 128
      %1650 = vxpose.xlu0.c.b16.cont [6/8] 0, 128
      %1651 = vxpose.xlu0.c.b16.cont [7/8] 0, 128
      %1652 = vxpose.xlu0.c.b16.end [8/8] 0, 128
      %v1653 = vpop.trf.xlu0
      %v1654 = vpop.trf.xlu0
      %v1655 = vpop.trf.xlu0
      %v1656 = vpop.trf.xlu0
      %v1657 = vpop.trf.xlu0
      %v1658 = vpop.trf.xlu0
      %v1659 = vpop.trf.xlu0
      %v1660 = vpop.trf.xlu0
      %1661 = vxpose.xlu0.c.b16.start [1/8] %v1312, 128
      %1662 = vxpose.xlu0.c.b16.cont [2/8] 0, 128
      %1663 = vxpose.xlu0.c.b16.cont [3/8] 0, 128
      %1664 = vxpose.xlu0.c.b16.cont [4/8] 0, 128
      %1665 = vxpose.xlu0.c.b16.cont [5/8] 0, 128
      %1666 = vxpose.xlu0.c.b16.cont [6/8] 0, 128
      %1667 = vxpose.xlu0.c.b16.cont [7/8] 0, 128
      %1668 = vxpose.xlu0.c.b16.end [8/8] 0, 128
      %v1669 = vpop.trf.xlu0
      %v1670 = vpop.trf.xlu0
      %v1671 = vpop.trf.xlu0
      %v1672 = vpop.trf.xlu0
      %v1673 = vpop.trf.xlu0
      %v1674 = vpop.trf.xlu0
      %v1675 = vpop.trf.xlu0
      %v1676 = vpop.trf.xlu0
      %1677 = vxpose.xlu0.c.b16.start [1/8] %v1248, 128
      %1678 = vxpose.xlu0.c.b16.cont [2/8] 0, 128
      %1679 = vxpose.xlu0.c.b16.cont [3/8] 0, 128
      %1680 = vxpose.xlu0.c.b16.cont [4/8] 0, 128
      %1681 = vxpose.xlu0.c.b16.cont [5/8] 0, 128
      %1682 = vxpose.xlu0.c.b16.cont [6/8] 0, 128
      %1683 = vxpose.xlu0.c.b16.cont [7/8] 0, 128
      %1684 = vxpose.xlu0.c.b16.end [8/8] 0, 128
      %v1685 = vpop.trf.xlu0
      %v1686 = vpop.trf.xlu0
      %v1687 = vpop.trf.xlu0
      %v1688 = vpop.trf.xlu0
      %v1689 = vpop.trf.xlu0
      %v1690 = vpop.trf.xlu0
      %v1691 = vpop.trf.xlu0
      %v1692 = vpop.trf.xlu0
      %1693 = vxpose.xlu0.c.b16.start [1/8] %v1316, 128
      %1694 = vxpose.xlu0.c.b16.cont [2/8] 0, 128
      %1695 = vxpose.xlu0.c.b16.cont [3/8] 0, 128
      %1696 = vxpose.xlu0.c.b16.cont [4/8] 0, 128
      %1697 = vxpose.xlu0.c.b16.cont [5/8] 0, 128
      %1698 = vxpose.xlu0.c.b16.cont [6/8] 0, 128
      %1699 = vxpose.xlu0.c.b16.cont [7/8] 0, 128
      %1700 = vxpose.xlu0.c.b16.end [8/8] 0, 128
      %v1701 = vpop.trf.xlu0
      %v1702 = vpop.trf.xlu0
      %v1703 = vpop.trf.xlu0
      %v1704 = vpop.trf.xlu0
      %v1705 = vpop.trf.xlu0
      %v1706 = vpop.trf.xlu0
      %v1707 = vpop.trf.xlu0
      %v1708 = vpop.trf.xlu0
      %1709 = vxpose.xlu0.c.b16.start [1/8] %v1357, 128
      %1710 = vxpose.xlu0.c.b16.cont [2/8] 0, 128
      %1711 = vxpose.xlu0.c.b16.cont [3/8] 0, 128
      %1712 = vxpose.xlu0.c.b16.cont [4/8] 0, 128
      %1713 = vxpose.xlu0.c.b16.cont [5/8] 0, 128
      %1714 = vxpose.xlu0.c.b16.cont [6/8] 0, 128
      %1715 = vxpose.xlu0.c.b16.cont [7/8] 0, 128
      %1716 = vxpose.xlu0.c.b16.end [8/8] 0, 128
      %v1717 = vpop.trf.xlu0
      %v1718 = vpop.trf.xlu0
      %v1719 = vpop.trf.xlu0
      %v1720 = vpop.trf.xlu0
      %v1721 = vpop.trf.xlu0
      %v1722 = vpop.trf.xlu0
      %v1723 = vpop.trf.xlu0
      %v1724 = vpop.trf.xlu0
      %1725 = vxpose.xlu0.c.b16.start [1/8] %v1425, 128
      %1726 = vxpose.xlu0.c.b16.cont [2/8] 0, 128
      %1727 = vxpose.xlu0.c.b16.cont [3/8] 0, 128
      %1728 = vxpose.xlu0.c.b16.cont [4/8] 0, 128
      %1729 = vxpose.xlu0.c.b16.cont [5/8] 0, 128
      %1730 = vxpose.xlu0.c.b16.cont [6/8] 0, 128
      %1731 = vxpose.xlu0.c.b16.cont [7/8] 0, 128
      %1732 = vxpose.xlu0.c.b16.end [8/8] 0, 128
      %v1733 = vpop.trf.xlu0
      %v1734 = vpop.trf.xlu0
      %v1735 = vpop.trf.xlu0
      %v1736 = vpop.trf.xlu0
      %v1737 = vpop.trf.xlu0
      %v1738 = vpop.trf.xlu0
      %v1739 = vpop.trf.xlu0
      %v1740 = vpop.trf.xlu0
      %1741 = vxpose.xlu0.c.b16.start [1/8] %v1381, 128
      %1742 = vxpose.xlu0.c.b16.cont [2/8] 0, 128
      %1743 = vxpose.xlu0.c.b16.cont [3/8] 0, 128
      %1744 = vxpose.xlu0.c.b16.cont [4/8] 0, 128
      %1745 = vxpose.xlu0.c.b16.cont [5/8] 0, 128
      %1746 = vxpose.xlu0.c.b16.cont [6/8] 0, 128
      %1747 = vxpose.xlu0.c.b16.cont [7/8] 0, 128
      %1748 = vxpose.xlu0.c.b16.end [8/8] 0, 128
      %v1749 = vpop.trf.xlu0
      %v1750 = vpop.trf.xlu0
      %v1751 = vpop.trf.xlu0
      %v1752 = vpop.trf.xlu0
      %v1753 = vpop.trf.xlu0
      %v1754 = vpop.trf.xlu0
      %v1755 = vpop.trf.xlu0
      %v1756 = vpop.trf.xlu0
      %1757 = vxpose.xlu0.c.b16.start [1/8] %v1449, 128
      %1758 = vxpose.xlu0.c.b16.cont [2/8] 0, 128
      %1759 = vxpose.xlu0.c.b16.cont [3/8] 0, 128
      %1760 = vxpose.xlu0.c.b16.cont [4/8] 0, 128
      %1761 = vxpose.xlu0.c.b16.cont [5/8] 0, 128
      %1762 = vxpose.xlu0.c.b16.cont [6/8] 0, 128
      %1763 = vxpose.xlu0.c.b16.cont [7/8] 0, 128
      %1764 = vxpose.xlu0.c.b16.end [8/8] 0, 128
      %v1765 = vpop.trf.xlu0
      %v1766 = vpop.trf.xlu0
      %v1767 = vpop.trf.xlu0
      %v1768 = vpop.trf.xlu0
      %v1769 = vpop.trf.xlu0
      %v1770 = vpop.trf.xlu0
      %v1771 = vpop.trf.xlu0
      %v1772 = vpop.trf.xlu0
      %1773 = vxpose.xlu0.c.b16.start [1/8] %v1364, 128
      %1774 = vxpose.xlu0.c.b16.cont [2/8] 0, 128
      %1775 = vxpose.xlu0.c.b16.cont [3/8] 0, 128
      %1776 = vxpose.xlu0.c.b16.cont [4/8] 0, 128
      %1777 = vxpose.xlu0.c.b16.cont [5/8] 0, 128
      %1778 = vxpose.xlu0.c.b16.cont [6/8] 0, 128
      %1779 = vxpose.xlu0.c.b16.cont [7/8] 0, 128
      %1780 = vxpose.xlu0.c.b16.end [8/8] 0, 128
      %v1781 = vpop.trf.xlu0
      %v1782 = vpop.trf.xlu0
      %v1783 = vpop.trf.xlu0
      %v1784 = vpop.trf.xlu0
      %v1785 = vpop.trf.xlu0
      %v1786 = vpop.trf.xlu0
      %v1787 = vpop.trf.xlu0
      %v1788 = vpop.trf.xlu0
      %1789 = vxpose.xlu0.c.b16.start [1/8] %v1432, 128
      %1790 = vxpose.xlu0.c.b16.cont [2/8] 0, 128
      %1791 = vxpose.xlu0.c.b16.cont [3/8] 0, 128
      %1792 = vxpose.xlu0.c.b16.cont [4/8] 0, 128
      %1793 = vxpose.xlu0.c.b16.cont [5/8] 0, 128
      %1794 = vxpose.xlu0.c.b16.cont [6/8] 0, 128
      %1795 = vxpose.xlu0.c.b16.cont [7/8] 0, 128
      %1796 = vxpose.xlu0.c.b16.end [8/8] 0, 128
      %v1797 = vpop.trf.xlu0
      %v1798 = vpop.trf.xlu0
      %v1799 = vpop.trf.xlu0
      %v1800 = vpop.trf.xlu0
      %v1801 = vpop.trf.xlu0
      %v1802 = vpop.trf.xlu0
      %v1803 = vpop.trf.xlu0
      %v1804 = vpop.trf.xlu0
      %1805 = vxpose.xlu0.c.b16.start [1/8] %v1382, 128
      %1806 = vxpose.xlu0.c.b16.cont [2/8] 0, 128
      %1807 = vxpose.xlu0.c.b16.cont [3/8] 0, 128
      %1808 = vxpose.xlu0.c.b16.cont [4/8] 0, 128
      %1809 = vxpose.xlu0.c.b16.cont [5/8] 0, 128
      %1810 = vxpose.xlu0.c.b16.cont [6/8] 0, 128
      %1811 = vxpose.xlu0.c.b16.cont [7/8] 0, 128
      %1812 = vxpose.xlu0.c.b16.end [8/8] 0, 128
      %v1813 = vpop.trf.xlu0
      %v1814 = vpop.trf.xlu0
      %v1815 = vpop.trf.xlu0
      %v1816 = vpop.trf.xlu0
      %v1817 = vpop.trf.xlu0
      %v1818 = vpop.trf.xlu0
      %v1819 = vpop.trf.xlu0
      %v1820 = vpop.trf.xlu0
      %1821 = vxpose.xlu0.c.b16.start [1/8] %v1450, 128
      %1822 = vxpose.xlu0.c.b16.cont [2/8] 0, 128
      %1823 = vxpose.xlu0.c.b16.cont [3/8] 0, 128
      %1824 = vxpose.xlu0.c.b16.cont [4/8] 0, 128
      %1825 = vxpose.xlu0.c.b16.cont [5/8] 0, 128
      %1826 = vxpose.xlu0.c.b16.cont [6/8] 0, 128
      %1827 = vxpose.xlu0.c.b16.cont [7/8] 0, 128
      %1828 = vxpose.xlu0.c.b16.end [8/8] 0, 128
      %v1829 = vpop.trf.xlu0
      %v1830 = vpop.trf.xlu0
      %v1831 = vpop.trf.xlu0
      %v1832 = vpop.trf.xlu0
      %v1833 = vpop.trf.xlu0
      %v1834 = vpop.trf.xlu0
      %v1835 = vpop.trf.xlu0
      %v1836 = vpop.trf.xlu0
      %1837 = vxpose.xlu0.c.b16.start [1/8] %v1373, 128
      %1838 = vxpose.xlu0.c.b16.cont [2/8] 0, 128
      %1839 = vxpose.xlu0.c.b16.cont [3/8] 0, 128
      %1840 = vxpose.xlu0.c.b16.cont [4/8] 0, 128
      %1841 = vxpose.xlu0.c.b16.cont [5/8] 0, 128
      %1842 = vxpose.xlu0.c.b16.cont [6/8] 0, 128
      %1843 = vxpose.xlu0.c.b16.cont [7/8] 0, 128
      %1844 = vxpose.xlu0.c.b16.end [8/8] 0, 128
      %v1845 = vpop.trf.xlu0
      %v1846 = vpop.trf.xlu0
      %v1847 = vpop.trf.xlu0
      %v1848 = vpop.trf.xlu0
      %v1849 = vpop.trf.xlu0
      %v1850 = vpop.trf.xlu0
      %v1851 = vpop.trf.xlu0
      %v1852 = vpop.trf.xlu0
      %1853 = vxpose.xlu0.c.b16.start [1/8] %v1441, 128
      %1854 = vxpose.xlu0.c.b16.cont [2/8] 0, 128
      %1855 = vxpose.xlu0.c.b16.cont [3/8] 0, 128
      %1856 = vxpose.xlu0.c.b16.cont [4/8] 0, 128
      %1857 = vxpose.xlu0.c.b16.cont [5/8] 0, 128
      %1858 = vxpose.xlu0.c.b16.cont [6/8] 0, 128
      %1859 = vxpose.xlu0.c.b16.cont [7/8] 0, 128
      %1860 = vxpose.xlu0.c.b16.end [8/8] 0, 128
      %v1861 = vpop.trf.xlu0
      %v1862 = vpop.trf.xlu0
      %v1863 = vpop.trf.xlu0
      %v1864 = vpop.trf.xlu0
      %v1865 = vpop.trf.xlu0
      %v1866 = vpop.trf.xlu0
      %v1867 = vpop.trf.xlu0
      %v1868 = vpop.trf.xlu0
      %1869 = vxpose.xlu0.c.b16.start [1/8] %v1383, 128
      %1870 = vxpose.xlu0.c.b16.cont [2/8] 0, 128
      %1871 = vxpose.xlu0.c.b16.cont [3/8] 0, 128
      %1872 = vxpose.xlu0.c.b16.cont [4/8] 0, 128
      %1873 = vxpose.xlu0.c.b16.cont [5/8] 0, 128
      %1874 = vxpose.xlu0.c.b16.cont [6/8] 0, 128
      %1875 = vxpose.xlu0.c.b16.cont [7/8] 0, 128
      %1876 = vxpose.xlu0.c.b16.end [8/8] 0, 128
      %v1877 = vpop.trf.xlu0
      %v1878 = vpop.trf.xlu0
      %v1879 = vpop.trf.xlu0
      %v1880 = vpop.trf.xlu0
      %v1881 = vpop.trf.xlu0
      %v1882 = vpop.trf.xlu0
      %v1883 = vpop.trf.xlu0
      %v1884 = vpop.trf.xlu0
      %1885 = vxpose.xlu0.c.b16.start [1/8] %v1451, 128
      %1886 = vxpose.xlu0.c.b16.cont [2/8] 0, 128
      %1887 = vxpose.xlu0.c.b16.cont [3/8] 0, 128
      %1888 = vxpose.xlu0.c.b16.cont [4/8] 0, 128
      %1889 = vxpose.xlu0.c.b16.cont [5/8] 0, 128
      %1890 = vxpose.xlu0.c.b16.cont [6/8] 0, 128
      %1891 = vxpose.xlu0.c.b16.cont [7/8] 0, 128
      %1892 = vxpose.xlu0.c.b16.end [8/8] 0, 128
      %v1893 = vpop.trf.xlu0
      %v1894 = vpop.trf.xlu0
      %v1895 = vpop.trf.xlu0
      %v1896 = vpop.trf.xlu0
      %v1897 = vpop.trf.xlu0
      %v1898 = vpop.trf.xlu0
      %v1899 = vpop.trf.xlu0
      %v1900 = vpop.trf.xlu0
      %1901 = vxpose.xlu0.c.b16.start [1/8] %v1380, 128
      %1902 = vxpose.xlu0.c.b16.cont [2/8] 0, 128
      %1903 = vxpose.xlu0.c.b16.cont [3/8] 0, 128
      %1904 = vxpose.xlu0.c.b16.cont [4/8] 0, 128
      %1905 = vxpose.xlu0.c.b16.cont [5/8] 0, 128
      %1906 = vxpose.xlu0.c.b16.cont [6/8] 0, 128
      %1907 = vxpose.xlu0.c.b16.cont [7/8] 0, 128
      %1908 = vxpose.xlu0.c.b16.end [8/8] 0, 128
      %v1909 = vpop.trf.xlu0
      %v1910 = vpop.trf.xlu0
      %v1911 = vpop.trf.xlu0
      %v1912 = vpop.trf.xlu0
      %v1913 = vpop.trf.xlu0
      %v1914 = vpop.trf.xlu0
      %v1915 = vpop.trf.xlu0
      %v1916 = vpop.trf.xlu0
      %1917 = vxpose.xlu0.c.b16.start [1/8] %v1448, 128
      %1918 = vxpose.xlu0.c.b16.cont [2/8] 0, 128
      %1919 = vxpose.xlu0.c.b16.cont [3/8] 0, 128
      %1920 = vxpose.xlu0.c.b16.cont [4/8] 0, 128
      %1921 = vxpose.xlu0.c.b16.cont [5/8] 0, 128
      %1922 = vxpose.xlu0.c.b16.cont [6/8] 0, 128
      %1923 = vxpose.xlu0.c.b16.cont [7/8] 0, 128
      %1924 = vxpose.xlu0.c.b16.end [8/8] 0, 128
      %v1925 = vpop.trf.xlu0
      %v1926 = vpop.trf.xlu0
      %v1927 = vpop.trf.xlu0
      %v1928 = vpop.trf.xlu0
      %v1929 = vpop.trf.xlu0
      %v1930 = vpop.trf.xlu0
      %v1931 = vpop.trf.xlu0
      %v1932 = vpop.trf.xlu0
      %1933 = vxpose.xlu0.c.b16.start [1/8] %v1384, 128
      %1934 = vxpose.xlu0.c.b16.cont [2/8] 0, 128
      %1935 = vxpose.xlu0.c.b16.cont [3/8] 0, 128
      %1936 = vxpose.xlu0.c.b16.cont [4/8] 0, 128
      %1937 = vxpose.xlu0.c.b16.cont [5/8] 0, 128
      %1938 = vxpose.xlu0.c.b16.cont [6/8] 0, 128
      %1939 = vxpose.xlu0.c.b16.cont [7/8] 0, 128
      %1940 = vxpose.xlu0.c.b16.end [8/8] 0, 128
      %v1941 = vpop.trf.xlu0
      %v1942 = vpop.trf.xlu0
      %v1943 = vpop.trf.xlu0
      %v1944 = vpop.trf.xlu0
      %v1945 = vpop.trf.xlu0
      %v1946 = vpop.trf.xlu0
      %v1947 = vpop.trf.xlu0
      %v1948 = vpop.trf.xlu0
      %1949 = vxpose.xlu0.c.b16.start [1/8] %v1452, 128
      %1950 = vxpose.xlu0.c.b16.cont [2/8] 0, 128
      %1951 = vxpose.xlu0.c.b16.cont [3/8] 0, 128
      %1952 = vxpose.xlu0.c.b16.cont [4/8] 0, 128
      %1953 = vxpose.xlu0.c.b16.cont [5/8] 0, 128
      %1954 = vxpose.xlu0.c.b16.cont [6/8] 0, 128
      %1955 = vxpose.xlu0.c.b16.cont [7/8] 0, 128
      %1956 = vxpose.xlu0.c.b16.end [8/8] 0, 128
      %v1957 = vpop.trf.xlu0
      %v1958 = vpop.trf.xlu0
      %v1959 = vpop.trf.xlu0
      %v1960 = vpop.trf.xlu0
      %v1961 = vpop.trf.xlu0
      %v1962 = vpop.trf.xlu0
      %v1963 = vpop.trf.xlu0
      %v1964 = vpop.trf.xlu0
      %v1965 = vcombine.low %v1461, %v1525
      %v1967 = vunpack.c.l.s4 1983009808
      %v1968 = vunpack.c.0.s8 %v1967
      %v1969 = vlaneseq
      %v1970 = vshrl.u32 %v1969, 7
      %v1971 = vsub.s32 %v1968, %v1970
      %v1972 = vrot.slane %v1965, %v1971
      %v1973 = vcombine.low %v1493, %v1557
      %v1975 = vunpack.c.l.s4 1983009808
      %v1976 = vunpack.c.0.s8 %v1975
      %v1977 = vlaneseq
      %v1978 = vshrl.u32 %v1977, 7
      %v1979 = vsub.s32 %v1976, %v1978
      %v1980 = vrot.slane %v1973, %v1979
      %v1981 = vcombine.low %v1589, %v1653
      %v1983 = vunpack.c.l.s4 1983009808
      %v1984 = vunpack.c.0.s8 %v1983
      %v1985 = vlaneseq
      %v1986 = vshrl.u32 %v1985, 7
      %v1987 = vsub.s32 %v1984, %v1986
      %v1988 = vrot.slane %v1981, %v1987
      %v1989 = vcombine.low %v1621, %v1685
      %v1991 = vunpack.c.l.s4 1983009808
      %v1992 = vunpack.c.0.s8 %v1991
      %v1993 = vlaneseq
      %v1994 = vshrl.u32 %v1993, 7
      %v1995 = vsub.s32 %v1992, %v1994
      %v1996 = vrot.slane %v1989, %v1995
      %v1997 = vcombine.low %v1972, %v1980
      %v1999 = vunpack.c.l.s4 1934713408
      %v2000 = vunpack.c.0.s8 %v1999
      %v2001 = vlaneseq
      %v2002 = vshrl.u32 %v2001, 7
      %v2003 = vsub.s32 %v2000, %v2002
      %v2004 = vrot.slane %v1997, %v2003
      %v2005 = vcombine.low %v1988, %v1996
      %v2007 = vunpack.c.l.s4 1934713408
      %v2008 = vunpack.c.0.s8 %v2007
      %v2009 = vlaneseq
      %v2010 = vshrl.u32 %v2009, 7
      %v2011 = vsub.s32 %v2008, %v2010
      %v2012 = vrot.slane %v2005, %v2011
      %v2013 = vcombine.low %v2004, %v2012
      %v2014 = vcombine.high %v2004, %v2012
      %v2015 = vcombine.low %v1477, %v1541
      %v2017 = vunpack.c.l.s4 1983009808
      %v2018 = vunpack.c.0.s8 %v2017
      %v2019 = vlaneseq
      %v2020 = vshrl.u32 %v2019, 7
      %v2021 = vsub.s32 %v2018, %v2020
      %v2022 = vrot.slane %v2015, %v2021
      %v2023 = vcombine.low %v1509, %v1573
      %v2025 = vunpack.c.l.s4 1983009808
      %v2026 = vunpack.c.0.s8 %v2025
      %v2027 = vlaneseq
      %v2028 = vshrl.u32 %v2027, 7
      %v2029 = vsub.s32 %v2026, %v2028
      %v2030 = vrot.slane %v2023, %v2029
      %v2031 = vcombine.low %v1605, %v1669
      %v2033 = vunpack.c.l.s4 1983009808
      %v2034 = vunpack.c.0.s8 %v2033
      %v2035 = vlaneseq
      %v2036 = vshrl.u32 %v2035, 7
      %v2037 = vsub.s32 %v2034, %v2036
      %v2038 = vrot.slane %v2031, %v2037
      %v2039 = vcombine.low %v1637, %v1701
      %v2041 = vunpack.c.l.s4 1983009808
      %v2042 = vunpack.c.0.s8 %v2041
      %v2043 = vlaneseq
      %v2044 = vshrl.u32 %v2043, 7
      %v2045 = vsub.s32 %v2042, %v2044
      %v2046 = vrot.slane %v2039, %v2045
      %v2047 = vcombine.low %v2022, %v2030
      %v2049 = vunpack.c.l.s4 1934713408
      %v2050 = vunpack.c.0.s8 %v2049
      %v2051 = vlaneseq
      %v2052 = vshrl.u32 %v2051, 7
      %v2053 = vsub.s32 %v2050, %v2052
      %v2054 = vrot.slane %v2047, %v2053
      %v2055 = vcombine.low %v2038, %v2046
      %v2057 = vunpack.c.l.s4 1934713408
      %v2058 = vunpack.c.0.s8 %v2057
      %v2059 = vlaneseq
      %v2060 = vshrl.u32 %v2059, 7
      %v2061 = vsub.s32 %v2058, %v2060
      %v2062 = vrot.slane %v2055, %v2061
      %v2063 = vcombine.low %v2054, %v2062
      %v2064 = vcombine.high %v2054, %v2062
      %v2065 = vcombine.low %v1717, %v1781
      %v2067 = vunpack.c.l.s4 1983009808
      %v2068 = vunpack.c.0.s8 %v2067
      %v2069 = vlaneseq
      %v2070 = vshrl.u32 %v2069, 7
      %v2071 = vsub.s32 %v2068, %v2070
      %v2072 = vrot.slane %v2065, %v2071
      %v2073 = vcombine.low %v1749, %v1813
      %v2075 = vunpack.c.l.s4 1983009808
      %v2076 = vunpack.c.0.s8 %v2075
      %v2077 = vlaneseq
      %v2078 = vshrl.u32 %v2077, 7
      %v2079 = vsub.s32 %v2076, %v2078
      %v2080 = vrot.slane %v2073, %v2079
      %v2081 = vcombine.low %v1845, %v1909
      %v2083 = vunpack.c.l.s4 1983009808
      %v2084 = vunpack.c.0.s8 %v2083
      %v2085 = vlaneseq
      %v2086 = vshrl.u32 %v2085, 7
      %v2087 = vsub.s32 %v2084, %v2086
      %v2088 = vrot.slane %v2081, %v2087
      %v2089 = vcombine.low %v1877, %v1941
      %v2091 = vunpack.c.l.s4 1983009808
      %v2092 = vunpack.c.0.s8 %v2091
      %v2093 = vlaneseq
      %v2094 = vshrl.u32 %v2093, 7
      %v2095 = vsub.s32 %v2092, %v2094
      %v2096 = vrot.slane %v2089, %v2095
      %v2097 = vcombine.low %v2072, %v2080
      %v2099 = vunpack.c.l.s4 1934713408
      %v2100 = vunpack.c.0.s8 %v2099
      %v2101 = vlaneseq
      %v2102 = vshrl.u32 %v2101, 7
      %v2103 = vsub.s32 %v2100, %v2102
      %v2104 = vrot.slane %v2097, %v2103
      %v2105 = vcombine.low %v2088, %v2096
      %v2107 = vunpack.c.l.s4 1934713408
      %v2108 = vunpack.c.0.s8 %v2107
      %v2109 = vlaneseq
      %v2110 = vshrl.u32 %v2109, 7
      %v2111 = vsub.s32 %v2108, %v2110
      %v2112 = vrot.slane %v2105, %v2111
      %v2113 = vcombine.low %v2104, %v2112
      %v2114 = vcombine.high %v2104, %v2112
      %v2115 = vcombine.low %v1733, %v1797
      %v2117 = vunpack.c.l.s4 1983009808
      %v2118 = vunpack.c.0.s8 %v2117
      %v2119 = vlaneseq
      %v2120 = vshrl.u32 %v2119, 7
      %v2121 = vsub.s32 %v2118, %v2120
      %v2122 = vrot.slane %v2115, %v2121
      %v2123 = vcombine.low %v1765, %v1829
      %v2125 = vunpack.c.l.s4 1983009808
      %v2126 = vunpack.c.0.s8 %v2125
      %v2127 = vlaneseq
      %v2128 = vshrl.u32 %v2127, 7
      %v2129 = vsub.s32 %v2126, %v2128
      %v2130 = vrot.slane %v2123, %v2129
      %v2131 = vcombine.low %v1861, %v1925
      %v2133 = vunpack.c.l.s4 1983009808
      %v2134 = vunpack.c.0.s8 %v2133
      %v2135 = vlaneseq
      %v2136 = vshrl.u32 %v2135, 7
      %v2137 = vsub.s32 %v2134, %v2136
      %v2138 = vrot.slane %v2131, %v2137
      %v2139 = vcombine.low %v1893, %v1957
      %v2141 = vunpack.c.l.s4 1983009808
      %v2142 = vunpack.c.0.s8 %v2141
      %v2143 = vlaneseq
      %v2144 = vshrl.u32 %v2143, 7
      %v2145 = vsub.s32 %v2142, %v2144
      %v2146 = vrot.slane %v2139, %v2145
      %v2147 = vcombine.low %v2122, %v2130
      %v2149 = vunpack.c.l.s4 1934713408
      %v2150 = vunpack.c.0.s8 %v2149
      %v2151 = vlaneseq
      %v2152 = vshrl.u32 %v2151, 7
      %v2153 = vsub.s32 %v2150, %v2152
      %v2154 = vrot.slane %v2147, %v2153
      %v2155 = vcombine.low %v2138, %v2146
      %v2157 = vunpack.c.l.s4 1934713408
      %v2158 = vunpack.c.0.s8 %v2157
      %v2159 = vlaneseq
      %v2160 = vshrl.u32 %v2159, 7
      %v2161 = vsub.s32 %v2158, %v2160
      %v2162 = vrot.slane %v2155, %v2161
      %v2163 = vcombine.low %v2154, %v2162
      %v2164 = vcombine.high %v2154, %v2162
      %v2167 = vpack.i.b16 %v2063, %v2013
      %v2169 = vshrl.u32 %v2013, 16
      %v2170 = vshrl.u32 %v2063, 16
      %v2171 = vpack.i.b16 %v2170, %v2169
      %v2175 = vpack.i.b16 %v2064, %v2014
      %v2177 = vshrl.u32 %v2014, 16
      %v2178 = vshrl.u32 %v2064, 16
      %v2179 = vpack.i.b16 %v2178, %v2177
      %v2183 = vpack.i.b16 %v2163, %v2113
      %v2185 = vshrl.u32 %v2113, 16
      %v2186 = vshrl.u32 %v2163, 16
      %v2187 = vpack.i.b16 %v2186, %v2185
      %v2191 = vpack.i.b16 %v2164, %v2114
      %v2193 = vshrl.u32 %v2114, 16
      %v2194 = vshrl.u32 %v2164, 16
      %v2195 = vpack.i.b16 %v2194, %v2193
      %vm2197 = vcmask 261120
      %v2199 = vsel %vm2197, %v979, 0
      %2201 = vmatprep.subr.bf16.mxu0 0
      %2202 = vmatpush1.bf16.msra.mxu0 %v2167
      %2203 = vmatprep.subr.bf16.mxu0 0
      %2204 = vmatpush1.bf16.msra.mxu0 %v2183
      %2205 = vmatprep.subr.bf16.mxu0 0
      %2206 = vmatpush1.bf16.msra.mxu0 0
      %2207 = vmatprep.subr.bf16.mxu0 0
      %2208 = vmatpush1.bf16.msra.mxu0 0
      %2209 = vmatprep.subr.bf16.mxu0 0
      %2210 = vmatpush1.bf16.msra.mxu0 0
      %2211 = vmatprep.subr.bf16.mxu0 0
      %2212 = vmatpush1.bf16.msra.mxu0 0
      %2213 = vmatprep.subr.bf16.mxu0 0
      %2214 = vmatpush1.bf16.msra.mxu0 0
      %2215 = vmatprep.subr.bf16.mxu0 0
      %2216 = vmatpush1.bf16.msra.mxu0 0
      %2217 = vmatprep.subr.bf16.mxu0 0
      %2218 = vmatpush1.bf16.msra.mxu0 0
      %2219 = vmatprep.subr.bf16.mxu0 0
      %2220 = vmatpush1.bf16.msra.mxu0 0
      %2221 = vmatprep.subr.bf16.mxu0 0
      %2222 = vmatpush1.bf16.msra.mxu0 0
      %2223 = vmatprep.subr.bf16.mxu0 0
      %2224 = vmatpush1.bf16.msra.mxu0 0
      %2225 = vmatprep.subr.bf16.mxu0 0
      %2226 = vmatpush1.bf16.msra.mxu0 0
      %2227 = vmatprep.subr.bf16.mxu0 0
      %2228 = vmatpush1.bf16.msra.mxu0 0
      %2229 = vmatprep.subr.bf16.mxu0 0
      %2230 = vmatpush1.bf16.msra.mxu0 0
      %2231 = vmatprep.subr.bf16.mxu0 0
      %2232 = vmatpush1.bf16.msra.mxu0 0
      %2233 = vmatprep.mubr.bf16.mxu0 0
      %2234 = vmatmul.mubr.bf16.gmra.mrb[0].mxu0 %v2199
      %v2235 = vpop.f32.mrb[0].mxu0
      %v2236 = vadd.f32 0.0, %v2235
      %v2237 = vpop.f32.mrb[0].mxu0
      %v2238 = vpop.f32.mrb[0].mxu0
      %v2239 = vpop.f32.mrb[0].mxu0
      %2240 = vdwg.mxu0
      %v2242 = vsel %vm2197, %v982, 0
      %2244 = vmatprep.subr.bf16.mxu0 0
      %2245 = vmatpush1.bf16.msra.mxu0 %v2171
      %2246 = vmatprep.subr.bf16.mxu0 0
      %2247 = vmatpush1.bf16.msra.mxu0 %v2187
      %2248 = vmatprep.subr.bf16.mxu0 0
      %2249 = vmatpush1.bf16.msra.mxu0 0
      %2250 = vmatprep.subr.bf16.mxu0 0
      %2251 = vmatpush1.bf16.msra.mxu0 0
      %2252 = vmatprep.subr.bf16.mxu0 0
      %2253 = vmatpush1.bf16.msra.mxu0 0
      %2254 = vmatprep.subr.bf16.mxu0 0
      %2255 = vmatpush1.bf16.msra.mxu0 0
      %2256 = vmatprep.subr.bf16.mxu0 0
      %2257 = vmatpush1.bf16.msra.mxu0 0
      %2258 = vmatprep.subr.bf16.mxu0 0
      %2259 = vmatpush1.bf16.msra.mxu0 0
      %2260 = vmatprep.subr.bf16.mxu0 0
      %2261 = vmatpush1.bf16.msra.mxu0 0
      %2262 = vmatprep.subr.bf16.mxu0 0
      %2263 = vmatpush1.bf16.msra.mxu0 0
      %2264 = vmatprep.subr.bf16.mxu0 0
      %2265 = vmatpush1.bf16.msra.mxu0 0
      %2266 = vmatprep.subr.bf16.mxu0 0
      %2267 = vmatpush1.bf16.msra.mxu0 0
      %2268 = vmatprep.subr.bf16.mxu0 0
      %2269 = vmatpush1.bf16.msra.mxu0 0
      %2270 = vmatprep.subr.bf16.mxu0 0
      %2271 = vmatpush1.bf16.msra.mxu0 0
      %2272 = vmatprep.subr.bf16.mxu0 0
      %2273 = vmatpush1.bf16.msra.mxu0 0
      %2274 = vmatprep.subr.bf16.mxu0 0
      %2275 = vmatpush1.bf16.msra.mxu0 0
      %2276 = vmatprep.mubr.bf16.mxu0 0
      %2277 = vmatmul.mubr.bf16.gmra.mrb[0].mxu0 %v2242
      %v2278 = vpop.f32.mrb[0].mxu0
      %v2279 = vadd.f32 0.0, %v2278
      %v2280 = vpop.f32.mrb[0].mxu0
      %v2281 = vpop.f32.mrb[0].mxu0
      %v2282 = vpop.f32.mrb[0].mxu0
      %2283 = vdwg.mxu0
      %v2285 = vsel %vm2197, %v985, 0
      %2287 = vmatprep.subr.bf16.mxu0 0
      %2288 = vmatpush1.bf16.msra.mxu0 %v2175
      %2289 = vmatprep.subr.bf16.mxu0 0
      %2290 = vmatpush1.bf16.msra.mxu0 %v2191
      %2291 = vmatprep.subr.bf16.mxu0 0
      %2292 = vmatpush1.bf16.msra.mxu0 0
      %2293 = vmatprep.subr.bf16.mxu0 0
      %2294 = vmatpush1.bf16.msra.mxu0 0
      %2295 = vmatprep.subr.bf16.mxu0 0
      %2296 = vmatpush1.bf16.msra.mxu0 0
      %2297 = vmatprep.subr.bf16.mxu0 0
      %2298 = vmatpush1.bf16.msra.mxu0 0
      %2299 = vmatprep.subr.bf16.mxu0 0
      %2300 = vmatpush1.bf16.msra.mxu0 0
      %2301 = vmatprep.subr.bf16.mxu0 0
      %2302 = vmatpush1.bf16.msra.mxu0 0
      %2303 = vmatprep.subr.bf16.mxu0 0
      %2304 = vmatpush1.bf16.msra.mxu0 0
      %2305 = vmatprep.subr.bf16.mxu0 0
      %2306 = vmatpush1.bf16.msra.mxu0 0
      %2307 = vmatprep.subr.bf16.mxu0 0
      %2308 = vmatpush1.bf16.msra.mxu0 0
      %2309 = vmatprep.subr.bf16.mxu0 0
      %2310 = vmatpush1.bf16.msra.mxu0 0
      %2311 = vmatprep.subr.bf16.mxu0 0
      %2312 = vmatpush1.bf16.msra.mxu0 0
      %2313 = vmatprep.subr.bf16.mxu0 0
      %2314 = vmatpush1.bf16.msra.mxu0 0
      %2315 = vmatprep.subr.bf16.mxu0 0
      %2316 = vmatpush1.bf16.msra.mxu0 0
      %2317 = vmatprep.subr.bf16.mxu0 0
      %2318 = vmatpush1.bf16.msra.mxu0 0
      %2319 = vmatprep.mubr.bf16.mxu0 0
      %2320 = vmatmul.mubr.bf16.gmra.mrb[0].mxu0 %v2285
      %v2321 = vpop.f32.mrb[0].mxu0
      %v2322 = vadd.f32 0.0, %v2321
      %v2323 = vpop.f32.mrb[0].mxu0
      %v2324 = vpop.f32.mrb[0].mxu0
      %v2325 = vpop.f32.mrb[0].mxu0
      %2326 = vdwg.mxu0
      %v2328 = vsel %vm2197, %v988, 0
      %2330 = vmatprep.subr.bf16.mxu0 0
      %2331 = vmatpush1.bf16.msra.mxu0 %v2179
      %2332 = vmatprep.subr.bf16.mxu0 0
      %2333 = vmatpush1.bf16.msra.mxu0 %v2195
      %2334 = vmatprep.subr.bf16.mxu0 0
      %2335 = vmatpush1.bf16.msra.mxu0 0
      %2336 = vmatprep.subr.bf16.mxu0 0
      %2337 = vmatpush1.bf16.msra.mxu0 0
      %2338 = vmatprep.subr.bf16.mxu0 0
      %2339 = vmatpush1.bf16.msra.mxu0 0
      %2340 = vmatprep.subr.bf16.mxu0 0
      %2341 = vmatpush1.bf16.msra.mxu0 0
      %2342 = vmatprep.subr.bf16.mxu0 0
      %2343 = vmatpush1.bf16.msra.mxu0 0
      %2344 = vmatprep.subr.bf16.mxu0 0
      %2345 = vmatpush1.bf16.msra.mxu0 0
      %2346 = vmatprep.subr.bf16.mxu0 0
      %2347 = vmatpush1.bf16.msra.mxu0 0
      %2348 = vmatprep.subr.bf16.mxu0 0
      %2349 = vmatpush1.bf16.msra.mxu0 0
      %2350 = vmatprep.subr.bf16.mxu0 0
      %2351 = vmatpush1.bf16.msra.mxu0 0
      %2352 = vmatprep.subr.bf16.mxu0 0
      %2353 = vmatpush1.bf16.msra.mxu0 0
      %2354 = vmatprep.subr.bf16.mxu0 0
      %2355 = vmatpush1.bf16.msra.mxu0 0
      %2356 = vmatprep.subr.bf16.mxu0 0
      %2357 = vmatpush1.bf16.msra.mxu0 0
      %2358 = vmatprep.subr.bf16.mxu0 0
      %2359 = vmatpush1.bf16.msra.mxu0 0
      %2360 = vmatprep.subr.bf16.mxu0 0
      %2361 = vmatpush1.bf16.msra.mxu0 0
      %2362 = vmatprep.mubr.bf16.mxu0 0
      %2363 = vmatmul.mubr.bf16.gmra.mrb[0].mxu0 %v2328
      %v2364 = vpop.f32.mrb[0].mxu0
      %v2365 = vadd.f32 0.0, %v2364
      %v2366 = vpop.f32.mrb[0].mxu0
      %v2367 = vpop.f32.mrb[0].mxu0
      %v2368 = vpop.f32.mrb[0].mxu0
      %2369 = vdwg.mxu0
      %vm2370 = vcmask 64512
      %v2371 = vsel %vm2370, %v2236, -inf
      %2372 = vmax.xlane.f32.xlu0 %v2371
      %v2373 = vpop.xlane.xlu0 %2372
      %v2374 = vsel %vm2370, %v2279, -inf
      %2375 = vmax.xlane.f32.xlu0 %v2374
      %v2376 = vpop.xlane.xlu0 %2375
      %v2377 = vsel %vm2370, %v2322, -inf
      %2378 = vmax.xlane.f32.xlu0 %v2377
      %v2379 = vpop.xlane.xlu0 %2378
      %v2380 = vsel %vm2370, %v2365, -inf
      %2381 = vmax.xlane.f32.xlu0 %v2380
      %v2382 = vpop.xlane.xlu0 %2381
      %v2383 = vsub.f32 %v2236, %v2373
      %v2384 = vsub.f32 %v2279, %v2376
      %v2385 = vsub.f32 %v2322, %v2379
      %v2386 = vsub.f32 %v2365, %v2382
      %v2387 = vmul.f32 %v2383, 1.442695
      %v2388 = vpow.pop %v2387
      %v2389 = vmul.f32 %v2384, 1.442695
      %v2390 = vpow.pop %v2389
      %v2391 = vmul.f32 %v2385, 1.442695
      %v2392 = vpow.pop %v2391
      %v2393 = vmul.f32 %v2386, 1.442695
      %v2394 = vpow.pop %v2393
      %v2395 = vsel %vm2370, %v2388, 0.0
      %2396 = vadd.xlane.f32.xlu0 %v2395
      %v2397 = vpop.xlane.xlu0 %2396
      %v2398 = vsel %vm2370, %v2390, 0.0
      %2399 = vadd.xlane.f32.xlu0 %v2398
      %v2400 = vpop.xlane.xlu0 %2399
      %v2401 = vsel %vm2370, %v2392, 0.0
      %2402 = vadd.xlane.f32.xlu0 %v2401
      %v2403 = vpop.xlane.xlu0 %2402
      %v2404 = vsel %vm2370, %v2394, 0.0
      %2405 = vadd.xlane.f32.xlu0 %v2404
      %v2406 = vpop.xlane.xlu0 %2405
      %v2407 = vrcp.pop %v2397
      %v2408 = vmul.f32 %v2388, %v2407
      %v2409 = vrcp.pop %v2400
      %v2410 = vmul.f32 %v2390, %v2409
      %v2411 = vrcp.pop %v2403
      %v2412 = vmul.f32 %v2392, %v2411
      %v2413 = vrcp.pop %v2406
      %v2414 = vmul.f32 %v2394, %v2413
      %v2415 = vpack.c.bf16 %v2408, %v2408
      %v2416 = vpack.c.bf16 %v2410, %v2410
      %v2417 = vpack.c.bf16 %v2412, %v2412
      %v2418 = vpack.c.bf16 %v2414, %v2414
      %2419 = vxpose.xlu0.c.b16.start [1/8] %v919, 128
      %2420 = vxpose.xlu0.c.b16.cont [2/8] 0, 128
      %2421 = vxpose.xlu0.c.b16.cont [3/8] 0, 128
      %2422 = vxpose.xlu0.c.b16.cont [4/8] 0, 128
      %2423 = vxpose.xlu0.c.b16.cont [5/8] 0, 128
      %2424 = vxpose.xlu0.c.b16.cont [6/8] 0, 128
      %2425 = vxpose.xlu0.c.b16.cont [7/8] 0, 128
      %2426 = vxpose.xlu0.c.b16.end [8/8] 0, 128
      %v2427 = vpop.trf.xlu0
      %v2428 = vpop.trf.xlu0
      %v2429 = vpop.trf.xlu0
      %v2430 = vpop.trf.xlu0
      %v2431 = vpop.trf.xlu0
      %v2432 = vpop.trf.xlu0
      %v2433 = vpop.trf.xlu0
      %v2434 = vpop.trf.xlu0
      %2435 = vxpose.xlu0.c.b16.start [1/8] %v920, 128
      %2436 = vxpose.xlu0.c.b16.cont [2/8] 0, 128
      %2437 = vxpose.xlu0.c.b16.cont [3/8] 0, 128
      %2438 = vxpose.xlu0.c.b16.cont [4/8] 0, 128
      %2439 = vxpose.xlu0.c.b16.cont [5/8] 0, 128
      %2440 = vxpose.xlu0.c.b16.cont [6/8] 0, 128
      %2441 = vxpose.xlu0.c.b16.cont [7/8] 0, 128
      %2442 = vxpose.xlu0.c.b16.end [8/8] 0, 128
      %v2443 = vpop.trf.xlu0
      %v2444 = vpop.trf.xlu0
      %v2445 = vpop.trf.xlu0
      %v2446 = vpop.trf.xlu0
      %v2447 = vpop.trf.xlu0
      %v2448 = vpop.trf.xlu0
      %v2449 = vpop.trf.xlu0
      %v2450 = vpop.trf.xlu0
      %2451 = vxpose.xlu0.c.b16.start [1/8] %v921, 128
      %2452 = vxpose.xlu0.c.b16.cont [2/8] 0, 128
      %2453 = vxpose.xlu0.c.b16.cont [3/8] 0, 128
      %2454 = vxpose.xlu0.c.b16.cont [4/8] 0, 128
      %2455 = vxpose.xlu0.c.b16.cont [5/8] 0, 128
      %2456 = vxpose.xlu0.c.b16.cont [6/8] 0, 128
      %2457 = vxpose.xlu0.c.b16.cont [7/8] 0, 128
      %2458 = vxpose.xlu0.c.b16.end [8/8] 0, 128
      %v2459 = vpop.trf.xlu0
      %v2460 = vpop.trf.xlu0
      %v2461 = vpop.trf.xlu0
      %v2462 = vpop.trf.xlu0
      %v2463 = vpop.trf.xlu0
      %v2464 = vpop.trf.xlu0
      %v2465 = vpop.trf.xlu0
      %v2466 = vpop.trf.xlu0
      %2467 = vxpose.xlu0.c.b16.start [1/8] %v922, 128
      %2468 = vxpose.xlu0.c.b16.cont [2/8] 0, 128
      %2469 = vxpose.xlu0.c.b16.cont [3/8] 0, 128
      %2470 = vxpose.xlu0.c.b16.cont [4/8] 0, 128
      %2471 = vxpose.xlu0.c.b16.cont [5/8] 0, 128
      %2472 = vxpose.xlu0.c.b16.cont [6/8] 0, 128
      %2473 = vxpose.xlu0.c.b16.cont [7/8] 0, 128
      %2474 = vxpose.xlu0.c.b16.end [8/8] 0, 128
      %v2475 = vpop.trf.xlu0
      %v2476 = vpop.trf.xlu0
      %v2477 = vpop.trf.xlu0
      %v2478 = vpop.trf.xlu0
      %v2479 = vpop.trf.xlu0
      %v2480 = vpop.trf.xlu0
      %v2481 = vpop.trf.xlu0
      %v2482 = vpop.trf.xlu0
      %2483 = vxpose.xlu0.c.b16.start [1/8] %v923, 128
      %2484 = vxpose.xlu0.c.b16.cont [2/8] 0, 128
      %2485 = vxpose.xlu0.c.b16.cont [3/8] 0, 128
      %2486 = vxpose.xlu0.c.b16.cont [4/8] 0, 128
      %2487 = vxpose.xlu0.c.b16.cont [5/8] 0, 128
      %2488 = vxpose.xlu0.c.b16.cont [6/8] 0, 128
      %2489 = vxpose.xlu0.c.b16.cont [7/8] 0, 128
      %2490 = vxpose.xlu0.c.b16.end [8/8] 0, 128
      %v2491 = vpop.trf.xlu0
      %v2492 = vpop.trf.xlu0
      %v2493 = vpop.trf.xlu0
      %v2494 = vpop.trf.xlu0
      %v2495 = vpop.trf.xlu0
      %v2496 = vpop.trf.xlu0
      %v2497 = vpop.trf.xlu0
      %v2498 = vpop.trf.xlu0
      %2499 = vxpose.xlu0.c.b16.start [1/8] %v924, 128
      %2500 = vxpose.xlu0.c.b16.cont [2/8] 0, 128
      %2501 = vxpose.xlu0.c.b16.cont [3/8] 0, 128
      %2502 = vxpose.xlu0.c.b16.cont [4/8] 0, 128
      %2503 = vxpose.xlu0.c.b16.cont [5/8] 0, 128
      %2504 = vxpose.xlu0.c.b16.cont [6/8] 0, 128
      %2505 = vxpose.xlu0.c.b16.cont [7/8] 0, 128
      %2506 = vxpose.xlu0.c.b16.end [8/8] 0, 128
      %v2507 = vpop.trf.xlu0
      %v2508 = vpop.trf.xlu0
      %v2509 = vpop.trf.xlu0
      %v2510 = vpop.trf.xlu0
      %v2511 = vpop.trf.xlu0
      %v2512 = vpop.trf.xlu0
      %v2513 = vpop.trf.xlu0
      %v2514 = vpop.trf.xlu0
      %2515 = vxpose.xlu0.c.b16.start [1/8] %v925, 128
      %2516 = vxpose.xlu0.c.b16.cont [2/8] 0, 128
      %2517 = vxpose.xlu0.c.b16.cont [3/8] 0, 128
      %2518 = vxpose.xlu0.c.b16.cont [4/8] 0, 128
      %2519 = vxpose.xlu0.c.b16.cont [5/8] 0, 128
      %2520 = vxpose.xlu0.c.b16.cont [6/8] 0, 128
      %2521 = vxpose.xlu0.c.b16.cont [7/8] 0, 128
      %2522 = vxpose.xlu0.c.b16.end [8/8] 0, 128
      %v2523 = vpop.trf.xlu0
      %v2524 = vpop.trf.xlu0
      %v2525 = vpop.trf.xlu0
      %v2526 = vpop.trf.xlu0
      %v2527 = vpop.trf.xlu0
      %v2528 = vpop.trf.xlu0
      %v2529 = vpop.trf.xlu0
      %v2530 = vpop.trf.xlu0
      %2531 = vxpose.xlu0.c.b16.start [1/8] %v926, 128
      %2532 = vxpose.xlu0.c.b16.cont [2/8] 0, 128
      %2533 = vxpose.xlu0.c.b16.cont [3/8] 0, 128
      %2534 = vxpose.xlu0.c.b16.cont [4/8] 0, 128
      %2535 = vxpose.xlu0.c.b16.cont [5/8] 0, 128
      %2536 = vxpose.xlu0.c.b16.cont [6/8] 0, 128
      %2537 = vxpose.xlu0.c.b16.cont [7/8] 0, 128
      %2538 = vxpose.xlu0.c.b16.end [8/8] 0, 128
      %v2539 = vpop.trf.xlu0
      %v2540 = vpop.trf.xlu0
      %v2541 = vpop.trf.xlu0
      %v2542 = vpop.trf.xlu0
      %v2543 = vpop.trf.xlu0
      %v2544 = vpop.trf.xlu0
      %v2545 = vpop.trf.xlu0
      %v2546 = vpop.trf.xlu0
      %v2549 = vpack.i.b16 %v2443, %v2427
      %v2551 = vshrl.u32 %v2427, 16
      %v2552 = vshrl.u32 %v2443, 16
      %v2553 = vpack.i.b16 %v2552, %v2551
      %v2557 = vpack.i.b16 %v2475, %v2459
      %v2559 = vshrl.u32 %v2459, 16
      %v2560 = vshrl.u32 %v2475, 16
      %v2561 = vpack.i.b16 %v2560, %v2559
      %v2565 = vpack.i.b16 %v2507, %v2491
      %v2567 = vshrl.u32 %v2491, 16
      %v2568 = vshrl.u32 %v2507, 16
      %v2569 = vpack.i.b16 %v2568, %v2567
      %v2573 = vpack.i.b16 %v2539, %v2523
      %v2575 = vshrl.u32 %v2523, 16
      %v2576 = vshrl.u32 %v2539, 16
      %v2577 = vpack.i.b16 %v2576, %v2575
      %v2581 = vpack.i.b16 %v2444, %v2428
      %v2583 = vshrl.u32 %v2428, 16
      %v2584 = vshrl.u32 %v2444, 16
      %v2585 = vpack.i.b16 %v2584, %v2583
      %v2589 = vpack.i.b16 %v2476, %v2460
      %v2591 = vshrl.u32 %v2460, 16
      %v2592 = vshrl.u32 %v2476, 16
      %v2593 = vpack.i.b16 %v2592, %v2591
      %v2597 = vpack.i.b16 %v2508, %v2492
      %v2599 = vshrl.u32 %v2492, 16
      %v2600 = vshrl.u32 %v2508, 16
      %v2601 = vpack.i.b16 %v2600, %v2599
      %v2605 = vpack.i.b16 %v2540, %v2524
      %v2607 = vshrl.u32 %v2524, 16
      %v2608 = vshrl.u32 %v2540, 16
      %v2609 = vpack.i.b16 %v2608, %v2607
      %v2611 = vcombine.low %v2549, %v2565
      %v2612 = vcombine.high %v2549, %v2565
      %v2614 = vunpack.c.l.s4 1983009808
      %v2615 = vunpack.c.0.s8 %v2614
      %v2616 = vlaneseq
      %v2617 = vshrl.u32 %v2616, 7
      %v2618 = vsub.s32 %v2615, %v2617
      %v2619 = vrot.slane %v2611, %v2618
      %v2621 = vunpack.c.l.s4 1983009808
      %v2622 = vunpack.c.0.s8 %v2621
      %v2623 = vlaneseq
      %v2624 = vshrl.u32 %v2623, 7
      %v2625 = vsub.s32 %v2622, %v2624
      %v2626 = vrot.slane %v2612, %v2625
      %v2627 = vcombine.low %v2557, %v2573
      %v2628 = vcombine.high %v2557, %v2573
      %v2630 = vunpack.c.l.s4 1983009808
      %v2631 = vunpack.c.0.s8 %v2630
      %v2632 = vlaneseq
      %v2633 = vshrl.u32 %v2632, 7
      %v2634 = vsub.s32 %v2631, %v2633
      %v2635 = vrot.slane %v2627, %v2634
      %v2637 = vunpack.c.l.s4 1983009808
      %v2638 = vunpack.c.0.s8 %v2637
      %v2639 = vlaneseq
      %v2640 = vshrl.u32 %v2639, 7
      %v2641 = vsub.s32 %v2638, %v2640
      %v2642 = vrot.slane %v2628, %v2641
      %v2643 = vcombine.low %v2619, %v2635
      %v2644 = vcombine.high %v2619, %v2635
      %v2646 = vunpack.c.l.s4 1934713408
      %v2647 = vunpack.c.0.s8 %v2646
      %v2648 = vlaneseq
      %v2649 = vshrl.u32 %v2648, 7
      %v2650 = vsub.s32 %v2647, %v2649
      %v2651 = vrot.slane %v2643, %v2650
      %v2653 = vunpack.c.l.s4 1934713408
      %v2654 = vunpack.c.0.s8 %v2653
      %v2655 = vlaneseq
      %v2656 = vshrl.u32 %v2655, 7
      %v2657 = vsub.s32 %v2654, %v2656
      %v2658 = vrot.slane %v2644, %v2657
      %v2659 = vcombine.low %v2626, %v2642
      %v2660 = vcombine.high %v2626, %v2642
      %v2662 = vunpack.c.l.s4 1934713408
      %v2663 = vunpack.c.0.s8 %v2662
      %v2664 = vlaneseq
      %v2665 = vshrl.u32 %v2664, 7
      %v2666 = vsub.s32 %v2663, %v2665
      %v2667 = vrot.slane %v2659, %v2666
      %v2669 = vunpack.c.l.s4 1934713408
      %v2670 = vunpack.c.0.s8 %v2669
      %v2671 = vlaneseq
      %v2672 = vshrl.u32 %v2671, 7
      %v2673 = vsub.s32 %v2670, %v2672
      %v2674 = vrot.slane %v2660, %v2673
      %v2675 = vcombine.high %v2651, 0
      %v2676 = vcombine.high %v2658, 0
      %v2677 = vcombine.high %v2667, 0
      %v2678 = vcombine.high %v2674, 0
      %v2679 = vcombine.low %v2553, %v2569
      %v2680 = vcombine.high %v2553, %v2569
      %v2682 = vunpack.c.l.s4 1983009808
      %v2683 = vunpack.c.0.s8 %v2682
      %v2684 = vlaneseq
      %v2685 = vshrl.u32 %v2684, 7
      %v2686 = vsub.s32 %v2683, %v2685
      %v2687 = vrot.slane %v2679, %v2686
      %v2689 = vunpack.c.l.s4 1983009808
      %v2690 = vunpack.c.0.s8 %v2689
      %v2691 = vlaneseq
      %v2692 = vshrl.u32 %v2691, 7
      %v2693 = vsub.s32 %v2690, %v2692
      %v2694 = vrot.slane %v2680, %v2693
      %v2695 = vcombine.low %v2561, %v2577
      %v2696 = vcombine.high %v2561, %v2577
      %v2698 = vunpack.c.l.s4 1983009808
      %v2699 = vunpack.c.0.s8 %v2698
      %v2700 = vlaneseq
      %v2701 = vshrl.u32 %v2700, 7
      %v2702 = vsub.s32 %v2699, %v2701
      %v2703 = vrot.slane %v2695, %v2702
      %v2705 = vunpack.c.l.s4 1983009808
      %v2706 = vunpack.c.0.s8 %v2705
      %v2707 = vlaneseq
      %v2708 = vshrl.u32 %v2707, 7
      %v2709 = vsub.s32 %v2706, %v2708
      %v2710 = vrot.slane %v2696, %v2709
      %v2711 = vcombine.low %v2687, %v2703
      %v2712 = vcombine.high %v2687, %v2703
      %v2714 = vunpack.c.l.s4 1934713408
      %v2715 = vunpack.c.0.s8 %v2714
      %v2716 = vlaneseq
      %v2717 = vshrl.u32 %v2716, 7
      %v2718 = vsub.s32 %v2715, %v2717
      %v2719 = vrot.slane %v2711, %v2718
      %v2721 = vunpack.c.l.s4 1934713408
      %v2722 = vunpack.c.0.s8 %v2721
      %v2723 = vlaneseq
      %v2724 = vshrl.u32 %v2723, 7
      %v2725 = vsub.s32 %v2722, %v2724
      %v2726 = vrot.slane %v2712, %v2725
      %v2727 = vcombine.low %v2694, %v2710
      %v2728 = vcombine.high %v2694, %v2710
      %v2730 = vunpack.c.l.s4 1934713408
      %v2731 = vunpack.c.0.s8 %v2730
      %v2732 = vlaneseq
      %v2733 = vshrl.u32 %v2732, 7
      %v2734 = vsub.s32 %v2731, %v2733
      %v2735 = vrot.slane %v2727, %v2734
      %v2737 = vunpack.c.l.s4 1934713408
      %v2738 = vunpack.c.0.s8 %v2737
      %v2739 = vlaneseq
      %v2740 = vshrl.u32 %v2739, 7
      %v2741 = vsub.s32 %v2738, %v2740
      %v2742 = vrot.slane %v2728, %v2741
      %v2743 = vcombine.high %v2719, 0
      %v2744 = vcombine.high %v2726, 0
      %v2745 = vcombine.high %v2735, 0
      %v2746 = vcombine.high %v2742, 0
      %v2747 = vcombine.low %v2581, %v2597
      %v2748 = vcombine.high %v2581, %v2597
      %v2750 = vunpack.c.l.s4 1983009808
      %v2751 = vunpack.c.0.s8 %v2750
      %v2752 = vlaneseq
      %v2753 = vshrl.u32 %v2752, 7
      %v2754 = vsub.s32 %v2751, %v2753
      %v2755 = vrot.slane %v2747, %v2754
      %v2757 = vunpack.c.l.s4 1983009808
      %v2758 = vunpack.c.0.s8 %v2757
      %v2759 = vlaneseq
      %v2760 = vshrl.u32 %v2759, 7
      %v2761 = vsub.s32 %v2758, %v2760
      %v2762 = vrot.slane %v2748, %v2761
      %v2763 = vcombine.low %v2589, %v2605
      %v2764 = vcombine.high %v2589, %v2605
      %v2766 = vunpack.c.l.s4 1983009808
      %v2767 = vunpack.c.0.s8 %v2766
      %v2768 = vlaneseq
      %v2769 = vshrl.u32 %v2768, 7
      %v2770 = vsub.s32 %v2767, %v2769
      %v2771 = vrot.slane %v2763, %v2770
      %v2773 = vunpack.c.l.s4 1983009808
      %v2774 = vunpack.c.0.s8 %v2773
      %v2775 = vlaneseq
      %v2776 = vshrl.u32 %v2775, 7
      %v2777 = vsub.s32 %v2774, %v2776
      %v2778 = vrot.slane %v2764, %v2777
      %v2779 = vcombine.low %v2755, %v2771
      %v2780 = vcombine.high %v2755, %v2771
      %v2782 = vunpack.c.l.s4 1934713408
      %v2783 = vunpack.c.0.s8 %v2782
      %v2784 = vlaneseq
      %v2785 = vshrl.u32 %v2784, 7
      %v2786 = vsub.s32 %v2783, %v2785
      %v2787 = vrot.slane %v2779, %v2786
      %v2789 = vunpack.c.l.s4 1934713408
      %v2790 = vunpack.c.0.s8 %v2789
      %v2791 = vlaneseq
      %v2792 = vshrl.u32 %v2791, 7
      %v2793 = vsub.s32 %v2790, %v2792
      %v2794 = vrot.slane %v2780, %v2793
      %v2795 = vcombine.low %v2762, %v2778
      %v2796 = vcombine.high %v2762, %v2778
      %v2798 = vunpack.c.l.s4 1934713408
      %v2799 = vunpack.c.0.s8 %v2798
      %v2800 = vlaneseq
      %v2801 = vshrl.u32 %v2800, 7
      %v2802 = vsub.s32 %v2799, %v2801
      %v2803 = vrot.slane %v2795, %v2802
      %v2805 = vunpack.c.l.s4 1934713408
      %v2806 = vunpack.c.0.s8 %v2805
      %v2807 = vlaneseq
      %v2808 = vshrl.u32 %v2807, 7
      %v2809 = vsub.s32 %v2806, %v2808
      %v2810 = vrot.slane %v2796, %v2809
      %v2811 = vcombine.high %v2787, 0
      %v2812 = vcombine.high %v2794, 0
      %v2813 = vcombine.high %v2803, 0
      %v2814 = vcombine.high %v2810, 0
      %v2815 = vcombine.low %v2585, %v2601
      %v2816 = vcombine.high %v2585, %v2601
      %v2818 = vunpack.c.l.s4 1983009808
      %v2819 = vunpack.c.0.s8 %v2818
      %v2820 = vlaneseq
      %v2821 = vshrl.u32 %v2820, 7
      %v2822 = vsub.s32 %v2819, %v2821
      %v2823 = vrot.slane %v2815, %v2822
      %v2825 = vunpack.c.l.s4 1983009808
      %v2826 = vunpack.c.0.s8 %v2825
      %v2827 = vlaneseq
      %v2828 = vshrl.u32 %v2827, 7
      %v2829 = vsub.s32 %v2826, %v2828
      %v2830 = vrot.slane %v2816, %v2829
      %v2831 = vcombine.low %v2593, %v2609
      %v2832 = vcombine.high %v2593, %v2609
      %v2834 = vunpack.c.l.s4 1983009808
      %v2835 = vunpack.c.0.s8 %v2834
      %v2836 = vlaneseq
      %v2837 = vshrl.u32 %v2836, 7
      %v2838 = vsub.s32 %v2835, %v2837
      %v2839 = vrot.slane %v2831, %v2838
      %v2841 = vunpack.c.l.s4 1983009808
      %v2842 = vunpack.c.0.s8 %v2841
      %v2843 = vlaneseq
      %v2844 = vshrl.u32 %v2843, 7
      %v2845 = vsub.s32 %v2842, %v2844
      %v2846 = vrot.slane %v2832, %v2845
      %v2847 = vcombine.low %v2823, %v2839
      %v2848 = vcombine.high %v2823, %v2839
      %v2850 = vunpack.c.l.s4 1934713408
      %v2851 = vunpack.c.0.s8 %v2850
      %v2852 = vlaneseq
      %v2853 = vshrl.u32 %v2852, 7
      %v2854 = vsub.s32 %v2851, %v2853
      %v2855 = vrot.slane %v2847, %v2854
      %v2857 = vunpack.c.l.s4 1934713408
      %v2858 = vunpack.c.0.s8 %v2857
      %v2859 = vlaneseq
      %v2860 = vshrl.u32 %v2859, 7
      %v2861 = vsub.s32 %v2858, %v2860
      %v2862 = vrot.slane %v2848, %v2861
      %v2863 = vcombine.low %v2830, %v2846
      %v2864 = vcombine.high %v2830, %v2846
      %v2866 = vunpack.c.l.s4 1934713408
      %v2867 = vunpack.c.0.s8 %v2866
      %v2868 = vlaneseq
      %v2869 = vshrl.u32 %v2868, 7
      %v2870 = vsub.s32 %v2867, %v2869
      %v2871 = vrot.slane %v2863, %v2870
      %v2873 = vunpack.c.l.s4 1934713408
      %v2874 = vunpack.c.0.s8 %v2873
      %v2875 = vlaneseq
      %v2876 = vshrl.u32 %v2875, 7
      %v2877 = vsub.s32 %v2874, %v2876
      %v2878 = vrot.slane %v2864, %v2877
      %v2879 = vcombine.high %v2855, 0
      %v2880 = vcombine.high %v2862, 0
      %v2881 = vcombine.high %v2871, 0
      %v2882 = vcombine.high %v2878, 0
      %2883 = vxpose.xlu0.c.b16.start [1/8] %v2651, 128
      %2884 = vxpose.xlu0.c.b16.cont [2/8] 0, 128
      %2885 = vxpose.xlu0.c.b16.cont [3/8] 0, 128
      %2886 = vxpose.xlu0.c.b16.cont [4/8] 0, 128
      %2887 = vxpose.xlu0.c.b16.cont [5/8] 0, 128
      %2888 = vxpose.xlu0.c.b16.cont [6/8] 0, 128
      %2889 = vxpose.xlu0.c.b16.cont [7/8] 0, 128
      %2890 = vxpose.xlu0.c.b16.end [8/8] 0, 128
      %v2891 = vpop.trf.xlu0
      %v2892 = vpop.trf.xlu0
      %v2893 = vpop.trf.xlu0
      %v2894 = vpop.trf.xlu0
      %v2895 = vpop.trf.xlu0
      %v2896 = vpop.trf.xlu0
      %v2897 = vpop.trf.xlu0
      %v2898 = vpop.trf.xlu0
      %2899 = vxpose.xlu0.c.b16.start [1/8] %v2719, 128
      %2900 = vxpose.xlu0.c.b16.cont [2/8] 0, 128
      %2901 = vxpose.xlu0.c.b16.cont [3/8] 0, 128
      %2902 = vxpose.xlu0.c.b16.cont [4/8] 0, 128
      %2903 = vxpose.xlu0.c.b16.cont [5/8] 0, 128
      %2904 = vxpose.xlu0.c.b16.cont [6/8] 0, 128
      %2905 = vxpose.xlu0.c.b16.cont [7/8] 0, 128
      %2906 = vxpose.xlu0.c.b16.end [8/8] 0, 128
      %v2907 = vpop.trf.xlu0
      %v2908 = vpop.trf.xlu0
      %v2909 = vpop.trf.xlu0
      %v2910 = vpop.trf.xlu0
      %v2911 = vpop.trf.xlu0
      %v2912 = vpop.trf.xlu0
      %v2913 = vpop.trf.xlu0
      %v2914 = vpop.trf.xlu0
      %2915 = vxpose.xlu0.c.b16.start [1/8] %v2675, 128
      %2916 = vxpose.xlu0.c.b16.cont [2/8] 0, 128
      %2917 = vxpose.xlu0.c.b16.cont [3/8] 0, 128
      %2918 = vxpose.xlu0.c.b16.cont [4/8] 0, 128
      %2919 = vxpose.xlu0.c.b16.cont [5/8] 0, 128
      %2920 = vxpose.xlu0.c.b16.cont [6/8] 0, 128
      %2921 = vxpose.xlu0.c.b16.cont [7/8] 0, 128
      %2922 = vxpose.xlu0.c.b16.end [8/8] 0, 128
      %v2923 = vpop.trf.xlu0
      %v2924 = vpop.trf.xlu0
      %v2925 = vpop.trf.xlu0
      %v2926 = vpop.trf.xlu0
      %v2927 = vpop.trf.xlu0
      %v2928 = vpop.trf.xlu0
      %v2929 = vpop.trf.xlu0
      %v2930 = vpop.trf.xlu0
      %2931 = vxpose.xlu0.c.b16.start [1/8] %v2743, 128
      %2932 = vxpose.xlu0.c.b16.cont [2/8] 0, 128
      %2933 = vxpose.xlu0.c.b16.cont [3/8] 0, 128
      %2934 = vxpose.xlu0.c.b16.cont [4/8] 0, 128
      %2935 = vxpose.xlu0.c.b16.cont [5/8] 0, 128
      %2936 = vxpose.xlu0.c.b16.cont [6/8] 0, 128
      %2937 = vxpose.xlu0.c.b16.cont [7/8] 0, 128
      %2938 = vxpose.xlu0.c.b16.end [8/8] 0, 128
      %v2939 = vpop.trf.xlu0
      %v2940 = vpop.trf.xlu0
      %v2941 = vpop.trf.xlu0
      %v2942 = vpop.trf.xlu0
      %v2943 = vpop.trf.xlu0
      %v2944 = vpop.trf.xlu0
      %v2945 = vpop.trf.xlu0
      %v2946 = vpop.trf.xlu0
      %2947 = vxpose.xlu0.c.b16.start [1/8] %v2658, 128
      %2948 = vxpose.xlu0.c.b16.cont [2/8] 0, 128
      %2949 = vxpose.xlu0.c.b16.cont [3/8] 0, 128
      %2950 = vxpose.xlu0.c.b16.cont [4/8] 0, 128
      %2951 = vxpose.xlu0.c.b16.cont [5/8] 0, 128
      %2952 = vxpose.xlu0.c.b16.cont [6/8] 0, 128
      %2953 = vxpose.xlu0.c.b16.cont [7/8] 0, 128
      %2954 = vxpose.xlu0.c.b16.end [8/8] 0, 128
      %v2955 = vpop.trf.xlu0
      %v2956 = vpop.trf.xlu0
      %v2957 = vpop.trf.xlu0
      %v2958 = vpop.trf.xlu0
      %v2959 = vpop.trf.xlu0
      %v2960 = vpop.trf.xlu0
      %v2961 = vpop.trf.xlu0
      %v2962 = vpop.trf.xlu0
      %2963 = vxpose.xlu0.c.b16.start [1/8] %v2726, 128
      %2964 = vxpose.xlu0.c.b16.cont [2/8] 0, 128
      %2965 = vxpose.xlu0.c.b16.cont [3/8] 0, 128
      %2966 = vxpose.xlu0.c.b16.cont [4/8] 0, 128
      %2967 = vxpose.xlu0.c.b16.cont [5/8] 0, 128
      %2968 = vxpose.xlu0.c.b16.cont [6/8] 0, 128
      %2969 = vxpose.xlu0.c.b16.cont [7/8] 0, 128
      %2970 = vxpose.xlu0.c.b16.end [8/8] 0, 128
      %v2971 = vpop.trf.xlu0
      %v2972 = vpop.trf.xlu0
      %v2973 = vpop.trf.xlu0
      %v2974 = vpop.trf.xlu0
      %v2975 = vpop.trf.xlu0
      %v2976 = vpop.trf.xlu0
      %v2977 = vpop.trf.xlu0
      %v2978 = vpop.trf.xlu0
      %2979 = vxpose.xlu0.c.b16.start [1/8] %v2676, 128
      %2980 = vxpose.xlu0.c.b16.cont [2/8] 0, 128
      %2981 = vxpose.xlu0.c.b16.cont [3/8] 0, 128
      %2982 = vxpose.xlu0.c.b16.cont [4/8] 0, 128
      %2983 = vxpose.xlu0.c.b16.cont [5/8] 0, 128
      %2984 = vxpose.xlu0.c.b16.cont [6/8] 0, 128
      %2985 = vxpose.xlu0.c.b16.cont [7/8] 0, 128
      %2986 = vxpose.xlu0.c.b16.end [8/8] 0, 128
      %v2987 = vpop.trf.xlu0
      %v2988 = vpop.trf.xlu0
      %v2989 = vpop.trf.xlu0
      %v2990 = vpop.trf.xlu0
      %v2991 = vpop.trf.xlu0
      %v2992 = vpop.trf.xlu0
      %v2993 = vpop.trf.xlu0
      %v2994 = vpop.trf.xlu0
      %2995 = vxpose.xlu0.c.b16.start [1/8] %v2744, 128
      %2996 = vxpose.xlu0.c.b16.cont [2/8] 0, 128
      %2997 = vxpose.xlu0.c.b16.cont [3/8] 0, 128
      %2998 = vxpose.xlu0.c.b16.cont [4/8] 0, 128
      %2999 = vxpose.xlu0.c.b16.cont [5/8] 0, 128
      %3000 = vxpose.xlu0.c.b16.cont [6/8] 0, 128
      %3001 = vxpose.xlu0.c.b16.cont [7/8] 0, 128
      %3002 = vxpose.xlu0.c.b16.end [8/8] 0, 128
      %v3003 = vpop.trf.xlu0
      %v3004 = vpop.trf.xlu0
      %v3005 = vpop.trf.xlu0
      %v3006 = vpop.trf.xlu0
      %v3007 = vpop.trf.xlu0
      %v3008 = vpop.trf.xlu0
      %v3009 = vpop.trf.xlu0
      %v3010 = vpop.trf.xlu0
      %3011 = vxpose.xlu0.c.b16.start [1/8] %v2667, 128
      %3012 = vxpose.xlu0.c.b16.cont [2/8] 0, 128
      %3013 = vxpose.xlu0.c.b16.cont [3/8] 0, 128
      %3014 = vxpose.xlu0.c.b16.cont [4/8] 0, 128
      %3015 = vxpose.xlu0.c.b16.cont [5/8] 0, 128
      %3016 = vxpose.xlu0.c.b16.cont [6/8] 0, 128
      %3017 = vxpose.xlu0.c.b16.cont [7/8] 0, 128
      %3018 = vxpose.xlu0.c.b16.end [8/8] 0, 128
      %v3019 = vpop.trf.xlu0
      %v3020 = vpop.trf.xlu0
      %v3021 = vpop.trf.xlu0
      %v3022 = vpop.trf.xlu0
      %v3023 = vpop.trf.xlu0
      %v3024 = vpop.trf.xlu0
      %v3025 = vpop.trf.xlu0
      %v3026 = vpop.trf.xlu0
      %3027 = vxpose.xlu0.c.b16.start [1/8] %v2735, 128
      %3028 = vxpose.xlu0.c.b16.cont [2/8] 0, 128
      %3029 = vxpose.xlu0.c.b16.cont [3/8] 0, 128
      %3030 = vxpose.xlu0.c.b16.cont [4/8] 0, 128
      %3031 = vxpose.xlu0.c.b16.cont [5/8] 0, 128
      %3032 = vxpose.xlu0.c.b16.cont [6/8] 0, 128
      %3033 = vxpose.xlu0.c.b16.cont [7/8] 0, 128
      %3034 = vxpose.xlu0.c.b16.end [8/8] 0, 128
      %v3035 = vpop.trf.xlu0
      %v3036 = vpop.trf.xlu0
      %v3037 = vpop.trf.xlu0
      %v3038 = vpop.trf.xlu0
      %v3039 = vpop.trf.xlu0
      %v3040 = vpop.trf.xlu0
      %v3041 = vpop.trf.xlu0
      %v3042 = vpop.trf.xlu0
      %3043 = vxpose.xlu0.c.b16.start [1/8] %v2677, 128
      %3044 = vxpose.xlu0.c.b16.cont [2/8] 0, 128
      %3045 = vxpose.xlu0.c.b16.cont [3/8] 0, 128
      %3046 = vxpose.xlu0.c.b16.cont [4/8] 0, 128
      %3047 = vxpose.xlu0.c.b16.cont [5/8] 0, 128
      %3048 = vxpose.xlu0.c.b16.cont [6/8] 0, 128
      %3049 = vxpose.xlu0.c.b16.cont [7/8] 0, 128
      %3050 = vxpose.xlu0.c.b16.end [8/8] 0, 128
      %v3051 = vpop.trf.xlu0
      %v3052 = vpop.trf.xlu0
      %v3053 = vpop.trf.xlu0
      %v3054 = vpop.trf.xlu0
      %v3055 = vpop.trf.xlu0
      %v3056 = vpop.trf.xlu0
      %v3057 = vpop.trf.xlu0
      %v3058 = vpop.trf.xlu0
      %3059 = vxpose.xlu0.c.b16.start [1/8] %v2745, 128
      %3060 = vxpose.xlu0.c.b16.cont [2/8] 0, 128
      %3061 = vxpose.xlu0.c.b16.cont [3/8] 0, 128
      %3062 = vxpose.xlu0.c.b16.cont [4/8] 0, 128
      %3063 = vxpose.xlu0.c.b16.cont [5/8] 0, 128
      %3064 = vxpose.xlu0.c.b16.cont [6/8] 0, 128
      %3065 = vxpose.xlu0.c.b16.cont [7/8] 0, 128
      %3066 = vxpose.xlu0.c.b16.end [8/8] 0, 128
      %v3067 = vpop.trf.xlu0
      %v3068 = vpop.trf.xlu0
      %v3069 = vpop.trf.xlu0
      %v3070 = vpop.trf.xlu0
      %v3071 = vpop.trf.xlu0
      %v3072 = vpop.trf.xlu0
      %v3073 = vpop.trf.xlu0
      %v3074 = vpop.trf.xlu0
      %3075 = vxpose.xlu0.c.b16.start [1/8] %v2674, 128
      %3076 = vxpose.xlu0.c.b16.cont [2/8] 0, 128
      %3077 = vxpose.xlu0.c.b16.cont [3/8] 0, 128
      %3078 = vxpose.xlu0.c.b16.cont [4/8] 0, 128
      %3079 = vxpose.xlu0.c.b16.cont [5/8] 0, 128
      %3080 = vxpose.xlu0.c.b16.cont [6/8] 0, 128
      %3081 = vxpose.xlu0.c.b16.cont [7/8] 0, 128
      %3082 = vxpose.xlu0.c.b16.end [8/8] 0, 128
      %v3083 = vpop.trf.xlu0
      %v3084 = vpop.trf.xlu0
      %v3085 = vpop.trf.xlu0
      %v3086 = vpop.trf.xlu0
      %v3087 = vpop.trf.xlu0
      %v3088 = vpop.trf.xlu0
      %v3089 = vpop.trf.xlu0
      %v3090 = vpop.trf.xlu0
      %3091 = vxpose.xlu0.c.b16.start [1/8] %v2742, 128
      %3092 = vxpose.xlu0.c.b16.cont [2/8] 0, 128
      %3093 = vxpose.xlu0.c.b16.cont [3/8] 0, 128
      %3094 = vxpose.xlu0.c.b16.cont [4/8] 0, 128
      %3095 = vxpose.xlu0.c.b16.cont [5/8] 0, 128
      %3096 = vxpose.xlu0.c.b16.cont [6/8] 0, 128
      %3097 = vxpose.xlu0.c.b16.cont [7/8] 0, 128
      %3098 = vxpose.xlu0.c.b16.end [8/8] 0, 128
      %v3099 = vpop.trf.xlu0
      %v3100 = vpop.trf.xlu0
      %v3101 = vpop.trf.xlu0
      %v3102 = vpop.trf.xlu0
      %v3103 = vpop.trf.xlu0
      %v3104 = vpop.trf.xlu0
      %v3105 = vpop.trf.xlu0
      %v3106 = vpop.trf.xlu0
      %3107 = vxpose.xlu0.c.b16.start [1/8] %v2678, 128
      %3108 = vxpose.xlu0.c.b16.cont [2/8] 0, 128
      %3109 = vxpose.xlu0.c.b16.cont [3/8] 0, 128
      %3110 = vxpose.xlu0.c.b16.cont [4/8] 0, 128
      %3111 = vxpose.xlu0.c.b16.cont [5/8] 0, 128
      %3112 = vxpose.xlu0.c.b16.cont [6/8] 0, 128
      %3113 = vxpose.xlu0.c.b16.cont [7/8] 0, 128
      %3114 = vxpose.xlu0.c.b16.end [8/8] 0, 128
      %v3115 = vpop.trf.xlu0
      %v3116 = vpop.trf.xlu0
      %v3117 = vpop.trf.xlu0
      %v3118 = vpop.trf.xlu0
      %v3119 = vpop.trf.xlu0
      %v3120 = vpop.trf.xlu0
      %v3121 = vpop.trf.xlu0
      %v3122 = vpop.trf.xlu0
      %3123 = vxpose.xlu0.c.b16.start [1/8] %v2746, 128
      %3124 = vxpose.xlu0.c.b16.cont [2/8] 0, 128
      %3125 = vxpose.xlu0.c.b16.cont [3/8] 0, 128
      %3126 = vxpose.xlu0.c.b16.cont [4/8] 0, 128
      %3127 = vxpose.xlu0.c.b16.cont [5/8] 0, 128
      %3128 = vxpose.xlu0.c.b16.cont [6/8] 0, 128
      %3129 = vxpose.xlu0.c.b16.cont [7/8] 0, 128
      %3130 = vxpose.xlu0.c.b16.end [8/8] 0, 128
      %v3131 = vpop.trf.xlu0
      %v3132 = vpop.trf.xlu0
      %v3133 = vpop.trf.xlu0
      %v3134 = vpop.trf.xlu0
      %v3135 = vpop.trf.xlu0
      %v3136 = vpop.trf.xlu0
      %v3137 = vpop.trf.xlu0
      %v3138 = vpop.trf.xlu0
      %3139 = vxpose.xlu0.c.b16.start [1/8] %v2787, 128
      %3140 = vxpose.xlu0.c.b16.cont [2/8] 0, 128
      %3141 = vxpose.xlu0.c.b16.cont [3/8] 0, 128
      %3142 = vxpose.xlu0.c.b16.cont [4/8] 0, 128
      %3143 = vxpose.xlu0.c.b16.cont [5/8] 0, 128
      %3144 = vxpose.xlu0.c.b16.cont [6/8] 0, 128
      %3145 = vxpose.xlu0.c.b16.cont [7/8] 0, 128
      %3146 = vxpose.xlu0.c.b16.end [8/8] 0, 128
      %v3147 = vpop.trf.xlu0
      %v3148 = vpop.trf.xlu0
      %v3149 = vpop.trf.xlu0
      %v3150 = vpop.trf.xlu0
      %v3151 = vpop.trf.xlu0
      %v3152 = vpop.trf.xlu0
      %v3153 = vpop.trf.xlu0
      %v3154 = vpop.trf.xlu0
      %3155 = vxpose.xlu0.c.b16.start [1/8] %v2855, 128
      %3156 = vxpose.xlu0.c.b16.cont [2/8] 0, 128
      %3157 = vxpose.xlu0.c.b16.cont [3/8] 0, 128
      %3158 = vxpose.xlu0.c.b16.cont [4/8] 0, 128
      %3159 = vxpose.xlu0.c.b16.cont [5/8] 0, 128
      %3160 = vxpose.xlu0.c.b16.cont [6/8] 0, 128
      %3161 = vxpose.xlu0.c.b16.cont [7/8] 0, 128
      %3162 = vxpose.xlu0.c.b16.end [8/8] 0, 128
      %v3163 = vpop.trf.xlu0
      %v3164 = vpop.trf.xlu0
      %v3165 = vpop.trf.xlu0
      %v3166 = vpop.trf.xlu0
      %v3167 = vpop.trf.xlu0
      %v3168 = vpop.trf.xlu0
      %v3169 = vpop.trf.xlu0
      %v3170 = vpop.trf.xlu0
      %3171 = vxpose.xlu0.c.b16.start [1/8] %v2811, 128
      %3172 = vxpose.xlu0.c.b16.cont [2/8] 0, 128
      %3173 = vxpose.xlu0.c.b16.cont [3/8] 0, 128
      %3174 = vxpose.xlu0.c.b16.cont [4/8] 0, 128
      %3175 = vxpose.xlu0.c.b16.cont [5/8] 0, 128
      %3176 = vxpose.xlu0.c.b16.cont [6/8] 0, 128
      %3177 = vxpose.xlu0.c.b16.cont [7/8] 0, 128
      %3178 = vxpose.xlu0.c.b16.end [8/8] 0, 128
      %v3179 = vpop.trf.xlu0
      %v3180 = vpop.trf.xlu0
      %v3181 = vpop.trf.xlu0
      %v3182 = vpop.trf.xlu0
      %v3183 = vpop.trf.xlu0
      %v3184 = vpop.trf.xlu0
      %v3185 = vpop.trf.xlu0
      %v3186 = vpop.trf.xlu0
      %3187 = vxpose.xlu0.c.b16.start [1/8] %v2879, 128
      %3188 = vxpose.xlu0.c.b16.cont [2/8] 0, 128
      %3189 = vxpose.xlu0.c.b16.cont [3/8] 0, 128
      %3190 = vxpose.xlu0.c.b16.cont [4/8] 0, 128
      %3191 = vxpose.xlu0.c.b16.cont [5/8] 0, 128
      %3192 = vxpose.xlu0.c.b16.cont [6/8] 0, 128
      %3193 = vxpose.xlu0.c.b16.cont [7/8] 0, 128
      %3194 = vxpose.xlu0.c.b16.end [8/8] 0, 128
      %v3195 = vpop.trf.xlu0
      %v3196 = vpop.trf.xlu0
      %v3197 = vpop.trf.xlu0
      %v3198 = vpop.trf.xlu0
      %v3199 = vpop.trf.xlu0
      %v3200 = vpop.trf.xlu0
      %v3201 = vpop.trf.xlu0
      %v3202 = vpop.trf.xlu0
      %3203 = vxpose.xlu0.c.b16.start [1/8] %v2794, 128
      %3204 = vxpose.xlu0.c.b16.cont [2/8] 0, 128
      %3205 = vxpose.xlu0.c.b16.cont [3/8] 0, 128
      %3206 = vxpose.xlu0.c.b16.cont [4/8] 0, 128
      %3207 = vxpose.xlu0.c.b16.cont [5/8] 0, 128
      %3208 = vxpose.xlu0.c.b16.cont [6/8] 0, 128
      %3209 = vxpose.xlu0.c.b16.cont [7/8] 0, 128
      %3210 = vxpose.xlu0.c.b16.end [8/8] 0, 128
      %v3211 = vpop.trf.xlu0
      %v3212 = vpop.trf.xlu0
      %v3213 = vpop.trf.xlu0
      %v3214 = vpop.trf.xlu0
      %v3215 = vpop.trf.xlu0
      %v3216 = vpop.trf.xlu0
      %v3217 = vpop.trf.xlu0
      %v3218 = vpop.trf.xlu0
      %3219 = vxpose.xlu0.c.b16.start [1/8] %v2862, 128
      %3220 = vxpose.xlu0.c.b16.cont [2/8] 0, 128
      %3221 = vxpose.xlu0.c.b16.cont [3/8] 0, 128
      %3222 = vxpose.xlu0.c.b16.cont [4/8] 0, 128
      %3223 = vxpose.xlu0.c.b16.cont [5/8] 0, 128
      %3224 = vxpose.xlu0.c.b16.cont [6/8] 0, 128
      %3225 = vxpose.xlu0.c.b16.cont [7/8] 0, 128
      %3226 = vxpose.xlu0.c.b16.end [8/8] 0, 128
      %v3227 = vpop.trf.xlu0
      %v3228 = vpop.trf.xlu0
      %v3229 = vpop.trf.xlu0
      %v3230 = vpop.trf.xlu0
      %v3231 = vpop.trf.xlu0
      %v3232 = vpop.trf.xlu0
      %v3233 = vpop.trf.xlu0
      %v3234 = vpop.trf.xlu0
      %3235 = vxpose.xlu0.c.b16.start [1/8] %v2812, 128
      %3236 = vxpose.xlu0.c.b16.cont [2/8] 0, 128
      %3237 = vxpose.xlu0.c.b16.cont [3/8] 0, 128
      %3238 = vxpose.xlu0.c.b16.cont [4/8] 0, 128
      %3239 = vxpose.xlu0.c.b16.cont [5/8] 0, 128
      %3240 = vxpose.xlu0.c.b16.cont [6/8] 0, 128
      %3241 = vxpose.xlu0.c.b16.cont [7/8] 0, 128
      %3242 = vxpose.xlu0.c.b16.end [8/8] 0, 128
      %v3243 = vpop.trf.xlu0
      %v3244 = vpop.trf.xlu0
      %v3245 = vpop.trf.xlu0
      %v3246 = vpop.trf.xlu0
      %v3247 = vpop.trf.xlu0
      %v3248 = vpop.trf.xlu0
      %v3249 = vpop.trf.xlu0
      %v3250 = vpop.trf.xlu0
      %3251 = vxpose.xlu0.c.b16.start [1/8] %v2880, 128
      %3252 = vxpose.xlu0.c.b16.cont [2/8] 0, 128
      %3253 = vxpose.xlu0.c.b16.cont [3/8] 0, 128
      %3254 = vxpose.xlu0.c.b16.cont [4/8] 0, 128
      %3255 = vxpose.xlu0.c.b16.cont [5/8] 0, 128
      %3256 = vxpose.xlu0.c.b16.cont [6/8] 0, 128
      %3257 = vxpose.xlu0.c.b16.cont [7/8] 0, 128
      %3258 = vxpose.xlu0.c.b16.end [8/8] 0, 128
      %v3259 = vpop.trf.xlu0
      %v3260 = vpop.trf.xlu0
      %v3261 = vpop.trf.xlu0
      %v3262 = vpop.trf.xlu0
      %v3263 = vpop.trf.xlu0
      %v3264 = vpop.trf.xlu0
      %v3265 = vpop.trf.xlu0
      %v3266 = vpop.trf.xlu0
      %3267 = vxpose.xlu0.c.b16.start [1/8] %v2803, 128
      %3268 = vxpose.xlu0.c.b16.cont [2/8] 0, 128
      %3269 = vxpose.xlu0.c.b16.cont [3/8] 0, 128
      %3270 = vxpose.xlu0.c.b16.cont [4/8] 0, 128
      %3271 = vxpose.xlu0.c.b16.cont [5/8] 0, 128
      %3272 = vxpose.xlu0.c.b16.cont [6/8] 0, 128
      %3273 = vxpose.xlu0.c.b16.cont [7/8] 0, 128
      %3274 = vxpose.xlu0.c.b16.end [8/8] 0, 128
      %v3275 = vpop.trf.xlu0
      %v3276 = vpop.trf.xlu0
      %v3277 = vpop.trf.xlu0
      %v3278 = vpop.trf.xlu0
      %v3279 = vpop.trf.xlu0
      %v3280 = vpop.trf.xlu0
      %v3281 = vpop.trf.xlu0
      %v3282 = vpop.trf.xlu0
      %3283 = vxpose.xlu0.c.b16.start [1/8] %v2871, 128
      %3284 = vxpose.xlu0.c.b16.cont [2/8] 0, 128
      %3285 = vxpose.xlu0.c.b16.cont [3/8] 0, 128
      %3286 = vxpose.xlu0.c.b16.cont [4/8] 0, 128
      %3287 = vxpose.xlu0.c.b16.cont [5/8] 0, 128
      %3288 = vxpose.xlu0.c.b16.cont [6/8] 0, 128
      %3289 = vxpose.xlu0.c.b16.cont [7/8] 0, 128
      %3290 = vxpose.xlu0.c.b16.end [8/8] 0, 128
      %v3291 = vpop.trf.xlu0
      %v3292 = vpop.trf.xlu0
      %v3293 = vpop.trf.xlu0
      %v3294 = vpop.trf.xlu0
      %v3295 = vpop.trf.xlu0
      %v3296 = vpop.trf.xlu0
      %v3297 = vpop.trf.xlu0
      %v3298 = vpop.trf.xlu0
      %3299 = vxpose.xlu0.c.b16.start [1/8] %v2813, 128
      %3300 = vxpose.xlu0.c.b16.cont [2/8] 0, 128
      %3301 = vxpose.xlu0.c.b16.cont [3/8] 0, 128
      %3302 = vxpose.xlu0.c.b16.cont [4/8] 0, 128
      %3303 = vxpose.xlu0.c.b16.cont [5/8] 0, 128
      %3304 = vxpose.xlu0.c.b16.cont [6/8] 0, 128
      %3305 = vxpose.xlu0.c.b16.cont [7/8] 0, 128
      %3306 = vxpose.xlu0.c.b16.end [8/8] 0, 128
      %v3307 = vpop.trf.xlu0
      %v3308 = vpop.trf.xlu0
      %v3309 = vpop.trf.xlu0
      %v3310 = vpop.trf.xlu0
      %v3311 = vpop.trf.xlu0
      %v3312 = vpop.trf.xlu0
      %v3313 = vpop.trf.xlu0
      %v3314 = vpop.trf.xlu0
      %3315 = vxpose.xlu0.c.b16.start [1/8] %v2881, 128
      %3316 = vxpose.xlu0.c.b16.cont [2/8] 0, 128
      %3317 = vxpose.xlu0.c.b16.cont [3/8] 0, 128
      %3318 = vxpose.xlu0.c.b16.cont [4/8] 0, 128
      %3319 = vxpose.xlu0.c.b16.cont [5/8] 0, 128
      %3320 = vxpose.xlu0.c.b16.cont [6/8] 0, 128
      %3321 = vxpose.xlu0.c.b16.cont [7/8] 0, 128
      %3322 = vxpose.xlu0.c.b16.end [8/8] 0, 128
      %v3323 = vpop.trf.xlu0
      %v3324 = vpop.trf.xlu0
      %v3325 = vpop.trf.xlu0
      %v3326 = vpop.trf.xlu0
      %v3327 = vpop.trf.xlu0
      %v3328 = vpop.trf.xlu0
      %v3329 = vpop.trf.xlu0
      %v3330 = vpop.trf.xlu0
      %3331 = vxpose.xlu0.c.b16.start [1/8] %v2810, 128
      %3332 = vxpose.xlu0.c.b16.cont [2/8] 0, 128
      %3333 = vxpose.xlu0.c.b16.cont [3/8] 0, 128
      %3334 = vxpose.xlu0.c.b16.cont [4/8] 0, 128
      %3335 = vxpose.xlu0.c.b16.cont [5/8] 0, 128
      %3336 = vxpose.xlu0.c.b16.cont [6/8] 0, 128
      %3337 = vxpose.xlu0.c.b16.cont [7/8] 0, 128
      %3338 = vxpose.xlu0.c.b16.end [8/8] 0, 128
      %v3339 = vpop.trf.xlu0
      %v3340 = vpop.trf.xlu0
      %v3341 = vpop.trf.xlu0
      %v3342 = vpop.trf.xlu0
      %v3343 = vpop.trf.xlu0
      %v3344 = vpop.trf.xlu0
      %v3345 = vpop.trf.xlu0
      %v3346 = vpop.trf.xlu0
      %3347 = vxpose.xlu0.c.b16.start [1/8] %v2878, 128
      %3348 = vxpose.xlu0.c.b16.cont [2/8] 0, 128
      %3349 = vxpose.xlu0.c.b16.cont [3/8] 0, 128
      %3350 = vxpose.xlu0.c.b16.cont [4/8] 0, 128
      %3351 = vxpose.xlu0.c.b16.cont [5/8] 0, 128
      %3352 = vxpose.xlu0.c.b16.cont [6/8] 0, 128
      %3353 = vxpose.xlu0.c.b16.cont [7/8] 0, 128
      %3354 = vxpose.xlu0.c.b16.end [8/8] 0, 128
      %v3355 = vpop.trf.xlu0
      %v3356 = vpop.trf.xlu0
      %v3357 = vpop.trf.xlu0
      %v3358 = vpop.trf.xlu0
      %v3359 = vpop.trf.xlu0
      %v3360 = vpop.trf.xlu0
      %v3361 = vpop.trf.xlu0
      %v3362 = vpop.trf.xlu0
      %3363 = vxpose.xlu0.c.b16.start [1/8] %v2814, 128
      %3364 = vxpose.xlu0.c.b16.cont [2/8] 0, 128
      %3365 = vxpose.xlu0.c.b16.cont [3/8] 0, 128
      %3366 = vxpose.xlu0.c.b16.cont [4/8] 0, 128
      %3367 = vxpose.xlu0.c.b16.cont [5/8] 0, 128
      %3368 = vxpose.xlu0.c.b16.cont [6/8] 0, 128
      %3369 = vxpose.xlu0.c.b16.cont [7/8] 0, 128
      %3370 = vxpose.xlu0.c.b16.end [8/8] 0, 128
      %v3371 = vpop.trf.xlu0
      %v3372 = vpop.trf.xlu0
      %v3373 = vpop.trf.xlu0
      %v3374 = vpop.trf.xlu0
      %v3375 = vpop.trf.xlu0
      %v3376 = vpop.trf.xlu0
      %v3377 = vpop.trf.xlu0
      %v3378 = vpop.trf.xlu0
      %3379 = vxpose.xlu0.c.b16.start [1/8] %v2882, 128
      %3380 = vxpose.xlu0.c.b16.cont [2/8] 0, 128
      %3381 = vxpose.xlu0.c.b16.cont [3/8] 0, 128
      %3382 = vxpose.xlu0.c.b16.cont [4/8] 0, 128
      %3383 = vxpose.xlu0.c.b16.cont [5/8] 0, 128
      %3384 = vxpose.xlu0.c.b16.cont [6/8] 0, 128
      %3385 = vxpose.xlu0.c.b16.cont [7/8] 0, 128
      %3386 = vxpose.xlu0.c.b16.end [8/8] 0, 128
      %v3387 = vpop.trf.xlu0
      %v3388 = vpop.trf.xlu0
      %v3389 = vpop.trf.xlu0
      %v3390 = vpop.trf.xlu0
      %v3391 = vpop.trf.xlu0
      %v3392 = vpop.trf.xlu0
      %v3393 = vpop.trf.xlu0
      %v3394 = vpop.trf.xlu0
      %v3395 = vcombine.low %v2891, %v2955
      %v3397 = vunpack.c.l.s4 1983009808
      %v3398 = vunpack.c.0.s8 %v3397
      %v3399 = vlaneseq
      %v3400 = vshrl.u32 %v3399, 7
      %v3401 = vsub.s32 %v3398, %v3400
      %v3402 = vrot.slane %v3395, %v3401
      %v3403 = vcombine.low %v2923, %v2987
      %v3405 = vunpack.c.l.s4 1983009808
      %v3406 = vunpack.c.0.s8 %v3405
      %v3407 = vlaneseq
      %v3408 = vshrl.u32 %v3407, 7
      %v3409 = vsub.s32 %v3406, %v3408
      %v3410 = vrot.slane %v3403, %v3409
      %v3411 = vcombine.low %v3019, %v3083
      %v3413 = vunpack.c.l.s4 1983009808
      %v3414 = vunpack.c.0.s8 %v3413
      %v3415 = vlaneseq
      %v3416 = vshrl.u32 %v3415, 7
      %v3417 = vsub.s32 %v3414, %v3416
      %v3418 = vrot.slane %v3411, %v3417
      %v3419 = vcombine.low %v3051, %v3115
      %v3421 = vunpack.c.l.s4 1983009808
      %v3422 = vunpack.c.0.s8 %v3421
      %v3423 = vlaneseq
      %v3424 = vshrl.u32 %v3423, 7
      %v3425 = vsub.s32 %v3422, %v3424
      %v3426 = vrot.slane %v3419, %v3425
      %v3427 = vcombine.low %v3402, %v3410
      %v3429 = vunpack.c.l.s4 1934713408
      %v3430 = vunpack.c.0.s8 %v3429
      %v3431 = vlaneseq
      %v3432 = vshrl.u32 %v3431, 7
      %v3433 = vsub.s32 %v3430, %v3432
      %v3434 = vrot.slane %v3427, %v3433
      %v3435 = vcombine.low %v3418, %v3426
      %v3437 = vunpack.c.l.s4 1934713408
      %v3438 = vunpack.c.0.s8 %v3437
      %v3439 = vlaneseq
      %v3440 = vshrl.u32 %v3439, 7
      %v3441 = vsub.s32 %v3438, %v3440
      %v3442 = vrot.slane %v3435, %v3441
      %v3443 = vcombine.low %v3434, %v3442
      %v3444 = vcombine.high %v3434, %v3442
      %v3445 = vcombine.low %v2907, %v2971
      %v3447 = vunpack.c.l.s4 1983009808
      %v3448 = vunpack.c.0.s8 %v3447
      %v3449 = vlaneseq
      %v3450 = vshrl.u32 %v3449, 7
      %v3451 = vsub.s32 %v3448, %v3450
      %v3452 = vrot.slane %v3445, %v3451
      %v3453 = vcombine.low %v2939, %v3003
      %v3455 = vunpack.c.l.s4 1983009808
      %v3456 = vunpack.c.0.s8 %v3455
      %v3457 = vlaneseq
      %v3458 = vshrl.u32 %v3457, 7
      %v3459 = vsub.s32 %v3456, %v3458
      %v3460 = vrot.slane %v3453, %v3459
      %v3461 = vcombine.low %v3035, %v3099
      %v3463 = vunpack.c.l.s4 1983009808
      %v3464 = vunpack.c.0.s8 %v3463
      %v3465 = vlaneseq
      %v3466 = vshrl.u32 %v3465, 7
      %v3467 = vsub.s32 %v3464, %v3466
      %v3468 = vrot.slane %v3461, %v3467
      %v3469 = vcombine.low %v3067, %v3131
      %v3471 = vunpack.c.l.s4 1983009808
      %v3472 = vunpack.c.0.s8 %v3471
      %v3473 = vlaneseq
      %v3474 = vshrl.u32 %v3473, 7
      %v3475 = vsub.s32 %v3472, %v3474
      %v3476 = vrot.slane %v3469, %v3475
      %v3477 = vcombine.low %v3452, %v3460
      %v3479 = vunpack.c.l.s4 1934713408
      %v3480 = vunpack.c.0.s8 %v3479
      %v3481 = vlaneseq
      %v3482 = vshrl.u32 %v3481, 7
      %v3483 = vsub.s32 %v3480, %v3482
      %v3484 = vrot.slane %v3477, %v3483
      %v3485 = vcombine.low %v3468, %v3476
      %v3487 = vunpack.c.l.s4 1934713408
      %v3488 = vunpack.c.0.s8 %v3487
      %v3489 = vlaneseq
      %v3490 = vshrl.u32 %v3489, 7
      %v3491 = vsub.s32 %v3488, %v3490
      %v3492 = vrot.slane %v3485, %v3491
      %v3493 = vcombine.low %v3484, %v3492
      %v3494 = vcombine.high %v3484, %v3492
      %v3495 = vcombine.low %v3147, %v3211
      %v3497 = vunpack.c.l.s4 1983009808
      %v3498 = vunpack.c.0.s8 %v3497
      %v3499 = vlaneseq
      %v3500 = vshrl.u32 %v3499, 7
      %v3501 = vsub.s32 %v3498, %v3500
      %v3502 = vrot.slane %v3495, %v3501
      %v3503 = vcombine.low %v3179, %v3243
      %v3505 = vunpack.c.l.s4 1983009808
      %v3506 = vunpack.c.0.s8 %v3505
      %v3507 = vlaneseq
      %v3508 = vshrl.u32 %v3507, 7
      %v3509 = vsub.s32 %v3506, %v3508
      %v3510 = vrot.slane %v3503, %v3509
      %v3511 = vcombine.low %v3275, %v3339
      %v3513 = vunpack.c.l.s4 1983009808
      %v3514 = vunpack.c.0.s8 %v3513
      %v3515 = vlaneseq
      %v3516 = vshrl.u32 %v3515, 7
      %v3517 = vsub.s32 %v3514, %v3516
      %v3518 = vrot.slane %v3511, %v3517
      %v3519 = vcombine.low %v3307, %v3371
      %v3521 = vunpack.c.l.s4 1983009808
      %v3522 = vunpack.c.0.s8 %v3521
      %v3523 = vlaneseq
      %v3524 = vshrl.u32 %v3523, 7
      %v3525 = vsub.s32 %v3522, %v3524
      %v3526 = vrot.slane %v3519, %v3525
      %v3527 = vcombine.low %v3502, %v3510
      %v3529 = vunpack.c.l.s4 1934713408
      %v3530 = vunpack.c.0.s8 %v3529
      %v3531 = vlaneseq
      %v3532 = vshrl.u32 %v3531, 7
      %v3533 = vsub.s32 %v3530, %v3532
      %v3534 = vrot.slane %v3527, %v3533
      %v3535 = vcombine.low %v3518, %v3526
      %v3537 = vunpack.c.l.s4 1934713408
      %v3538 = vunpack.c.0.s8 %v3537
      %v3539 = vlaneseq
      %v3540 = vshrl.u32 %v3539, 7
      %v3541 = vsub.s32 %v3538, %v3540
      %v3542 = vrot.slane %v3535, %v3541
      %v3543 = vcombine.low %v3534, %v3542
      %v3544 = vcombine.high %v3534, %v3542
      %v3545 = vcombine.low %v3163, %v3227
      %v3547 = vunpack.c.l.s4 1983009808
      %v3548 = vunpack.c.0.s8 %v3547
      %v3549 = vlaneseq
      %v3550 = vshrl.u32 %v3549, 7
      %v3551 = vsub.s32 %v3548, %v3550
      %v3552 = vrot.slane %v3545, %v3551
      %v3553 = vcombine.low %v3195, %v3259
      %v3555 = vunpack.c.l.s4 1983009808
      %v3556 = vunpack.c.0.s8 %v3555
      %v3557 = vlaneseq
      %v3558 = vshrl.u32 %v3557, 7
      %v3559 = vsub.s32 %v3556, %v3558
      %v3560 = vrot.slane %v3553, %v3559
      %v3561 = vcombine.low %v3291, %v3355
      %v3563 = vunpack.c.l.s4 1983009808
      %v3564 = vunpack.c.0.s8 %v3563
      %v3565 = vlaneseq
      %v3566 = vshrl.u32 %v3565, 7
      %v3567 = vsub.s32 %v3564, %v3566
      %v3568 = vrot.slane %v3561, %v3567
      %v3569 = vcombine.low %v3323, %v3387
      %v3571 = vunpack.c.l.s4 1983009808
      %v3572 = vunpack.c.0.s8 %v3571
      %v3573 = vlaneseq
      %v3574 = vshrl.u32 %v3573, 7
      %v3575 = vsub.s32 %v3572, %v3574
      %v3576 = vrot.slane %v3569, %v3575
      %v3577 = vcombine.low %v3552, %v3560
      %v3579 = vunpack.c.l.s4 1934713408
      %v3580 = vunpack.c.0.s8 %v3579
      %v3581 = vlaneseq
      %v3582 = vshrl.u32 %v3581, 7
      %v3583 = vsub.s32 %v3580, %v3582
      %v3584 = vrot.slane %v3577, %v3583
      %v3585 = vcombine.low %v3568, %v3576
      %v3587 = vunpack.c.l.s4 1934713408
      %v3588 = vunpack.c.0.s8 %v3587
      %v3589 = vlaneseq
      %v3590 = vshrl.u32 %v3589, 7
      %v3591 = vsub.s32 %v3588, %v3590
      %v3592 = vrot.slane %v3585, %v3591
      %v3593 = vcombine.low %v3584, %v3592
      %v3594 = vcombine.high %v3584, %v3592
      %v3597 = vpack.i.b16 %v3493, %v3443
      %v3598 = vshrl.u32 %v3443, 16
      %v3599 = vshrl.u32 %v3493, 16
      %v3600 = vpack.i.b16 %v3599, %v3598
      %v3603 = vpack.i.b16 %v3494, %v3444
      %v3604 = vshrl.u32 %v3444, 16
      %v3605 = vshrl.u32 %v3494, 16
      %v3606 = vpack.i.b16 %v3605, %v3604
      %v3609 = vpack.i.b16 %v3593, %v3543
      %v3610 = vshrl.u32 %v3543, 16
      %v3611 = vshrl.u32 %v3593, 16
      %v3612 = vpack.i.b16 %v3611, %v3610
      %v3615 = vpack.i.b16 %v3594, %v3544
      %v3616 = vshrl.u32 %v3544, 16
      %v3617 = vshrl.u32 %v3594, 16
      %v3618 = vpack.i.b16 %v3617, %v3616
      %v3620 = vsel %vm2370, %v3597, 0
      %v3623 = vsel %vm2370, %v3609, 0
      %v3626 = vsel %vm2370, %v2415, 0
      %3628 = vmatprep.subr.bf16.mxu0 0
      %3629 = vmatpush1.bf16.xpose.msra.mxu0 %v3626
      %3630 = vmatprep.subr.bf16.mxu0 0
      %3631 = vmatpush1.bf16.xpose.msra.mxu0 0
      %3632 = vmatprep.subr.bf16.mxu0 0
      %3633 = vmatpush1.bf16.xpose.msra.mxu0 0
      %3634 = vmatprep.subr.bf16.mxu0 0
      %3635 = vmatpush1.bf16.xpose.msra.mxu0 0
      %3636 = vmatprep.subr.bf16.mxu0 0
      %3637 = vmatpush1.bf16.xpose.msra.mxu0 0
      %3638 = vmatprep.subr.bf16.mxu0 0
      %3639 = vmatpush1.bf16.xpose.msra.mxu0 0
      %3640 = vmatprep.subr.bf16.mxu0 0
      %3641 = vmatpush1.bf16.xpose.msra.mxu0 0
      %3642 = vmatprep.subr.bf16.mxu0 0
      %3643 = vmatpush1.bf16.xpose.msra.mxu0 0
      %3644 = vmatprep.subr.bf16.mxu0 0
      %3645 = vmatpush1.bf16.xpose.msra.mxu0 0
      %3646 = vmatprep.subr.bf16.mxu0 0
      %3647 = vmatpush1.bf16.xpose.msra.mxu0 0
      %3648 = vmatprep.subr.bf16.mxu0 0
      %3649 = vmatpush1.bf16.xpose.msra.mxu0 0
      %3650 = vmatprep.subr.bf16.mxu0 0
      %3651 = vmatpush1.bf16.xpose.msra.mxu0 0
      %3652 = vmatprep.subr.bf16.mxu0 0
      %3653 = vmatpush1.bf16.xpose.msra.mxu0 0
      %3654 = vmatprep.subr.bf16.mxu0 0
      %3655 = vmatpush1.bf16.xpose.msra.mxu0 0
      %3656 = vmatprep.subr.bf16.mxu0 0
      %3657 = vmatpush1.bf16.xpose.msra.mxu0 0
      %3658 = vmatprep.subr.bf16.mxu0 0
      %3659 = vmatpush1.bf16.xpose.msra.mxu0 0
      %3660 = vmatprep.mubr.bf16.mxu0 0
      %3661 = vmatmul.mubr.bf16.gmra.mrb[0].mxu0 %v3620
      %v3662 = vpop.f32.mrb[0].mxu0
      %v3663 = vadd.f32 0.0, %v3662
      %v3664 = vpop.f32.mrb[0].mxu0
      %v3665 = vpop.f32.mrb[0].mxu0
      %v3666 = vadd.f32 0.0, %v3665
      %v3667 = vpop.f32.mrb[0].mxu0
      %3668 = vmatprep.mubr.bf16.mxu0 0
      %3669 = vmatmul.mubr.bf16.gmra.mrb[0].mxu0 %v3623
      %v3670 = vpop.f32.mrb[0].mxu0
      %v3671 = vadd.f32 0.0, %v3670
      %v3672 = vpop.f32.mrb[0].mxu0
      %v3673 = vpop.f32.mrb[0].mxu0
      %v3674 = vadd.f32 0.0, %v3673
      %v3675 = vpop.f32.mrb[0].mxu0
      %3676 = vdwg.mxu0
      %v3678 = vsel %vm2370, %v3600, 0
      %v3681 = vsel %vm2370, %v3612, 0
      %v3684 = vsel %vm2370, %v2416, 0
      %3686 = vmatprep.subr.bf16.mxu0 0
      %3687 = vmatpush1.bf16.xpose.msra.mxu0 %v3684
      %3688 = vmatprep.subr.bf16.mxu0 0
      %3689 = vmatpush1.bf16.xpose.msra.mxu0 0
      %3690 = vmatprep.subr.bf16.mxu0 0
      %3691 = vmatpush1.bf16.xpose.msra.mxu0 0
      %3692 = vmatprep.subr.bf16.mxu0 0
      %3693 = vmatpush1.bf16.xpose.msra.mxu0 0
      %3694 = vmatprep.subr.bf16.mxu0 0
      %3695 = vmatpush1.bf16.xpose.msra.mxu0 0
      %3696 = vmatprep.subr.bf16.mxu0 0
      %3697 = vmatpush1.bf16.xpose.msra.mxu0 0
      %3698 = vmatprep.subr.bf16.mxu0 0
      %3699 = vmatpush1.bf16.xpose.msra.mxu0 0
      %3700 = vmatprep.subr.bf16.mxu0 0
      %3701 = vmatpush1.bf16.xpose.msra.mxu0 0
      %3702 = vmatprep.subr.bf16.mxu0 0
      %3703 = vmatpush1.bf16.xpose.msra.mxu0 0
      %3704 = vmatprep.subr.bf16.mxu0 0
      %3705 = vmatpush1.bf16.xpose.msra.mxu0 0
      %3706 = vmatprep.subr.bf16.mxu0 0
      %3707 = vmatpush1.bf16.xpose.msra.mxu0 0
      %3708 = vmatprep.subr.bf16.mxu0 0
      %3709 = vmatpush1.bf16.xpose.msra.mxu0 0
      %3710 = vmatprep.subr.bf16.mxu0 0
      %3711 = vmatpush1.bf16.xpose.msra.mxu0 0
      %3712 = vmatprep.subr.bf16.mxu0 0
      %3713 = vmatpush1.bf16.xpose.msra.mxu0 0
      %3714 = vmatprep.subr.bf16.mxu0 0
      %3715 = vmatpush1.bf16.xpose.msra.mxu0 0
      %3716 = vmatprep.subr.bf16.mxu0 0
      %3717 = vmatpush1.bf16.xpose.msra.mxu0 0
      %3718 = vmatprep.mubr.bf16.mxu0 0
      %3719 = vmatmul.mubr.bf16.gmra.mrb[0].mxu0 %v3678
      %v3720 = vpop.f32.mrb[0].mxu0
      %v3721 = vadd.f32 0.0, %v3720
      %v3722 = vpop.f32.mrb[0].mxu0
      %v3723 = vpop.f32.mrb[0].mxu0
      %v3724 = vadd.f32 0.0, %v3723
      %v3725 = vpop.f32.mrb[0].mxu0
      %3726 = vmatprep.mubr.bf16.mxu0 0
      %3727 = vmatmul.mubr.bf16.gmra.mrb[0].mxu0 %v3681
      %v3728 = vpop.f32.mrb[0].mxu0
      %v3729 = vadd.f32 0.0, %v3728
      %v3730 = vpop.f32.mrb[0].mxu0
      %v3731 = vpop.f32.mrb[0].mxu0
      %v3732 = vadd.f32 0.0, %v3731
      %v3733 = vpop.f32.mrb[0].mxu0
      %3734 = vdwg.mxu0
      %v3736 = vsel %vm2370, %v3603, 0
      %v3739 = vsel %vm2370, %v3615, 0
      %v3742 = vsel %vm2370, %v2417, 0
      %3744 = vmatprep.subr.bf16.mxu0 0
      %3745 = vmatpush1.bf16.xpose.msra.mxu0 %v3742
      %3746 = vmatprep.subr.bf16.mxu0 0
      %3747 = vmatpush1.bf16.xpose.msra.mxu0 0
      %3748 = vmatprep.subr.bf16.mxu0 0
      %3749 = vmatpush1.bf16.xpose.msra.mxu0 0
      %3750 = vmatprep.subr.bf16.mxu0 0
      %3751 = vmatpush1.bf16.xpose.msra.mxu0 0
      %3752 = vmatprep.subr.bf16.mxu0 0
      %3753 = vmatpush1.bf16.xpose.msra.mxu0 0
      %3754 = vmatprep.subr.bf16.mxu0 0
      %3755 = vmatpush1.bf16.xpose.msra.mxu0 0
      %3756 = vmatprep.subr.bf16.mxu0 0
      %3757 = vmatpush1.bf16.xpose.msra.mxu0 0
      %3758 = vmatprep.subr.bf16.mxu0 0
      %3759 = vmatpush1.bf16.xpose.msra.mxu0 0
      %3760 = vmatprep.subr.bf16.mxu0 0
      %3761 = vmatpush1.bf16.xpose.msra.mxu0 0
      %3762 = vmatprep.subr.bf16.mxu0 0
      %3763 = vmatpush1.bf16.xpose.msra.mxu0 0
      %3764 = vmatprep.subr.bf16.mxu0 0
      %3765 = vmatpush1.bf16.xpose.msra.mxu0 0
      %3766 = vmatprep.subr.bf16.mxu0 0
      %3767 = vmatpush1.bf16.xpose.msra.mxu0 0
      %3768 = vmatprep.subr.bf16.mxu0 0
      %3769 = vmatpush1.bf16.xpose.msra.mxu0 0
      %3770 = vmatprep.subr.bf16.mxu0 0
      %3771 = vmatpush1.bf16.xpose.msra.mxu0 0
      %3772 = vmatprep.subr.bf16.mxu0 0
      %3773 = vmatpush1.bf16.xpose.msra.mxu0 0
      %3774 = vmatprep.subr.bf16.mxu0 0
      %3775 = vmatpush1.bf16.xpose.msra.mxu0 0
      %3776 = vmatprep.mubr.bf16.mxu0 0
      %3777 = vmatmul.mubr.bf16.gmra.mrb[0].mxu0 %v3736
      %v3778 = vpop.f32.mrb[0].mxu0
      %v3779 = vadd.f32 0.0, %v3778
      %v3780 = vpop.f32.mrb[0].mxu0
      %v3781 = vpop.f32.mrb[0].mxu0
      %v3782 = vadd.f32 0.0, %v3781
      %v3783 = vpop.f32.mrb[0].mxu0
      %3784 = vmatprep.mubr.bf16.mxu0 0
      %3785 = vmatmul.mubr.bf16.gmra.mrb[0].mxu0 %v3739
      %v3786 = vpop.f32.mrb[0].mxu0
      %v3787 = vadd.f32 0.0, %v3786
      %v3788 = vpop.f32.mrb[0].mxu0
      %v3789 = vpop.f32.mrb[0].mxu0
      %v3790 = vadd.f32 0.0, %v3789
      %v3791 = vpop.f32.mrb[0].mxu0
      %3792 = vdwg.mxu0
      %v3794 = vsel %vm2370, %v3606, 0
      %v3797 = vsel %vm2370, %v3618, 0
      %v3800 = vsel %vm2370, %v2418, 0
      %3802 = vmatprep.subr.bf16.mxu0 0
      %3803 = vmatpush1.bf16.xpose.msra.mxu0 %v3800
      %3804 = vmatprep.subr.bf16.mxu0 0
      %3805 = vmatpush1.bf16.xpose.msra.mxu0 0
      %3806 = vmatprep.subr.bf16.mxu0 0
      %3807 = vmatpush1.bf16.xpose.msra.mxu0 0
      %3808 = vmatprep.subr.bf16.mxu0 0
      %3809 = vmatpush1.bf16.xpose.msra.mxu0 0
      %3810 = vmatprep.subr.bf16.mxu0 0
      %3811 = vmatpush1.bf16.xpose.msra.mxu0 0
      %3812 = vmatprep.subr.bf16.mxu0 0
      %3813 = vmatpush1.bf16.xpose.msra.mxu0 0
      %3814 = vmatprep.subr.bf16.mxu0 0
      %3815 = vmatpush1.bf16.xpose.msra.mxu0 0
      %3816 = vmatprep.subr.bf16.mxu0 0
      %3817 = vmatpush1.bf16.xpose.msra.mxu0 0
      %3818 = vmatprep.subr.bf16.mxu0 0
      %3819 = vmatpush1.bf16.xpose.msra.mxu0 0
      %3820 = vmatprep.subr.bf16.mxu0 0
      %3821 = vmatpush1.bf16.xpose.msra.mxu0 0
      %3822 = vmatprep.subr.bf16.mxu0 0
      %3823 = vmatpush1.bf16.xpose.msra.mxu0 0
      %3824 = vmatprep.subr.bf16.mxu0 0
      %3825 = vmatpush1.bf16.xpose.msra.mxu0 0
      %3826 = vmatprep.subr.bf16.mxu0 0
      %3827 = vmatpush1.bf16.xpose.msra.mxu0 0
      %3828 = vmatprep.subr.bf16.mxu0 0
      %3829 = vmatpush1.bf16.xpose.msra.mxu0 0
      %3830 = vmatprep.subr.bf16.mxu0 0
      %3831 = vmatpush1.bf16.xpose.msra.mxu0 0
      %3832 = vmatprep.subr.bf16.mxu0 0
      %3833 = vmatpush1.bf16.xpose.msra.mxu0 0
      %3834 = vmatprep.mubr.bf16.mxu0 0
      %3835 = vmatmul.mubr.bf16.gmra.mrb[0].mxu0 %v3794
      %v3836 = vpop.f32.mrb[0].mxu0
      %v3837 = vadd.f32 0.0, %v3836
      %v3838 = vpop.f32.mrb[0].mxu0
      %v3839 = vpop.f32.mrb[0].mxu0
      %v3840 = vadd.f32 0.0, %v3839
      %v3841 = vpop.f32.mrb[0].mxu0
      %3842 = vmatprep.mubr.bf16.mxu0 0
      %3843 = vmatmul.mubr.bf16.gmra.mrb[0].mxu0 %v3797
      %v3844 = vpop.f32.mrb[0].mxu0
      %v3845 = vadd.f32 0.0, %v3844
      %v3846 = vpop.f32.mrb[0].mxu0
      %v3847 = vpop.f32.mrb[0].mxu0
      %v3848 = vadd.f32 0.0, %v3847
      %v3849 = vpop.f32.mrb[0].mxu0
      %3850 = vdwg.mxu0
      %3851 = vxpose.xlu0.b32.start [1/16] %v3663, 128
      %3852 = vxpose.xlu0.b32.cont [2/16] %v3666, 128
      %3853 = vxpose.xlu0.b32.cont [3/16] %v3671, 128
      %3854 = vxpose.xlu0.b32.cont [4/16] %v3674, 128
      %3855 = vxpose.xlu0.b32.cont [5/16] 0.0, 128
      %3856 = vxpose.xlu0.b32.cont [6/16] 0.0, 128
      %3857 = vxpose.xlu0.b32.cont [7/16] 0.0, 128
      %3858 = vxpose.xlu0.b32.cont [8/16] 0.0, 128
      %3859 = vxpose.xlu0.b32.cont [9/16] 0.0, 128
      %3860 = vxpose.xlu0.b32.cont [10/16] 0.0, 128
      %3861 = vxpose.xlu0.b32.cont [11/16] 0.0, 128
      %3862 = vxpose.xlu0.b32.cont [12/16] 0.0, 128
      %3863 = vxpose.xlu0.b32.cont [13/16] 0.0, 128
      %3864 = vxpose.xlu0.b32.cont [14/16] 0.0, 128
      %3865 = vxpose.xlu0.b32.cont [15/16] 0.0, 128
      %3866 = vxpose.xlu0.b32.end [16/16] 0.0, 128
      %v3867 = vpop.trf.xlu0
      %v3868 = vpop.trf.xlu0
      %v3869 = vpop.trf.xlu0
      %v3870 = vpop.trf.xlu0
      %v3871 = vpop.trf.xlu0
      %v3872 = vpop.trf.xlu0
      %v3873 = vpop.trf.xlu0
      %v3874 = vpop.trf.xlu0
      %v3875 = vpop.trf.xlu0
      %v3876 = vpop.trf.xlu0
      %v3877 = vpop.trf.xlu0
      %v3878 = vpop.trf.xlu0
      %v3879 = vpop.trf.xlu0
      %v3880 = vpop.trf.xlu0
      %v3881 = vpop.trf.xlu0
      %v3882 = vpop.trf.xlu0
      %3883 = vxpose.xlu0.b32.start [1/16] %v3721, 128
      %3884 = vxpose.xlu0.b32.cont [2/16] %v3724, 128
      %3885 = vxpose.xlu0.b32.cont [3/16] %v3729, 128
      %3886 = vxpose.xlu0.b32.cont [4/16] %v3732, 128
      %3887 = vxpose.xlu0.b32.cont [5/16] 0.0, 128
      %3888 = vxpose.xlu0.b32.cont [6/16] 0.0, 128
      %3889 = vxpose.xlu0.b32.cont [7/16] 0.0, 128
      %3890 = vxpose.xlu0.b32.cont [8/16] 0.0, 128
      %3891 = vxpose.xlu0.b32.cont [9/16] 0.0, 128
      %3892 = vxpose.xlu0.b32.cont [10/16] 0.0, 128
      %3893 = vxpose.xlu0.b32.cont [11/16] 0.0, 128
      %3894 = vxpose.xlu0.b32.cont [12/16] 0.0, 128
      %3895 = vxpose.xlu0.b32.cont [13/16] 0.0, 128
      %3896 = vxpose.xlu0.b32.cont [14/16] 0.0, 128
      %3897 = vxpose.xlu0.b32.cont [15/16] 0.0, 128
      %3898 = vxpose.xlu0.b32.end [16/16] 0.0, 128
      %v3899 = vpop.trf.xlu0
      %v3900 = vpop.trf.xlu0
      %v3901 = vpop.trf.xlu0
      %v3902 = vpop.trf.xlu0
      %v3903 = vpop.trf.xlu0
      %v3904 = vpop.trf.xlu0
      %v3905 = vpop.trf.xlu0
      %v3906 = vpop.trf.xlu0
      %v3907 = vpop.trf.xlu0
      %v3908 = vpop.trf.xlu0
      %v3909 = vpop.trf.xlu0
      %v3910 = vpop.trf.xlu0
      %v3911 = vpop.trf.xlu0
      %v3912 = vpop.trf.xlu0
      %v3913 = vpop.trf.xlu0
      %v3914 = vpop.trf.xlu0
      %3915 = vxpose.xlu0.b32.start [1/16] %v3779, 128
      %3916 = vxpose.xlu0.b32.cont [2/16] %v3782, 128
      %3917 = vxpose.xlu0.b32.cont [3/16] %v3787, 128
      %3918 = vxpose.xlu0.b32.cont [4/16] %v3790, 128
      %3919 = vxpose.xlu0.b32.cont [5/16] 0.0, 128
      %3920 = vxpose.xlu0.b32.cont [6/16] 0.0, 128
      %3921 = vxpose.xlu0.b32.cont [7/16] 0.0, 128
      %3922 = vxpose.xlu0.b32.cont [8/16] 0.0, 128
      %3923 = vxpose.xlu0.b32.cont [9/16] 0.0, 128
      %3924 = vxpose.xlu0.b32.cont [10/16] 0.0, 128
      %3925 = vxpose.xlu0.b32.cont [11/16] 0.0, 128
      %3926 = vxpose.xlu0.b32.cont [12/16] 0.0, 128
      %3927 = vxpose.xlu0.b32.cont [13/16] 0.0, 128
      %3928 = vxpose.xlu0.b32.cont [14/16] 0.0, 128
      %3929 = vxpose.xlu0.b32.cont [15/16] 0.0, 128
      %3930 = vxpose.xlu0.b32.end [16/16] 0.0, 128
      %v3931 = vpop.trf.xlu0
      %v3932 = vpop.trf.xlu0
      %v3933 = vpop.trf.xlu0
      %v3934 = vpop.trf.xlu0
      %v3935 = vpop.trf.xlu0
      %v3936 = vpop.trf.xlu0
      %v3937 = vpop.trf.xlu0
      %v3938 = vpop.trf.xlu0
      %v3939 = vpop.trf.xlu0
      %v3940 = vpop.trf.xlu0
      %v3941 = vpop.trf.xlu0
      %v3942 = vpop.trf.xlu0
      %v3943 = vpop.trf.xlu0
      %v3944 = vpop.trf.xlu0
      %v3945 = vpop.trf.xlu0
      %v3946 = vpop.trf.xlu0
      %3947 = vxpose.xlu0.b32.start [1/16] %v3837, 128
      %3948 = vxpose.xlu0.b32.cont [2/16] %v3840, 128
      %3949 = vxpose.xlu0.b32.cont [3/16] %v3845, 128
      %3950 = vxpose.xlu0.b32.cont [4/16] %v3848, 128
      %3951 = vxpose.xlu0.b32.cont [5/16] 0.0, 128
      %3952 = vxpose.xlu0.b32.cont [6/16] 0.0, 128
      %3953 = vxpose.xlu0.b32.cont [7/16] 0.0, 128
      %3954 = vxpose.xlu0.b32.cont [8/16] 0.0, 128
      %3955 = vxpose.xlu0.b32.cont [9/16] 0.0, 128
      %3956 = vxpose.xlu0.b32.cont [10/16] 0.0, 128
      %3957 = vxpose.xlu0.b32.cont [11/16] 0.0, 128
      %3958 = vxpose.xlu0.b32.cont [12/16] 0.0, 128
      %3959 = vxpose.xlu0.b32.cont [13/16] 0.0, 128
      %3960 = vxpose.xlu0.b32.cont [14/16] 0.0, 128
      %3961 = vxpose.xlu0.b32.cont [15/16] 0.0, 128
      %3962 = vxpose.xlu0.b32.end [16/16] 0.0, 128
      %v3963 = vpop.trf.xlu0
      %v3964 = vpop.trf.xlu0
      %v3965 = vpop.trf.xlu0
      %v3966 = vpop.trf.xlu0
      %v3967 = vpop.trf.xlu0
      %v3968 = vpop.trf.xlu0
      %v3969 = vpop.trf.xlu0
      %v3970 = vpop.trf.xlu0
      %v3971 = vpop.trf.xlu0
      %v3972 = vpop.trf.xlu0
      %v3973 = vpop.trf.xlu0
      %v3974 = vpop.trf.xlu0
      %v3975 = vpop.trf.xlu0
      %v3976 = vpop.trf.xlu0
      %v3977 = vpop.trf.xlu0
      %v3978 = vpop.trf.xlu0
      %v3979 = vcombine.low %v3867, %v3931
      %v3980 = vcombine.high %v3867, %v3931
      %v3982 = vunpack.c.l.s4 1983009808
      %v3983 = vunpack.c.0.s8 %v3982
      %v3984 = vlaneseq
      %v3985 = vshrl.u32 %v3984, 7
      %v3986 = vsub.s32 %v3983, %v3985
      %v3987 = vrot.slane %v3979, %v3986
      %v3989 = vunpack.c.l.s4 1983009808
      %v3990 = vunpack.c.0.s8 %v3989
      %v3991 = vlaneseq
      %v3992 = vshrl.u32 %v3991, 7
      %v3993 = vsub.s32 %v3990, %v3992
      %v3994 = vrot.slane %v3980, %v3993
      %v3995 = vcombine.low %v3899, %v3963
      %v3996 = vcombine.high %v3899, %v3963
      %v3998 = vunpack.c.l.s4 1983009808
      %v3999 = vunpack.c.0.s8 %v3998
      %v4000 = vlaneseq
      %v4001 = vshrl.u32 %v4000, 7
      %v4002 = vsub.s32 %v3999, %v4001
      %v4003 = vrot.slane %v3995, %v4002
      %v4005 = vunpack.c.l.s4 1983009808
      %v4006 = vunpack.c.0.s8 %v4005
      %v4007 = vlaneseq
      %v4008 = vshrl.u32 %v4007, 7
      %v4009 = vsub.s32 %v4006, %v4008
      %v4010 = vrot.slane %v3996, %v4009
      %v4011 = vcombine.low %v3987, %v4003
      %v4012 = vcombine.high %v3987, %v4003
      %v4014 = vunpack.c.l.s4 1934713408
      %v4015 = vunpack.c.0.s8 %v4014
      %v4016 = vlaneseq
      %v4017 = vshrl.u32 %v4016, 7
      %v4018 = vsub.s32 %v4015, %v4017
      %v4019 = vrot.slane %v4011, %v4018
      %v4021 = vunpack.c.l.s4 1934713408
      %v4022 = vunpack.c.0.s8 %v4021
      %v4023 = vlaneseq
      %v4024 = vshrl.u32 %v4023, 7
      %v4025 = vsub.s32 %v4022, %v4024
      %v4026 = vrot.slane %v4012, %v4025
      %v4027 = vcombine.low %v3994, %v4010
      %v4028 = vcombine.high %v3994, %v4010
      %v4030 = vunpack.c.l.s4 1934713408
      %v4031 = vunpack.c.0.s8 %v4030
      %v4032 = vlaneseq
      %v4033 = vshrl.u32 %v4032, 7
      %v4034 = vsub.s32 %v4031, %v4033
      %v4035 = vrot.slane %v4027, %v4034
      %v4037 = vunpack.c.l.s4 1934713408
      %v4038 = vunpack.c.0.s8 %v4037
      %v4039 = vlaneseq
      %v4040 = vshrl.u32 %v4039, 7
      %v4041 = vsub.s32 %v4038, %v4040
      %v4042 = vrot.slane %v4028, %v4041
      %v4043 = vcombine.high %v4019, 0.0
      %v4044 = vcombine.high %v4026, 0.0
      %v4045 = vcombine.high %v4035, 0.0
      %v4046 = vcombine.high %v4042, 0.0
      %v4047 = vcombine.low %v4019, %v4026
      %v4049 = vunpack.c.l.s4 1983009808
      %v4050 = vunpack.c.0.s8 %v4049
      %v4051 = vlaneseq
      %v4052 = vshrl.u32 %v4051, 7
      %v4053 = vsub.s32 %v4050, %v4052
      %v4054 = vrot.slane %v4047, %v4053
      %v4055 = vcombine.low %v4043, %v4044
      %v4057 = vunpack.c.l.s4 1983009808
      %v4058 = vunpack.c.0.s8 %v4057
      %v4059 = vlaneseq
      %v4060 = vshrl.u32 %v4059, 7
      %v4061 = vsub.s32 %v4058, %v4060
      %v4062 = vrot.slane %v4055, %v4061
      %v4063 = vcombine.low %v4035, %v4042
      %v4065 = vunpack.c.l.s4 1983009808
      %v4066 = vunpack.c.0.s8 %v4065
      %v4067 = vlaneseq
      %v4068 = vshrl.u32 %v4067, 7
      %v4069 = vsub.s32 %v4066, %v4068
      %v4070 = vrot.slane %v4063, %v4069
      %v4071 = vcombine.low %v4045, %v4046
      %v4073 = vunpack.c.l.s4 1983009808
      %v4074 = vunpack.c.0.s8 %v4073
      %v4075 = vlaneseq
      %v4076 = vshrl.u32 %v4075, 7
      %v4077 = vsub.s32 %v4074, %v4076
      %v4078 = vrot.slane %v4071, %v4077
      %v4079 = vcombine.low %v4054, %v4062
      %v4080 = vcombine.high %v4054, %v4062
      %v4082 = vunpack.c.l.s4 1934713408
      %v4083 = vunpack.c.0.s8 %v4082
      %v4084 = vlaneseq
      %v4085 = vshrl.u32 %v4084, 7
      %v4086 = vsub.s32 %v4083, %v4085
      %v4087 = vrot.slane %v4079, %v4086
      %v4089 = vunpack.c.l.s4 1934713408
      %v4090 = vunpack.c.0.s8 %v4089
      %v4091 = vlaneseq
      %v4092 = vshrl.u32 %v4091, 7
      %v4093 = vsub.s32 %v4090, %v4092
      %v4094 = vrot.slane %v4080, %v4093
      %v4095 = vcombine.low %v4070, %v4078
      %v4096 = vcombine.high %v4070, %v4078
      %v4098 = vunpack.c.l.s4 1934713408
      %v4099 = vunpack.c.0.s8 %v4098
      %v4100 = vlaneseq
      %v4101 = vshrl.u32 %v4100, 7
      %v4102 = vsub.s32 %v4099, %v4101
      %v4103 = vrot.slane %v4095, %v4102
      %v4105 = vunpack.c.l.s4 1934713408
      %v4106 = vunpack.c.0.s8 %v4105
      %v4107 = vlaneseq
      %v4108 = vshrl.u32 %v4107, 7
      %v4109 = vsub.s32 %v4106, %v4108
      %v4110 = vrot.slane %v4096, %v4109
      %v4111 = vcombine.low %v4087, %v4103
      %v4112 = vcombine.high %v4087, %v4103
      %v4113 = vcombine.low %v4094, %v4110
      %v4114 = vcombine.high %v4094, %v4110
      %4116 = vrot.lane.b32.xlu0 %v4112, 32
      %v4117 = vpop.permute.xlu0 %4116
      %4120 = vrot.lane.b32.xlu0 %v4113, 64
      %v4121 = vpop.permute.xlu0 %4120
      %4124 = vrot.lane.b32.xlu0 %v4114, 96
      %v4125 = vpop.permute.xlu0 %4124
      %v4127 = vsel %vm2197, %v4111, %v4117
      %vm4128 = vcmask 523264
      %v4129 = vsel %vm4128, %v4127, %v4121
      %vm4130 = vcmask 785408
      %v4131 = vsel %vm4130, %v4129, %v4125
      %v4132 = vpack.c.bf16 %v4131, %v4131
      %v4133 = vld [vmem:[%s6] sm:$0xf]
      %v4134 = vld [vmem:[%s6 + $0x4] sm:$0xf]
      %v4135 = vld [vmem:[%s6 + $0x8] sm:$0xf]
      %v4136 = vld [vmem:[%s6 + $0xc] sm:$0xf]
      %v4137 = vld [vmem:[%s6 + $0x10] sm:$0xf]
      %v4138 = vld [vmem:[%s6 + $0x14] sm:$0xf]
      %v4139 = vld [vmem:[%s6 + $0x18] sm:$0xf]
      %v4140 = vld [vmem:[%s6 + $0x1c] sm:$0xf]
      %v4141 = vld [vmem:[%s6 + $0x20] sm:$0xf]
      %v4142 = vld [vmem:[%s6 + $0x24] sm:$0xf]
      %v4143 = vld [vmem:[%s6 + $0x28] sm:$0xf]
      %v4144 = vld [vmem:[%s6 + $0x2c] sm:$0xf]
      %v4145 = vld [vmem:[%s6 + $0x30] sm:$0xf]
      %v4146 = vld [vmem:[%s6 + $0x34] sm:$0xf]
      %v4147 = vld [vmem:[%s6 + $0x38] sm:$0xf]
      %v4148 = vld [vmem:[%s6 + $0x3c] sm:$0xf]
      %v4149 = vld [vmem:[%s7] sm:$0x1]
      %v4151 = vlaneseq
      %v4152 = vshrl.u32 %v4151, 7
      %v4153 = vsub.s32 0, %v4152
      %v4154 = vrot.slane %v4149, %v4153
      %v4172 = vunpack.c.l.b16 %v4133
      %v4173 = vunpack.c.l.b16 %v4134
      %v4174 = vunpack.c.l.b16 %v4135
      %v4175 = vunpack.c.l.b16 %v4136
      %v4176 = vunpack.c.l.b16 %v4137
      %v4177 = vunpack.c.l.b16 %v4138
      %v4178 = vunpack.c.l.b16 %v4139
      %v4179 = vunpack.c.l.b16 %v4140
      %v4180 = vunpack.c.l.b16 %v4141
      %v4181 = vunpack.c.l.b16 %v4142
      %v4182 = vunpack.c.l.b16 %v4143
      %v4183 = vunpack.c.l.b16 %v4144
      %v4184 = vunpack.c.l.b16 %v4145
      %v4185 = vunpack.c.l.b16 %v4146
      %v4186 = vunpack.c.l.b16 %v4147
      %v4187 = vunpack.c.l.b16 %v4148
      %v4188 = vpack.c.b16 %v4173, %v4172
      %v4189 = vpack.c.b16 %v4175, %v4174
      %v4190 = vpack.c.b16 %v4177, %v4176
      %v4191 = vpack.c.b16 %v4179, %v4178
      %v4192 = vpack.c.b16 %v4181, %v4180
      %v4193 = vpack.c.b16 %v4183, %v4182
      %v4194 = vpack.c.b16 %v4185, %v4184
      %v4195 = vpack.c.b16 %v4187, %v4186
      %4204 = vmatprep.subr.bf16.mxu0 0
      %4205 = vmatpush1.bf16.msra.mxu0 %v4188
      %4206 = vmatprep.subr.bf16.mxu0 0
      %4207 = vmatpush1.bf16.msra.mxu0 %v4189
      %4208 = vmatprep.subr.bf16.mxu0 0
      %4209 = vmatpush1.bf16.msra.mxu0 %v4190
      %4210 = vmatprep.subr.bf16.mxu0 0
      %4211 = vmatpush1.bf16.msra.mxu0 %v4191
      %4212 = vmatprep.subr.bf16.mxu0 0
      %4213 = vmatpush1.bf16.msra.mxu0 %v4192
      %4214 = vmatprep.subr.bf16.mxu0 0
      %4215 = vmatpush1.bf16.msra.mxu0 %v4193
      %4216 = vmatprep.subr.bf16.mxu0 0
      %4217 = vmatpush1.bf16.msra.mxu0 %v4194
      %4218 = vmatprep.subr.bf16.mxu0 0
      %4219 = vmatpush1.bf16.msra.mxu0 %v4195
      %4220 = vmatprep.subr.bf16.mxu0 0
      %4221 = vmatpush1.bf16.msra.mxu0 0
      %4222 = vmatprep.subr.bf16.mxu0 0
      %4223 = vmatpush1.bf16.msra.mxu0 0
      %4224 = vmatprep.subr.bf16.mxu0 0
      %4225 = vmatpush1.bf16.msra.mxu0 0
      %4226 = vmatprep.subr.bf16.mxu0 0
      %4227 = vmatpush1.bf16.msra.mxu0 0
      %4228 = vmatprep.subr.bf16.mxu0 0
      %4229 = vmatpush1.bf16.msra.mxu0 0
      %4230 = vmatprep.subr.bf16.mxu0 0
      %4231 = vmatpush1.bf16.msra.mxu0 0
      %4232 = vmatprep.subr.bf16.mxu0 0
      %4233 = vmatpush1.bf16.msra.mxu0 0
      %4234 = vmatprep.subr.bf16.mxu0 0
      %4235 = vmatpush1.bf16.msra.mxu0 0
      %4236 = vmatprep.mubr.bf16.mxu0 0
      %4237 = vmatmul.mubr.bf16.gmra.mrb[0].mxu0 %v4132
      %v4238 = vpop.f32.mrb[0].mxu0
      %v4239 = vadd.f32 %v4154, %v4238
      %v4240 = vpop.f32.mrb[0].mxu0
      %v4241 = vpop.f32.mrb[0].mxu0
      %v4242 = vpop.f32.mrb[0].mxu0
      %4243 = vdwg.mxu0
      %v4244 = vadd.f32 %v404, %v4239
      %4245 = vadd.xlane.f32.xlu0 %v4244
      %v4246 = vpop.xlane.xlu0 %4245
      %v4247 = vrcp.pop 128.0
      %v4248 = vmul.f32 %v4246, %v4247
      %v4249 = vsub.f32 %v4244, %v4248
      %v4250 = vmul.f32 %v4249, %v4249
      %4251 = vadd.xlane.f32.xlu0 %v4250
      %v4252 = vpop.xlane.xlu0 %4251
      %v4253 = vmul.f32 %v4252, %v4247
      %v4254 = vadd.f32 %v4253, 1e-05
      %v4255 = vrsqrt.pop %v4254
      %v4256 = vmul.f32 %v4249, %v4255
      %v4257 = vld [vmem:[%s8] sm:$0x1]
      %v4259 = vlaneseq
      %v4260 = vshrl.u32 %v4259, 7
      %v4261 = vsub.s32 0, %v4260
      %v4262 = vrot.slane %v4257, %v4261
      %v4264 = vmul.f32 %v4256, %v4262
      %v4265 = vld [vmem:[%s9] sm:$0x1]
      %v4267 = vlaneseq
      %v4268 = vshrl.u32 %v4267, 7
      %v4269 = vsub.s32 0, %v4268
      %v4270 = vrot.slane %v4265, %v4269
      %v4272 = vadd.f32 %v4264, %v4270
      %4273 = vst [vmem:[%s402] sm:$0xff] %v4272
      %p4274 = scmp.lt.s32.totalorder %s25, 1
      %s4275 = scalar_select %p4274, %s25, 1
      %p4276 = scmp.lt.s32.totalorder %s26, 0
      %s4277 = scalar_select %p4276, %s26, 0
      %s4278 = sadd.s32 %s4277, %s4275
      %s4279 = smul.addr %s4278, 8
      %s4280 = scalar_lea.vmem %s10, %s4279
      // Predicated region
      $region61: #{transformer_lm_forward.7} parent=59 // pred_check
        %p4281 = pneg %p275
      $region62: #{transformer_lm_forward.7} parent=59 // pred_check_branch
        %4283 = sbr.rel (%p4281) target = $region64
      $region63: #{transformer_lm_forward.7} parent=59 // pred_region
        _
      $region64: #{transformer_lm_forward.7} parent=59 // pred_fallthru
        _
    $region60: #{transformer_lm_forward.7} parent=5 // pred_fallthru
      _
    %p4284 = scmp.le.s32.totalorder 2, %s16
    // Predicated region
    $region65: #{transformer_lm_forward.7} parent=5 // pred_check
      %p4285 = pneg %p4284
    $region66: #{transformer_lm_forward.7} parent=5 // pred_check_branch
      %4287 = sbr.rel (%p4285) target = $region68
    $region67: #{transformer_lm_forward.7} parent=5 // pred_region
      %s4288 = ssub.s32 %s16, 2
      // Predicated region
      $region69: #{transformer_lm_forward.7} parent=67 // pred_check
        %p4289 = pneg %p281
      $region70: #{transformer_lm_forward.7} parent=67 // pred_check_branch
        %4291 = sbr.rel (%p4289) target = $region72
      $region71: #{transformer_lm_forward.7} parent=67 // pred_region
        %p4292 = scmp.lt.s32.totalorder %s27, 1
        %s4293 = scalar_select %p4292, %s27, 1
        %p4294 = scmp.lt.s32.totalorder %s28, 0
        %s4295 = scalar_select %p4294, %s28, 0
        %s4296 = sadd.s32 %s4295, %s4293
        %s4297 = smul.addr %s4296, 8
        %s4298 = scalar_lea.vmem %s10, %s4297
      $region72: #{transformer_lm_forward.7} parent=67 // pred_fallthru
        _
    $region68: #{transformer_lm_forward.7} parent=5 // pred_fallthru
      _
  $region6: #{transformer_lm_forward.7} parent=0 // loop_footer
    %s20 = sadd.s32 1, %s16
  $region7: #{transformer_lm_forward.7} parent=0 // loop_footer_branch
    %15 = sbr.rel target = $region3
  $region8: #{transformer_lm_forward.7} parent=0 // loop_exit
    _

</llo_original>
